<compile_context>
chip_gen: v7x
topology: tpu7x:2x2x1
jax: 0.10.0
libtpu: 0.0.40
codegen_flags: <defaults>
</compile_context>

<pallas_src>
import functools
import math

import jax
import jax.numpy as jnp
from jax.experimental import pallas as pl
from jax.experimental.pallas import tpu as pltpu

NEG_INF = -1e9
EPS = 1e-6

_STACK_ORDER = ("a1", "b1", "wqkv", "bqkv", "wo", "bo",
                "a2", "b2", "w1", "bf1", "w2", "bf2")


# ----------------------------- in-kernel math ------------------------------


def _norm(x, alpha, bias):
    # tutorial-style Norm: alpha * (x - mean) / (std + eps) + bias, std with ddof=1
    d_last = x.shape[-1]
    mean = jnp.mean(x, axis=-1, keepdims=True)
    d = x - mean
    var = jnp.sum(d * d, axis=-1, keepdims=True) * (1.0 / (d_last - 1))
    std = jnp.sqrt(var)
    inv = pl.reciprocal(std + EPS, approx=True)
    return alpha * d * inv + bias


def _encoder_layer(x, addmask, a1, b1, wqkv, bqkv, wo, bo, a2, b2, w1, bf1, w2, bf2,
                   heads):
    # x: (R, S, D), addmask: (R, 1, S) additive (0 / -1e9) key mask
    R, S, D = x.shape
    dk = D // heads
    scale = 1.0 / math.sqrt(dk)

    # --- self-attention block (pre-norm), fused QKV projection ---
    x2 = _norm(x, a1, b1)
    x2f = x2.reshape(R * S, D)
    qkv = jnp.dot(x2f, wqkv, preferred_element_type=jnp.float32) + bqkv   # (R*S, 3D)
    q = qkv[:, 0 * D:1 * D].reshape(R, S, D)
    k = qkv[:, 1 * D:2 * D].reshape(R, S, D)
    v = qkv[:, 2 * D:3 * D].reshape(R, S, D)

    head_outs = []
    for h in range(heads):                       # static, row-batched per head
        sl = slice(h * dk, (h + 1) * dk)
        qh, kh, vh = q[..., sl], k[..., sl], v[..., sl]          # (R, S, dk)
        s = jnp.einsum('bqd,bkd->bqk', qh, kh,
                       preferred_element_type=jnp.float32) * scale
        s = s + addmask                                           # broadcast over queries
        s = s - jnp.max(s, axis=-1, keepdims=True)
        p = jnp.exp(s)
        p = p * pl.reciprocal(jnp.sum(p, axis=-1, keepdims=True), approx=True)
        head_outs.append(jnp.einsum('bqk,bkd->bqd', p, vh,
                                    preferred_element_type=jnp.float32))
    ctx = jnp.concatenate(head_outs, axis=-1)                     # (R, S, D)
    attn = jnp.dot(ctx.reshape(R * S, D), wo,
                   preferred_element_type=jnp.float32) + bo
    x = x + attn.reshape(R, S, D)               # dropout is identity in eval mode

    # --- feed-forward block (pre-norm) ---
    x2 = _norm(x, a2, b2)
    h1 = jnp.maximum(
        jnp.dot(x2.reshape(R * S, D), w1, preferred_element_type=jnp.float32) + bf1, 0.0)
    ff = jnp.dot(h1, w2, preferred_element_type=jnp.float32) + bf2
    return x + ff.reshape(R, S, D)


def _run_layers(x, addmask, refs, heads, n_layers):
    (a1_ref, b1_ref, wqkv_ref, bqkv_ref, wo_ref, bo_ref,
     a2_ref, b2_ref, w1_ref, bf1_ref, w2_ref, bf2_ref) = refs
    for l in range(n_layers):                   # static unroll over layers
        x = _encoder_layer(x, addmask,
                           a1_ref[l], b1_ref[l], wqkv_ref[l], bqkv_ref[l],
                           wo_ref[l], bo_ref[l], a2_ref[l], b2_ref[l],
                           w1_ref[l], bf1_ref[l], w2_ref[l], bf2_ref[l],
                           heads)
    return x


# ----------------------------- Pallas kernels ------------------------------


def char_encoder_kernel(x_ref, m_ref,
                        a1_ref, b1_ref, wqkv_ref, bqkv_ref, wo_ref, bo_ref,
                        a2_ref, b2_ref, w1_ref, bf1_ref, w2_ref, bf2_ref,
                        na_ref, nb_ref,
                        o_ref, *, heads, n_layers):
    x = x_ref[...]                                            # (rt, S, D)
    addmask = jnp.where(m_ref[...] == 0.0, NEG_INF, 0.0)      # (rt, 1, S)
    x = _run_layers(x, addmask,
                    (a1_ref, b1_ref, wqkv_ref, bqkv_ref, wo_ref, bo_ref,
                     a2_ref, b2_ref, w1_ref, bf1_ref, w2_ref, bf2_ref),
                    heads, n_layers)
    xn = _norm(x, na_ref[...], nb_ref[...])
    # fused char mean-pool over the char axis (replaces .view(...).mean(axis=2))
    o_ref[...] = jnp.mean(xn, axis=1)                         # (rt, D)


def word_encoder_head_kernel(x_ref, m_ref,
                             a1_ref, b1_ref, wqkv_ref, bqkv_ref, wo_ref, bo_ref,
                             a2_ref, b2_ref, w1_ref, bf1_ref, w2_ref, bf2_ref,
                             na_ref, nb_ref, wout_ref, bout_ref,
                             o_ref, *, heads, n_layers):
    x = x_ref[...]                                            # (bt, W, D)
    addmask = jnp.where(m_ref[...] == 0.0, NEG_INF, 0.0)      # (bt, 1, W)
    x = _run_layers(x, addmask,
                    (a1_ref, b1_ref, wqkv_ref, bqkv_ref, wo_ref, bo_ref,
                     a2_ref, b2_ref, w1_ref, bf1_ref, w2_ref, bf2_ref),
                    heads, n_layers)
    xn = _norm(x, na_ref[...], nb_ref[...])
    pooled = jnp.mean(xn, axis=1)                             # (bt, D)  (seq_output=False)
    # dropout == identity in eval; fused output Linear
    o_ref[...] = jnp.dot(pooled, wout_ref[...],
                         preferred_element_type=jnp.float32) + bout_ref[...]


# ----------------------------- kernel wrappers ------------------------------


def _row_tile(rows):
    # Full rows in one block when small; otherwise sublane-aligned (multiple of 8) tiles
    # so multiple grid steps can be split across TensorCores (v7x megacore).
    if rows <= 8 or rows % 8 != 0:
        return rows
    for t in (256, 128, 64, 32, 16, 8):
        if rows % t == 0:
            return t
    return rows


def _const_spec(shape):
    nd = len(shape)
    return pl.BlockSpec(tuple(shape), lambda i, _nd=nd: (0,) * _nd)


def _row_spec(full_shape, tile):
    nd = len(full_shape)
    blk = (tile,) + tuple(full_shape[1:])
    return pl.BlockSpec(blk, lambda i, _nd=nd: (i,) + (0,) * (_nd - 1))


def _stacked_specs(sp):
    return [_const_spec(sp[k].shape) for k in _STACK_ORDER]


def _stacked_args(sp):
    return tuple(sp[k] for k in _STACK_ORDER)


def run_char_encoder(x, keymask, sp, norm_a, norm_b, heads):
    R, S, D = x.shape
    n_layers = sp["a1"].shape[0]
    rt = _row_tile(R)
    kernel = functools.partial(char_encoder_kernel, heads=heads, n_layers=n_layers)
    return pl.pallas_call(
        kernel,
        out_shape=jax.ShapeDtypeStruct((R, D), jnp.float32),
        grid=(R // rt,),
        in_specs=[_row_spec((R, S, D), rt), _row_spec((R, 1, S), rt)]
                 + _stacked_specs(sp)
                 + [_const_spec((1, D)), _const_spec((1, D))],
        out_specs=pl.BlockSpec((rt, D), lambda i: (i, 0)),
        compiler_params=pltpu.CompilerParams(dimension_semantics=("parallel",)),
    )(x, keymask, *_stacked_args(sp), norm_a, norm_b)


def run_word_encoder_head(y, keymask, sp, norm_a, norm_b, w_out, b_out, heads):
    B, W, D = y.shape
    n_layers = sp["a1"].shape[0]
    n_out = w_out.shape[1]
    bt = _row_tile(B)
    kernel = functools.partial(word_encoder_head_kernel, heads=heads, n_layers=n_layers)
    return pl.pallas_call(
        kernel,
        out_shape=jax.ShapeDtypeStruct((B, n_out), jnp.float32),
        grid=(B // bt,),
        in_specs=[_row_spec((B, W, D), bt), _row_spec((B, 1, W), bt)]
                 + _stacked_specs(sp)
                 + [_const_spec((1, D)), _const_spec((1, D)),
                    _const_spec((D, n_out)), _const_spec((1, n_out))],
        out_specs=pl.BlockSpec((bt, n_out), lambda i: (i, 0)),
        compiler_params=pltpu.CompilerParams(dimension_semantics=("parallel",)),
    )(y, keymask, *_stacked_args(sp), norm_a, norm_b, w_out, b_out)


# ----------------------------- model glue ------------------------------


def sinusoid_pe(max_len, d_model):
    pos = jnp.arange(max_len, dtype=jnp.float32)[:, None]
    i = jnp.arange(d_model // 2, dtype=jnp.float32)[None, :]
    angle = pos / jnp.power(10000.0, (2.0 * i) / d_model)
    pe = jnp.zeros((max_len, d_model), jnp.float32)
    pe = pe.at[:, 0::2].set(jnp.sin(angle))
    pe = pe.at[:, 1::2].set(jnp.cos(angle))
    return pe


def _stack_layer_params(layers):
    return dict(
        a1=jnp.stack([lp["a1"] for lp in layers]),
        b1=jnp.stack([lp["b1"] for lp in layers]),
        wqkv=jnp.stack([jnp.concatenate([lp["wq"], lp["wk"], lp["wv"]], axis=1)
                        for lp in layers]),
        bqkv=jnp.stack([jnp.concatenate([lp["bq"], lp["bk"], lp["bv"]], axis=1)
                        for lp in layers]),
        wo=jnp.stack([lp["wo"] for lp in layers]),
        bo=jnp.stack([lp["bo"] for lp in layers]),
        a2=jnp.stack([lp["a2"] for lp in layers]),
        b2=jnp.stack([lp["b2"] for lp in layers]),
        w1=jnp.stack([lp["w1"] for lp in layers]),
        bf1=jnp.stack([lp["bf1"] for lp in layers]),
        w2=jnp.stack([lp["w2"] for lp in layers]),
        bf2=jnp.stack([lp["bf2"] for lp in layers]),
    )


def init_params(key, char_vocab, word_vocab, d_model, d_ff, N, n_out):
    keys = iter(jax.random.split(key, 256))

    def nrm(shape, scale=0.02):
        return (scale * jax.random.normal(next(keys), shape)).astype(jnp.float32)

    def layer():
        return dict(
            a1=jnp.ones((1, d_model), jnp.float32), b1=jnp.zeros((1, d_model), jnp.float32),
            wq=nrm((d_model, d_model)), bq=jnp.zeros((1, d_model), jnp.float32),
            wk=nrm((d_model, d_model)), bk=jnp.zeros((1, d_model), jnp.float32),
            wv=nrm((d_model, d_model)), bv=jnp.zeros((1, d_model), jnp.float32),
            wo=nrm((d_model, d_model)), bo=jnp.zeros((1, d_model), jnp.float32),
            a2=jnp.ones((1, d_model), jnp.float32), b2=jnp.zeros((1, d_model), jnp.float32),
            w1=nrm((d_model, d_ff)), bf1=jnp.zeros((1, d_ff), jnp.float32),
            w2=nrm((d_ff, d_model)), bf2=jnp.zeros((1, d_model), jnp.float32),
        )

    return dict(
        char_emb=nrm((char_vocab, d_model), 1.0),
        word_emb=nrm((word_vocab, d_model), 1.0),
        char_layers=[layer() for _ in range(N)],
        word_layers=[layer() for _ in range(N)],
        char_norm_a=jnp.ones((1, d_model), jnp.float32),
        char_norm_b=jnp.zeros((1, d_model), jnp.float32),
        word_norm_a=jnp.ones((1, d_model), jnp.float32),
        word_norm_b=jnp.zeros((1, d_model), jnp.float32),
        w_out=nrm((d_model, n_out)),
        b_out=jnp.zeros((1, n_out), jnp.float32),
    )


def hierarchical_transformer_forward(params, src, word_src, char_src_mask, word_src_mask,
                                     *, d_model, heads, max_len):
    B, W, C = src.shape
    pe = sinusoid_pe(max_len, d_model)
    scale = math.sqrt(d_model)

    char_sp = _stack_layer_params(params["char_layers"])
    word_sp = _stack_layer_params(params["word_layers"])

    # --- TimeDistributed char Encoder: embed + PE, N layers + final Norm + char-mean
    #     (one fused pallas_call; only the (B*W, D) pooled result leaves VMEM) ---
    ids = src.reshape(B * W, C)
    x = params["char_emb"][ids] * scale + pe[:C][None]            # (B*W, C, D)
    cmask = char_src_mask.reshape(B * W, 1, C).astype(jnp.float32)
    char_pooled = run_char_encoder(x, cmask, char_sp,
                                   params["char_norm_a"], params["char_norm_b"],
                                   heads)                         # (B*W, D)

    # char mean + word embedding, then word-encoder PE scaling (matches reference order)
    word_feat = char_pooled.reshape(B, W, d_model) + params["word_emb"][word_src]
    y = word_feat * scale + pe[:W][None]
    wmask = word_src_mask.reshape(B, 1, W).astype(jnp.float32)

    # --- word Encoder: N layers + final Norm + mean over words + output Linear
    #     (one fused pallas_call; seq_output=False, dropout == identity in eval) ---
    return run_word_encoder_head(y, wmask, word_sp,
                                 params["word_norm_a"], params["word_norm_b"],
                                 params["w_out"], params["b_out"], heads)   # (B, n_out)


# ----------------------------- main ------------------------------


if __name__ == "__main__":
    key = jax.random.PRNGKey(0)
    B, W, C = 2, 4, 8
    char_vocab, word_vocab = 30, 50
    d_model, max_len, N, heads, n_out, d_ff = 32, 16, 2, 2, 3, 64

    kp, ks, kw = jax.random.split(key, 3)
    params = init_params(kp, char_vocab, word_vocab, d_model, d_ff, N, n_out)

    src = jax.random.randint(ks, (B, W, C), 1, char_vocab)
    word_src = jax.random.randint(kw, (B, W), 1, word_vocab)
    # masks: 1 = attend.  First 6 chars of each word are valid; all words valid.
    char_src_mask = (jnp.arange(C)[None, None, :] < 6).astype(jnp.int32) \
        * jnp.ones((B, W, C), jnp.int32)
    word_src_mask = jnp.ones((B, W), jnp.int32)

    fwd = jax.jit(functools.partial(hierarchical_transformer_forward,
                                    d_model=d_model, heads=heads, max_len=max_len))
    out = fwd(params, src, word_src, char_src_mask, word_src_mask)
    jax.block_until_ready(out)
    assert out.shape == (B, n_out) and out.dtype == jnp.float32
    print("KERNEL_OK")
</pallas_src>

<mosaic_0001>
module attributes {stable_mosaic.version = 11 : i64} {
  func.func @char_encoder_kernel(%arg0: i32, %arg1: memref<8x8x32xf32, #tpu.memory_space<vmem>>, %arg2: memref<8x1x8xf32, #tpu.memory_space<vmem>>, %arg3: memref<2x1x32xf32, #tpu.memory_space<vmem>>, %arg4: memref<2x1x32xf32, #tpu.memory_space<vmem>>, %arg5: memref<2x32x96xf32, #tpu.memory_space<vmem>>, %arg6: memref<2x1x96xf32, #tpu.memory_space<vmem>>, %arg7: memref<2x32x32xf32, #tpu.memory_space<vmem>>, %arg8: memref<2x1x32xf32, #tpu.memory_space<vmem>>, %arg9: memref<2x1x32xf32, #tpu.memory_space<vmem>>, %arg10: memref<2x1x32xf32, #tpu.memory_space<vmem>>, %arg11: memref<2x32x64xf32, #tpu.memory_space<vmem>>, %arg12: memref<2x1x64xf32, #tpu.memory_space<vmem>>, %arg13: memref<2x64x32xf32, #tpu.memory_space<vmem>>, %arg14: memref<2x1x32xf32, #tpu.memory_space<vmem>>, %arg15: memref<1x32xf32, #tpu.memory_space<vmem>>, %arg16: memref<1x32xf32, #tpu.memory_space<vmem>>, %arg17: memref<8x32xf32, #tpu.memory_space<vmem>>) attributes {dimension_semantics = [#tpu.dimension_semantics<parallel>], iteration_bounds = array<i64: 1>, scalar_prefetch = 0 : i64, scratch_operands = 0 : i64, tpu.core_type = #tpu.core_type<tc>, window_params = [{transform_indices = @transform_0, window_bounds = array<i64: 8, 8, 32>}, {transform_indices = @transform_1, window_bounds = array<i64: 8, 1, 8>}, {pipeline_mode = #tpu.pipeline_mode<synchronous>, transform_indices = @transform_2, window_bounds = array<i64: 2, 1, 32>}, {pipeline_mode = #tpu.pipeline_mode<synchronous>, transform_indices = @transform_3, window_bounds = array<i64: 2, 1, 32>}, {pipeline_mode = #tpu.pipeline_mode<synchronous>, transform_indices = @transform_4, window_bounds = array<i64: 2, 32, 96>}, {pipeline_mode = #tpu.pipeline_mode<synchronous>, transform_indices = @transform_5, window_bounds = array<i64: 2, 1, 96>}, {pipeline_mode = #tpu.pipeline_mode<synchronous>, transform_indices = @transform_6, window_bounds = array<i64: 2, 32, 32>}, {pipeline_mode = #tpu.pipeline_mode<synchronous>, transform_indices = @transform_7, window_bounds = array<i64: 2, 1, 32>}, {pipeline_mode = #tpu.pipeline_mode<synchronous>, transform_indices = @transform_8, window_bounds = array<i64: 2, 1, 32>}, {pipeline_mode = #tpu.pipeline_mode<synchronous>, transform_indices = @transform_9, window_bounds = array<i64: 2, 1, 32>}, {pipeline_mode = #tpu.pipeline_mode<synchronous>, transform_indices = @transform_10, window_bounds = array<i64: 2, 32, 64>}, {pipeline_mode = #tpu.pipeline_mode<synchronous>, transform_indices = @transform_11, window_bounds = array<i64: 2, 1, 64>}, {pipeline_mode = #tpu.pipeline_mode<synchronous>, transform_indices = @transform_12, window_bounds = array<i64: 2, 64, 32>}, {pipeline_mode = #tpu.pipeline_mode<synchronous>, transform_indices = @transform_13, window_bounds = array<i64: 2, 1, 32>}, {pipeline_mode = #tpu.pipeline_mode<synchronous>, transform_indices = @transform_14, window_bounds = array<i64: 1, 32>}, {pipeline_mode = #tpu.pipeline_mode<synchronous>, transform_indices = @transform_15, window_bounds = array<i64: 1, 32>}, {transform_indices = @transform_16, window_bounds = array<i64: 8, 32>}]} {
    %c0 = arith.constant 0 : index
    %c0_0 = arith.constant 0 : index
    %c0_1 = arith.constant 0 : index
    %0 = vector.load %arg1[%c0, %c0_0, %c0_1] : memref<8x8x32xf32, #tpu.memory_space<vmem>>, vector<8x8x32xf32>
    %c0_2 = arith.constant 0 : index
    %c0_3 = arith.constant 0 : index
    %c0_4 = arith.constant 0 : index
    %1 = vector.load %arg2[%c0_2, %c0_3, %c0_4] : memref<8x1x8xf32, #tpu.memory_space<vmem>>, vector<8x1x8xf32>
    %cst = arith.constant 0.000000e+00 : f32
    %2 = vector.broadcast %cst : f32 to vector<8x1x8xf32>
    %3 = arith.cmpf oeq, %1, %2 : vector<8x1x8xf32>
    %cst_5 = arith.constant -1.000000e+09 : f32
    %cst_6 = arith.constant 0.000000e+00 : f32
    %4 = vector.broadcast %cst_5 : f32 to vector<8x1x8xf32>
    %5 = vector.broadcast %cst_6 : f32 to vector<8x1x8xf32>
    %6 = arith.select %3, %4, %5 : vector<8x1x8xi1>, vector<8x1x8xf32>
    %c0_7 = arith.constant 0 : index
    %c0_8 = arith.constant 0 : index
    %c0_9 = arith.constant 0 : index
    %7 = vector.load %arg3[%c0_7, %c0_8, %c0_9] : memref<2x1x32xf32, #tpu.memory_space<vmem>>, vector<1x1x32xf32>
    %8 = vector.shape_cast %7 : vector<1x1x32xf32> to vector<1x32xf32>
    %c0_10 = arith.constant 0 : index
    %c0_11 = arith.constant 0 : index
    %c0_12 = arith.constant 0 : index
    %9 = vector.load %arg4[%c0_10, %c0_11, %c0_12] : memref<2x1x32xf32, #tpu.memory_space<vmem>>, vector<1x1x32xf32>
    %10 = vector.shape_cast %9 : vector<1x1x32xf32> to vector<1x32xf32>
    %c0_13 = arith.constant 0 : index
    %c0_14 = arith.constant 0 : index
    %c0_15 = arith.constant 0 : index
    %11 = vector.load %arg5[%c0_13, %c0_14, %c0_15] : memref<2x32x96xf32, #tpu.memory_space<vmem>>, vector<1x32x96xf32>
    %12 = vector.shape_cast %11 : vector<1x32x96xf32> to vector<32x96xf32>
    %c0_16 = arith.constant 0 : index
    %c0_17 = arith.constant 0 : index
    %c0_18 = arith.constant 0 : index
    %13 = vector.load %arg6[%c0_16, %c0_17, %c0_18] : memref<2x1x96xf32, #tpu.memory_space<vmem>>, vector<1x1x96xf32>
    %14 = vector.shape_cast %13 : vector<1x1x96xf32> to vector<1x96xf32>
    %c0_19 = arith.constant 0 : index
    %c0_20 = arith.constant 0 : index
    %c0_21 = arith.constant 0 : index
    %15 = vector.load %arg7[%c0_19, %c0_20, %c0_21] : memref<2x32x32xf32, #tpu.memory_space<vmem>>, vector<1x32x32xf32>
    %16 = vector.shape_cast %15 : vector<1x32x32xf32> to vector<32x32xf32>
    %c0_22 = arith.constant 0 : index
    %c0_23 = arith.constant 0 : index
    %c0_24 = arith.constant 0 : index
    %17 = vector.load %arg8[%c0_22, %c0_23, %c0_24] : memref<2x1x32xf32, #tpu.memory_space<vmem>>, vector<1x1x32xf32>
    %18 = vector.shape_cast %17 : vector<1x1x32xf32> to vector<1x32xf32>
    %c0_25 = arith.constant 0 : index
    %c0_26 = arith.constant 0 : index
    %c0_27 = arith.constant 0 : index
    %19 = vector.load %arg9[%c0_25, %c0_26, %c0_27] : memref<2x1x32xf32, #tpu.memory_space<vmem>>, vector<1x1x32xf32>
    %20 = vector.shape_cast %19 : vector<1x1x32xf32> to vector<1x32xf32>
    %c0_28 = arith.constant 0 : index
    %c0_29 = arith.constant 0 : index
    %c0_30 = arith.constant 0 : index
    %21 = vector.load %arg10[%c0_28, %c0_29, %c0_30] : memref<2x1x32xf32, #tpu.memory_space<vmem>>, vector<1x1x32xf32>
    %22 = vector.shape_cast %21 : vector<1x1x32xf32> to vector<1x32xf32>
    %c0_31 = arith.constant 0 : index
    %c0_32 = arith.constant 0 : index
    %c0_33 = arith.constant 0 : index
    %23 = vector.load %arg11[%c0_31, %c0_32, %c0_33] : memref<2x32x64xf32, #tpu.memory_space<vmem>>, vector<1x32x64xf32>
    %24 = vector.shape_cast %23 : vector<1x32x64xf32> to vector<32x64xf32>
    %c0_34 = arith.constant 0 : index
    %c0_35 = arith.constant 0 : index
    %c0_36 = arith.constant 0 : index
    %25 = vector.load %arg12[%c0_34, %c0_35, %c0_36] : memref<2x1x64xf32, #tpu.memory_space<vmem>>, vector<1x1x64xf32>
    %26 = vector.shape_cast %25 : vector<1x1x64xf32> to vector<1x64xf32>
    %c0_37 = arith.constant 0 : index
    %c0_38 = arith.constant 0 : index
    %c0_39 = arith.constant 0 : index
    %27 = vector.load %arg13[%c0_37, %c0_38, %c0_39] : memref<2x64x32xf32, #tpu.memory_space<vmem>>, vector<1x64x32xf32>
    %28 = vector.shape_cast %27 : vector<1x64x32xf32> to vector<64x32xf32>
    %c0_40 = arith.constant 0 : index
    %c0_41 = arith.constant 0 : index
    %c0_42 = arith.constant 0 : index
    %29 = vector.load %arg14[%c0_40, %c0_41, %c0_42] : memref<2x1x32xf32, #tpu.memory_space<vmem>>, vector<1x1x32xf32>
    %30 = vector.shape_cast %29 : vector<1x1x32xf32> to vector<1x32xf32>
    %cst_43 = arith.constant dense<0.000000e+00> : vector<8x8xf32>
    %31 = vector.multi_reduction <add>, %0, %cst_43 [2] : vector<8x8x32xf32> to vector<8x8xf32>
    %32 = vector.shape_cast %31 : vector<8x8xf32> to vector<8x8x1xf32>
    %cst_44 = arith.constant 3.200000e+01 : f32
    %33 = vector.broadcast %cst_44 : f32 to vector<8x8x1xf32>
    %34 = arith.divf %32, %33 : vector<8x8x1xf32>
    %35 = vector.broadcast %34 : vector<8x8x1xf32> to vector<8x8x32xf32>
    %36 = arith.subf %0, %35 : vector<8x8x32xf32>
    %37 = arith.mulf %36, %36 : vector<8x8x32xf32>
    %cst_45 = arith.constant dense<0.000000e+00> : vector<8x8xf32>
    %38 = vector.multi_reduction <add>, %37, %cst_45 [2] : vector<8x8x32xf32> to vector<8x8xf32>
    %39 = vector.shape_cast %38 : vector<8x8xf32> to vector<8x8x1xf32>
    %cst_46 = arith.constant 0.0322580636 : f32
    %40 = vector.broadcast %cst_46 : f32 to vector<8x8x1xf32>
    %41 = arith.mulf %39, %40 : vector<8x8x1xf32>
    %42 = math.sqrt %41 : vector<8x8x1xf32>
    %cst_47 = arith.constant 9.99999997E-7 : f32
    %43 = vector.broadcast %cst_47 : f32 to vector<8x8x1xf32>
    %44 = arith.addf %42, %43 : vector<8x8x1xf32>
    %45 = tpu.reciprocal %44 {approx = true} : vector<8x8x1xf32> -> vector<8x8x1xf32>
    %46 = vector.shape_cast %8 : vector<1x32xf32> to vector<1x1x32xf32>
    %47 = vector.broadcast %46 : vector<1x1x32xf32> to vector<8x8x32xf32>
    %48 = arith.mulf %47, %36 : vector<8x8x32xf32>
    %49 = vector.broadcast %45 : vector<8x8x1xf32> to vector<8x8x32xf32>
    %50 = arith.mulf %48, %49 : vector<8x8x32xf32>
    %51 = vector.shape_cast %10 : vector<1x32xf32> to vector<1x1x32xf32>
    %52 = vector.broadcast %51 : vector<1x1x32xf32> to vector<8x8x32xf32>
    %53 = arith.addf %50, %52 : vector<8x8x32xf32>
    %54 = vector.shape_cast %53 : vector<8x8x32xf32> to vector<64x32xf32>
    %cst_48 = arith.constant dense<0.000000e+00> : vector<64x96xf32>
    %55 = tpu.matmul %54, %12, %cst_48 {dimension_numbers = #tpu.dot_dimension_numbers<[1], [0], [0], [1], [0, 0, 1, 1], [], []>} : vector<64x32xf32>, vector<32x96xf32>, vector<64x96xf32> -> vector<64x96xf32>
    %56 = vector.broadcast %14 : vector<1x96xf32> to vector<64x96xf32>
    %57 = arith.addf %55, %56 : vector<64x96xf32>
    %58 = vector.extract_strided_slice %57 {offsets = [0, 0], sizes = [64, 32], strides = [1, 1]} : vector<64x96xf32> to vector<64x32xf32>
    %59 = vector.shape_cast %58 : vector<64x32xf32> to vector<8x8x32xf32>
    %60 = vector.extract_strided_slice %57 {offsets = [0, 32], sizes = [64, 32], strides = [1, 1]} : vector<64x96xf32> to vector<64x32xf32>
    %61 = vector.shape_cast %60 : vector<64x32xf32> to vector<8x8x32xf32>
    %62 = vector.extract_strided_slice %57 {offsets = [0, 64], sizes = [64, 32], strides = [1, 1]} : vector<64x96xf32> to vector<64x32xf32>
    %63 = vector.shape_cast %62 : vector<64x32xf32> to vector<8x8x32xf32>
    %64 = vector.extract_strided_slice %59 {offsets = [0, 0, 0], sizes = [8, 8, 16], strides = [1, 1, 1]} : vector<8x8x32xf32> to vector<8x8x16xf32>
    %65 = vector.extract_strided_slice %61 {offsets = [0, 0, 0], sizes = [8, 8, 16], strides = [1, 1, 1]} : vector<8x8x32xf32> to vector<8x8x16xf32>
    %66 = vector.extract_strided_slice %63 {offsets = [0, 0, 0], sizes = [8, 8, 16], strides = [1, 1, 1]} : vector<8x8x32xf32> to vector<8x8x16xf32>
    "tpu.trace_start"() <{level = 10 : i32, message = "bqd,bkd->bqk"}> : () -> ()
    %cst_49 = arith.constant dense<0.000000e+00> : vector<8x8x8xf32>
    %67 = tpu.matmul %64, %65, %cst_49 {dimension_numbers = #tpu.dot_dimension_numbers<[2], [2], [1], [1], [0, 0, 0, 1, 1, 1], [0], [0]>} : vector<8x8x16xf32>, vector<8x8x16xf32>, vector<8x8x8xf32> -> vector<8x8x8xf32>
    "tpu.trace_stop"() : () -> ()
    %cst_50 = arith.constant 2.500000e-01 : f32
    %68 = vector.broadcast %cst_50 : f32 to vector<8x8x8xf32>
    %69 = arith.mulf %67, %68 : vector<8x8x8xf32>
    %70 = vector.broadcast %6 : vector<8x1x8xf32> to vector<8x8x8xf32>
    %71 = arith.addf %69, %70 : vector<8x8x8xf32>
    %cst_51 = arith.constant dense<0xFF800000> : vector<8x8xf32>
    %72 = vector.multi_reduction <maximumf>, %71, %cst_51 [2] : vector<8x8x8xf32> to vector<8x8xf32>
    %73 = vector.shape_cast %72 : vector<8x8xf32> to vector<8x8x1xf32>
    %74 = vector.broadcast %73 : vector<8x8x1xf32> to vector<8x8x8xf32>
    %75 = arith.subf %71, %74 : vector<8x8x8xf32>
    %76 = math.exp %75 : vector<8x8x8xf32>
    %cst_52 = arith.constant dense<0.000000e+00> : vector<8x8xf32>
    %77 = vector.multi_reduction <add>, %76, %cst_52 [2] : vector<8x8x8xf32> to vector<8x8xf32>
    %78 = vector.shape_cast %77 : vector<8x8xf32> to vector<8x8x1xf32>
    %79 = tpu.reciprocal %78 {approx = true} : vector<8x8x1xf32> -> vector<8x8x1xf32>
    %80 = vector.broadcast %79 : vector<8x8x1xf32> to vector<8x8x8xf32>
    %81 = arith.mulf %76, %80 : vector<8x8x8xf32>
    "tpu.trace_start"() <{level = 10 : i32, message = "bqk,bkd->bqd"}> : () -> ()
    %cst_53 = arith.constant dense<0.000000e+00> : vector<8x8x16xf32>
    %82 = tpu.matmul %81, %66, %cst_53 {dimension_numbers = #tpu.dot_dimension_numbers<[2], [1], [1], [2], [0, 0, 0, 1, 1, 2], [0], [0]>} : vector<8x8x8xf32>, vector<8x8x16xf32>, vector<8x8x16xf32> -> vector<8x8x16xf32>
    "tpu.trace_stop"() : () -> ()
    %83 = vector.extract_strided_slice %59 {offsets = [0, 0, 16], sizes = [8, 8, 16], strides = [1, 1, 1]} : vector<8x8x32xf32> to vector<8x8x16xf32>
    %84 = vector.extract_strided_slice %61 {offsets = [0, 0, 16], sizes = [8, 8, 16], strides = [1, 1, 1]} : vector<8x8x32xf32> to vector<8x8x16xf32>
    %85 = vector.extract_strided_slice %63 {offsets = [0, 0, 16], sizes = [8, 8, 16], strides = [1, 1, 1]} : vector<8x8x32xf32> to vector<8x8x16xf32>
    "tpu.trace_start"() <{level = 10 : i32, message = "bqd,bkd->bqk"}> : () -> ()
    %cst_54 = arith.constant dense<0.000000e+00> : vector<8x8x8xf32>
    %86 = tpu.matmul %83, %84, %cst_54 {dimension_numbers = #tpu.dot_dimension_numbers<[2], [2], [1], [1], [0, 0, 0, 1, 1, 1], [0], [0]>} : vector<8x8x16xf32>, vector<8x8x16xf32>, vector<8x8x8xf32> -> vector<8x8x8xf32>
    "tpu.trace_stop"() : () -> ()
    %cst_55 = arith.constant 2.500000e-01 : f32
    %87 = vector.broadcast %cst_55 : f32 to vector<8x8x8xf32>
    %88 = arith.mulf %86, %87 : vector<8x8x8xf32>
    %89 = vector.broadcast %6 : vector<8x1x8xf32> to vector<8x8x8xf32>
    %90 = arith.addf %88, %89 : vector<8x8x8xf32>
    %cst_56 = arith.constant dense<0xFF800000> : vector<8x8xf32>
    %91 = vector.multi_reduction <maximumf>, %90, %cst_56 [2] : vector<8x8x8xf32> to vector<8x8xf32>
    %92 = vector.shape_cast %91 : vector<8x8xf32> to vector<8x8x1xf32>
    %93 = vector.broadcast %92 : vector<8x8x1xf32> to vector<8x8x8xf32>
    %94 = arith.subf %90, %93 : vector<8x8x8xf32>
    %95 = math.exp %94 : vector<8x8x8xf32>
    %cst_57 = arith.constant dense<0.000000e+00> : vector<8x8xf32>
    %96 = vector.multi_reduction <add>, %95, %cst_57 [2] : vector<8x8x8xf32> to vector<8x8xf32>
    %97 = vector.shape_cast %96 : vector<8x8xf32> to vector<8x8x1xf32>
    %98 = tpu.reciprocal %97 {approx = true} : vector<8x8x1xf32> -> vector<8x8x1xf32>
    %99 = vector.broadcast %98 : vector<8x8x1xf32> to vector<8x8x8xf32>
    %100 = arith.mulf %95, %99 : vector<8x8x8xf32>
    "tpu.trace_start"() <{level = 10 : i32, message = "bqk,bkd->bqd"}> : () -> ()
    %cst_58 = arith.constant dense<0.000000e+00> : vector<8x8x16xf32>
    %101 = tpu.matmul %100, %85, %cst_58 {dimension_numbers = #tpu.dot_dimension_numbers<[2], [1], [1], [2], [0, 0, 0, 1, 1, 2], [0], [0]>} : vector<8x8x8xf32>, vector<8x8x16xf32>, vector<8x8x16xf32> -> vector<8x8x16xf32>
    "tpu.trace_stop"() : () -> ()
    %102 = tpu.concatenate %82, %101 in 2 : vector<8x8x16xf32>, vector<8x8x16xf32> -> vector<8x8x32xf32>
    %103 = vector.shape_cast %102 : vector<8x8x32xf32> to vector<64x32xf32>
    %cst_59 = arith.constant dense<0.000000e+00> : vector<64x32xf32>
    %104 = tpu.matmul %103, %16, %cst_59 {dimension_numbers = #tpu.dot_dimension_numbers<[1], [0], [0], [1], [0, 0, 1, 1], [], []>} : vector<64x32xf32>, vector<32x32xf32>, vector<64x32xf32> -> vector<64x32xf32>
    %105 = vector.broadcast %18 : vector<1x32xf32> to vector<64x32xf32>
    %106 = arith.addf %104, %105 : vector<64x32xf32>
    %107 = vector.shape_cast %106 : vector<64x32xf32> to vector<8x8x32xf32>
    %108 = arith.addf %0, %107 : vector<8x8x32xf32>
    %cst_60 = arith.constant dense<0.000000e+00> : vector<8x8xf32>
    %109 = vector.multi_reduction <add>, %108, %cst_60 [2] : vector<8x8x32xf32> to vector<8x8xf32>
    %110 = vector.shape_cast %109 : vector<8x8xf32> to vector<8x8x1xf32>
    %cst_61 = arith.constant 3.200000e+01 : f32
    %111 = vector.broadcast %cst_61 : f32 to vector<8x8x1xf32>
    %112 = arith.divf %110, %111 : vector<8x8x1xf32>
    %113 = vector.broadcast %112 : vector<8x8x1xf32> to vector<8x8x32xf32>
    %114 = arith.subf %108, %113 : vector<8x8x32xf32>
    %115 = arith.mulf %114, %114 : vector<8x8x32xf32>
    %cst_62 = arith.constant dense<0.000000e+00> : vector<8x8xf32>
    %116 = vector.multi_reduction <add>, %115, %cst_62 [2] : vector<8x8x32xf32> to vector<8x8xf32>
    %117 = vector.shape_cast %116 : vector<8x8xf32> to vector<8x8x1xf32>
    %cst_63 = arith.constant 0.0322580636 : f32
    %118 = vector.broadcast %cst_63 : f32 to vector<8x8x1xf32>
    %119 = arith.mulf %117, %118 : vector<8x8x1xf32>
    %120 = math.sqrt %119 : vector<8x8x1xf32>
    %cst_64 = arith.constant 9.99999997E-7 : f32
    %121 = vector.broadcast %cst_64 : f32 to vector<8x8x1xf32>
    %122 = arith.addf %120, %121 : vector<8x8x1xf32>
    %123 = tpu.reciprocal %122 {approx = true} : vector<8x8x1xf32> -> vector<8x8x1xf32>
    %124 = vector.shape_cast %20 : vector<1x32xf32> to vector<1x1x32xf32>
    %125 = vector.broadcast %124 : vector<1x1x32xf32> to vector<8x8x32xf32>
    %126 = arith.mulf %125, %114 : vector<8x8x32xf32>
    %127 = vector.broadcast %123 : vector<8x8x1xf32> to vector<8x8x32xf32>
    %128 = arith.mulf %126, %127 : vector<8x8x32xf32>
    %129 = vector.shape_cast %22 : vector<1x32xf32> to vector<1x1x32xf32>
    %130 = vector.broadcast %129 : vector<1x1x32xf32> to vector<8x8x32xf32>
    %131 = arith.addf %128, %130 : vector<8x8x32xf32>
    %132 = vector.shape_cast %131 : vector<8x8x32xf32> to vector<64x32xf32>
    %cst_65 = arith.constant dense<0.000000e+00> : vector<64x64xf32>
    %133 = tpu.matmul %132, %24, %cst_65 {dimension_numbers = #tpu.dot_dimension_numbers<[1], [0], [0], [1], [0, 0, 1, 1], [], []>} : vector<64x32xf32>, vector<32x64xf32>, vector<64x64xf32> -> vector<64x64xf32>
    %134 = vector.broadcast %26 : vector<1x64xf32> to vector<64x64xf32>
    %135 = arith.addf %133, %134 : vector<64x64xf32>
    %cst_66 = arith.constant 0.000000e+00 : f32
    %136 = vector.broadcast %cst_66 : f32 to vector<64x64xf32>
    %137 = arith.maximumf %135, %136 : vector<64x64xf32>
    %cst_67 = arith.constant dense<0.000000e+00> : vector<64x32xf32>
    %138 = tpu.matmul %137, %28, %cst_67 {dimension_numbers = #tpu.dot_dimension_numbers<[1], [0], [0], [1], [0, 0, 1, 1], [], []>} : vector<64x64xf32>, vector<64x32xf32>, vector<64x32xf32> -> vector<64x32xf32>
    %139 = vector.broadcast %30 : vector<1x32xf32> to vector<64x32xf32>
    %140 = arith.addf %138, %139 : vector<64x32xf32>
    %141 = vector.shape_cast %140 : vector<64x32xf32> to vector<8x8x32xf32>
    %142 = arith.addf %108, %141 : vector<8x8x32xf32>
    %c1 = arith.constant 1 : index
    %c0_68 = arith.constant 0 : index
    %c0_69 = arith.constant 0 : index
    %143 = vector.load %arg3[%c1, %c0_68, %c0_69] : memref<2x1x32xf32, #tpu.memory_space<vmem>>, vector<1x1x32xf32>
    %144 = vector.shape_cast %143 : vector<1x1x32xf32> to vector<1x32xf32>
    %c1_70 = arith.constant 1 : index
    %c0_71 = arith.constant 0 : index
    %c0_72 = arith.constant 0 : index
    %145 = vector.load %arg4[%c1_70, %c0_71, %c0_72] : memref<2x1x32xf32, #tpu.memory_space<vmem>>, vector<1x1x32xf32>
    %146 = vector.shape_cast %145 : vector<1x1x32xf32> to vector<1x32xf32>
    %c1_73 = arith.constant 1 : index
    %c0_74 = arith.constant 0 : index
    %c0_75 = arith.constant 0 : index
    %147 = vector.load %arg5[%c1_73, %c0_74, %c0_75] : memref<2x32x96xf32, #tpu.memory_space<vmem>>, vector<1x32x96xf32>
    %148 = vector.shape_cast %147 : vector<1x32x96xf32> to vector<32x96xf32>
    %c1_76 = arith.constant 1 : index
    %c0_77 = arith.constant 0 : index
    %c0_78 = arith.constant 0 : index
    %149 = vector.load %arg6[%c1_76, %c0_77, %c0_78] : memref<2x1x96xf32, #tpu.memory_space<vmem>>, vector<1x1x96xf32>
    %150 = vector.shape_cast %149 : vector<1x1x96xf32> to vector<1x96xf32>
    %c1_79 = arith.constant 1 : index
    %c0_80 = arith.constant 0 : index
    %c0_81 = arith.constant 0 : index
    %151 = vector.load %arg7[%c1_79, %c0_80, %c0_81] : memref<2x32x32xf32, #tpu.memory_space<vmem>>, vector<1x32x32xf32>
    %152 = vector.shape_cast %151 : vector<1x32x32xf32> to vector<32x32xf32>
    %c1_82 = arith.constant 1 : index
    %c0_83 = arith.constant 0 : index
    %c0_84 = arith.constant 0 : index
    %153 = vector.load %arg8[%c1_82, %c0_83, %c0_84] : memref<2x1x32xf32, #tpu.memory_space<vmem>>, vector<1x1x32xf32>
    %154 = vector.shape_cast %153 : vector<1x1x32xf32> to vector<1x32xf32>
    %c1_85 = arith.constant 1 : index
    %c0_86 = arith.constant 0 : index
    %c0_87 = arith.constant 0 : index
    %155 = vector.load %arg9[%c1_85, %c0_86, %c0_87] : memref<2x1x32xf32, #tpu.memory_space<vmem>>, vector<1x1x32xf32>
    %156 = vector.shape_cast %155 : vector<1x1x32xf32> to vector<1x32xf32>
    %c1_88 = arith.constant 1 : index
    %c0_89 = arith.constant 0 : index
    %c0_90 = arith.constant 0 : index
    %157 = vector.load %arg10[%c1_88, %c0_89, %c0_90] : memref<2x1x32xf32, #tpu.memory_space<vmem>>, vector<1x1x32xf32>
    %158 = vector.shape_cast %157 : vector<1x1x32xf32> to vector<1x32xf32>
    %c1_91 = arith.constant 1 : index
    %c0_92 = arith.constant 0 : index
    %c0_93 = arith.constant 0 : index
    %159 = vector.load %arg11[%c1_91, %c0_92, %c0_93] : memref<2x32x64xf32, #tpu.memory_space<vmem>>, vector<1x32x64xf32>
    %160 = vector.shape_cast %159 : vector<1x32x64xf32> to vector<32x64xf32>
    %c1_94 = arith.constant 1 : index
    %c0_95 = arith.constant 0 : index
    %c0_96 = arith.constant 0 : index
    %161 = vector.load %arg12[%c1_94, %c0_95, %c0_96] : memref<2x1x64xf32, #tpu.memory_space<vmem>>, vector<1x1x64xf32>
    %162 = vector.shape_cast %161 : vector<1x1x64xf32> to vector<1x64xf32>
    %c1_97 = arith.constant 1 : index
    %c0_98 = arith.constant 0 : index
    %c0_99 = arith.constant 0 : index
    %163 = vector.load %arg13[%c1_97, %c0_98, %c0_99] : memref<2x64x32xf32, #tpu.memory_space<vmem>>, vector<1x64x32xf32>
    %164 = vector.shape_cast %163 : vector<1x64x32xf32> to vector<64x32xf32>
    %c1_100 = arith.constant 1 : index
    %c0_101 = arith.constant 0 : index
    %c0_102 = arith.constant 0 : index
    %165 = vector.load %arg14[%c1_100, %c0_101, %c0_102] : memref<2x1x32xf32, #tpu.memory_space<vmem>>, vector<1x1x32xf32>
    %166 = vector.shape_cast %165 : vector<1x1x32xf32> to vector<1x32xf32>
    %cst_103 = arith.constant dense<0.000000e+00> : vector<8x8xf32>
    %167 = vector.multi_reduction <add>, %142, %cst_103 [2] : vector<8x8x32xf32> to vector<8x8xf32>
    %168 = vector.shape_cast %167 : vector<8x8xf32> to vector<8x8x1xf32>
    %cst_104 = arith.constant 3.200000e+01 : f32
    %169 = vector.broadcast %cst_104 : f32 to vector<8x8x1xf32>
    %170 = arith.divf %168, %169 : vector<8x8x1xf32>
    %171 = vector.broadcast %170 : vector<8x8x1xf32> to vector<8x8x32xf32>
    %172 = arith.subf %142, %171 : vector<8x8x32xf32>
    %173 = arith.mulf %172, %172 : vector<8x8x32xf32>
    %cst_105 = arith.constant dense<0.000000e+00> : vector<8x8xf32>
    %174 = vector.multi_reduction <add>, %173, %cst_105 [2] : vector<8x8x32xf32> to vector<8x8xf32>
    %175 = vector.shape_cast %174 : vector<8x8xf32> to vector<8x8x1xf32>
    %cst_106 = arith.constant 0.0322580636 : f32
    %176 = vector.broadcast %cst_106 : f32 to vector<8x8x1xf32>
    %177 = arith.mulf %175, %176 : vector<8x8x1xf32>
    %178 = math.sqrt %177 : vector<8x8x1xf32>
    %cst_107 = arith.constant 9.99999997E-7 : f32
    %179 = vector.broadcast %cst_107 : f32 to vector<8x8x1xf32>
    %180 = arith.addf %178, %179 : vector<8x8x1xf32>
    %181 = tpu.reciprocal %180 {approx = true} : vector<8x8x1xf32> -> vector<8x8x1xf32>
    %182 = vector.shape_cast %144 : vector<1x32xf32> to vector<1x1x32xf32>
    %183 = vector.broadcast %182 : vector<1x1x32xf32> to vector<8x8x32xf32>
    %184 = arith.mulf %183, %172 : vector<8x8x32xf32>
    %185 = vector.broadcast %181 : vector<8x8x1xf32> to vector<8x8x32xf32>
    %186 = arith.mulf %184, %185 : vector<8x8x32xf32>
    %187 = vector.shape_cast %146 : vector<1x32xf32> to vector<1x1x32xf32>
    %188 = vector.broadcast %187 : vector<1x1x32xf32> to vector<8x8x32xf32>
    %189 = arith.addf %186, %188 : vector<8x8x32xf32>
    %190 = vector.shape_cast %189 : vector<8x8x32xf32> to vector<64x32xf32>
    %cst_108 = arith.constant dense<0.000000e+00> : vector<64x96xf32>
    %191 = tpu.matmul %190, %148, %cst_108 {dimension_numbers = #tpu.dot_dimension_numbers<[1], [0], [0], [1], [0, 0, 1, 1], [], []>} : vector<64x32xf32>, vector<32x96xf32>, vector<64x96xf32> -> vector<64x96xf32>
    %192 = vector.broadcast %150 : vector<1x96xf32> to vector<64x96xf32>
    %193 = arith.addf %191, %192 : vector<64x96xf32>
    %194 = vector.extract_strided_slice %193 {offsets = [0, 0], sizes = [64, 32], strides = [1, 1]} : vector<64x96xf32> to vector<64x32xf32>
    %195 = vector.shape_cast %194 : vector<64x32xf32> to vector<8x8x32xf32>
    %196 = vector.extract_strided_slice %193 {offsets = [0, 32], sizes = [64, 32], strides = [1, 1]} : vector<64x96xf32> to vector<64x32xf32>
    %197 = vector.shape_cast %196 : vector<64x32xf32> to vector<8x8x32xf32>
    %198 = vector.extract_strided_slice %193 {offsets = [0, 64], sizes = [64, 32], strides = [1, 1]} : vector<64x96xf32> to vector<64x32xf32>
    %199 = vector.shape_cast %198 : vector<64x32xf32> to vector<8x8x32xf32>
    %200 = vector.extract_strided_slice %195 {offsets = [0, 0, 0], sizes = [8, 8, 16], strides = [1, 1, 1]} : vector<8x8x32xf32> to vector<8x8x16xf32>
    %201 = vector.extract_strided_slice %197 {offsets = [0, 0, 0], sizes = [8, 8, 16], strides = [1, 1, 1]} : vector<8x8x32xf32> to vector<8x8x16xf32>
    %202 = vector.extract_strided_slice %199 {offsets = [0, 0, 0], sizes = [8, 8, 16], strides = [1, 1, 1]} : vector<8x8x32xf32> to vector<8x8x16xf32>
    "tpu.trace_start"() <{level = 10 : i32, message = "bqd,bkd->bqk"}> : () -> ()
    %cst_109 = arith.constant dense<0.000000e+00> : vector<8x8x8xf32>
    %203 = tpu.matmul %200, %201, %cst_109 {dimension_numbers = #tpu.dot_dimension_numbers<[2], [2], [1], [1], [0, 0, 0, 1, 1, 1], [0], [0]>} : vector<8x8x16xf32>, vector<8x8x16xf32>, vector<8x8x8xf32> -> vector<8x8x8xf32>
    "tpu.trace_stop"() : () -> ()
    %cst_110 = arith.constant 2.500000e-01 : f32
    %204 = vector.broadcast %cst_110 : f32 to vector<8x8x8xf32>
    %205 = arith.mulf %203, %204 : vector<8x8x8xf32>
    %206 = vector.broadcast %6 : vector<8x1x8xf32> to vector<8x8x8xf32>
    %207 = arith.addf %205, %206 : vector<8x8x8xf32>
    %cst_111 = arith.constant dense<0xFF800000> : vector<8x8xf32>
    %208 = vector.multi_reduction <maximumf>, %207, %cst_111 [2] : vector<8x8x8xf32> to vector<8x8xf32>
    %209 = vector.shape_cast %208 : vector<8x8xf32> to vector<8x8x1xf32>
    %210 = vector.broadcast %209 : vector<8x8x1xf32> to vector<8x8x8xf32>
    %211 = arith.subf %207, %210 : vector<8x8x8xf32>
    %212 = math.exp %211 : vector<8x8x8xf32>
    %cst_112 = arith.constant dense<0.000000e+00> : vector<8x8xf32>
    %213 = vector.multi_reduction <add>, %212, %cst_112 [2] : vector<8x8x8xf32> to vector<8x8xf32>
    %214 = vector.shape_cast %213 : vector<8x8xf32> to vector<8x8x1xf32>
    %215 = tpu.reciprocal %214 {approx = true} : vector<8x8x1xf32> -> vector<8x8x1xf32>
    %216 = vector.broadcast %215 : vector<8x8x1xf32> to vector<8x8x8xf32>
    %217 = arith.mulf %212, %216 : vector<8x8x8xf32>
    "tpu.trace_start"() <{level = 10 : i32, message = "bqk,bkd->bqd"}> : () -> ()
    %cst_113 = arith.constant dense<0.000000e+00> : vector<8x8x16xf32>
    %218 = tpu.matmul %217, %202, %cst_113 {dimension_numbers = #tpu.dot_dimension_numbers<[2], [1], [1], [2], [0, 0, 0, 1, 1, 2], [0], [0]>} : vector<8x8x8xf32>, vector<8x8x16xf32>, vector<8x8x16xf32> -> vector<8x8x16xf32>
    "tpu.trace_stop"() : () -> ()
    %219 = vector.extract_strided_slice %195 {offsets = [0, 0, 16], sizes = [8, 8, 16], strides = [1, 1, 1]} : vector<8x8x32xf32> to vector<8x8x16xf32>
    %220 = vector.extract_strided_slice %197 {offsets = [0, 0, 16], sizes = [8, 8, 16], strides = [1, 1, 1]} : vector<8x8x32xf32> to vector<8x8x16xf32>
    %221 = vector.extract_strided_slice %199 {offsets = [0, 0, 16], sizes = [8, 8, 16], strides = [1, 1, 1]} : vector<8x8x32xf32> to vector<8x8x16xf32>
    "tpu.trace_start"() <{level = 10 : i32, message = "bqd,bkd->bqk"}> : () -> ()
    %cst_114 = arith.constant dense<0.000000e+00> : vector<8x8x8xf32>
    %222 = tpu.matmul %219, %220, %cst_114 {dimension_numbers = #tpu.dot_dimension_numbers<[2], [2], [1], [1], [0, 0, 0, 1, 1, 1], [0], [0]>} : vector<8x8x16xf32>, vector<8x8x16xf32>, vector<8x8x8xf32> -> vector<8x8x8xf32>
    "tpu.trace_stop"() : () -> ()
    %cst_115 = arith.constant 2.500000e-01 : f32
    %223 = vector.broadcast %cst_115 : f32 to vector<8x8x8xf32>
    %224 = arith.mulf %222, %223 : vector<8x8x8xf32>
    %225 = vector.broadcast %6 : vector<8x1x8xf32> to vector<8x8x8xf32>
    %226 = arith.addf %224, %225 : vector<8x8x8xf32>
    %cst_116 = arith.constant dense<0xFF800000> : vector<8x8xf32>
    %227 = vector.multi_reduction <maximumf>, %226, %cst_116 [2] : vector<8x8x8xf32> to vector<8x8xf32>
    %228 = vector.shape_cast %227 : vector<8x8xf32> to vector<8x8x1xf32>
    %229 = vector.broadcast %228 : vector<8x8x1xf32> to vector<8x8x8xf32>
    %230 = arith.subf %226, %229 : vector<8x8x8xf32>
    %231 = math.exp %230 : vector<8x8x8xf32>
    %cst_117 = arith.constant dense<0.000000e+00> : vector<8x8xf32>
    %232 = vector.multi_reduction <add>, %231, %cst_117 [2] : vector<8x8x8xf32> to vector<8x8xf32>
    %233 = vector.shape_cast %232 : vector<8x8xf32> to vector<8x8x1xf32>
    %234 = tpu.reciprocal %233 {approx = true} : vector<8x8x1xf32> -> vector<8x8x1xf32>
    %235 = vector.broadcast %234 : vector<8x8x1xf32> to vector<8x8x8xf32>
    %236 = arith.mulf %231, %235 : vector<8x8x8xf32>
    "tpu.trace_start"() <{level = 10 : i32, message = "bqk,bkd->bqd"}> : () -> ()
    %cst_118 = arith.constant dense<0.000000e+00> : vector<8x8x16xf32>
    %237 = tpu.matmul %236, %221, %cst_118 {dimension_numbers = #tpu.dot_dimension_numbers<[2], [1], [1], [2], [0, 0, 0, 1, 1, 2], [0], [0]>} : vector<8x8x8xf32>, vector<8x8x16xf32>, vector<8x8x16xf32> -> vector<8x8x16xf32>
    "tpu.trace_stop"() : () -> ()
    %238 = tpu.concatenate %218, %237 in 2 : vector<8x8x16xf32>, vector<8x8x16xf32> -> vector<8x8x32xf32>
    %239 = vector.shape_cast %238 : vector<8x8x32xf32> to vector<64x32xf32>
    %cst_119 = arith.constant dense<0.000000e+00> : vector<64x32xf32>
    %240 = tpu.matmul %239, %152, %cst_119 {dimension_numbers = #tpu.dot_dimension_numbers<[1], [0], [0], [1], [0, 0, 1, 1], [], []>} : vector<64x32xf32>, vector<32x32xf32>, vector<64x32xf32> -> vector<64x32xf32>
    %241 = vector.broadcast %154 : vector<1x32xf32> to vector<64x32xf32>
    %242 = arith.addf %240, %241 : vector<64x32xf32>
    %243 = vector.shape_cast %242 : vector<64x32xf32> to vector<8x8x32xf32>
    %244 = arith.addf %142, %243 : vector<8x8x32xf32>
    %cst_120 = arith.constant dense<0.000000e+00> : vector<8x8xf32>
    %245 = vector.multi_reduction <add>, %244, %cst_120 [2] : vector<8x8x32xf32> to vector<8x8xf32>
    %246 = vector.shape_cast %245 : vector<8x8xf32> to vector<8x8x1xf32>
    %cst_121 = arith.constant 3.200000e+01 : f32
    %247 = vector.broadcast %cst_121 : f32 to vector<8x8x1xf32>
    %248 = arith.divf %246, %247 : vector<8x8x1xf32>
    %249 = vector.broadcast %248 : vector<8x8x1xf32> to vector<8x8x32xf32>
    %250 = arith.subf %244, %249 : vector<8x8x32xf32>
    %251 = arith.mulf %250, %250 : vector<8x8x32xf32>
    %cst_122 = arith.constant dense<0.000000e+00> : vector<8x8xf32>
    %252 = vector.multi_reduction <add>, %251, %cst_122 [2] : vector<8x8x32xf32> to vector<8x8xf32>
    %253 = vector.shape_cast %252 : vector<8x8xf32> to vector<8x8x1xf32>
    %cst_123 = arith.constant 0.0322580636 : f32
    %254 = vector.broadcast %cst_123 : f32 to vector<8x8x1xf32>
    %255 = arith.mulf %253, %254 : vector<8x8x1xf32>
    %256 = math.sqrt %255 : vector<8x8x1xf32>
    %cst_124 = arith.constant 9.99999997E-7 : f32
    %257 = vector.broadcast %cst_124 : f32 to vector<8x8x1xf32>
    %258 = arith.addf %256, %257 : vector<8x8x1xf32>
    %259 = tpu.reciprocal %258 {approx = true} : vector<8x8x1xf32> -> vector<8x8x1xf32>
    %260 = vector.shape_cast %156 : vector<1x32xf32> to vector<1x1x32xf32>
    %261 = vector.broadcast %260 : vector<1x1x32xf32> to vector<8x8x32xf32>
    %262 = arith.mulf %261, %250 : vector<8x8x32xf32>
    %263 = vector.broadcast %259 : vector<8x8x1xf32> to vector<8x8x32xf32>
    %264 = arith.mulf %262, %263 : vector<8x8x32xf32>
    %265 = vector.shape_cast %158 : vector<1x32xf32> to vector<1x1x32xf32>
    %266 = vector.broadcast %265 : vector<1x1x32xf32> to vector<8x8x32xf32>
    %267 = arith.addf %264, %266 : vector<8x8x32xf32>
    %268 = vector.shape_cast %267 : vector<8x8x32xf32> to vector<64x32xf32>
    %cst_125 = arith.constant dense<0.000000e+00> : vector<64x64xf32>
    %269 = tpu.matmul %268, %160, %cst_125 {dimension_numbers = #tpu.dot_dimension_numbers<[1], [0], [0], [1], [0, 0, 1, 1], [], []>} : vector<64x32xf32>, vector<32x64xf32>, vector<64x64xf32> -> vector<64x64xf32>
    %270 = vector.broadcast %162 : vector<1x64xf32> to vector<64x64xf32>
    %271 = arith.addf %269, %270 : vector<64x64xf32>
    %cst_126 = arith.constant 0.000000e+00 : f32
    %272 = vector.broadcast %cst_126 : f32 to vector<64x64xf32>
    %273 = arith.maximumf %271, %272 : vector<64x64xf32>
    %cst_127 = arith.constant dense<0.000000e+00> : vector<64x32xf32>
    %274 = tpu.matmul %273, %164, %cst_127 {dimension_numbers = #tpu.dot_dimension_numbers<[1], [0], [0], [1], [0, 0, 1, 1], [], []>} : vector<64x64xf32>, vector<64x32xf32>, vector<64x32xf32> -> vector<64x32xf32>
    %275 = vector.broadcast %166 : vector<1x32xf32> to vector<64x32xf32>
    %276 = arith.addf %274, %275 : vector<64x32xf32>
    %277 = vector.shape_cast %276 : vector<64x32xf32> to vector<8x8x32xf32>
    %278 = arith.addf %244, %277 : vector<8x8x32xf32>
    %c0_128 = arith.constant 0 : index
    %c0_129 = arith.constant 0 : index
    %279 = vector.load %arg15[%c0_128, %c0_129] : memref<1x32xf32, #tpu.memory_space<vmem>>, vector<1x32xf32>
    %c0_130 = arith.constant 0 : index
    %c0_131 = arith.constant 0 : index
    %280 = vector.load %arg16[%c0_130, %c0_131] : memref<1x32xf32, #tpu.memory_space<vmem>>, vector<1x32xf32>
    %cst_132 = arith.constant dense<0.000000e+00> : vector<8x8xf32>
    %281 = vector.multi_reduction <add>, %278, %cst_132 [2] : vector<8x8x32xf32> to vector<8x8xf32>
    %282 = vector.shape_cast %281 : vector<8x8xf32> to vector<8x8x1xf32>
    %cst_133 = arith.constant 3.200000e+01 : f32
    %283 = vector.broadcast %cst_133 : f32 to vector<8x8x1xf32>
    %284 = arith.divf %282, %283 : vector<8x8x1xf32>
    %285 = vector.broadcast %284 : vector<8x8x1xf32> to vector<8x8x32xf32>
    %286 = arith.subf %278, %285 : vector<8x8x32xf32>
    %287 = arith.mulf %286, %286 : vector<8x8x32xf32>
    %cst_134 = arith.constant dense<0.000000e+00> : vector<8x8xf32>
    %288 = vector.multi_reduction <add>, %287, %cst_134 [2] : vector<8x8x32xf32> to vector<8x8xf32>
    %289 = vector.shape_cast %288 : vector<8x8xf32> to vector<8x8x1xf32>
    %cst_135 = arith.constant 0.0322580636 : f32
    %290 = vector.broadcast %cst_135 : f32 to vector<8x8x1xf32>
    %291 = arith.mulf %289, %290 : vector<8x8x1xf32>
    %292 = math.sqrt %291 : vector<8x8x1xf32>
    %cst_136 = arith.constant 9.99999997E-7 : f32
    %293 = vector.broadcast %cst_136 : f32 to vector<8x8x1xf32>
    %294 = arith.addf %292, %293 : vector<8x8x1xf32>
    %295 = tpu.reciprocal %294 {approx = true} : vector<8x8x1xf32> -> vector<8x8x1xf32>
    %296 = vector.shape_cast %279 : vector<1x32xf32> to vector<1x1x32xf32>
    %297 = vector.broadcast %296 : vector<1x1x32xf32> to vector<8x8x32xf32>
    %298 = arith.mulf %297, %286 : vector<8x8x32xf32>
    %299 = vector.broadcast %295 : vector<8x8x1xf32> to vector<8x8x32xf32>
    %300 = arith.mulf %298, %299 : vector<8x8x32xf32>
    %301 = vector.shape_cast %280 : vector<1x32xf32> to vector<1x1x32xf32>
    %302 = vector.broadcast %301 : vector<1x1x32xf32> to vector<8x8x32xf32>
    %303 = arith.addf %300, %302 : vector<8x8x32xf32>
    %cst_137 = arith.constant dense<0.000000e+00> : vector<8x32xf32>
    %304 = vector.multi_reduction <add>, %303, %cst_137 [1] : vector<8x8x32xf32> to vector<8x32xf32>
    %cst_138 = arith.constant 8.000000e+00 : f32
    %305 = vector.broadcast %cst_138 : f32 to vector<8x32xf32>
    %306 = arith.divf %304, %305 : vector<8x32xf32>
    %c0_139 = arith.constant 0 : index
    %c0_140 = arith.constant 0 : index
    %307 = vector.load %arg17[%c0_139, %c0_140] : memref<8x32xf32, #tpu.memory_space<vmem>>, vector<8x32xf32>
    tpu.vector_store %arg17[%c0_139, %c0_140], %306 {strides = array<i32>} : memref<8x32xf32, #tpu.memory_space<vmem>>, vector<8x32xf32>,
    return
  }
  func.func @transform_0(%arg0: i32) -> (i32, i32, i32) {
    %c0_i32 = arith.constant 0 : i32
    %c0_i32_0 = arith.constant 0 : i32
    %c0_i32_1 = arith.constant 0 : i32
    return %arg0, %c0_i32, %c0_i32_0 : i32, i32, i32
  }
  func.func @transform_1(%arg0: i32) -> (i32, i32, i32) {
    %c0_i32 = arith.constant 0 : i32
    %c0_i32_0 = arith.constant 0 : i32
    %c0_i32_1 = arith.constant 0 : i32
    return %arg0, %c0_i32, %c0_i32_0 : i32, i32, i32
  }
  func.func @transform_2(%arg0: i32) -> (i32, i32, i32) {
    %c0_i32 = arith.constant 0 : i32
    %c0_i32_0 = arith.constant 0 : i32
    %c0_i32_1 = arith.constant 0 : i32
    %c0_i32_2 = arith.constant 0 : i32
    return %c0_i32, %c0_i32_0, %c0_i32_1 : i32, i32, i32
  }
  func.func @transform_3(%arg0: i32) -> (i32, i32, i32) {
    %c0_i32 = arith.constant 0 : i32
    %c0_i32_0 = arith.constant 0 : i32
    %c0_i32_1 = arith.constant 0 : i32
    %c0_i32_2 = arith.constant 0 : i32
    return %c0_i32, %c0_i32_0, %c0_i32_1 : i32, i32, i32
  }
  func.func @transform_4(%arg0: i32) -> (i32, i32, i32) {
    %c0_i32 = arith.constant 0 : i32
    %c0_i32_0 = arith.constant 0 : i32
    %c0_i32_1 = arith.constant 0 : i32
    %c0_i32_2 = arith.constant 0 : i32
    return %c0_i32, %c0_i32_0, %c0_i32_1 : i32, i32, i32
  }
  func.func @transform_5(%arg0: i32) -> (i32, i32, i32) {
    %c0_i32 = arith.constant 0 : i32
    %c0_i32_0 = arith.constant 0 : i32
    %c0_i32_1 = arith.constant 0 : i32
    %c0_i32_2 = arith.constant 0 : i32
    return %c0_i32, %c0_i32_0, %c0_i32_1 : i32, i32, i32
  }
  func.func @transform_6(%arg0: i32) -> (i32, i32, i32) {
    %c0_i32 = arith.constant 0 : i32
    %c0_i32_0 = arith.constant 0 : i32
    %c0_i32_1 = arith.constant 0 : i32
    %c0_i32_2 = arith.constant 0 : i32
    return %c0_i32, %c0_i32_0, %c0_i32_1 : i32, i32, i32
  }
  func.func @transform_7(%arg0: i32) -> (i32, i32, i32) {
    %c0_i32 = arith.constant 0 : i32
    %c0_i32_0 = arith.constant 0 : i32
    %c0_i32_1 = arith.constant 0 : i32
    %c0_i32_2 = arith.constant 0 : i32
    return %c0_i32, %c0_i32_0, %c0_i32_1 : i32, i32, i32
  }
  func.func @transform_8(%arg0: i32) -> (i32, i32, i32) {
    %c0_i32 = arith.constant 0 : i32
    %c0_i32_0 = arith.constant 0 : i32
    %c0_i32_1 = arith.constant 0 : i32
    %c0_i32_2 = arith.constant 0 : i32
    return %c0_i32, %c0_i32_0, %c0_i32_1 : i32, i32, i32
  }
  func.func @transform_9(%arg0: i32) -> (i32, i32, i32) {
    %c0_i32 = arith.constant 0 : i32
    %c0_i32_0 = arith.constant 0 : i32
    %c0_i32_1 = arith.constant 0 : i32
    %c0_i32_2 = arith.constant 0 : i32
    return %c0_i32, %c0_i32_0, %c0_i32_1 : i32, i32, i32
  }
  func.func @transform_10(%arg0: i32) -> (i32, i32, i32) {
    %c0_i32 = arith.constant 0 : i32
    %c0_i32_0 = arith.constant 0 : i32
    %c0_i32_1 = arith.constant 0 : i32
    %c0_i32_2 = arith.constant 0 : i32
    return %c0_i32, %c0_i32_0, %c0_i32_1 : i32, i32, i32
  }
  func.func @transform_11(%arg0: i32) -> (i32, i32, i32) {
    %c0_i32 = arith.constant 0 : i32
    %c0_i32_0 = arith.constant 0 : i32
    %c0_i32_1 = arith.constant 0 : i32
    %c0_i32_2 = arith.constant 0 : i32
    return %c0_i32, %c0_i32_0, %c0_i32_1 : i32, i32, i32
  }
  func.func @transform_12(%arg0: i32) -> (i32, i32, i32) {
    %c0_i32 = arith.constant 0 : i32
    %c0_i32_0 = arith.constant 0 : i32
    %c0_i32_1 = arith.constant 0 : i32
    %c0_i32_2 = arith.constant 0 : i32
    return %c0_i32, %c0_i32_0, %c0_i32_1 : i32, i32, i32
  }
  func.func @transform_13(%arg0: i32) -> (i32, i32, i32) {
    %c0_i32 = arith.constant 0 : i32
    %c0_i32_0 = arith.constant 0 : i32
    %c0_i32_1 = arith.constant 0 : i32
    %c0_i32_2 = arith.constant 0 : i32
    return %c0_i32, %c0_i32_0, %c0_i32_1 : i32, i32, i32
  }
  func.func @transform_14(%arg0: i32) -> (i32, i32) {
    %c0_i32 = arith.constant 0 : i32
    %c0_i32_0 = arith.constant 0 : i32
    %c0_i32_1 = arith.constant 0 : i32
    return %c0_i32, %c0_i32_0 : i32, i32
  }
  func.func @transform_15(%arg0: i32) -> (i32, i32) {
    %c0_i32 = arith.constant 0 : i32
    %c0_i32_0 = arith.constant 0 : i32
    %c0_i32_1 = arith.constant 0 : i32
    return %c0_i32, %c0_i32_0 : i32, i32
  }
  func.func @transform_16(%arg0: i32) -> (i32, i32) {
    %c0_i32 = arith.constant 0 : i32
    %c0_i32_0 = arith.constant 0 : i32
    return %arg0, %c0_i32 : i32, i32
  }
}

module attributes {stable_mosaic.version = 11 : i64} {
  func.func @word_encoder_head_kernel(%arg0: i32, %arg1: memref<2x4x32xf32, #tpu.memory_space<vmem>>, %arg2: memref<2x1x4xf32, #tpu.memory_space<vmem>>, %arg3: memref<2x1x32xf32, #tpu.memory_space<vmem>>, %arg4: memref<2x1x32xf32, #tpu.memory_space<vmem>>, %arg5: memref<2x32x96xf32, #tpu.memory_space<vmem>>, %arg6: memref<2x1x96xf32, #tpu.memory_space<vmem>>, %arg7: memref<2x32x32xf32, #tpu.memory_space<vmem>>, %arg8: memref<2x1x32xf32, #tpu.memory_space<vmem>>, %arg9: memref<2x1x32xf32, #tpu.memory_space<vmem>>, %arg10: memref<2x1x32xf32, #tpu.memory_space<vmem>>, %arg11: memref<2x32x64xf32, #tpu.memory_space<vmem>>, %arg12: memref<2x1x64xf32, #tpu.memory_space<vmem>>, %arg13: memref<2x64x32xf32, #tpu.memory_space<vmem>>, %arg14: memref<2x1x32xf32, #tpu.memory_space<vmem>>, %arg15: memref<1x32xf32, #tpu.memory_space<vmem>>, %arg16: memref<1x32xf32, #tpu.memory_space<vmem>>, %arg17: memref<32x3xf32, #tpu.memory_space<vmem>>, %arg18: memref<1x3xf32, #tpu.memory_space<vmem>>, %arg19: memref<2x3xf32, #tpu.memory_space<vmem>>) attributes {dimension_semantics = [#tpu.dimension_semantics<parallel>], iteration_bounds = array<i64: 1>, scalar_prefetch = 0 : i64, scratch_operands = 0 : i64, tpu.core_type = #tpu.core_type<tc>, window_params = [{transform_indices = @transform_0, window_bounds = array<i64: 2, 4, 32>}, {transform_indices = @transform_1, window_bounds = array<i64: 2, 1, 4>}, {pipeline_mode = #tpu.pipeline_mode<synchronous>, transform_indices = @transform_2, window_bounds = array<i64: 2, 1, 32>}, {pipeline_mode = #tpu.pipeline_mode<synchronous>, transform_indices = @transform_3, window_bounds = array<i64: 2, 1, 32>}, {pipeline_mode = #tpu.pipeline_mode<synchronous>, transform_indices = @transform_4, window_bounds = array<i64: 2, 32, 96>}, {pipeline_mode = #tpu.pipeline_mode<synchronous>, transform_indices = @transform_5, window_bounds = array<i64: 2, 1, 96>}, {pipeline_mode = #tpu.pipeline_mode<synchronous>, transform_indices = @transform_6, window_bounds = array<i64: 2, 32, 32>}, {pipeline_mode = #tpu.pipeline_mode<synchronous>, transform_indices = @transform_7, window_bounds = array<i64: 2, 1, 32>}, {pipeline_mode = #tpu.pipeline_mode<synchronous>, transform_indices = @transform_8, window_bounds = array<i64: 2, 1, 32>}, {pipeline_mode = #tpu.pipeline_mode<synchronous>, transform_indices = @transform_9, window_bounds = array<i64: 2, 1, 32>}, {pipeline_mode = #tpu.pipeline_mode<synchronous>, transform_indices = @transform_10, window_bounds = array<i64: 2, 32, 64>}, {pipeline_mode = #tpu.pipeline_mode<synchronous>, transform_indices = @transform_11, window_bounds = array<i64: 2, 1, 64>}, {pipeline_mode = #tpu.pipeline_mode<synchronous>, transform_indices = @transform_12, window_bounds = array<i64: 2, 64, 32>}, {pipeline_mode = #tpu.pipeline_mode<synchronous>, transform_indices = @transform_13, window_bounds = array<i64: 2, 1, 32>}, {pipeline_mode = #tpu.pipeline_mode<synchronous>, transform_indices = @transform_14, window_bounds = array<i64: 1, 32>}, {pipeline_mode = #tpu.pipeline_mode<synchronous>, transform_indices = @transform_15, window_bounds = array<i64: 1, 32>}, {pipeline_mode = #tpu.pipeline_mode<synchronous>, transform_indices = @transform_16, window_bounds = array<i64: 32, 3>}, {pipeline_mode = #tpu.pipeline_mode<synchronous>, transform_indices = @transform_17, window_bounds = array<i64: 1, 3>}, {transform_indices = @transform_18, window_bounds = array<i64: 2, 3>}]} {
    %c0 = arith.constant 0 : index
    %c0_0 = arith.constant 0 : index
    %c0_1 = arith.constant 0 : index
    %0 = vector.load %arg1[%c0, %c0_0, %c0_1] : memref<2x4x32xf32, #tpu.memory_space<vmem>>, vector<2x4x32xf32>
    %c0_2 = arith.constant 0 : index
    %c0_3 = arith.constant 0 : index
    %c0_4 = arith.constant 0 : index
    %1 = vector.load %arg2[%c0_2, %c0_3, %c0_4] : memref<2x1x4xf32, #tpu.memory_space<vmem>>, vector<2x1x4xf32>
    %cst = arith.constant 0.000000e+00 : f32
    %2 = vector.broadcast %cst : f32 to vector<2x1x4xf32>
    %3 = arith.cmpf oeq, %1, %2 : vector<2x1x4xf32>
    %cst_5 = arith.constant -1.000000e+09 : f32
    %cst_6 = arith.constant 0.000000e+00 : f32
    %4 = vector.broadcast %cst_5 : f32 to vector<2x1x4xf32>
    %5 = vector.broadcast %cst_6 : f32 to vector<2x1x4xf32>
    %6 = arith.select %3, %4, %5 : vector<2x1x4xi1>, vector<2x1x4xf32>
    %c0_7 = arith.constant 0 : index
    %c0_8 = arith.constant 0 : index
    %c0_9 = arith.constant 0 : index
    %7 = vector.load %arg3[%c0_7, %c0_8, %c0_9] : memref<2x1x32xf32, #tpu.memory_space<vmem>>, vector<1x1x32xf32>
    %8 = vector.shape_cast %7 : vector<1x1x32xf32> to vector<1x32xf32>
    %c0_10 = arith.constant 0 : index
    %c0_11 = arith.constant 0 : index
    %c0_12 = arith.constant 0 : index
    %9 = vector.load %arg4[%c0_10, %c0_11, %c0_12] : memref<2x1x32xf32, #tpu.memory_space<vmem>>, vector<1x1x32xf32>
    %10 = vector.shape_cast %9 : vector<1x1x32xf32> to vector<1x32xf32>
    %c0_13 = arith.constant 0 : index
    %c0_14 = arith.constant 0 : index
    %c0_15 = arith.constant 0 : index
    %11 = vector.load %arg5[%c0_13, %c0_14, %c0_15] : memref<2x32x96xf32, #tpu.memory_space<vmem>>, vector<1x32x96xf32>
    %12 = vector.shape_cast %11 : vector<1x32x96xf32> to vector<32x96xf32>
    %c0_16 = arith.constant 0 : index
    %c0_17 = arith.constant 0 : index
    %c0_18 = arith.constant 0 : index
    %13 = vector.load %arg6[%c0_16, %c0_17, %c0_18] : memref<2x1x96xf32, #tpu.memory_space<vmem>>, vector<1x1x96xf32>
    %14 = vector.shape_cast %13 : vector<1x1x96xf32> to vector<1x96xf32>
    %c0_19 = arith.constant 0 : index
    %c0_20 = arith.constant 0 : index
    %c0_21 = arith.constant 0 : index
    %15 = vector.load %arg7[%c0_19, %c0_20, %c0_21] : memref<2x32x32xf32, #tpu.memory_space<vmem>>, vector<1x32x32xf32>
    %16 = vector.shape_cast %15 : vector<1x32x32xf32> to vector<32x32xf32>
    %c0_22 = arith.constant 0 : index
    %c0_23 = arith.constant 0 : index
    %c0_24 = arith.constant 0 : index
    %17 = vector.load %arg8[%c0_22, %c0_23, %c0_24] : memref<2x1x32xf32, #tpu.memory_space<vmem>>, vector<1x1x32xf32>
    %18 = vector.shape_cast %17 : vector<1x1x32xf32> to vector<1x32xf32>
    %c0_25 = arith.constant 0 : index
    %c0_26 = arith.constant 0 : index
    %c0_27 = arith.constant 0 : index
    %19 = vector.load %arg9[%c0_25, %c0_26, %c0_27] : memref<2x1x32xf32, #tpu.memory_space<vmem>>, vector<1x1x32xf32>
    %20 = vector.shape_cast %19 : vector<1x1x32xf32> to vector<1x32xf32>
    %c0_28 = arith.constant 0 : index
    %c0_29 = arith.constant 0 : index
    %c0_30 = arith.constant 0 : index
    %21 = vector.load %arg10[%c0_28, %c0_29, %c0_30] : memref<2x1x32xf32, #tpu.memory_space<vmem>>, vector<1x1x32xf32>
    %22 = vector.shape_cast %21 : vector<1x1x32xf32> to vector<1x32xf32>
    %c0_31 = arith.constant 0 : index
    %c0_32 = arith.constant 0 : index
    %c0_33 = arith.constant 0 : index
    %23 = vector.load %arg11[%c0_31, %c0_32, %c0_33] : memref<2x32x64xf32, #tpu.memory_space<vmem>>, vector<1x32x64xf32>
    %24 = vector.shape_cast %23 : vector<1x32x64xf32> to vector<32x64xf32>
    %c0_34 = arith.constant 0 : index
    %c0_35 = arith.constant 0 : index
    %c0_36 = arith.constant 0 : index
    %25 = vector.load %arg12[%c0_34, %c0_35, %c0_36] : memref<2x1x64xf32, #tpu.memory_space<vmem>>, vector<1x1x64xf32>
    %26 = vector.shape_cast %25 : vector<1x1x64xf32> to vector<1x64xf32>
    %c0_37 = arith.constant 0 : index
    %c0_38 = arith.constant 0 : index
    %c0_39 = arith.constant 0 : index
    %27 = vector.load %arg13[%c0_37, %c0_38, %c0_39] : memref<2x64x32xf32, #tpu.memory_space<vmem>>, vector<1x64x32xf32>
    %28 = vector.shape_cast %27 : vector<1x64x32xf32> to vector<64x32xf32>
    %c0_40 = arith.constant 0 : index
    %c0_41 = arith.constant 0 : index
    %c0_42 = arith.constant 0 : index
    %29 = vector.load %arg14[%c0_40, %c0_41, %c0_42] : memref<2x1x32xf32, #tpu.memory_space<vmem>>, vector<1x1x32xf32>
    %30 = vector.shape_cast %29 : vector<1x1x32xf32> to vector<1x32xf32>
    %cst_43 = arith.constant dense<0.000000e+00> : vector<2x4xf32>
    %31 = vector.multi_reduction <add>, %0, %cst_43 [2] : vector<2x4x32xf32> to vector<2x4xf32>
    %32 = vector.shape_cast %31 : vector<2x4xf32> to vector<2x4x1xf32>
    %cst_44 = arith.constant 3.200000e+01 : f32
    %33 = vector.broadcast %cst_44 : f32 to vector<2x4x1xf32>
    %34 = arith.divf %32, %33 : vector<2x4x1xf32>
    %35 = vector.broadcast %34 : vector<2x4x1xf32> to vector<2x4x32xf32>
    %36 = arith.subf %0, %35 : vector<2x4x32xf32>
    %37 = arith.mulf %36, %36 : vector<2x4x32xf32>
    %cst_45 = arith.constant dense<0.000000e+00> : vector<2x4xf32>
    %38 = vector.multi_reduction <add>, %37, %cst_45 [2] : vector<2x4x32xf32> to vector<2x4xf32>
    %39 = vector.shape_cast %38 : vector<2x4xf32> to vector<2x4x1xf32>
    %cst_46 = arith.constant 0.0322580636 : f32
    %40 = vector.broadcast %cst_46 : f32 to vector<2x4x1xf32>
    %41 = arith.mulf %39, %40 : vector<2x4x1xf32>
    %42 = math.sqrt %41 : vector<2x4x1xf32>
    %cst_47 = arith.constant 9.99999997E-7 : f32
    %43 = vector.broadcast %cst_47 : f32 to vector<2x4x1xf32>
    %44 = arith.addf %42, %43 : vector<2x4x1xf32>
    %45 = tpu.reciprocal %44 {approx = true} : vector<2x4x1xf32> -> vector<2x4x1xf32>
    %46 = vector.shape_cast %8 : vector<1x32xf32> to vector<1x1x32xf32>
    %47 = vector.broadcast %46 : vector<1x1x32xf32> to vector<2x4x32xf32>
    %48 = arith.mulf %47, %36 : vector<2x4x32xf32>
    %49 = vector.broadcast %45 : vector<2x4x1xf32> to vector<2x4x32xf32>
    %50 = arith.mulf %48, %49 : vector<2x4x32xf32>
    %51 = vector.shape_cast %10 : vector<1x32xf32> to vector<1x1x32xf32>
    %52 = vector.broadcast %51 : vector<1x1x32xf32> to vector<2x4x32xf32>
    %53 = arith.addf %50, %52 : vector<2x4x32xf32>
    %54 = vector.shape_cast %53 : vector<2x4x32xf32> to vector<8x32xf32>
    %cst_48 = arith.constant dense<0.000000e+00> : vector<8x96xf32>
    %55 = tpu.matmul %54, %12, %cst_48 {dimension_numbers = #tpu.dot_dimension_numbers<[1], [0], [0], [1], [0, 0, 1, 1], [], []>} : vector<8x32xf32>, vector<32x96xf32>, vector<8x96xf32> -> vector<8x96xf32>
    %56 = vector.broadcast %14 : vector<1x96xf32> to vector<8x96xf32>
    %57 = arith.addf %55, %56 : vector<8x96xf32>
    %58 = vector.extract_strided_slice %57 {offsets = [0, 0], sizes = [8, 32], strides = [1, 1]} : vector<8x96xf32> to vector<8x32xf32>
    %59 = vector.shape_cast %58 : vector<8x32xf32> to vector<2x4x32xf32>
    %60 = vector.extract_strided_slice %57 {offsets = [0, 32], sizes = [8, 32], strides = [1, 1]} : vector<8x96xf32> to vector<8x32xf32>
    %61 = vector.shape_cast %60 : vector<8x32xf32> to vector<2x4x32xf32>
    %62 = vector.extract_strided_slice %57 {offsets = [0, 64], sizes = [8, 32], strides = [1, 1]} : vector<8x96xf32> to vector<8x32xf32>
    %63 = vector.shape_cast %62 : vector<8x32xf32> to vector<2x4x32xf32>
    %64 = vector.extract_strided_slice %59 {offsets = [0, 0, 0], sizes = [2, 4, 16], strides = [1, 1, 1]} : vector<2x4x32xf32> to vector<2x4x16xf32>
    %65 = vector.extract_strided_slice %61 {offsets = [0, 0, 0], sizes = [2, 4, 16], strides = [1, 1, 1]} : vector<2x4x32xf32> to vector<2x4x16xf32>
    %66 = vector.extract_strided_slice %63 {offsets = [0, 0, 0], sizes = [2, 4, 16], strides = [1, 1, 1]} : vector<2x4x32xf32> to vector<2x4x16xf32>
    "tpu.trace_start"() <{level = 10 : i32, message = "bqd,bkd->bqk"}> : () -> ()
    %cst_49 = arith.constant dense<0.000000e+00> : vector<2x4x4xf32>
    %67 = tpu.matmul %64, %65, %cst_49 {dimension_numbers = #tpu.dot_dimension_numbers<[2], [2], [1], [1], [0, 0, 0, 1, 1, 1], [0], [0]>} : vector<2x4x16xf32>, vector<2x4x16xf32>, vector<2x4x4xf32> -> vector<2x4x4xf32>
    "tpu.trace_stop"() : () -> ()
    %cst_50 = arith.constant 2.500000e-01 : f32
    %68 = vector.broadcast %cst_50 : f32 to vector<2x4x4xf32>
    %69 = arith.mulf %67, %68 : vector<2x4x4xf32>
    %70 = vector.broadcast %6 : vector<2x1x4xf32> to vector<2x4x4xf32>
    %71 = arith.addf %69, %70 : vector<2x4x4xf32>
    %cst_51 = arith.constant dense<0xFF800000> : vector<2x4xf32>
    %72 = vector.multi_reduction <maximumf>, %71, %cst_51 [2] : vector<2x4x4xf32> to vector<2x4xf32>
    %73 = vector.shape_cast %72 : vector<2x4xf32> to vector<2x4x1xf32>
    %74 = vector.broadcast %73 : vector<2x4x1xf32> to vector<2x4x4xf32>
    %75 = arith.subf %71, %74 : vector<2x4x4xf32>
    %76 = math.exp %75 : vector<2x4x4xf32>
    %cst_52 = arith.constant dense<0.000000e+00> : vector<2x4xf32>
    %77 = vector.multi_reduction <add>, %76, %cst_52 [2] : vector<2x4x4xf32> to vector<2x4xf32>
    %78 = vector.shape_cast %77 : vector<2x4xf32> to vector<2x4x1xf32>
    %79 = tpu.reciprocal %78 {approx = true} : vector<2x4x1xf32> -> vector<2x4x1xf32>
    %80 = vector.broadcast %79 : vector<2x4x1xf32> to vector<2x4x4xf32>
    %81 = arith.mulf %76, %80 : vector<2x4x4xf32>
    "tpu.trace_start"() <{level = 10 : i32, message = "bqk,bkd->bqd"}> : () -> ()
    %cst_53 = arith.constant dense<0.000000e+00> : vector<2x4x16xf32>
    %82 = tpu.matmul %81, %66, %cst_53 {dimension_numbers = #tpu.dot_dimension_numbers<[2], [1], [1], [2], [0, 0, 0, 1, 1, 2], [0], [0]>} : vector<2x4x4xf32>, vector<2x4x16xf32>, vector<2x4x16xf32> -> vector<2x4x16xf32>
    "tpu.trace_stop"() : () -> ()
    %83 = vector.extract_strided_slice %59 {offsets = [0, 0, 16], sizes = [2, 4, 16], strides = [1, 1, 1]} : vector<2x4x32xf32> to vector<2x4x16xf32>
    %84 = vector.extract_strided_slice %61 {offsets = [0, 0, 16], sizes = [2, 4, 16], strides = [1, 1, 1]} : vector<2x4x32xf32> to vector<2x4x16xf32>
    %85 = vector.extract_strided_slice %63 {offsets = [0, 0, 16], sizes = [2, 4, 16], strides = [1, 1, 1]} : vector<2x4x32xf32> to vector<2x4x16xf32>
    "tpu.trace_start"() <{level = 10 : i32, message = "bqd,bkd->bqk"}> : () -> ()
    %cst_54 = arith.constant dense<0.000000e+00> : vector<2x4x4xf32>
    %86 = tpu.matmul %83, %84, %cst_54 {dimension_numbers = #tpu.dot_dimension_numbers<[2], [2], [1], [1], [0, 0, 0, 1, 1, 1], [0], [0]>} : vector<2x4x16xf32>, vector<2x4x16xf32>, vector<2x4x4xf32> -> vector<2x4x4xf32>
    "tpu.trace_stop"() : () -> ()
    %cst_55 = arith.constant 2.500000e-01 : f32
    %87 = vector.broadcast %cst_55 : f32 to vector<2x4x4xf32>
    %88 = arith.mulf %86, %87 : vector<2x4x4xf32>
    %89 = vector.broadcast %6 : vector<2x1x4xf32> to vector<2x4x4xf32>
    %90 = arith.addf %88, %89 : vector<2x4x4xf32>
    %cst_56 = arith.constant dense<0xFF800000> : vector<2x4xf32>
    %91 = vector.multi_reduction <maximumf>, %90, %cst_56 [2] : vector<2x4x4xf32> to vector<2x4xf32>
    %92 = vector.shape_cast %91 : vector<2x4xf32> to vector<2x4x1xf32>
    %93 = vector.broadcast %92 : vector<2x4x1xf32> to vector<2x4x4xf32>
    %94 = arith.subf %90, %93 : vector<2x4x4xf32>
    %95 = math.exp %94 : vector<2x4x4xf32>
    %cst_57 = arith.constant dense<0.000000e+00> : vector<2x4xf32>
    %96 = vector.multi_reduction <add>, %95, %cst_57 [2] : vector<2x4x4xf32> to vector<2x4xf32>
    %97 = vector.shape_cast %96 : vector<2x4xf32> to vector<2x4x1xf32>
    %98 = tpu.reciprocal %97 {approx = true} : vector<2x4x1xf32> -> vector<2x4x1xf32>
    %99 = vector.broadcast %98 : vector<2x4x1xf32> to vector<2x4x4xf32>
    %100 = arith.mulf %95, %99 : vector<2x4x4xf32>
    "tpu.trace_start"() <{level = 10 : i32, message = "bqk,bkd->bqd"}> : () -> ()
    %cst_58 = arith.constant dense<0.000000e+00> : vector<2x4x16xf32>
    %101 = tpu.matmul %100, %85, %cst_58 {dimension_numbers = #tpu.dot_dimension_numbers<[2], [1], [1], [2], [0, 0, 0, 1, 1, 2], [0], [0]>} : vector<2x4x4xf32>, vector<2x4x16xf32>, vector<2x4x16xf32> -> vector<2x4x16xf32>
    "tpu.trace_stop"() : () -> ()
    %102 = tpu.concatenate %82, %101 in 2 : vector<2x4x16xf32>, vector<2x4x16xf32> -> vector<2x4x32xf32>
    %103 = vector.shape_cast %102 : vector<2x4x32xf32> to vector<8x32xf32>
    %cst_59 = arith.constant dense<0.000000e+00> : vector<8x32xf32>
    %104 = tpu.matmul %103, %16, %cst_59 {dimension_numbers = #tpu.dot_dimension_numbers<[1], [0], [0], [1], [0, 0, 1, 1], [], []>} : vector<8x32xf32>, vector<32x32xf32>, vector<8x32xf32> -> vector<8x32xf32>
    %105 = vector.broadcast %18 : vector<1x32xf32> to vector<8x32xf32>
    %106 = arith.addf %104, %105 : vector<8x32xf32>
    %107 = vector.shape_cast %106 : vector<8x32xf32> to vector<2x4x32xf32>
    %108 = arith.addf %0, %107 : vector<2x4x32xf32>
    %cst_60 = arith.constant dense<0.000000e+00> : vector<2x4xf32>
    %109 = vector.multi_reduction <add>, %108, %cst_60 [2] : vector<2x4x32xf32> to vector<2x4xf32>
    %110 = vector.shape_cast %109 : vector<2x4xf32> to vector<2x4x1xf32>
    %cst_61 = arith.constant 3.200000e+01 : f32
    %111 = vector.broadcast %cst_61 : f32 to vector<2x4x1xf32>
    %112 = arith.divf %110, %111 : vector<2x4x1xf32>
    %113 = vector.broadcast %112 : vector<2x4x1xf32> to vector<2x4x32xf32>
    %114 = arith.subf %108, %113 : vector<2x4x32xf32>
    %115 = arith.mulf %114, %114 : vector<2x4x32xf32>
    %cst_62 = arith.constant dense<0.000000e+00> : vector<2x4xf32>
    %116 = vector.multi_reduction <add>, %115, %cst_62 [2] : vector<2x4x32xf32> to vector<2x4xf32>
    %117 = vector.shape_cast %116 : vector<2x4xf32> to vector<2x4x1xf32>
    %cst_63 = arith.constant 0.0322580636 : f32
    %118 = vector.broadcast %cst_63 : f32 to vector<2x4x1xf32>
    %119 = arith.mulf %117, %118 : vector<2x4x1xf32>
    %120 = math.sqrt %119 : vector<2x4x1xf32>
    %cst_64 = arith.constant 9.99999997E-7 : f32
    %121 = vector.broadcast %cst_64 : f32 to vector<2x4x1xf32>
    %122 = arith.addf %120, %121 : vector<2x4x1xf32>
    %123 = tpu.reciprocal %122 {approx = true} : vector<2x4x1xf32> -> vector<2x4x1xf32>
    %124 = vector.shape_cast %20 : vector<1x32xf32> to vector<1x1x32xf32>
    %125 = vector.broadcast %124 : vector<1x1x32xf32> to vector<2x4x32xf32>
    %126 = arith.mulf %125, %114 : vector<2x4x32xf32>
    %127 = vector.broadcast %123 : vector<2x4x1xf32> to vector<2x4x32xf32>
    %128 = arith.mulf %126, %127 : vector<2x4x32xf32>
    %129 = vector.shape_cast %22 : vector<1x32xf32> to vector<1x1x32xf32>
    %130 = vector.broadcast %129 : vector<1x1x32xf32> to vector<2x4x32xf32>
    %131 = arith.addf %128, %130 : vector<2x4x32xf32>
    %132 = vector.shape_cast %131 : vector<2x4x32xf32> to vector<8x32xf32>
    %cst_65 = arith.constant dense<0.000000e+00> : vector<8x64xf32>
    %133 = tpu.matmul %132, %24, %cst_65 {dimension_numbers = #tpu.dot_dimension_numbers<[1], [0], [0], [1], [0, 0, 1, 1], [], []>} : vector<8x32xf32>, vector<32x64xf32>, vector<8x64xf32> -> vector<8x64xf32>
    %134 = vector.broadcast %26 : vector<1x64xf32> to vector<8x64xf32>
    %135 = arith.addf %133, %134 : vector<8x64xf32>
    %cst_66 = arith.constant 0.000000e+00 : f32
    %136 = vector.broadcast %cst_66 : f32 to vector<8x64xf32>
    %137 = arith.maximumf %135, %136 : vector<8x64xf32>
    %cst_67 = arith.constant dense<0.000000e+00> : vector<8x32xf32>
    %138 = tpu.matmul %137, %28, %cst_67 {dimension_numbers = #tpu.dot_dimension_numbers<[1], [0], [0], [1], [0, 0, 1, 1], [], []>} : vector<8x64xf32>, vector<64x32xf32>, vector<8x32xf32> -> vector<8x32xf32>
    %139 = vector.broadcast %30 : vector<1x32xf32> to vector<8x32xf32>
    %140 = arith.addf %138, %139 : vector<8x32xf32>
    %141 = vector.shape_cast %140 : vector<8x32xf32> to vector<2x4x32xf32>
    %142 = arith.addf %108, %141 : vector<2x4x32xf32>
    %c1 = arith.constant 1 : index
    %c0_68 = arith.constant 0 : index
    %c0_69 = arith.constant 0 : index
    %143 = vector.load %arg3[%c1, %c0_68, %c0_69] : memref<2x1x32xf32, #tpu.memory_space<vmem>>, vector<1x1x32xf32>
    %144 = vector.shape_cast %143 : vector<1x1x32xf32> to vector<1x32xf32>
    %c1_70 = arith.constant 1 : index
    %c0_71 = arith.constant 0 : index
    %c0_72 = arith.constant 0 : index
    %145 = vector.load %arg4[%c1_70, %c0_71, %c0_72] : memref<2x1x32xf32, #tpu.memory_space<vmem>>, vector<1x1x32xf32>
    %146 = vector.shape_cast %145 : vector<1x1x32xf32> to vector<1x32xf32>
    %c1_73 = arith.constant 1 : index
    %c0_74 = arith.constant 0 : index
    %c0_75 = arith.constant 0 : index
    %147 = vector.load %arg5[%c1_73, %c0_74, %c0_75] : memref<2x32x96xf32, #tpu.memory_space<vmem>>, vector<1x32x96xf32>
    %148 = vector.shape_cast %147 : vector<1x32x96xf32> to vector<32x96xf32>
    %c1_76 = arith.constant 1 : index
    %c0_77 = arith.constant 0 : index
    %c0_78 = arith.constant 0 : index
    %149 = vector.load %arg6[%c1_76, %c0_77, %c0_78] : memref<2x1x96xf32, #tpu.memory_space<vmem>>, vector<1x1x96xf32>
    %150 = vector.shape_cast %149 : vector<1x1x96xf32> to vector<1x96xf32>
    %c1_79 = arith.constant 1 : index
    %c0_80 = arith.constant 0 : index
    %c0_81 = arith.constant 0 : index
    %151 = vector.load %arg7[%c1_79, %c0_80, %c0_81] : memref<2x32x32xf32, #tpu.memory_space<vmem>>, vector<1x32x32xf32>
    %152 = vector.shape_cast %151 : vector<1x32x32xf32> to vector<32x32xf32>
    %c1_82 = arith.constant 1 : index
    %c0_83 = arith.constant 0 : index
    %c0_84 = arith.constant 0 : index
    %153 = vector.load %arg8[%c1_82, %c0_83, %c0_84] : memref<2x1x32xf32, #tpu.memory_space<vmem>>, vector<1x1x32xf32>
    %154 = vector.shape_cast %153 : vector<1x1x32xf32> to vector<1x32xf32>
    %c1_85 = arith.constant 1 : index
    %c0_86 = arith.constant 0 : index
    %c0_87 = arith.constant 0 : index
    %155 = vector.load %arg9[%c1_85, %c0_86, %c0_87] : memref<2x1x32xf32, #tpu.memory_space<vmem>>, vector<1x1x32xf32>
    %156 = vector.shape_cast %155 : vector<1x1x32xf32> to vector<1x32xf32>
    %c1_88 = arith.constant 1 : index
    %c0_89 = arith.constant 0 : index
    %c0_90 = arith.constant 0 : index
    %157 = vector.load %arg10[%c1_88, %c0_89, %c0_90] : memref<2x1x32xf32, #tpu.memory_space<vmem>>, vector<1x1x32xf32>
    %158 = vector.shape_cast %157 : vector<1x1x32xf32> to vector<1x32xf32>
    %c1_91 = arith.constant 1 : index
    %c0_92 = arith.constant 0 : index
    %c0_93 = arith.constant 0 : index
    %159 = vector.load %arg11[%c1_91, %c0_92, %c0_93] : memref<2x32x64xf32, #tpu.memory_space<vmem>>, vector<1x32x64xf32>
    %160 = vector.shape_cast %159 : vector<1x32x64xf32> to vector<32x64xf32>
    %c1_94 = arith.constant 1 : index
    %c0_95 = arith.constant 0 : index
    %c0_96 = arith.constant 0 : index
    %161 = vector.load %arg12[%c1_94, %c0_95, %c0_96] : memref<2x1x64xf32, #tpu.memory_space<vmem>>, vector<1x1x64xf32>
    %162 = vector.shape_cast %161 : vector<1x1x64xf32> to vector<1x64xf32>
    %c1_97 = arith.constant 1 : index
    %c0_98 = arith.constant 0 : index
    %c0_99 = arith.constant 0 : index
    %163 = vector.load %arg13[%c1_97, %c0_98, %c0_99] : memref<2x64x32xf32, #tpu.memory_space<vmem>>, vector<1x64x32xf32>
    %164 = vector.shape_cast %163 : vector<1x64x32xf32> to vector<64x32xf32>
    %c1_100 = arith.constant 1 : index
    %c0_101 = arith.constant 0 : index
    %c0_102 = arith.constant 0 : index
    %165 = vector.load %arg14[%c1_100, %c0_101, %c0_102] : memref<2x1x32xf32, #tpu.memory_space<vmem>>, vector<1x1x32xf32>
    %166 = vector.shape_cast %165 : vector<1x1x32xf32> to vector<1x32xf32>
    %cst_103 = arith.constant dense<0.000000e+00> : vector<2x4xf32>
    %167 = vector.multi_reduction <add>, %142, %cst_103 [2] : vector<2x4x32xf32> to vector<2x4xf32>
    %168 = vector.shape_cast %167 : vector<2x4xf32> to vector<2x4x1xf32>
    %cst_104 = arith.constant 3.200000e+01 : f32
    %169 = vector.broadcast %cst_104 : f32 to vector<2x4x1xf32>
    %170 = arith.divf %168, %169 : vector<2x4x1xf32>
    %171 = vector.broadcast %170 : vector<2x4x1xf32> to vector<2x4x32xf32>
    %172 = arith.subf %142, %171 : vector<2x4x32xf32>
    %173 = arith.mulf %172, %172 : vector<2x4x32xf32>
    %cst_105 = arith.constant dense<0.000000e+00> : vector<2x4xf32>
    %174 = vector.multi_reduction <add>, %173, %cst_105 [2] : vector<2x4x32xf32> to vector<2x4xf32>
    %175 = vector.shape_cast %174 : vector<2x4xf32> to vector<2x4x1xf32>
    %cst_106 = arith.constant 0.0322580636 : f32
    %176 = vector.broadcast %cst_106 : f32 to vector<2x4x1xf32>
    %177 = arith.mulf %175, %176 : vector<2x4x1xf32>
    %178 = math.sqrt %177 : vector<2x4x1xf32>
    %cst_107 = arith.constant 9.99999997E-7 : f32
    %179 = vector.broadcast %cst_107 : f32 to vector<2x4x1xf32>
    %180 = arith.addf %178, %179 : vector<2x4x1xf32>
    %181 = tpu.reciprocal %180 {approx = true} : vector<2x4x1xf32> -> vector<2x4x1xf32>
    %182 = vector.shape_cast %144 : vector<1x32xf32> to vector<1x1x32xf32>
    %183 = vector.broadcast %182 : vector<1x1x32xf32> to vector<2x4x32xf32>
    %184 = arith.mulf %183, %172 : vector<2x4x32xf32>
    %185 = vector.broadcast %181 : vector<2x4x1xf32> to vector<2x4x32xf32>
    %186 = arith.mulf %184, %185 : vector<2x4x32xf32>
    %187 = vector.shape_cast %146 : vector<1x32xf32> to vector<1x1x32xf32>
    %188 = vector.broadcast %187 : vector<1x1x32xf32> to vector<2x4x32xf32>
    %189 = arith.addf %186, %188 : vector<2x4x32xf32>
    %190 = vector.shape_cast %189 : vector<2x4x32xf32> to vector<8x32xf32>
    %cst_108 = arith.constant dense<0.000000e+00> : vector<8x96xf32>
    %191 = tpu.matmul %190, %148, %cst_108 {dimension_numbers = #tpu.dot_dimension_numbers<[1], [0], [0], [1], [0, 0, 1, 1], [], []>} : vector<8x32xf32>, vector<32x96xf32>, vector<8x96xf32> -> vector<8x96xf32>
    %192 = vector.broadcast %150 : vector<1x96xf32> to vector<8x96xf32>
    %193 = arith.addf %191, %192 : vector<8x96xf32>
    %194 = vector.extract_strided_slice %193 {offsets = [0, 0], sizes = [8, 32], strides = [1, 1]} : vector<8x96xf32> to vector<8x32xf32>
    %195 = vector.shape_cast %194 : vector<8x32xf32> to vector<2x4x32xf32>
    %196 = vector.extract_strided_slice %193 {offsets = [0, 32], sizes = [8, 32], strides = [1, 1]} : vector<8x96xf32> to vector<8x32xf32>
    %197 = vector.shape_cast %196 : vector<8x32xf32> to vector<2x4x32xf32>
    %198 = vector.extract_strided_slice %193 {offsets = [0, 64], sizes = [8, 32], strides = [1, 1]} : vector<8x96xf32> to vector<8x32xf32>
    %199 = vector.shape_cast %198 : vector<8x32xf32> to vector<2x4x32xf32>
    %200 = vector.extract_strided_slice %195 {offsets = [0, 0, 0], sizes = [2, 4, 16], strides = [1, 1, 1]} : vector<2x4x32xf32> to vector<2x4x16xf32>
    %201 = vector.extract_strided_slice %197 {offsets = [0, 0, 0], sizes = [2, 4, 16], strides = [1, 1, 1]} : vector<2x4x32xf32> to vector<2x4x16xf32>
    %202 = vector.extract_strided_slice %199 {offsets = [0, 0, 0], sizes = [2, 4, 16], strides = [1, 1, 1]} : vector<2x4x32xf32> to vector<2x4x16xf32>
    "tpu.trace_start"() <{level = 10 : i32, message = "bqd,bkd->bqk"}> : () -> ()
    %cst_109 = arith.constant dense<0.000000e+00> : vector<2x4x4xf32>
    %203 = tpu.matmul %200, %201, %cst_109 {dimension_numbers = #tpu.dot_dimension_numbers<[2], [2], [1], [1], [0, 0, 0, 1, 1, 1], [0], [0]>} : vector<2x4x16xf32>, vector<2x4x16xf32>, vector<2x4x4xf32> -> vector<2x4x4xf32>
    "tpu.trace_stop"() : () -> ()
    %cst_110 = arith.constant 2.500000e-01 : f32
    %204 = vector.broadcast %cst_110 : f32 to vector<2x4x4xf32>
    %205 = arith.mulf %203, %204 : vector<2x4x4xf32>
    %206 = vector.broadcast %6 : vector<2x1x4xf32> to vector<2x4x4xf32>
    %207 = arith.addf %205, %206 : vector<2x4x4xf32>
    %cst_111 = arith.constant dense<0xFF800000> : vector<2x4xf32>
    %208 = vector.multi_reduction <maximumf>, %207, %cst_111 [2] : vector<2x4x4xf32> to vector<2x4xf32>
    %209 = vector.shape_cast %208 : vector<2x4xf32> to vector<2x4x1xf32>
    %210 = vector.broadcast %209 : vector<2x4x1xf32> to vector<2x4x4xf32>
    %211 = arith.subf %207, %210 : vector<2x4x4xf32>
    %212 = math.exp %211 : vector<2x4x4xf32>
    %cst_112 = arith.constant dense<0.000000e+00> : vector<2x4xf32>
    %213 = vector.multi_reduction <add>, %212, %cst_112 [2] : vector<2x4x4xf32> to vector<2x4xf32>
    %214 = vector.shape_cast %213 : vector<2x4xf32> to vector<2x4x1xf32>
    %215 = tpu.reciprocal %214 {approx = true} : vector<2x4x1xf32> -> vector<2x4x1xf32>
    %216 = vector.broadcast %215 : vector<2x4x1xf32> to vector<2x4x4xf32>
    %217 = arith.mulf %212, %216 : vector<2x4x4xf32>
    "tpu.trace_start"() <{level = 10 : i32, message = "bqk,bkd->bqd"}> : () -> ()
    %cst_113 = arith.constant dense<0.000000e+00> : vector<2x4x16xf32>
    %218 = tpu.matmul %217, %202, %cst_113 {dimension_numbers = #tpu.dot_dimension_numbers<[2], [1], [1], [2], [0, 0, 0, 1, 1, 2], [0], [0]>} : vector<2x4x4xf32>, vector<2x4x16xf32>, vector<2x4x16xf32> -> vector<2x4x16xf32>
    "tpu.trace_stop"() : () -> ()
    %219 = vector.extract_strided_slice %195 {offsets = [0, 0, 16], sizes = [2, 4, 16], strides = [1, 1, 1]} : vector<2x4x32xf32> to vector<2x4x16xf32>
    %220 = vector.extract_strided_slice %197 {offsets = [0, 0, 16], sizes = [2, 4, 16], strides = [1, 1, 1]} : vector<2x4x32xf32> to vector<2x4x16xf32>
    %221 = vector.extract_strided_slice %199 {offsets = [0, 0, 16], sizes = [2, 4, 16], strides = [1, 1, 1]} : vector<2x4x32xf32> to vector<2x4x16xf32>
    "tpu.trace_start"() <{level = 10 : i32, message = "bqd,bkd->bqk"}> : () -> ()
    %cst_114 = arith.constant dense<0.000000e+00> : vector<2x4x4xf32>
    %222 = tpu.matmul %219, %220, %cst_114 {dimension_numbers = #tpu.dot_dimension_numbers<[2], [2], [1], [1], [0, 0, 0, 1, 1, 1], [0], [0]>} : vector<2x4x16xf32>, vector<2x4x16xf32>, vector<2x4x4xf32> -> vector<2x4x4xf32>
    "tpu.trace_stop"() : () -> ()
    %cst_115 = arith.constant 2.500000e-01 : f32
    %223 = vector.broadcast %cst_115 : f32 to vector<2x4x4xf32>
    %224 = arith.mulf %222, %223 : vector<2x4x4xf32>
    %225 = vector.broadcast %6 : vector<2x1x4xf32> to vector<2x4x4xf32>
    %226 = arith.addf %224, %225 : vector<2x4x4xf32>
    %cst_116 = arith.constant dense<0xFF800000> : vector<2x4xf32>
    %227 = vector.multi_reduction <maximumf>, %226, %cst_116 [2] : vector<2x4x4xf32> to vector<2x4xf32>
    %228 = vector.shape_cast %227 : vector<2x4xf32> to vector<2x4x1xf32>
    %229 = vector.broadcast %228 : vector<2x4x1xf32> to vector<2x4x4xf32>
    %230 = arith.subf %226, %229 : vector<2x4x4xf32>
    %231 = math.exp %230 : vector<2x4x4xf32>
    %cst_117 = arith.constant dense<0.000000e+00> : vector<2x4xf32>
    %232 = vector.multi_reduction <add>, %231, %cst_117 [2] : vector<2x4x4xf32> to vector<2x4xf32>
    %233 = vector.shape_cast %232 : vector<2x4xf32> to vector<2x4x1xf32>
    %234 = tpu.reciprocal %233 {approx = true} : vector<2x4x1xf32> -> vector<2x4x1xf32>
    %235 = vector.broadcast %234 : vector<2x4x1xf32> to vector<2x4x4xf32>
    %236 = arith.mulf %231, %235 : vector<2x4x4xf32>
    "tpu.trace_start"() <{level = 10 : i32, message = "bqk,bkd->bqd"}> : () -> ()
    %cst_118 = arith.constant dense<0.000000e+00> : vector<2x4x16xf32>
    %237 = tpu.matmul %236, %221, %cst_118 {dimension_numbers = #tpu.dot_dimension_numbers<[2], [1], [1], [2], [0, 0, 0, 1, 1, 2], [0], [0]>} : vector<2x4x4xf32>, vector<2x4x16xf32>, vector<2x4x16xf32> -> vector<2x4x16xf32>
    "tpu.trace_stop"() : () -> ()
    %238 = tpu.concatenate %218, %237 in 2 : vector<2x4x16xf32>, vector<2x4x16xf32> -> vector<2x4x32xf32>
    %239 = vector.shape_cast %238 : vector<2x4x32xf32> to vector<8x32xf32>
    %cst_119 = arith.constant dense<0.000000e+00> : vector<8x32xf32>
    %240 = tpu.matmul %239, %152, %cst_119 {dimension_numbers = #tpu.dot_dimension_numbers<[1], [0], [0], [1], [0, 0, 1, 1], [], []>} : vector<8x32xf32>, vector<32x32xf32>, vector<8x32xf32> -> vector<8x32xf32>
    %241 = vector.broadcast %154 : vector<1x32xf32> to vector<8x32xf32>
    %242 = arith.addf %240, %241 : vector<8x32xf32>
    %243 = vector.shape_cast %242 : vector<8x32xf32> to vector<2x4x32xf32>
    %244 = arith.addf %142, %243 : vector<2x4x32xf32>
    %cst_120 = arith.constant dense<0.000000e+00> : vector<2x4xf32>
    %245 = vector.multi_reduction <add>, %244, %cst_120 [2] : vector<2x4x32xf32> to vector<2x4xf32>
    %246 = vector.shape_cast %245 : vector<2x4xf32> to vector<2x4x1xf32>
    %cst_121 = arith.constant 3.200000e+01 : f32
    %247 = vector.broadcast %cst_121 : f32 to vector<2x4x1xf32>
    %248 = arith.divf %246, %247 : vector<2x4x1xf32>
    %249 = vector.broadcast %248 : vector<2x4x1xf32> to vector<2x4x32xf32>
    %250 = arith.subf %244, %249 : vector<2x4x32xf32>
    %251 = arith.mulf %250, %250 : vector<2x4x32xf32>
    %cst_122 = arith.constant dense<0.000000e+00> : vector<2x4xf32>
    %252 = vector.multi_reduction <add>, %251, %cst_122 [2] : vector<2x4x32xf32> to vector<2x4xf32>
    %253 = vector.shape_cast %252 : vector<2x4xf32> to vector<2x4x1xf32>
    %cst_123 = arith.constant 0.0322580636 : f32
    %254 = vector.broadcast %cst_123 : f32 to vector<2x4x1xf32>
    %255 = arith.mulf %253, %254 : vector<2x4x1xf32>
    %256 = math.sqrt %255 : vector<2x4x1xf32>
    %cst_124 = arith.constant 9.99999997E-7 : f32
    %257 = vector.broadcast %cst_124 : f32 to vector<2x4x1xf32>
    %258 = arith.addf %256, %257 : vector<2x4x1xf32>
    %259 = tpu.reciprocal %258 {approx = true} : vector<2x4x1xf32> -> vector<2x4x1xf32>
    %260 = vector.shape_cast %156 : vector<1x32xf32> to vector<1x1x32xf32>
    %261 = vector.broadcast %260 : vector<1x1x32xf32> to vector<2x4x32xf32>
    %262 = arith.mulf %261, %250 : vector<2x4x32xf32>
    %263 = vector.broadcast %259 : vector<2x4x1xf32> to vector<2x4x32xf32>
    %264 = arith.mulf %262, %263 : vector<2x4x32xf32>
    %265 = vector.shape_cast %158 : vector<1x32xf32> to vector<1x1x32xf32>
    %266 = vector.broadcast %265 : vector<1x1x32xf32> to vector<2x4x32xf32>
    %267 = arith.addf %264, %266 : vector<2x4x32xf32>
    %268 = vector.shape_cast %267 : vector<2x4x32xf32> to vector<8x32xf32>
    %cst_125 = arith.constant dense<0.000000e+00> : vector<8x64xf32>
    %269 = tpu.matmul %268, %160, %cst_125 {dimension_numbers = #tpu.dot_dimension_numbers<[1], [0], [0], [1], [0, 0, 1, 1], [], []>} : vector<8x32xf32>, vector<32x64xf32>, vector<8x64xf32> -> vector<8x64xf32>
    %270 = vector.broadcast %162 : vector<1x64xf32> to vector<8x64xf32>
    %271 = arith.addf %269, %270 : vector<8x64xf32>
    %cst_126 = arith.constant 0.000000e+00 : f32
    %272 = vector.broadcast %cst_126 : f32 to vector<8x64xf32>
    %273 = arith.maximumf %271, %272 : vector<8x64xf32>
    %cst_127 = arith.constant dense<0.000000e+00> : vector<8x32xf32>
    %274 = tpu.matmul %273, %164, %cst_127 {dimension_numbers = #tpu.dot_dimension_numbers<[1], [0], [0], [1], [0, 0, 1, 1], [], []>} : vector<8x64xf32>, vector<64x32xf32>, vector<8x32xf32> -> vector<8x32xf32>
    %275 = vector.broadcast %166 : vector<1x32xf32> to vector<8x32xf32>
    %276 = arith.addf %274, %275 : vector<8x32xf32>
    %277 = vector.shape_cast %276 : vector<8x32xf32> to vector<2x4x32xf32>
    %278 = arith.addf %244, %277 : vector<2x4x32xf32>
    %c0_128 = arith.constant 0 : index
    %c0_129 = arith.constant 0 : index
    %279 = vector.load %arg15[%c0_128, %c0_129] : memref<1x32xf32, #tpu.memory_space<vmem>>, vector<1x32xf32>
    %c0_130 = arith.constant 0 : index
    %c0_131 = arith.constant 0 : index
    %280 = vector.load %arg16[%c0_130, %c0_131] : memref<1x32xf32, #tpu.memory_space<vmem>>, vector<1x32xf32>
    %cst_132 = arith.constant dense<0.000000e+00> : vector<2x4xf32>
    %281 = vector.multi_reduction <add>, %278, %cst_132 [2] : vector<2x4x32xf32> to vector<2x4xf32>
    %282 = vector.shape_cast %281 : vector<2x4xf32> to vector<2x4x1xf32>
    %cst_133 = arith.constant 3.200000e+01 : f32
    %283 = vector.broadcast %cst_133 : f32 to vector<2x4x1xf32>
    %284 = arith.divf %282, %283 : vector<2x4x1xf32>
    %285 = vector.broadcast %284 : vector<2x4x1xf32> to vector<2x4x32xf32>
    %286 = arith.subf %278, %285 : vector<2x4x32xf32>
    %287 = arith.mulf %286, %286 : vector<2x4x32xf32>
    %cst_134 = arith.constant dense<0.000000e+00> : vector<2x4xf32>
    %288 = vector.multi_reduction <add>, %287, %cst_134 [2] : vector<2x4x32xf32> to vector<2x4xf32>
    %289 = vector.shape_cast %288 : vector<2x4xf32> to vector<2x4x1xf32>
    %cst_135 = arith.constant 0.0322580636 : f32
    %290 = vector.broadcast %cst_135 : f32 to vector<2x4x1xf32>
    %291 = arith.mulf %289, %290 : vector<2x4x1xf32>
    %292 = math.sqrt %291 : vector<2x4x1xf32>
    %cst_136 = arith.constant 9.99999997E-7 : f32
    %293 = vector.broadcast %cst_136 : f32 to vector<2x4x1xf32>
    %294 = arith.addf %292, %293 : vector<2x4x1xf32>
    %295 = tpu.reciprocal %294 {approx = true} : vector<2x4x1xf32> -> vector<2x4x1xf32>
    %296 = vector.shape_cast %279 : vector<1x32xf32> to vector<1x1x32xf32>
    %297 = vector.broadcast %296 : vector<1x1x32xf32> to vector<2x4x32xf32>
    %298 = arith.mulf %297, %286 : vector<2x4x32xf32>
    %299 = vector.broadcast %295 : vector<2x4x1xf32> to vector<2x4x32xf32>
    %300 = arith.mulf %298, %299 : vector<2x4x32xf32>
    %301 = vector.shape_cast %280 : vector<1x32xf32> to vector<1x1x32xf32>
    %302 = vector.broadcast %301 : vector<1x1x32xf32> to vector<2x4x32xf32>
    %303 = arith.addf %300, %302 : vector<2x4x32xf32>
    %cst_137 = arith.constant dense<0.000000e+00> : vector<2x32xf32>
    %304 = vector.multi_reduction <add>, %303, %cst_137 [1] : vector<2x4x32xf32> to vector<2x32xf32>
    %cst_138 = arith.constant 4.000000e+00 : f32
    %305 = vector.broadcast %cst_138 : f32 to vector<2x32xf32>
    %306 = arith.divf %304, %305 : vector<2x32xf32>
    %c0_139 = arith.constant 0 : index
    %c0_140 = arith.constant 0 : index
    %307 = vector.load %arg17[%c0_139, %c0_140] : memref<32x3xf32, #tpu.memory_space<vmem>>, vector<32x3xf32>
    %cst_141 = arith.constant dense<0.000000e+00> : vector<2x3xf32>
    %308 = tpu.matmul %306, %307, %cst_141 {dimension_numbers = #tpu.dot_dimension_numbers<[1], [0], [0], [1], [0, 0, 1, 1], [], []>} : vector<2x32xf32>, vector<32x3xf32>, vector<2x3xf32> -> vector<2x3xf32>
    %c0_142 = arith.constant 0 : index
    %c0_143 = arith.constant 0 : index
    %309 = vector.load %arg18[%c0_142, %c0_143] : memref<1x3xf32, #tpu.memory_space<vmem>>, vector<1x3xf32>
    %310 = vector.broadcast %309 : vector<1x3xf32> to vector<2x3xf32>
    %311 = arith.addf %308, %310 : vector<2x3xf32>
    %c0_144 = arith.constant 0 : index
    %c0_145 = arith.constant 0 : index
    %312 = vector.load %arg19[%c0_144, %c0_145] : memref<2x3xf32, #tpu.memory_space<vmem>>, vector<2x3xf32>
    tpu.vector_store %arg19[%c0_144, %c0_145], %311 {strides = array<i32>} : memref<2x3xf32, #tpu.memory_space<vmem>>, vector<2x3xf32>,
    return
  }
  func.func @transform_0(%arg0: i32) -> (i32, i32, i32) {
    %c0_i32 = arith.constant 0 : i32
    %c0_i32_0 = arith.constant 0 : i32
    %c0_i32_1 = arith.constant 0 : i32
    return %arg0, %c0_i32, %c0_i32_0 : i32, i32, i32
  }
  func.func @transform_1(%arg0: i32) -> (i32, i32, i32) {
    %c0_i32 = arith.constant 0 : i32
    %c0_i32_0 = arith.constant 0 : i32
    %c0_i32_1 = arith.constant 0 : i32
    return %arg0, %c0_i32, %c0_i32_0 : i32, i32, i32
  }
  func.func @transform_2(%arg0: i32) -> (i32, i32, i32) {
    %c0_i32 = arith.constant 0 : i32
    %c0_i32_0 = arith.constant 0 : i32
    %c0_i32_1 = arith.constant 0 : i32
    %c0_i32_2 = arith.constant 0 : i32
    return %c0_i32, %c0_i32_0, %c0_i32_1 : i32, i32, i32
  }
  func.func @transform_3(%arg0: i32) -> (i32, i32, i32) {
    %c0_i32 = arith.constant 0 : i32
    %c0_i32_0 = arith.constant 0 : i32
    %c0_i32_1 = arith.constant 0 : i32
    %c0_i32_2 = arith.constant 0 : i32
    return %c0_i32, %c0_i32_0, %c0_i32_1 : i32, i32, i32
  }
  func.func @transform_4(%arg0: i32) -> (i32, i32, i32) {
    %c0_i32 = arith.constant 0 : i32
    %c0_i32_0 = arith.constant 0 : i32
    %c0_i32_1 = arith.constant 0 : i32
    %c0_i32_2 = arith.constant 0 : i32
    return %c0_i32, %c0_i32_0, %c0_i32_1 : i32, i32, i32
  }
  func.func @transform_5(%arg0: i32) -> (i32, i32, i32) {
    %c0_i32 = arith.constant 0 : i32
    %c0_i32_0 = arith.constant 0 : i32
    %c0_i32_1 = arith.constant 0 : i32
    %c0_i32_2 = arith.constant 0 : i32
    return %c0_i32, %c0_i32_0, %c0_i32_1 : i32, i32, i32
  }
  func.func @transform_6(%arg0: i32) -> (i32, i32, i32) {
    %c0_i32 = arith.constant 0 : i32
    %c0_i32_0 = arith.constant 0 : i32
    %c0_i32_1 = arith.constant 0 : i32
    %c0_i32_2 = arith.constant 0 : i32
    return %c0_i32, %c0_i32_0, %c0_i32_1 : i32, i32, i32
  }
  func.func @transform_7(%arg0: i32) -> (i32, i32, i32) {
    %c0_i32 = arith.constant 0 : i32
    %c0_i32_0 = arith.constant 0 : i32
    %c0_i32_1 = arith.constant 0 : i32
    %c0_i32_2 = arith.constant 0 : i32
    return %c0_i32, %c0_i32_0, %c0_i32_1 : i32, i32, i32
  }
  func.func @transform_8(%arg0: i32) -> (i32, i32, i32) {
    %c0_i32 = arith.constant 0 : i32
    %c0_i32_0 = arith.constant 0 : i32
    %c0_i32_1 = arith.constant 0 : i32
    %c0_i32_2 = arith.constant 0 : i32
    return %c0_i32, %c0_i32_0, %c0_i32_1 : i32, i32, i32
  }
  func.func @transform_9(%arg0: i32) -> (i32, i32, i32) {
    %c0_i32 = arith.constant 0 : i32
    %c0_i32_0 = arith.constant 0 : i32
    %c0_i32_1 = arith.constant 0 : i32
    %c0_i32_2 = arith.constant 0 : i32
    return %c0_i32, %c0_i32_0, %c0_i32_1 : i32, i32, i32
  }
  func.func @transform_10(%arg0: i32) -> (i32, i32, i32) {
    %c0_i32 = arith.constant 0 : i32
    %c0_i32_0 = arith.constant 0 : i32
    %c0_i32_1 = arith.constant 0 : i32
    %c0_i32_2 = arith.constant 0 : i32
    return %c0_i32, %c0_i32_0, %c0_i32_1 : i32, i32, i32
  }
  func.func @transform_11(%arg0: i32) -> (i32, i32, i32) {
    %c0_i32 = arith.constant 0 : i32
    %c0_i32_0 = arith.constant 0 : i32
    %c0_i32_1 = arith.constant 0 : i32
    %c0_i32_2 = arith.constant 0 : i32
    return %c0_i32, %c0_i32_0, %c0_i32_1 : i32, i32, i32
  }
  func.func @transform_12(%arg0: i32) -> (i32, i32, i32) {
    %c0_i32 = arith.constant 0 : i32
    %c0_i32_0 = arith.constant 0 : i32
    %c0_i32_1 = arith.constant 0 : i32
    %c0_i32_2 = arith.constant 0 : i32
    return %c0_i32, %c0_i32_0, %c0_i32_1 : i32, i32, i32
  }
  func.func @transform_13(%arg0: i32) -> (i32, i32, i32) {
    %c0_i32 = arith.constant 0 : i32
    %c0_i32_0 = arith.constant 0 : i32
    %c0_i32_1 = arith.constant 0 : i32
    %c0_i32_2 = arith.constant 0 : i32
    return %c0_i32, %c0_i32_0, %c0_i32_1 : i32, i32, i32
  }
  func.func @transform_14(%arg0: i32) -> (i32, i32) {
    %c0_i32 = arith.constant 0 : i32
    %c0_i32_0 = arith.constant 0 : i32
    %c0_i32_1 = arith.constant 0 : i32
    return %c0_i32, %c0_i32_0 : i32, i32
  }
  func.func @transform_15(%arg0: i32) -> (i32, i32) {
    %c0_i32 = arith.constant 0 : i32
    %c0_i32_0 = arith.constant 0 : i32
    %c0_i32_1 = arith.constant 0 : i32
    return %c0_i32, %c0_i32_0 : i32, i32
  }
  func.func @transform_16(%arg0: i32) -> (i32, i32) {
    %c0_i32 = arith.constant 0 : i32
    %c0_i32_0 = arith.constant 0 : i32
    %c0_i32_1 = arith.constant 0 : i32
    return %c0_i32, %c0_i32_0 : i32, i32
  }
  func.func @transform_17(%arg0: i32) -> (i32, i32) {
    %c0_i32 = arith.constant 0 : i32
    %c0_i32_0 = arith.constant 0 : i32
    %c0_i32_1 = arith.constant 0 : i32
    return %c0_i32, %c0_i32_0 : i32, i32
  }
  func.func @transform_18(%arg0: i32) -> (i32, i32) {
    %c0_i32 = arith.constant 0 : i32
    %c0_i32_0 = arith.constant 0 : i32
    return %arg0, %c0_i32 : i32, i32
  }
}

</mosaic_0001>

<llo_original>
// kernel: hierarchical_transformer_forward.3
$region0: #{hierarchical_transformer_forward.3}
  #allocation0 [shape = 'u32[]', space=smem, size = 0x4, offset = 0x4, fixed_abs, tag = 'smem constant byte address 0x4 - core index']
  #allocation1 [shape = 'u32[144,128]{1,0:T(1,128)}', space=vmem, size = 0x12000, scoped, tag = 'internal scratch']
  %s0 = inlined_call_operand.vmem [shape: f32[2,4,32], index: 0, kind: input, shape index: {}]
  %s1 = inlined_call_operand.vmem [shape: f32[2,1,4], index: 1, kind: input, shape index: {}]
  %s2 = inlined_call_operand.vmem [shape: f32[2,1,32], index: 2, kind: input, shape index: {}]
  %s3 = inlined_call_operand.vmem [shape: f32[2,1,32], index: 3, kind: input, shape index: {}]
  %s4 = inlined_call_operand.vmem [shape: f32[2,32,96], index: 4, kind: input, shape index: {}]
  %s5 = inlined_call_operand.vmem [shape: f32[2,1,96], index: 5, kind: input, shape index: {}]
  %s6 = inlined_call_operand.vmem [shape: f32[2,32,32], index: 6, kind: input, shape index: {}]
  %s7 = inlined_call_operand.vmem [shape: f32[2,1,32], index: 7, kind: input, shape index: {}]
  %s8 = inlined_call_operand.vmem [shape: f32[2,1,32], index: 8, kind: input, shape index: {}]
  %s9 = inlined_call_operand.vmem [shape: f32[2,1,32], index: 9, kind: input, shape index: {}]
  %s10 = inlined_call_operand.vmem [shape: f32[2,32,64], index: 10, kind: input, shape index: {}]
  %s11 = inlined_call_operand.vmem [shape: f32[2,1,64], index: 11, kind: input, shape index: {}]
  %s12 = inlined_call_operand.vmem [shape: f32[2,64,32], index: 12, kind: input, shape index: {}]
  %s13 = inlined_call_operand.vmem [shape: f32[2,1,32], index: 13, kind: input, shape index: {}]
  %s14 = inlined_call_operand.vmem [shape: f32[1,32], index: 14, kind: input, shape index: {}]
  %s15 = inlined_call_operand.vmem [shape: f32[1,32], index: 15, kind: input, shape index: {}]
  %s16 = inlined_call_operand.vmem [shape: f32[32,3], index: 16, kind: input, shape index: {}]
  %s17 = inlined_call_operand.vmem [shape: f32[1,3], index: 17, kind: input, shape index: {}]
  %s18 = inlined_call_operand.hbm [shape: f32[2,3], index: 18, kind: output, shape index: {}]
  %s19 = sld [smem:[#allocation0]]
  $region82: #{hierarchical_transformer_forward.3} parent=0
    _
  %s21 = ssub.s32 1, %s19
  %s22 = scalar_select 0, %s21, %s19
  $region1: #{hierarchical_transformer_forward.3} parent=0
    #allocation2 [shape = 'u8[1024]{0}', space=vmem, size = 0x400, scoped, tag = 'output window, operand 0, single buffered']
    #allocation3 [shape = 's32[1]{0}', space=sflag, size = 0x4, scoped, tag = 'scoped memory for hierarchical_transformer_forward.3']
    %23 = vsyncpa [#allocation3], 0
    // Predicated region
    $region2: #{hierarchical_transformer_forward.3} parent=1 // pred_check
      _
    $region3: #{hierarchical_transformer_forward.3} parent=1 // pred_check_branch
      %25 = sbr.rel (0) target = $region5
    $region4: #{hierarchical_transformer_forward.3} parent=1 // pred_region
      _
    $region5: #{hierarchical_transformer_forward.3} parent=1 // pred_fallthru
      _
    // Predicated region
    $region6: #{hierarchical_transformer_forward.3} parent=1 // pred_check
      _
    $region7: #{hierarchical_transformer_forward.3} parent=1 // pred_check_branch
      %27 = sbr.rel (0) target = $region9
    $region8: #{hierarchical_transformer_forward.3} parent=1 // pred_region
      _
    $region9: #{hierarchical_transformer_forward.3} parent=1 // pred_fallthru
      _
    // Predicated region
    $region10: #{hierarchical_transformer_forward.3} parent=1 // pred_check
      _
    $region11: #{hierarchical_transformer_forward.3} parent=1 // pred_check_branch
      %29 = sbr.rel (0) target = $region13
    $region12: #{hierarchical_transformer_forward.3} parent=1 // pred_region
      _
    $region13: #{hierarchical_transformer_forward.3} parent=1 // pred_fallthru
      _
    // Predicated region
    $region14: #{hierarchical_transformer_forward.3} parent=1 // pred_check
      _
    $region15: #{hierarchical_transformer_forward.3} parent=1 // pred_check_branch
      %31 = sbr.rel (0) target = $region17
    $region16: #{hierarchical_transformer_forward.3} parent=1 // pred_region
      _
    $region17: #{hierarchical_transformer_forward.3} parent=1 // pred_fallthru
      _
    // Predicated region
    $region18: #{hierarchical_transformer_forward.3} parent=1 // pred_check
      _
    $region19: #{hierarchical_transformer_forward.3} parent=1 // pred_check_branch
      %33 = sbr.rel (0) target = $region21
    $region20: #{hierarchical_transformer_forward.3} parent=1 // pred_region
      _
    $region21: #{hierarchical_transformer_forward.3} parent=1 // pred_fallthru
      _
    // Predicated region
    $region22: #{hierarchical_transformer_forward.3} parent=1 // pred_check
      _
    $region23: #{hierarchical_transformer_forward.3} parent=1 // pred_check_branch
      %35 = sbr.rel (0) target = $region25
    $region24: #{hierarchical_transformer_forward.3} parent=1 // pred_region
      _
    $region25: #{hierarchical_transformer_forward.3} parent=1 // pred_fallthru
      _
    // Predicated region
    $region26: #{hierarchical_transformer_forward.3} parent=1 // pred_check
      _
    $region27: #{hierarchical_transformer_forward.3} parent=1 // pred_check_branch
      %37 = sbr.rel (0) target = $region29
    $region28: #{hierarchical_transformer_forward.3} parent=1 // pred_region
      _
    $region29: #{hierarchical_transformer_forward.3} parent=1 // pred_fallthru
      _
    // Predicated region
    $region30: #{hierarchical_transformer_forward.3} parent=1 // pred_check
      _
    $region31: #{hierarchical_transformer_forward.3} parent=1 // pred_check_branch
      %39 = sbr.rel (0) target = $region33
    $region32: #{hierarchical_transformer_forward.3} parent=1 // pred_region
      _
    $region33: #{hierarchical_transformer_forward.3} parent=1 // pred_fallthru
      _
    // Predicated region
    $region34: #{hierarchical_transformer_forward.3} parent=1 // pred_check
      _
    $region35: #{hierarchical_transformer_forward.3} parent=1 // pred_check_branch
      %41 = sbr.rel (0) target = $region37
    $region36: #{hierarchical_transformer_forward.3} parent=1 // pred_region
      _
    $region37: #{hierarchical_transformer_forward.3} parent=1 // pred_fallthru
      _
    // Predicated region
    $region38: #{hierarchical_transformer_forward.3} parent=1 // pred_check
      _
    $region39: #{hierarchical_transformer_forward.3} parent=1 // pred_check_branch
      %43 = sbr.rel (0) target = $region41
    $region40: #{hierarchical_transformer_forward.3} parent=1 // pred_region
      _
    $region41: #{hierarchical_transformer_forward.3} parent=1 // pred_fallthru
      _
    // Predicated region
    $region42: #{hierarchical_transformer_forward.3} parent=1 // pred_check
      _
    $region43: #{hierarchical_transformer_forward.3} parent=1 // pred_check_branch
      %45 = sbr.rel (0) target = $region45
    $region44: #{hierarchical_transformer_forward.3} parent=1 // pred_region
      _
    $region45: #{hierarchical_transformer_forward.3} parent=1 // pred_fallthru
      _
    // Predicated region
    $region46: #{hierarchical_transformer_forward.3} parent=1 // pred_check
      _
    $region47: #{hierarchical_transformer_forward.3} parent=1 // pred_check_branch
      %47 = sbr.rel (0) target = $region49
    $region48: #{hierarchical_transformer_forward.3} parent=1 // pred_region
      _
    $region49: #{hierarchical_transformer_forward.3} parent=1 // pred_fallthru
      _
    // Predicated region
    $region50: #{hierarchical_transformer_forward.3} parent=1 // pred_check
      _
    $region51: #{hierarchical_transformer_forward.3} parent=1 // pred_check_branch
      %49 = sbr.rel (0) target = $region53
    $region52: #{hierarchical_transformer_forward.3} parent=1 // pred_region
      _
    $region53: #{hierarchical_transformer_forward.3} parent=1 // pred_fallthru
      _
    // Predicated region
    $region54: #{hierarchical_transformer_forward.3} parent=1 // pred_check
      _
    $region55: #{hierarchical_transformer_forward.3} parent=1 // pred_check_branch
      %51 = sbr.rel (0) target = $region57
    $region56: #{hierarchical_transformer_forward.3} parent=1 // pred_region
      _
    $region57: #{hierarchical_transformer_forward.3} parent=1 // pred_fallthru
      _
    // Predicated region
    $region58: #{hierarchical_transformer_forward.3} parent=1 // pred_check
      _
    $region59: #{hierarchical_transformer_forward.3} parent=1 // pred_check_branch
      %53 = sbr.rel (0) target = $region61
    $region60: #{hierarchical_transformer_forward.3} parent=1 // pred_region
      _
    $region61: #{hierarchical_transformer_forward.3} parent=1 // pred_fallthru
      _
    // Predicated region
    $region62: #{hierarchical_transformer_forward.3} parent=1 // pred_check
      _
    $region63: #{hierarchical_transformer_forward.3} parent=1 // pred_check_branch
      %55 = sbr.rel (0) target = $region65
    $region64: #{hierarchical_transformer_forward.3} parent=1 // pred_region
      _
    $region65: #{hierarchical_transformer_forward.3} parent=1 // pred_fallthru
      _
    // Predicated region
    $region66: #{hierarchical_transformer_forward.3} parent=1 // pred_check
      _
    $region67: #{hierarchical_transformer_forward.3} parent=1 // pred_check_branch
      %57 = sbr.rel (0) target = $region69
    $region68: #{hierarchical_transformer_forward.3} parent=1 // pred_region
      _
    $region69: #{hierarchical_transformer_forward.3} parent=1 // pred_fallthru
      _
    // Predicated region
    $region70: #{hierarchical_transformer_forward.3} parent=1 // pred_check
      _
    $region71: #{hierarchical_transformer_forward.3} parent=1 // pred_check_branch
      %59 = sbr.rel (0) target = $region73
    $region72: #{hierarchical_transformer_forward.3} parent=1 // pred_region
      _
    $region73: #{hierarchical_transformer_forward.3} parent=1 // pred_fallthru
      _
    %v60 = vld [vmem:[%s0] sm:$0xf]
    %v61 = vld [vmem:[%s0 + $0x4] sm:$0xf]
    %v62 = vld [vmem:[%s1] sm:$0x1]
    %v63 = vld [vmem:[%s1 + $0x1] sm:$0x1]
    %vm64 = vcmp.eq.f32.partialorder %v62, 0.0
    %vm65 = vcmp.eq.f32.partialorder %v63, 0.0
    %v66 = vsel %vm64, -1e+09, 0.0
    %v67 = vsel %vm65, -1e+09, 0.0
    %v68 = vld [vmem:[%s2] sm:$0x1]
    %v69 = vld [vmem:[%s3] sm:$0x1]
    %v70 = vld [vmem:[%s4] sm:$0xff]
    %v71 = vld [vmem:[%s4 + $0x8] sm:$0xff]
    %v72 = vld [vmem:[%s4 + $0x10] sm:$0xff]
    %v73 = vld [vmem:[%s4 + $0x18] sm:$0xff]
    %v74 = vld [vmem:[%s5] sm:$0x1]
    %v75 = vld [vmem:[%s6] sm:$0xff]
    %v76 = vld [vmem:[%s6 + $0x8] sm:$0xff]
    %v77 = vld [vmem:[%s6 + $0x10] sm:$0xff]
    %v78 = vld [vmem:[%s6 + $0x18] sm:$0xff]
    %v79 = vld [vmem:[%s7] sm:$0x1]
    %v80 = vld [vmem:[%s8] sm:$0x1]
    %v81 = vld [vmem:[%s9] sm:$0x1]
    %v82 = vld [vmem:[%s10] sm:$0xff]
    %v83 = vld [vmem:[%s10 + $0x8] sm:$0xff]
    %v84 = vld [vmem:[%s10 + $0x10] sm:$0xff]
    %v85 = vld [vmem:[%s10 + $0x18] sm:$0xff]
    %v86 = vld [vmem:[%s11] sm:$0x1]
    %v87 = vld [vmem:[%s12] sm:$0xff]
    %v88 = vld [vmem:[%s12 + $0x8] sm:$0xff]
    %v89 = vld [vmem:[%s12 + $0x10] sm:$0xff]
    %v90 = vld [vmem:[%s12 + $0x18] sm:$0xff]
    %v91 = vld [vmem:[%s12 + $0x20] sm:$0xff]
    %v92 = vld [vmem:[%s12 + $0x28] sm:$0xff]
    %v93 = vld [vmem:[%s12 + $0x30] sm:$0xff]
    %v94 = vld [vmem:[%s12 + $0x38] sm:$0xff]
    %v95 = vld [vmem:[%s13] sm:$0x1]
    %vm96 = vcmask 257024
    %v97 = vsel %vm96, %v60, 0.0
    %98 = vadd.xlane.f32.xlu0 %v97
    %v99 = vpop.xlane.xlu0 %98
    %v100 = vsel %vm96, %v61, 0.0
    %101 = vadd.xlane.f32.xlu0 %v100
    %v102 = vpop.xlane.xlu0 %101
    %v103 = vrcp.pop 32.0
    %v104 = vmul.f32 %v99, %v103
    %v105 = vmul.f32 %v102, %v103
    %v106 = vsub.f32 %v60, %v104
    %v107 = vsub.f32 %v61, %v105
    %v108 = vmul.f32 %v106, %v106
    %v109 = vmul.f32 %v107, %v107
    %v110 = vsel %vm96, %v108, 0.0
    %111 = vadd.xlane.f32.xlu0 %v110
    %v112 = vpop.xlane.xlu0 %111
    %v113 = vsel %vm96, %v109, 0.0
    %114 = vadd.xlane.f32.xlu0 %v113
    %v115 = vpop.xlane.xlu0 %114
    %v116 = vmul.f32 %v112, 0.032258064
    %v117 = vmul.f32 %v115, 0.032258064
    %v118 = vrsqrt.pop %v116
    %v119 = vmul.f32 %v116, %v118
    %vm120 = vcmp.eq.f32.partialorder %v116, inf
    %v121 = vsel %vm120, %v116, %v119
    %vm122 = vcmp.eq.f32.partialorder %v116, 0.0
    %v123 = vand.u32 %v116, 2147483648
    %v124 = vsel %vm122, %v123, %v121
    %v125 = vrsqrt.pop %v117
    %v126 = vmul.f32 %v117, %v125
    %vm127 = vcmp.eq.f32.partialorder %v117, inf
    %v128 = vsel %vm127, %v117, %v126
    %vm129 = vcmp.eq.f32.partialorder %v117, 0.0
    %v130 = vand.u32 %v117, 2147483648
    %v131 = vsel %vm129, %v130, %v128
    %v132 = vadd.f32 %v124, 1e-06
    %v133 = vadd.f32 %v131, 1e-06
    %v134 = vrcp.pop %v132
    %v135 = vrcp.pop %v133
    %v137 = vlaneseq
    %v138 = vshrl.u32 %v137, 7
    %v139 = vsub.s32 0, %v138
    %v140 = vrot.slane %v68, %v139
    %v142 = vmul.f32 %v140, %v106
    %v143 = vmul.f32 %v140, %v107
    %v144 = vmul.f32 %v142, %v134
    %v145 = vmul.f32 %v143, %v135
    %v147 = vlaneseq
    %v148 = vshrl.u32 %v147, 7
    %v149 = vsub.s32 0, %v148
    %v150 = vrot.slane %v69, %v149
    %v152 = vadd.f32 %v144, %v150
    %v153 = vadd.f32 %v145, %v150
    %v155 = vlaneseq
    %v156 = vshrl.u32 %v155, 7
    %v157 = vsub.s32 0, %v156
    %v158 = vrot.slane %v74, %v157
    %v162 = vcombine.low %v152, %v153
    %vm163 = vcmask 261120
    %v164 = vsel %vm163, %v162, 0
    %166 = vmatprep.subr.mxu0 0.0
    %167 = vmatpush1.msra.mxu0 %v70
    %168 = vmatprep.subr.mxu0 0.0
    %169 = vmatpush1.msra.mxu0 %v71
    %170 = vmatprep.subr.mxu0 0.0
    %171 = vmatpush1.msra.mxu0 %v72
    %172 = vmatprep.subr.mxu0 0.0
    %173 = vmatpush1.msra.mxu0 %v73
    %174 = vmatprep.subr.mxu0 0.0
    %175 = vmatpush1.msra.mxu0 0.0
    %176 = vmatprep.subr.mxu0 0.0
    %177 = vmatpush1.msra.mxu0 0.0
    %178 = vmatprep.subr.mxu0 0.0
    %179 = vmatpush1.msra.mxu0 0.0
    %180 = vmatprep.subr.mxu0 0.0
    %181 = vmatpush1.msra.mxu0 0.0
    %182 = vmatprep.subr.mxu0 0.0
    %183 = vmatpush1.msra.mxu0 0.0
    %184 = vmatprep.subr.mxu0 0.0
    %185 = vmatpush1.msra.mxu0 0.0
    %186 = vmatprep.subr.mxu0 0.0
    %187 = vmatpush1.msra.mxu0 0.0
    %188 = vmatprep.subr.mxu0 0.0
    %189 = vmatpush1.msra.mxu0 0.0
    %190 = vmatprep.subr.mxu0 0.0
    %191 = vmatpush1.msra.mxu0 0.0
    %192 = vmatprep.subr.mxu0 0.0
    %193 = vmatpush1.msra.mxu0 0.0
    %194 = vmatprep.subr.mxu0 0.0
    %195 = vmatpush1.msra.mxu0 0.0
    %196 = vmatprep.subr.mxu0 0.0
    %197 = vmatpush1.msra.mxu0 0.0
    %198 = vmatprep.subr.mxu0 0.0
    %199 = vmatpush1.msra.mxu0 0.0
    %200 = vmatprep.subr.mxu0 0.0
    %201 = vmatpush1.msra.mxu0 0.0
    %202 = vmatprep.subr.mxu0 0.0
    %203 = vmatpush1.msra.mxu0 0.0
    %204 = vmatprep.subr.mxu0 0.0
    %205 = vmatpush1.msra.mxu0 0.0
    %206 = vmatprep.subr.mxu0 0.0
    %207 = vmatpush1.msra.mxu0 0.0
    %208 = vmatprep.subr.mxu0 0.0
    %209 = vmatpush1.msra.mxu0 0.0
    %210 = vmatprep.subr.mxu0 0.0
    %211 = vmatpush1.msra.mxu0 0.0
    %212 = vmatprep.subr.mxu0 0.0
    %213 = vmatpush1.msra.mxu0 0.0
    %214 = vmatprep.subr.mxu0 0.0
    %215 = vmatpush1.msra.mxu0 0.0
    %216 = vmatprep.subr.mxu0 0.0
    %217 = vmatpush1.msra.mxu0 0.0
    %218 = vmatprep.subr.mxu0 0.0
    %219 = vmatpush1.msra.mxu0 0.0
    %220 = vmatprep.subr.mxu0 0.0
    %221 = vmatpush1.msra.mxu0 0.0
    %222 = vmatprep.subr.mxu0 0.0
    %223 = vmatpush1.msra.mxu0 0.0
    %224 = vmatprep.subr.mxu0 0.0
    %225 = vmatpush1.msra.mxu0 0.0
    %226 = vmatprep.subr.mxu0 0.0
    %227 = vmatpush1.msra.mxu0 0.0
    %228 = vmatprep.subr.mxu0 0.0
    %229 = vmatpush1.msra.mxu0 0.0
    %230 = vmatprep.mubr.f32.mxu0 0.0
    %231 = vmatmul.mubr.f32.gmra.mrb[0].mxu0 %v164
    %v232 = vpop.f32.mrb[0].mxu0
    %v233 = vadd.f32 %v158, %v232
    %v234 = vpop.f32.mrb[0].mxu0
    %235 = vdwg.mxu0
    %v237 = vcombine.high %v233, %v233
    %238 = vrot.lane.b32.xlu0 %v233, 96
    %v239 = vpop.permute.xlu0 %238
    %vm240 = vcmask 130048
    %v241 = vsel %vm240, %v233, 0
    %v243 = vsel %vm240, %v239, 0
    %245 = vmatprep.subr.mxu0 0.0
    %246 = vmatpush1.xpose.msra.mxu0 %v243
    %247 = vmatprep.subr.mxu0 0.0
    %248 = vmatpush1.xpose.msra.mxu0 0.0
    %249 = vmatprep.subr.mxu0 0.0
    %250 = vmatpush1.xpose.msra.mxu0 0.0
    %251 = vmatprep.subr.mxu0 0.0
    %252 = vmatpush1.xpose.msra.mxu0 0.0
    %253 = vmatprep.subr.mxu0 0.0
    %254 = vmatpush1.xpose.msra.mxu0 0.0
    %255 = vmatprep.subr.mxu0 0.0
    %256 = vmatpush1.xpose.msra.mxu0 0.0
    %257 = vmatprep.subr.mxu0 0.0
    %258 = vmatpush1.xpose.msra.mxu0 0.0
    %259 = vmatprep.subr.mxu0 0.0
    %260 = vmatpush1.xpose.msra.mxu0 0.0
    %261 = vmatprep.subr.mxu0 0.0
    %262 = vmatpush1.xpose.msra.mxu0 0.0
    %263 = vmatprep.subr.mxu0 0.0
    %264 = vmatpush1.xpose.msra.mxu0 0.0
    %265 = vmatprep.subr.mxu0 0.0
    %266 = vmatpush1.xpose.msra.mxu0 0.0
    %267 = vmatprep.subr.mxu0 0.0
    %268 = vmatpush1.xpose.msra.mxu0 0.0
    %269 = vmatprep.subr.mxu0 0.0
    %270 = vmatpush1.xpose.msra.mxu0 0.0
    %271 = vmatprep.subr.mxu0 0.0
    %272 = vmatpush1.xpose.msra.mxu0 0.0
    %273 = vmatprep.subr.mxu0 0.0
    %274 = vmatpush1.xpose.msra.mxu0 0.0
    %275 = vmatprep.subr.mxu0 0.0
    %276 = vmatpush1.xpose.msra.mxu0 0.0
    %277 = vmatprep.subr.mxu0 0.0
    %278 = vmatpush1.xpose.msra.mxu0 0.0
    %279 = vmatprep.subr.mxu0 0.0
    %280 = vmatpush1.xpose.msra.mxu0 0.0
    %281 = vmatprep.subr.mxu0 0.0
    %282 = vmatpush1.xpose.msra.mxu0 0.0
    %283 = vmatprep.subr.mxu0 0.0
    %284 = vmatpush1.xpose.msra.mxu0 0.0
    %285 = vmatprep.subr.mxu0 0.0
    %286 = vmatpush1.xpose.msra.mxu0 0.0
    %287 = vmatprep.subr.mxu0 0.0
    %288 = vmatpush1.xpose.msra.mxu0 0.0
    %289 = vmatprep.subr.mxu0 0.0
    %290 = vmatpush1.xpose.msra.mxu0 0.0
    %291 = vmatprep.subr.mxu0 0.0
    %292 = vmatpush1.xpose.msra.mxu0 0.0
    %293 = vmatprep.subr.mxu0 0.0
    %294 = vmatpush1.xpose.msra.mxu0 0.0
    %295 = vmatprep.subr.mxu0 0.0
    %296 = vmatpush1.xpose.msra.mxu0 0.0
    %297 = vmatprep.subr.mxu0 0.0
    %298 = vmatpush1.xpose.msra.mxu0 0.0
    %299 = vmatprep.subr.mxu0 0.0
    %300 = vmatpush1.xpose.msra.mxu0 0.0
    %301 = vmatprep.subr.mxu0 0.0
    %302 = vmatpush1.xpose.msra.mxu0 0.0
    %303 = vmatprep.subr.mxu0 0.0
    %304 = vmatpush1.xpose.msra.mxu0 0.0
    %305 = vmatprep.subr.mxu0 0.0
    %306 = vmatpush1.xpose.msra.mxu0 0.0
    %307 = vmatprep.subr.mxu0 0.0
    %308 = vmatpush1.xpose.msra.mxu0 0.0
    %309 = vmatprep.mubr.f32.mxu0 0.0
    %310 = vmatmul.mubr.f32.gmra.mrb[0].mxu0 %v241
    %v311 = vpop.f32.mrb[0].mxu0
    %v312 = vadd.f32 0.0, %v311
    %v313 = vpop.f32.mrb[0].mxu0
    %314 = vdwg.mxu0
    %315 = vrot.lane.b32.xlu0 %v237, 96
    %v316 = vpop.permute.xlu0 %315
    %v317 = vsel %vm240, %v237, 0
    %v319 = vsel %vm240, %v316, 0
    %321 = vmatprep.subr.mxu0 0.0
    %322 = vmatpush1.xpose.msra.mxu0 %v319
    %323 = vmatprep.subr.mxu0 0.0
    %324 = vmatpush1.xpose.msra.mxu0 0.0
    %325 = vmatprep.subr.mxu0 0.0
    %326 = vmatpush1.xpose.msra.mxu0 0.0
    %327 = vmatprep.subr.mxu0 0.0
    %328 = vmatpush1.xpose.msra.mxu0 0.0
    %329 = vmatprep.subr.mxu0 0.0
    %330 = vmatpush1.xpose.msra.mxu0 0.0
    %331 = vmatprep.subr.mxu0 0.0
    %332 = vmatpush1.xpose.msra.mxu0 0.0
    %333 = vmatprep.subr.mxu0 0.0
    %334 = vmatpush1.xpose.msra.mxu0 0.0
    %335 = vmatprep.subr.mxu0 0.0
    %336 = vmatpush1.xpose.msra.mxu0 0.0
    %337 = vmatprep.subr.mxu0 0.0
    %338 = vmatpush1.xpose.msra.mxu0 0.0
    %339 = vmatprep.subr.mxu0 0.0
    %340 = vmatpush1.xpose.msra.mxu0 0.0
    %341 = vmatprep.subr.mxu0 0.0
    %342 = vmatpush1.xpose.msra.mxu0 0.0
    %343 = vmatprep.subr.mxu0 0.0
    %344 = vmatpush1.xpose.msra.mxu0 0.0
    %345 = vmatprep.subr.mxu0 0.0
    %346 = vmatpush1.xpose.msra.mxu0 0.0
    %347 = vmatprep.subr.mxu0 0.0
    %348 = vmatpush1.xpose.msra.mxu0 0.0
    %349 = vmatprep.subr.mxu0 0.0
    %350 = vmatpush1.xpose.msra.mxu0 0.0
    %351 = vmatprep.subr.mxu0 0.0
    %352 = vmatpush1.xpose.msra.mxu0 0.0
    %353 = vmatprep.subr.mxu0 0.0
    %354 = vmatpush1.xpose.msra.mxu0 0.0
    %355 = vmatprep.subr.mxu0 0.0
    %356 = vmatpush1.xpose.msra.mxu0 0.0
    %357 = vmatprep.subr.mxu0 0.0
    %358 = vmatpush1.xpose.msra.mxu0 0.0
    %359 = vmatprep.subr.mxu0 0.0
    %360 = vmatpush1.xpose.msra.mxu0 0.0
    %361 = vmatprep.subr.mxu0 0.0
    %362 = vmatpush1.xpose.msra.mxu0 0.0
    %363 = vmatprep.subr.mxu0 0.0
    %364 = vmatpush1.xpose.msra.mxu0 0.0
    %365 = vmatprep.subr.mxu0 0.0
    %366 = vmatpush1.xpose.msra.mxu0 0.0
    %367 = vmatprep.subr.mxu0 0.0
    %368 = vmatpush1.xpose.msra.mxu0 0.0
    %369 = vmatprep.subr.mxu0 0.0
    %370 = vmatpush1.xpose.msra.mxu0 0.0
    %371 = vmatprep.subr.mxu0 0.0
    %372 = vmatpush1.xpose.msra.mxu0 0.0
    %373 = vmatprep.subr.mxu0 0.0
    %374 = vmatpush1.xpose.msra.mxu0 0.0
    %375 = vmatprep.subr.mxu0 0.0
    %376 = vmatpush1.xpose.msra.mxu0 0.0
    %377 = vmatprep.subr.mxu0 0.0
    %378 = vmatpush1.xpose.msra.mxu0 0.0
    %379 = vmatprep.subr.mxu0 0.0
    %380 = vmatpush1.xpose.msra.mxu0 0.0
    %381 = vmatprep.subr.mxu0 0.0
    %382 = vmatpush1.xpose.msra.mxu0 0.0
    %383 = vmatprep.subr.mxu0 0.0
    %384 = vmatpush1.xpose.msra.mxu0 0.0
    %385 = vmatprep.mubr.f32.mxu0 0.0
    %386 = vmatmul.mubr.f32.gmra.mrb[0].mxu0 %v317
    %v387 = vpop.f32.mrb[0].mxu0
    %v388 = vadd.f32 0.0, %v387
    %v389 = vpop.f32.mrb[0].mxu0
    %390 = vdwg.mxu0
    %v391 = vmul.f32 %v312, 0.25
    %v392 = vmul.f32 %v388, 0.25
    %v395 = vlaneseq
    %v396 = vshrl.u32 %v395, 7
    %v397 = vsub.s32 0, %v396
    %v398 = vrot.slane %v66, %v397
    %v399 = vlaneseq
    %v400 = vshrl.u32 %v399, 7
    %v401 = vsub.s32 0, %v400
    %v402 = vrot.slane %v67, %v401
    %v405 = vadd.f32 %v391, %v398
    %v406 = vadd.f32 %v392, %v402
    %vm407 = vcmask 27648
    %v408 = vsel %vm407, %v405, -inf
    %409 = vmax.xlane.f32.xlu0 %v408
    %v410 = vpop.xlane.xlu0 %409
    %v411 = vsel %vm407, %v406, -inf
    %412 = vmax.xlane.f32.xlu0 %v411
    %v413 = vpop.xlane.xlu0 %412
    %v414 = vsub.f32 %v405, %v410
    %v415 = vsub.f32 %v406, %v413
    %v416 = vmul.f32 %v414, 1.442695
    %v417 = vpow.pop %v416
    %v418 = vmul.f32 %v415, 1.442695
    %v419 = vpow.pop %v418
    %v420 = vsel %vm407, %v417, 0.0
    %421 = vadd.xlane.f32.xlu0 %v420
    %v422 = vpop.xlane.xlu0 %421
    %v423 = vsel %vm407, %v419, 0.0
    %424 = vadd.xlane.f32.xlu0 %v423
    %v425 = vpop.xlane.xlu0 %424
    %v426 = vrcp.pop %v422
    %v427 = vrcp.pop %v425
    %v428 = vmul.f32 %v417, %v426
    %v429 = vmul.f32 %v419, %v427
    %430 = vrot.lane.b32.xlu0 %v233, 64
    %v431 = vpop.permute.xlu0 %430
    %vm432 = vcmask 31744
    %v434 = vsel %vm432, %v428, 0
    %vm436 = vcmask 1043456
    %v437 = vsel %vm436, %v431, 0
    %439 = vmatprep.subr.mxu0 0.0
    %440 = vmatpush1.msra.mxu0 %v437
    %441 = vmatprep.subr.mxu0 0.0
    %442 = vmatpush1.msra.mxu0 0.0
    %443 = vmatprep.subr.mxu0 0.0
    %444 = vmatpush1.msra.mxu0 0.0
    %445 = vmatprep.subr.mxu0 0.0
    %446 = vmatpush1.msra.mxu0 0.0
    %447 = vmatprep.subr.mxu0 0.0
    %448 = vmatpush1.msra.mxu0 0.0
    %449 = vmatprep.subr.mxu0 0.0
    %450 = vmatpush1.msra.mxu0 0.0
    %451 = vmatprep.subr.mxu0 0.0
    %452 = vmatpush1.msra.mxu0 0.0
    %453 = vmatprep.subr.mxu0 0.0
    %454 = vmatpush1.msra.mxu0 0.0
    %455 = vmatprep.subr.mxu0 0.0
    %456 = vmatpush1.msra.mxu0 0.0
    %457 = vmatprep.subr.mxu0 0.0
    %458 = vmatpush1.msra.mxu0 0.0
    %459 = vmatprep.subr.mxu0 0.0
    %460 = vmatpush1.msra.mxu0 0.0
    %461 = vmatprep.subr.mxu0 0.0
    %462 = vmatpush1.msra.mxu0 0.0
    %463 = vmatprep.subr.mxu0 0.0
    %464 = vmatpush1.msra.mxu0 0.0
    %465 = vmatprep.subr.mxu0 0.0
    %466 = vmatpush1.msra.mxu0 0.0
    %467 = vmatprep.subr.mxu0 0.0
    %468 = vmatpush1.msra.mxu0 0.0
    %469 = vmatprep.subr.mxu0 0.0
    %470 = vmatpush1.msra.mxu0 0.0
    %471 = vmatprep.subr.mxu0 0.0
    %472 = vmatpush1.msra.mxu0 0.0
    %473 = vmatprep.subr.mxu0 0.0
    %474 = vmatpush1.msra.mxu0 0.0
    %475 = vmatprep.subr.mxu0 0.0
    %476 = vmatpush1.msra.mxu0 0.0
    %477 = vmatprep.subr.mxu0 0.0
    %478 = vmatpush1.msra.mxu0 0.0
    %479 = vmatprep.subr.mxu0 0.0
    %480 = vmatpush1.msra.mxu0 0.0
    %481 = vmatprep.subr.mxu0 0.0
    %482 = vmatpush1.msra.mxu0 0.0
    %483 = vmatprep.subr.mxu0 0.0
    %484 = vmatpush1.msra.mxu0 0.0
    %485 = vmatprep.subr.mxu0 0.0
    %486 = vmatpush1.msra.mxu0 0.0
    %487 = vmatprep.subr.mxu0 0.0
    %488 = vmatpush1.msra.mxu0 0.0
    %489 = vmatprep.subr.mxu0 0.0
    %490 = vmatpush1.msra.mxu0 0.0
    %491 = vmatprep.subr.mxu0 0.0
    %492 = vmatpush1.msra.mxu0 0.0
    %493 = vmatprep.subr.mxu0 0.0
    %494 = vmatpush1.msra.mxu0 0.0
    %495 = vmatprep.subr.mxu0 0.0
    %496 = vmatpush1.msra.mxu0 0.0
    %497 = vmatprep.subr.mxu0 0.0
    %498 = vmatpush1.msra.mxu0 0.0
    %499 = vmatprep.subr.mxu0 0.0
    %500 = vmatpush1.msra.mxu0 0.0
    %501 = vmatprep.subr.mxu0 0.0
    %502 = vmatpush1.msra.mxu0 0.0
    %503 = vmatprep.mubr.f32.mxu0 0.0
    %504 = vmatmul.mubr.f32.gmra.mrb[0].mxu0 %v434
    %v505 = vpop.f32.mrb[0].mxu0
    %v506 = vadd.f32 0.0, %v505
    %v507 = vpop.f32.mrb[0].mxu0
    %508 = vdwg.mxu0
    %509 = vrot.lane.b32.xlu0 %v237, 64
    %v510 = vpop.permute.xlu0 %509
    %v512 = vsel %vm432, %v429, 0
    %v514 = vsel %vm436, %v510, 0
    %516 = vmatprep.subr.mxu0 0.0
    %517 = vmatpush1.msra.mxu0 %v514
    %518 = vmatprep.subr.mxu0 0.0
    %519 = vmatpush1.msra.mxu0 0.0
    %520 = vmatprep.subr.mxu0 0.0
    %521 = vmatpush1.msra.mxu0 0.0
    %522 = vmatprep.subr.mxu0 0.0
    %523 = vmatpush1.msra.mxu0 0.0
    %524 = vmatprep.subr.mxu0 0.0
    %525 = vmatpush1.msra.mxu0 0.0
    %526 = vmatprep.subr.mxu0 0.0
    %527 = vmatpush1.msra.mxu0 0.0
    %528 = vmatprep.subr.mxu0 0.0
    %529 = vmatpush1.msra.mxu0 0.0
    %530 = vmatprep.subr.mxu0 0.0
    %531 = vmatpush1.msra.mxu0 0.0
    %532 = vmatprep.subr.mxu0 0.0
    %533 = vmatpush1.msra.mxu0 0.0
    %534 = vmatprep.subr.mxu0 0.0
    %535 = vmatpush1.msra.mxu0 0.0
    %536 = vmatprep.subr.mxu0 0.0
    %537 = vmatpush1.msra.mxu0 0.0
    %538 = vmatprep.subr.mxu0 0.0
    %539 = vmatpush1.msra.mxu0 0.0
    %540 = vmatprep.subr.mxu0 0.0
    %541 = vmatpush1.msra.mxu0 0.0
    %542 = vmatprep.subr.mxu0 0.0
    %543 = vmatpush1.msra.mxu0 0.0
    %544 = vmatprep.subr.mxu0 0.0
    %545 = vmatpush1.msra.mxu0 0.0
    %546 = vmatprep.subr.mxu0 0.0
    %547 = vmatpush1.msra.mxu0 0.0
    %548 = vmatprep.subr.mxu0 0.0
    %549 = vmatpush1.msra.mxu0 0.0
    %550 = vmatprep.subr.mxu0 0.0
    %551 = vmatpush1.msra.mxu0 0.0
    %552 = vmatprep.subr.mxu0 0.0
    %553 = vmatpush1.msra.mxu0 0.0
    %554 = vmatprep.subr.mxu0 0.0
    %555 = vmatpush1.msra.mxu0 0.0
    %556 = vmatprep.subr.mxu0 0.0
    %557 = vmatpush1.msra.mxu0 0.0
    %558 = vmatprep.subr.mxu0 0.0
    %559 = vmatpush1.msra.mxu0 0.0
    %560 = vmatprep.subr.mxu0 0.0
    %561 = vmatpush1.msra.mxu0 0.0
    %562 = vmatprep.subr.mxu0 0.0
    %563 = vmatpush1.msra.mxu0 0.0
    %564 = vmatprep.subr.mxu0 0.0
    %565 = vmatpush1.msra.mxu0 0.0
    %566 = vmatprep.subr.mxu0 0.0
    %567 = vmatpush1.msra.mxu0 0.0
    %568 = vmatprep.subr.mxu0 0.0
    %569 = vmatpush1.msra.mxu0 0.0
    %570 = vmatprep.subr.mxu0 0.0
    %571 = vmatpush1.msra.mxu0 0.0
    %572 = vmatprep.subr.mxu0 0.0
    %573 = vmatpush1.msra.mxu0 0.0
    %574 = vmatprep.subr.mxu0 0.0
    %575 = vmatpush1.msra.mxu0 0.0
    %576 = vmatprep.subr.mxu0 0.0
    %577 = vmatpush1.msra.mxu0 0.0
    %578 = vmatprep.subr.mxu0 0.0
    %579 = vmatpush1.msra.mxu0 0.0
    %580 = vmatprep.mubr.f32.mxu0 0.0
    %581 = vmatmul.mubr.f32.gmra.mrb[0].mxu0 %v512
    %v582 = vpop.f32.mrb[0].mxu0
    %v583 = vadd.f32 0.0, %v582
    %v584 = vpop.f32.mrb[0].mxu0
    %585 = vdwg.mxu0
    %586 = vrot.lane.b32.xlu0 %v233, 112
    %v587 = vpop.permute.xlu0 %586
    %588 = vrot.lane.b32.xlu0 %v233, 80
    %v589 = vpop.permute.xlu0 %588
    %v590 = vsel %vm240, %v587, 0
    %v592 = vsel %vm240, %v589, 0
    %594 = vmatprep.subr.mxu0 0.0
    %595 = vmatpush1.xpose.msra.mxu0 %v592
    %596 = vmatprep.subr.mxu0 0.0
    %597 = vmatpush1.xpose.msra.mxu0 0.0
    %598 = vmatprep.subr.mxu0 0.0
    %599 = vmatpush1.xpose.msra.mxu0 0.0
    %600 = vmatprep.subr.mxu0 0.0
    %601 = vmatpush1.xpose.msra.mxu0 0.0
    %602 = vmatprep.subr.mxu0 0.0
    %603 = vmatpush1.xpose.msra.mxu0 0.0
    %604 = vmatprep.subr.mxu0 0.0
    %605 = vmatpush1.xpose.msra.mxu0 0.0
    %606 = vmatprep.subr.mxu0 0.0
    %607 = vmatpush1.xpose.msra.mxu0 0.0
    %608 = vmatprep.subr.mxu0 0.0
    %609 = vmatpush1.xpose.msra.mxu0 0.0
    %610 = vmatprep.subr.mxu0 0.0
    %611 = vmatpush1.xpose.msra.mxu0 0.0
    %612 = vmatprep.subr.mxu0 0.0
    %613 = vmatpush1.xpose.msra.mxu0 0.0
    %614 = vmatprep.subr.mxu0 0.0
    %615 = vmatpush1.xpose.msra.mxu0 0.0
    %616 = vmatprep.subr.mxu0 0.0
    %617 = vmatpush1.xpose.msra.mxu0 0.0
    %618 = vmatprep.subr.mxu0 0.0
    %619 = vmatpush1.xpose.msra.mxu0 0.0
    %620 = vmatprep.subr.mxu0 0.0
    %621 = vmatpush1.xpose.msra.mxu0 0.0
    %622 = vmatprep.subr.mxu0 0.0
    %623 = vmatpush1.xpose.msra.mxu0 0.0
    %624 = vmatprep.subr.mxu0 0.0
    %625 = vmatpush1.xpose.msra.mxu0 0.0
    %626 = vmatprep.subr.mxu0 0.0
    %627 = vmatpush1.xpose.msra.mxu0 0.0
    %628 = vmatprep.subr.mxu0 0.0
    %629 = vmatpush1.xpose.msra.mxu0 0.0
    %630 = vmatprep.subr.mxu0 0.0
    %631 = vmatpush1.xpose.msra.mxu0 0.0
    %632 = vmatprep.subr.mxu0 0.0
    %633 = vmatpush1.xpose.msra.mxu0 0.0
    %634 = vmatprep.subr.mxu0 0.0
    %635 = vmatpush1.xpose.msra.mxu0 0.0
    %636 = vmatprep.subr.mxu0 0.0
    %637 = vmatpush1.xpose.msra.mxu0 0.0
    %638 = vmatprep.subr.mxu0 0.0
    %639 = vmatpush1.xpose.msra.mxu0 0.0
    %640 = vmatprep.subr.mxu0 0.0
    %641 = vmatpush1.xpose.msra.mxu0 0.0
    %642 = vmatprep.subr.mxu0 0.0
    %643 = vmatpush1.xpose.msra.mxu0 0.0
    %644 = vmatprep.subr.mxu0 0.0
    %645 = vmatpush1.xpose.msra.mxu0 0.0
    %646 = vmatprep.subr.mxu0 0.0
    %647 = vmatpush1.xpose.msra.mxu0 0.0
    %648 = vmatprep.subr.mxu0 0.0
    %649 = vmatpush1.xpose.msra.mxu0 0.0
    %650 = vmatprep.subr.mxu0 0.0
    %651 = vmatpush1.xpose.msra.mxu0 0.0
    %652 = vmatprep.subr.mxu0 0.0
    %653 = vmatpush1.xpose.msra.mxu0 0.0
    %654 = vmatprep.subr.mxu0 0.0
    %655 = vmatpush1.xpose.msra.mxu0 0.0
    %656 = vmatprep.subr.mxu0 0.0
    %657 = vmatpush1.xpose.msra.mxu0 0.0
    %658 = vmatprep.mubr.f32.mxu0 0.0
    %659 = vmatmul.mubr.f32.gmra.mrb[0].mxu0 %v590
    %v660 = vpop.f32.mrb[0].mxu0
    %v661 = vadd.f32 0.0, %v660
    %v662 = vpop.f32.mrb[0].mxu0
    %663 = vdwg.mxu0
    %664 = vrot.lane.b32.xlu0 %v237, 112
    %v665 = vpop.permute.xlu0 %664
    %666 = vrot.lane.b32.xlu0 %v237, 80
    %v667 = vpop.permute.xlu0 %666
    %v668 = vsel %vm240, %v665, 0
    %v670 = vsel %vm240, %v667, 0
    %672 = vmatprep.subr.mxu0 0.0
    %673 = vmatpush1.xpose.msra.mxu0 %v670
    %674 = vmatprep.subr.mxu0 0.0
    %675 = vmatpush1.xpose.msra.mxu0 0.0
    %676 = vmatprep.subr.mxu0 0.0
    %677 = vmatpush1.xpose.msra.mxu0 0.0
    %678 = vmatprep.subr.mxu0 0.0
    %679 = vmatpush1.xpose.msra.mxu0 0.0
    %680 = vmatprep.subr.mxu0 0.0
    %681 = vmatpush1.xpose.msra.mxu0 0.0
    %682 = vmatprep.subr.mxu0 0.0
    %683 = vmatpush1.xpose.msra.mxu0 0.0
    %684 = vmatprep.subr.mxu0 0.0
    %685 = vmatpush1.xpose.msra.mxu0 0.0
    %686 = vmatprep.subr.mxu0 0.0
    %687 = vmatpush1.xpose.msra.mxu0 0.0
    %688 = vmatprep.subr.mxu0 0.0
    %689 = vmatpush1.xpose.msra.mxu0 0.0
    %690 = vmatprep.subr.mxu0 0.0
    %691 = vmatpush1.xpose.msra.mxu0 0.0
    %692 = vmatprep.subr.mxu0 0.0
    %693 = vmatpush1.xpose.msra.mxu0 0.0
    %694 = vmatprep.subr.mxu0 0.0
    %695 = vmatpush1.xpose.msra.mxu0 0.0
    %696 = vmatprep.subr.mxu0 0.0
    %697 = vmatpush1.xpose.msra.mxu0 0.0
    %698 = vmatprep.subr.mxu0 0.0
    %699 = vmatpush1.xpose.msra.mxu0 0.0
    %700 = vmatprep.subr.mxu0 0.0
    %701 = vmatpush1.xpose.msra.mxu0 0.0
    %702 = vmatprep.subr.mxu0 0.0
    %703 = vmatpush1.xpose.msra.mxu0 0.0
    %704 = vmatprep.subr.mxu0 0.0
    %705 = vmatpush1.xpose.msra.mxu0 0.0
    %706 = vmatprep.subr.mxu0 0.0
    %707 = vmatpush1.xpose.msra.mxu0 0.0
    %708 = vmatprep.subr.mxu0 0.0
    %709 = vmatpush1.xpose.msra.mxu0 0.0
    %710 = vmatprep.subr.mxu0 0.0
    %711 = vmatpush1.xpose.msra.mxu0 0.0
    %712 = vmatprep.subr.mxu0 0.0
    %713 = vmatpush1.xpose.msra.mxu0 0.0
    %714 = vmatprep.subr.mxu0 0.0
    %715 = vmatpush1.xpose.msra.mxu0 0.0
    %716 = vmatprep.subr.mxu0 0.0
    %717 = vmatpush1.xpose.msra.mxu0 0.0
    %718 = vmatprep.subr.mxu0 0.0
    %719 = vmatpush1.xpose.msra.mxu0 0.0
    %720 = vmatprep.subr.mxu0 0.0
    %721 = vmatpush1.xpose.msra.mxu0 0.0
    %722 = vmatprep.subr.mxu0 0.0
    %723 = vmatpush1.xpose.msra.mxu0 0.0
    %724 = vmatprep.subr.mxu0 0.0
    %725 = vmatpush1.xpose.msra.mxu0 0.0
    %726 = vmatprep.subr.mxu0 0.0
    %727 = vmatpush1.xpose.msra.mxu0 0.0
    %728 = vmatprep.subr.mxu0 0.0
    %729 = vmatpush1.xpose.msra.mxu0 0.0
    %730 = vmatprep.subr.mxu0 0.0
    %731 = vmatpush1.xpose.msra.mxu0 0.0
    %732 = vmatprep.subr.mxu0 0.0
    %733 = vmatpush1.xpose.msra.mxu0 0.0
    %734 = vmatprep.subr.mxu0 0.0
    %735 = vmatpush1.xpose.msra.mxu0 0.0
    %736 = vmatprep.mubr.f32.mxu0 0.0
    %737 = vmatmul.mubr.f32.gmra.mrb[0].mxu0 %v668
    %v738 = vpop.f32.mrb[0].mxu0
    %v739 = vadd.f32 0.0, %v738
    %v740 = vpop.f32.mrb[0].mxu0
    %741 = vdwg.mxu0
    %v742 = vmul.f32 %v661, 0.25
    %v743 = vmul.f32 %v739, 0.25
    %v744 = vadd.f32 %v742, %v398
    %v745 = vadd.f32 %v743, %v402
    %v746 = vsel %vm407, %v744, -inf
    %747 = vmax.xlane.f32.xlu0 %v746
    %v748 = vpop.xlane.xlu0 %747
    %v749 = vsel %vm407, %v745, -inf
    %750 = vmax.xlane.f32.xlu0 %v749
    %v751 = vpop.xlane.xlu0 %750
    %v752 = vsub.f32 %v744, %v748
    %v753 = vsub.f32 %v745, %v751
    %v754 = vmul.f32 %v752, 1.442695
    %v755 = vpow.pop %v754
    %v756 = vmul.f32 %v753, 1.442695
    %v757 = vpow.pop %v756
    %v758 = vsel %vm407, %v755, 0.0
    %759 = vadd.xlane.f32.xlu0 %v758
    %v760 = vpop.xlane.xlu0 %759
    %v761 = vsel %vm407, %v757, 0.0
    %762 = vadd.xlane.f32.xlu0 %v761
    %v763 = vpop.xlane.xlu0 %762
    %v764 = vrcp.pop %v760
    %v765 = vrcp.pop %v763
    %v766 = vmul.f32 %v755, %v764
    %v767 = vmul.f32 %v757, %v765
    %768 = vrot.lane.b32.xlu0 %v233, 48
    %v769 = vpop.permute.xlu0 %768
    %v771 = vsel %vm432, %v766, 0
    %v773 = vsel %vm436, %v769, 0
    %775 = vmatprep.subr.mxu0 0.0
    %776 = vmatpush1.msra.mxu0 %v773
    %777 = vmatprep.subr.mxu0 0.0
    %778 = vmatpush1.msra.mxu0 0.0
    %779 = vmatprep.subr.mxu0 0.0
    %780 = vmatpush1.msra.mxu0 0.0
    %781 = vmatprep.subr.mxu0 0.0
    %782 = vmatpush1.msra.mxu0 0.0
    %783 = vmatprep.subr.mxu0 0.0
    %784 = vmatpush1.msra.mxu0 0.0
    %785 = vmatprep.subr.mxu0 0.0
    %786 = vmatpush1.msra.mxu0 0.0
    %787 = vmatprep.subr.mxu0 0.0
    %788 = vmatpush1.msra.mxu0 0.0
    %789 = vmatprep.subr.mxu0 0.0
    %790 = vmatpush1.msra.mxu0 0.0
    %791 = vmatprep.subr.mxu0 0.0
    %792 = vmatpush1.msra.mxu0 0.0
    %793 = vmatprep.subr.mxu0 0.0
    %794 = vmatpush1.msra.mxu0 0.0
    %795 = vmatprep.subr.mxu0 0.0
    %796 = vmatpush1.msra.mxu0 0.0
    %797 = vmatprep.subr.mxu0 0.0
    %798 = vmatpush1.msra.mxu0 0.0
    %799 = vmatprep.subr.mxu0 0.0
    %800 = vmatpush1.msra.mxu0 0.0
    %801 = vmatprep.subr.mxu0 0.0
    %802 = vmatpush1.msra.mxu0 0.0
    %803 = vmatprep.subr.mxu0 0.0
    %804 = vmatpush1.msra.mxu0 0.0
    %805 = vmatprep.subr.mxu0 0.0
    %806 = vmatpush1.msra.mxu0 0.0
    %807 = vmatprep.subr.mxu0 0.0
    %808 = vmatpush1.msra.mxu0 0.0
    %809 = vmatprep.subr.mxu0 0.0
    %810 = vmatpush1.msra.mxu0 0.0
    %811 = vmatprep.subr.mxu0 0.0
    %812 = vmatpush1.msra.mxu0 0.0
    %813 = vmatprep.subr.mxu0 0.0
    %814 = vmatpush1.msra.mxu0 0.0
    %815 = vmatprep.subr.mxu0 0.0
    %816 = vmatpush1.msra.mxu0 0.0
    %817 = vmatprep.subr.mxu0 0.0
    %818 = vmatpush1.msra.mxu0 0.0
    %819 = vmatprep.subr.mxu0 0.0
    %820 = vmatpush1.msra.mxu0 0.0
    %821 = vmatprep.subr.mxu0 0.0
    %822 = vmatpush1.msra.mxu0 0.0
    %823 = vmatprep.subr.mxu0 0.0
    %824 = vmatpush1.msra.mxu0 0.0
    %825 = vmatprep.subr.mxu0 0.0
    %826 = vmatpush1.msra.mxu0 0.0
    %827 = vmatprep.subr.mxu0 0.0
    %828 = vmatpush1.msra.mxu0 0.0
    %829 = vmatprep.subr.mxu0 0.0
    %830 = vmatpush1.msra.mxu0 0.0
    %831 = vmatprep.subr.mxu0 0.0
    %832 = vmatpush1.msra.mxu0 0.0
    %833 = vmatprep.subr.mxu0 0.0
    %834 = vmatpush1.msra.mxu0 0.0
    %835 = vmatprep.subr.mxu0 0.0
    %836 = vmatpush1.msra.mxu0 0.0
    %837 = vmatprep.subr.mxu0 0.0
    %838 = vmatpush1.msra.mxu0 0.0
    %839 = vmatprep.mubr.f32.mxu0 0.0
    %840 = vmatmul.mubr.f32.gmra.mrb[0].mxu0 %v771
    %v841 = vpop.f32.mrb[0].mxu0
    %v842 = vadd.f32 0.0, %v841
    %v843 = vpop.f32.mrb[0].mxu0
    %844 = vdwg.mxu0
    %845 = vrot.lane.b32.xlu0 %v237, 48
    %v846 = vpop.permute.xlu0 %845
    %v848 = vsel %vm432, %v767, 0
    %v850 = vsel %vm436, %v846, 0
    %852 = vmatprep.subr.mxu0 0.0
    %853 = vmatpush1.msra.mxu0 %v850
    %854 = vmatprep.subr.mxu0 0.0
    %855 = vmatpush1.msra.mxu0 0.0
    %856 = vmatprep.subr.mxu0 0.0
    %857 = vmatpush1.msra.mxu0 0.0
    %858 = vmatprep.subr.mxu0 0.0
    %859 = vmatpush1.msra.mxu0 0.0
    %860 = vmatprep.subr.mxu0 0.0
    %861 = vmatpush1.msra.mxu0 0.0
    %862 = vmatprep.subr.mxu0 0.0
    %863 = vmatpush1.msra.mxu0 0.0
    %864 = vmatprep.subr.mxu0 0.0
    %865 = vmatpush1.msra.mxu0 0.0
    %866 = vmatprep.subr.mxu0 0.0
    %867 = vmatpush1.msra.mxu0 0.0
    %868 = vmatprep.subr.mxu0 0.0
    %869 = vmatpush1.msra.mxu0 0.0
    %870 = vmatprep.subr.mxu0 0.0
    %871 = vmatpush1.msra.mxu0 0.0
    %872 = vmatprep.subr.mxu0 0.0
    %873 = vmatpush1.msra.mxu0 0.0
    %874 = vmatprep.subr.mxu0 0.0
    %875 = vmatpush1.msra.mxu0 0.0
    %876 = vmatprep.subr.mxu0 0.0
    %877 = vmatpush1.msra.mxu0 0.0
    %878 = vmatprep.subr.mxu0 0.0
    %879 = vmatpush1.msra.mxu0 0.0
    %880 = vmatprep.subr.mxu0 0.0
    %881 = vmatpush1.msra.mxu0 0.0
    %882 = vmatprep.subr.mxu0 0.0
    %883 = vmatpush1.msra.mxu0 0.0
    %884 = vmatprep.subr.mxu0 0.0
    %885 = vmatpush1.msra.mxu0 0.0
    %886 = vmatprep.subr.mxu0 0.0
    %887 = vmatpush1.msra.mxu0 0.0
    %888 = vmatprep.subr.mxu0 0.0
    %889 = vmatpush1.msra.mxu0 0.0
    %890 = vmatprep.subr.mxu0 0.0
    %891 = vmatpush1.msra.mxu0 0.0
    %892 = vmatprep.subr.mxu0 0.0
    %893 = vmatpush1.msra.mxu0 0.0
    %894 = vmatprep.subr.mxu0 0.0
    %895 = vmatpush1.msra.mxu0 0.0
    %896 = vmatprep.subr.mxu0 0.0
    %897 = vmatpush1.msra.mxu0 0.0
    %898 = vmatprep.subr.mxu0 0.0
    %899 = vmatpush1.msra.mxu0 0.0
    %900 = vmatprep.subr.mxu0 0.0
    %901 = vmatpush1.msra.mxu0 0.0
    %902 = vmatprep.subr.mxu0 0.0
    %903 = vmatpush1.msra.mxu0 0.0
    %904 = vmatprep.subr.mxu0 0.0
    %905 = vmatpush1.msra.mxu0 0.0
    %906 = vmatprep.subr.mxu0 0.0
    %907 = vmatpush1.msra.mxu0 0.0
    %908 = vmatprep.subr.mxu0 0.0
    %909 = vmatpush1.msra.mxu0 0.0
    %910 = vmatprep.subr.mxu0 0.0
    %911 = vmatpush1.msra.mxu0 0.0
    %912 = vmatprep.subr.mxu0 0.0
    %913 = vmatpush1.msra.mxu0 0.0
    %914 = vmatprep.subr.mxu0 0.0
    %915 = vmatpush1.msra.mxu0 0.0
    %916 = vmatprep.mubr.f32.mxu0 0.0
    %917 = vmatmul.mubr.f32.gmra.mrb[0].mxu0 %v848
    %v918 = vpop.f32.mrb[0].mxu0
    %v919 = vadd.f32 0.0, %v918
    %v920 = vpop.f32.mrb[0].mxu0
    %921 = vdwg.mxu0
    %924 = vrot.lane.b32.xlu0 %v842, 16
    %v925 = vpop.permute.xlu0 %924
    %926 = vrot.lane.b32.xlu0 %v919, 16
    %v927 = vpop.permute.xlu0 %926
    %v930 = vsel %vm240, %v506, %v925
    %v931 = vsel %vm240, %v583, %v927
    %v933 = vlaneseq
    %v934 = vshrl.u32 %v933, 7
    %v935 = vsub.s32 0, %v934
    %v936 = vrot.slane %v79, %v935
    %v940 = vcombine.low %v930, %v931
    %v941 = vsel %vm163, %v940, 0
    %943 = vmatprep.subr.mxu0 0.0
    %944 = vmatpush1.msra.mxu0 %v75
    %945 = vmatprep.subr.mxu0 0.0
    %946 = vmatpush1.msra.mxu0 %v76
    %947 = vmatprep.subr.mxu0 0.0
    %948 = vmatpush1.msra.mxu0 %v77
    %949 = vmatprep.subr.mxu0 0.0
    %950 = vmatpush1.msra.mxu0 %v78
    %951 = vmatprep.subr.mxu0 0.0
    %952 = vmatpush1.msra.mxu0 0.0
    %953 = vmatprep.subr.mxu0 0.0
    %954 = vmatpush1.msra.mxu0 0.0
    %955 = vmatprep.subr.mxu0 0.0
    %956 = vmatpush1.msra.mxu0 0.0
    %957 = vmatprep.subr.mxu0 0.0
    %958 = vmatpush1.msra.mxu0 0.0
    %959 = vmatprep.subr.mxu0 0.0
    %960 = vmatpush1.msra.mxu0 0.0
    %961 = vmatprep.subr.mxu0 0.0
    %962 = vmatpush1.msra.mxu0 0.0
    %963 = vmatprep.subr.mxu0 0.0
    %964 = vmatpush1.msra.mxu0 0.0
    %965 = vmatprep.subr.mxu0 0.0
    %966 = vmatpush1.msra.mxu0 0.0
    %967 = vmatprep.subr.mxu0 0.0
    %968 = vmatpush1.msra.mxu0 0.0
    %969 = vmatprep.subr.mxu0 0.0
    %970 = vmatpush1.msra.mxu0 0.0
    %971 = vmatprep.subr.mxu0 0.0
    %972 = vmatpush1.msra.mxu0 0.0
    %973 = vmatprep.subr.mxu0 0.0
    %974 = vmatpush1.msra.mxu0 0.0
    %975 = vmatprep.subr.mxu0 0.0
    %976 = vmatpush1.msra.mxu0 0.0
    %977 = vmatprep.subr.mxu0 0.0
    %978 = vmatpush1.msra.mxu0 0.0
    %979 = vmatprep.subr.mxu0 0.0
    %980 = vmatpush1.msra.mxu0 0.0
    %981 = vmatprep.subr.mxu0 0.0
    %982 = vmatpush1.msra.mxu0 0.0
    %983 = vmatprep.subr.mxu0 0.0
    %984 = vmatpush1.msra.mxu0 0.0
    %985 = vmatprep.subr.mxu0 0.0
    %986 = vmatpush1.msra.mxu0 0.0
    %987 = vmatprep.subr.mxu0 0.0
    %988 = vmatpush1.msra.mxu0 0.0
    %989 = vmatprep.subr.mxu0 0.0
    %990 = vmatpush1.msra.mxu0 0.0
    %991 = vmatprep.subr.mxu0 0.0
    %992 = vmatpush1.msra.mxu0 0.0
    %993 = vmatprep.subr.mxu0 0.0
    %994 = vmatpush1.msra.mxu0 0.0
    %995 = vmatprep.subr.mxu0 0.0
    %996 = vmatpush1.msra.mxu0 0.0
    %997 = vmatprep.subr.mxu0 0.0
    %998 = vmatpush1.msra.mxu0 0.0
    %999 = vmatprep.subr.mxu0 0.0
    %1000 = vmatpush1.msra.mxu0 0.0
    %1001 = vmatprep.subr.mxu0 0.0
    %1002 = vmatpush1.msra.mxu0 0.0
    %1003 = vmatprep.subr.mxu0 0.0
    %1004 = vmatpush1.msra.mxu0 0.0
    %1005 = vmatprep.subr.mxu0 0.0
    %1006 = vmatpush1.msra.mxu0 0.0
    %1007 = vmatprep.mubr.f32.mxu0 0.0
    %1008 = vmatmul.mubr.f32.gmra.mrb[0].mxu0 %v941
    %v1009 = vpop.f32.mrb[0].mxu0
    %v1010 = vadd.f32 %v936, %v1009
    %v1011 = vpop.f32.mrb[0].mxu0
    %1012 = vdwg.mxu0
    %v1014 = vcombine.high %v1010, %v1010
    %v1016 = vadd.f32 %v60, %v1010
    %v1017 = vadd.f32 %v61, %v1014
    %v1018 = vsel %vm96, %v1016, 0.0
    %1019 = vadd.xlane.f32.xlu0 %v1018
    %v1020 = vpop.xlane.xlu0 %1019
    %v1021 = vsel %vm96, %v1017, 0.0
    %1022 = vadd.xlane.f32.xlu0 %v1021
    %v1023 = vpop.xlane.xlu0 %1022
    %v1024 = vmul.f32 %v1020, %v103
    %v1025 = vmul.f32 %v1023, %v103
    %v1026 = vsub.f32 %v1016, %v1024
    %v1027 = vsub.f32 %v1017, %v1025
    %v1028 = vmul.f32 %v1026, %v1026
    %v1029 = vmul.f32 %v1027, %v1027
    %v1030 = vsel %vm96, %v1028, 0.0
    %1031 = vadd.xlane.f32.xlu0 %v1030
    %v1032 = vpop.xlane.xlu0 %1031
    %v1033 = vsel %vm96, %v1029, 0.0
    %1034 = vadd.xlane.f32.xlu0 %v1033
    %v1035 = vpop.xlane.xlu0 %1034
    %v1036 = vmul.f32 %v1032, 0.032258064
    %v1037 = vmul.f32 %v1035, 0.032258064
    %v1038 = vrsqrt.pop %v1036
    %v1039 = vmul.f32 %v1036, %v1038
    %vm1040 = vcmp.eq.f32.partialorder %v1036, inf
    %v1041 = vsel %vm1040, %v1036, %v1039
    %vm1042 = vcmp.eq.f32.partialorder %v1036, 0.0
    %v1043 = vand.u32 %v1036, 2147483648
    %v1044 = vsel %vm1042, %v1043, %v1041
    %v1045 = vrsqrt.pop %v1037
    %v1046 = vmul.f32 %v1037, %v1045
    %vm1047 = vcmp.eq.f32.partialorder %v1037, inf
    %v1048 = vsel %vm1047, %v1037, %v1046
    %vm1049 = vcmp.eq.f32.partialorder %v1037, 0.0
    %v1050 = vand.u32 %v1037, 2147483648
    %v1051 = vsel %vm1049, %v1050, %v1048
    %v1052 = vadd.f32 %v1044, 1e-06
    %v1053 = vadd.f32 %v1051, 1e-06
    %v1054 = vrcp.pop %v1052
    %v1055 = vrcp.pop %v1053
    %v1057 = vlaneseq
    %v1058 = vshrl.u32 %v1057, 7
    %v1059 = vsub.s32 0, %v1058
    %v1060 = vrot.slane %v80, %v1059
    %v1062 = vmul.f32 %v1060, %v1026
    %v1063 = vmul.f32 %v1060, %v1027
    %v1064 = vmul.f32 %v1062, %v1054
    %v1065 = vmul.f32 %v1063, %v1055
    %v1067 = vlaneseq
    %v1068 = vshrl.u32 %v1067, 7
    %v1069 = vsub.s32 0, %v1068
    %v1070 = vrot.slane %v81, %v1069
    %v1072 = vadd.f32 %v1064, %v1070
    %v1073 = vadd.f32 %v1065, %v1070
    %v1075 = vlaneseq
    %v1076 = vshrl.u32 %v1075, 7
    %v1077 = vsub.s32 0, %v1076
    %v1078 = vrot.slane %v86, %v1077
    %v1082 = vcombine.low %v1072, %v1073
    %v1083 = vsel %vm163, %v1082, 0
    %1085 = vmatprep.subr.mxu0 0.0
    %1086 = vmatpush1.msra.mxu0 %v82
    %1087 = vmatprep.subr.mxu0 0.0
    %1088 = vmatpush1.msra.mxu0 %v83
    %1089 = vmatprep.subr.mxu0 0.0
    %1090 = vmatpush1.msra.mxu0 %v84
    %1091 = vmatprep.subr.mxu0 0.0
    %1092 = vmatpush1.msra.mxu0 %v85
    %1093 = vmatprep.subr.mxu0 0.0
    %1094 = vmatpush1.msra.mxu0 0.0
    %1095 = vmatprep.subr.mxu0 0.0
    %1096 = vmatpush1.msra.mxu0 0.0
    %1097 = vmatprep.subr.mxu0 0.0
    %1098 = vmatpush1.msra.mxu0 0.0
    %1099 = vmatprep.subr.mxu0 0.0
    %1100 = vmatpush1.msra.mxu0 0.0
    %1101 = vmatprep.subr.mxu0 0.0
    %1102 = vmatpush1.msra.mxu0 0.0
    %1103 = vmatprep.subr.mxu0 0.0
    %1104 = vmatpush1.msra.mxu0 0.0
    %1105 = vmatprep.subr.mxu0 0.0
    %1106 = vmatpush1.msra.mxu0 0.0
    %1107 = vmatprep.subr.mxu0 0.0
    %1108 = vmatpush1.msra.mxu0 0.0
    %1109 = vmatprep.subr.mxu0 0.0
    %1110 = vmatpush1.msra.mxu0 0.0
    %1111 = vmatprep.subr.mxu0 0.0
    %1112 = vmatpush1.msra.mxu0 0.0
    %1113 = vmatprep.subr.mxu0 0.0
    %1114 = vmatpush1.msra.mxu0 0.0
    %1115 = vmatprep.subr.mxu0 0.0
    %1116 = vmatpush1.msra.mxu0 0.0
    %1117 = vmatprep.subr.mxu0 0.0
    %1118 = vmatpush1.msra.mxu0 0.0
    %1119 = vmatprep.subr.mxu0 0.0
    %1120 = vmatpush1.msra.mxu0 0.0
    %1121 = vmatprep.subr.mxu0 0.0
    %1122 = vmatpush1.msra.mxu0 0.0
    %1123 = vmatprep.subr.mxu0 0.0
    %1124 = vmatpush1.msra.mxu0 0.0
    %1125 = vmatprep.subr.mxu0 0.0
    %1126 = vmatpush1.msra.mxu0 0.0
    %1127 = vmatprep.subr.mxu0 0.0
    %1128 = vmatpush1.msra.mxu0 0.0
    %1129 = vmatprep.subr.mxu0 0.0
    %1130 = vmatpush1.msra.mxu0 0.0
    %1131 = vmatprep.subr.mxu0 0.0
    %1132 = vmatpush1.msra.mxu0 0.0
    %1133 = vmatprep.subr.mxu0 0.0
    %1134 = vmatpush1.msra.mxu0 0.0
    %1135 = vmatprep.subr.mxu0 0.0
    %1136 = vmatpush1.msra.mxu0 0.0
    %1137 = vmatprep.subr.mxu0 0.0
    %1138 = vmatpush1.msra.mxu0 0.0
    %1139 = vmatprep.subr.mxu0 0.0
    %1140 = vmatpush1.msra.mxu0 0.0
    %1141 = vmatprep.subr.mxu0 0.0
    %1142 = vmatpush1.msra.mxu0 0.0
    %1143 = vmatprep.subr.mxu0 0.0
    %1144 = vmatpush1.msra.mxu0 0.0
    %1145 = vmatprep.subr.mxu0 0.0
    %1146 = vmatpush1.msra.mxu0 0.0
    %1147 = vmatprep.subr.mxu0 0.0
    %1148 = vmatpush1.msra.mxu0 0.0
    %1149 = vmatprep.mubr.f32.mxu0 0.0
    %1150 = vmatmul.mubr.f32.gmra.mrb[0].mxu0 %v1083
    %v1151 = vpop.f32.mrb[0].mxu0
    %v1152 = vadd.f32 %v1078, %v1151
    %v1153 = vpop.f32.mrb[0].mxu0
    %1154 = vdwg.mxu0
    %v1155 = vmax.f32 %v1152, 0.0
    %v1157 = vlaneseq
    %v1158 = vshrl.u32 %v1157, 7
    %v1159 = vsub.s32 0, %v1158
    %v1160 = vrot.slane %v95, %v1159
    %vm1162 = vcmask 523264
    %v1164 = vsel %vm1162, %v1155, 0
    %1166 = vmatprep.subr.mxu0 0.0
    %1167 = vmatpush1.msra.mxu0 %v87
    %1168 = vmatprep.subr.mxu0 0.0
    %1169 = vmatpush1.msra.mxu0 %v88
    %1170 = vmatprep.subr.mxu0 0.0
    %1171 = vmatpush1.msra.mxu0 %v89
    %1172 = vmatprep.subr.mxu0 0.0
    %1173 = vmatpush1.msra.mxu0 %v90
    %1174 = vmatprep.subr.mxu0 0.0
    %1175 = vmatpush1.msra.mxu0 %v91
    %1176 = vmatprep.subr.mxu0 0.0
    %1177 = vmatpush1.msra.mxu0 %v92
    %1178 = vmatprep.subr.mxu0 0.0
    %1179 = vmatpush1.msra.mxu0 %v93
    %1180 = vmatprep.subr.mxu0 0.0
    %1181 = vmatpush1.msra.mxu0 %v94
    %1182 = vmatprep.subr.mxu0 0.0
    %1183 = vmatpush1.msra.mxu0 0.0
    %1184 = vmatprep.subr.mxu0 0.0
    %1185 = vmatpush1.msra.mxu0 0.0
    %1186 = vmatprep.subr.mxu0 0.0
    %1187 = vmatpush1.msra.mxu0 0.0
    %1188 = vmatprep.subr.mxu0 0.0
    %1189 = vmatpush1.msra.mxu0 0.0
    %1190 = vmatprep.subr.mxu0 0.0
    %1191 = vmatpush1.msra.mxu0 0.0
    %1192 = vmatprep.subr.mxu0 0.0
    %1193 = vmatpush1.msra.mxu0 0.0
    %1194 = vmatprep.subr.mxu0 0.0
    %1195 = vmatpush1.msra.mxu0 0.0
    %1196 = vmatprep.subr.mxu0 0.0
    %1197 = vmatpush1.msra.mxu0 0.0
    %1198 = vmatprep.subr.mxu0 0.0
    %1199 = vmatpush1.msra.mxu0 0.0
    %1200 = vmatprep.subr.mxu0 0.0
    %1201 = vmatpush1.msra.mxu0 0.0
    %1202 = vmatprep.subr.mxu0 0.0
    %1203 = vmatpush1.msra.mxu0 0.0
    %1204 = vmatprep.subr.mxu0 0.0
    %1205 = vmatpush1.msra.mxu0 0.0
    %1206 = vmatprep.subr.mxu0 0.0
    %1207 = vmatpush1.msra.mxu0 0.0
    %1208 = vmatprep.subr.mxu0 0.0
    %1209 = vmatpush1.msra.mxu0 0.0
    %1210 = vmatprep.subr.mxu0 0.0
    %1211 = vmatpush1.msra.mxu0 0.0
    %1212 = vmatprep.subr.mxu0 0.0
    %1213 = vmatpush1.msra.mxu0 0.0
    %1214 = vmatprep.subr.mxu0 0.0
    %1215 = vmatpush1.msra.mxu0 0.0
    %1216 = vmatprep.subr.mxu0 0.0
    %1217 = vmatpush1.msra.mxu0 0.0
    %1218 = vmatprep.subr.mxu0 0.0
    %1219 = vmatpush1.msra.mxu0 0.0
    %1220 = vmatprep.subr.mxu0 0.0
    %1221 = vmatpush1.msra.mxu0 0.0
    %1222 = vmatprep.subr.mxu0 0.0
    %1223 = vmatpush1.msra.mxu0 0.0
    %1224 = vmatprep.subr.mxu0 0.0
    %1225 = vmatpush1.msra.mxu0 0.0
    %1226 = vmatprep.subr.mxu0 0.0
    %1227 = vmatpush1.msra.mxu0 0.0
    %1228 = vmatprep.subr.mxu0 0.0
    %1229 = vmatpush1.msra.mxu0 0.0
    %1230 = vmatprep.mubr.f32.mxu0 0.0
    %1231 = vmatmul.mubr.f32.gmra.mrb[0].mxu0 %v1164
    %v1232 = vpop.f32.mrb[0].mxu0
    %v1233 = vadd.f32 %v1160, %v1232
    %v1234 = vpop.f32.mrb[0].mxu0
    %1235 = vdwg.mxu0
    %v1237 = vcombine.high %v1233, %v1233
    %v1239 = vadd.f32 %v1016, %v1233
    %v1240 = vadd.f32 %v1017, %v1237
    %s1241 = scalar_lea.vmem %s2, 1
    %v1242 = vld [vmem:[%s1241] sm:$0x1]
    %s1243 = scalar_lea.vmem %s3, 1
    %v1244 = vld [vmem:[%s1243] sm:$0x1]
    %s1245 = scalar_lea.vmem %s4, 32
    %v1246 = vld [vmem:[%s1245] sm:$0xff]
    %v1247 = vld [vmem:[%s1245 + $0x8] sm:$0xff]
    %v1248 = vld [vmem:[%s1245 + $0x10] sm:$0xff]
    %v1249 = vld [vmem:[%s1245 + $0x18] sm:$0xff]
    %s1250 = scalar_lea.vmem %s5, 1
    %v1251 = vld [vmem:[%s1250] sm:$0x1]
    %s1252 = scalar_lea.vmem %s6, 32
    %v1253 = vld [vmem:[%s1252] sm:$0xff]
    %v1254 = vld [vmem:[%s1252 + $0x8] sm:$0xff]
    %v1255 = vld [vmem:[%s1252 + $0x10] sm:$0xff]
    %v1256 = vld [vmem:[%s1252 + $0x18] sm:$0xff]
    %s1257 = scalar_lea.vmem %s7, 1
    %v1258 = vld [vmem:[%s1257] sm:$0x1]
    %s1259 = scalar_lea.vmem %s8, 1
    %v1260 = vld [vmem:[%s1259] sm:$0x1]
    %s1261 = scalar_lea.vmem %s9, 1
    %v1262 = vld [vmem:[%s1261] sm:$0x1]
    %s1263 = scalar_lea.vmem %s10, 32
    %v1264 = vld [vmem:[%s1263] sm:$0xff]
    %v1265 = vld [vmem:[%s1263 + $0x8] sm:$0xff]
    %v1266 = vld [vmem:[%s1263 + $0x10] sm:$0xff]
    %v1267 = vld [vmem:[%s1263 + $0x18] sm:$0xff]
    %s1268 = scalar_lea.vmem %s11, 1
    %v1269 = vld [vmem:[%s1268] sm:$0x1]
    %s1270 = scalar_lea.vmem %s12, 64
    %v1271 = vld [vmem:[%s1270] sm:$0xff]
    %v1272 = vld [vmem:[%s1270 + $0x8] sm:$0xff]
    %v1273 = vld [vmem:[%s1270 + $0x10] sm:$0xff]
    %v1274 = vld [vmem:[%s1270 + $0x18] sm:$0xff]
    %v1275 = vld [vmem:[%s1270 + $0x20] sm:$0xff]
    %v1276 = vld [vmem:[%s1270 + $0x28] sm:$0xff]
    %v1277 = vld [vmem:[%s1270 + $0x30] sm:$0xff]
    %v1278 = vld [vmem:[%s1270 + $0x38] sm:$0xff]
    %s1279 = scalar_lea.vmem %s13, 1
    %v1280 = vld [vmem:[%s1279] sm:$0x1]
    %v1281 = vsel %vm96, %v1239, 0.0
    %1282 = vadd.xlane.f32.xlu0 %v1281
    %v1283 = vpop.xlane.xlu0 %1282
    %v1284 = vsel %vm96, %v1240, 0.0
    %1285 = vadd.xlane.f32.xlu0 %v1284
    %v1286 = vpop.xlane.xlu0 %1285
    %v1287 = vmul.f32 %v1283, %v103
    %v1288 = vmul.f32 %v1286, %v103
    %v1289 = vsub.f32 %v1239, %v1287
    %v1290 = vsub.f32 %v1240, %v1288
    %v1291 = vmul.f32 %v1289, %v1289
    %v1292 = vmul.f32 %v1290, %v1290
    %v1293 = vsel %vm96, %v1291, 0.0
    %1294 = vadd.xlane.f32.xlu0 %v1293
    %v1295 = vpop.xlane.xlu0 %1294
    %v1296 = vsel %vm96, %v1292, 0.0
    %1297 = vadd.xlane.f32.xlu0 %v1296
    %v1298 = vpop.xlane.xlu0 %1297
    %v1299 = vmul.f32 %v1295, 0.032258064
    %v1300 = vmul.f32 %v1298, 0.032258064
    %v1301 = vrsqrt.pop %v1299
    %v1302 = vmul.f32 %v1299, %v1301
    %vm1303 = vcmp.eq.f32.partialorder %v1299, inf
    %v1304 = vsel %vm1303, %v1299, %v1302
    %vm1305 = vcmp.eq.f32.partialorder %v1299, 0.0
    %v1306 = vand.u32 %v1299, 2147483648
    %v1307 = vsel %vm1305, %v1306, %v1304
    %v1308 = vrsqrt.pop %v1300
    %v1309 = vmul.f32 %v1300, %v1308
    %vm1310 = vcmp.eq.f32.partialorder %v1300, inf
    %v1311 = vsel %vm1310, %v1300, %v1309
    %vm1312 = vcmp.eq.f32.partialorder %v1300, 0.0
    %v1313 = vand.u32 %v1300, 2147483648
    %v1314 = vsel %vm1312, %v1313, %v1311
    %v1315 = vadd.f32 %v1307, 1e-06
    %v1316 = vadd.f32 %v1314, 1e-06
    %v1317 = vrcp.pop %v1315
    %v1318 = vrcp.pop %v1316
    %v1320 = vlaneseq
    %v1321 = vshrl.u32 %v1320, 7
    %v1322 = vsub.s32 0, %v1321
    %v1323 = vrot.slane %v1242, %v1322
    %v1325 = vmul.f32 %v1323, %v1289
    %v1326 = vmul.f32 %v1323, %v1290
    %v1327 = vmul.f32 %v1325, %v1317
    %v1328 = vmul.f32 %v1326, %v1318
    %v1330 = vlaneseq
    %v1331 = vshrl.u32 %v1330, 7
    %v1332 = vsub.s32 0, %v1331
    %v1333 = vrot.slane %v1244, %v1332
    %v1335 = vadd.f32 %v1327, %v1333
    %v1336 = vadd.f32 %v1328, %v1333
    %v1338 = vlaneseq
    %v1339 = vshrl.u32 %v1338, 7
    %v1340 = vsub.s32 0, %v1339
    %v1341 = vrot.slane %v1251, %v1340
    %v1345 = vcombine.low %v1335, %v1336
    %v1346 = vsel %vm163, %v1345, 0
    %1348 = vmatprep.subr.mxu0 0.0
    %1349 = vmatpush1.msra.mxu0 %v1246
    %1350 = vmatprep.subr.mxu0 0.0
    %1351 = vmatpush1.msra.mxu0 %v1247
    %1352 = vmatprep.subr.mxu0 0.0
    %1353 = vmatpush1.msra.mxu0 %v1248
    %1354 = vmatprep.subr.mxu0 0.0
    %1355 = vmatpush1.msra.mxu0 %v1249
    %1356 = vmatprep.subr.mxu0 0.0
    %1357 = vmatpush1.msra.mxu0 0.0
    %1358 = vmatprep.subr.mxu0 0.0
    %1359 = vmatpush1.msra.mxu0 0.0
    %1360 = vmatprep.subr.mxu0 0.0
    %1361 = vmatpush1.msra.mxu0 0.0
    %1362 = vmatprep.subr.mxu0 0.0
    %1363 = vmatpush1.msra.mxu0 0.0
    %1364 = vmatprep.subr.mxu0 0.0
    %1365 = vmatpush1.msra.mxu0 0.0
    %1366 = vmatprep.subr.mxu0 0.0
    %1367 = vmatpush1.msra.mxu0 0.0
    %1368 = vmatprep.subr.mxu0 0.0
    %1369 = vmatpush1.msra.mxu0 0.0
    %1370 = vmatprep.subr.mxu0 0.0
    %1371 = vmatpush1.msra.mxu0 0.0
    %1372 = vmatprep.subr.mxu0 0.0
    %1373 = vmatpush1.msra.mxu0 0.0
    %1374 = vmatprep.subr.mxu0 0.0
    %1375 = vmatpush1.msra.mxu0 0.0
    %1376 = vmatprep.subr.mxu0 0.0
    %1377 = vmatpush1.msra.mxu0 0.0
    %1378 = vmatprep.subr.mxu0 0.0
    %1379 = vmatpush1.msra.mxu0 0.0
    %1380 = vmatprep.subr.mxu0 0.0
    %1381 = vmatpush1.msra.mxu0 0.0
    %1382 = vmatprep.subr.mxu0 0.0
    %1383 = vmatpush1.msra.mxu0 0.0
    %1384 = vmatprep.subr.mxu0 0.0
    %1385 = vmatpush1.msra.mxu0 0.0
    %1386 = vmatprep.subr.mxu0 0.0
    %1387 = vmatpush1.msra.mxu0 0.0
    %1388 = vmatprep.subr.mxu0 0.0
    %1389 = vmatpush1.msra.mxu0 0.0
    %1390 = vmatprep.subr.mxu0 0.0
    %1391 = vmatpush1.msra.mxu0 0.0
    %1392 = vmatprep.subr.mxu0 0.0
    %1393 = vmatpush1.msra.mxu0 0.0
    %1394 = vmatprep.subr.mxu0 0.0
    %1395 = vmatpush1.msra.mxu0 0.0
    %1396 = vmatprep.subr.mxu0 0.0
    %1397 = vmatpush1.msra.mxu0 0.0
    %1398 = vmatprep.subr.mxu0 0.0
    %1399 = vmatpush1.msra.mxu0 0.0
    %1400 = vmatprep.subr.mxu0 0.0
    %1401 = vmatpush1.msra.mxu0 0.0
    %1402 = vmatprep.subr.mxu0 0.0
    %1403 = vmatpush1.msra.mxu0 0.0
    %1404 = vmatprep.subr.mxu0 0.0
    %1405 = vmatpush1.msra.mxu0 0.0
    %1406 = vmatprep.subr.mxu0 0.0
    %1407 = vmatpush1.msra.mxu0 0.0
    %1408 = vmatprep.subr.mxu0 0.0
    %1409 = vmatpush1.msra.mxu0 0.0
    %1410 = vmatprep.subr.mxu0 0.0
    %1411 = vmatpush1.msra.mxu0 0.0
    %1412 = vmatprep.mubr.f32.mxu0 0.0
    %1413 = vmatmul.mubr.f32.gmra.mrb[0].mxu0 %v1346
    %v1414 = vpop.f32.mrb[0].mxu0
    %v1415 = vadd.f32 %v1341, %v1414
    %v1416 = vpop.f32.mrb[0].mxu0
    %1417 = vdwg.mxu0
    %v1419 = vcombine.high %v1415, %v1415
    %1420 = vrot.lane.b32.xlu0 %v1415, 96
    %v1421 = vpop.permute.xlu0 %1420
    %v1422 = vsel %vm240, %v1415, 0
    %v1424 = vsel %vm240, %v1421, 0
    %1426 = vmatprep.subr.mxu0 0.0
    %1427 = vmatpush1.xpose.msra.mxu0 %v1424
    %1428 = vmatprep.subr.mxu0 0.0
    %1429 = vmatpush1.xpose.msra.mxu0 0.0
    %1430 = vmatprep.subr.mxu0 0.0
    %1431 = vmatpush1.xpose.msra.mxu0 0.0
    %1432 = vmatprep.subr.mxu0 0.0
    %1433 = vmatpush1.xpose.msra.mxu0 0.0
    %1434 = vmatprep.subr.mxu0 0.0
    %1435 = vmatpush1.xpose.msra.mxu0 0.0
    %1436 = vmatprep.subr.mxu0 0.0
    %1437 = vmatpush1.xpose.msra.mxu0 0.0
    %1438 = vmatprep.subr.mxu0 0.0
    %1439 = vmatpush1.xpose.msra.mxu0 0.0
    %1440 = vmatprep.subr.mxu0 0.0
    %1441 = vmatpush1.xpose.msra.mxu0 0.0
    %1442 = vmatprep.subr.mxu0 0.0
    %1443 = vmatpush1.xpose.msra.mxu0 0.0
    %1444 = vmatprep.subr.mxu0 0.0
    %1445 = vmatpush1.xpose.msra.mxu0 0.0
    %1446 = vmatprep.subr.mxu0 0.0
    %1447 = vmatpush1.xpose.msra.mxu0 0.0
    %1448 = vmatprep.subr.mxu0 0.0
    %1449 = vmatpush1.xpose.msra.mxu0 0.0
    %1450 = vmatprep.subr.mxu0 0.0
    %1451 = vmatpush1.xpose.msra.mxu0 0.0
    %1452 = vmatprep.subr.mxu0 0.0
    %1453 = vmatpush1.xpose.msra.mxu0 0.0
    %1454 = vmatprep.subr.mxu0 0.0
    %1455 = vmatpush1.xpose.msra.mxu0 0.0
    %1456 = vmatprep.subr.mxu0 0.0
    %1457 = vmatpush1.xpose.msra.mxu0 0.0
    %1458 = vmatprep.subr.mxu0 0.0
    %1459 = vmatpush1.xpose.msra.mxu0 0.0
    %1460 = vmatprep.subr.mxu0 0.0
    %1461 = vmatpush1.xpose.msra.mxu0 0.0
    %1462 = vmatprep.subr.mxu0 0.0
    %1463 = vmatpush1.xpose.msra.mxu0 0.0
    %1464 = vmatprep.subr.mxu0 0.0
    %1465 = vmatpush1.xpose.msra.mxu0 0.0
    %1466 = vmatprep.subr.mxu0 0.0
    %1467 = vmatpush1.xpose.msra.mxu0 0.0
    %1468 = vmatprep.subr.mxu0 0.0
    %1469 = vmatpush1.xpose.msra.mxu0 0.0
    %1470 = vmatprep.subr.mxu0 0.0
    %1471 = vmatpush1.xpose.msra.mxu0 0.0
    %1472 = vmatprep.subr.mxu0 0.0
    %1473 = vmatpush1.xpose.msra.mxu0 0.0
    %1474 = vmatprep.subr.mxu0 0.0
    %1475 = vmatpush1.xpose.msra.mxu0 0.0
    %1476 = vmatprep.subr.mxu0 0.0
    %1477 = vmatpush1.xpose.msra.mxu0 0.0
    %1478 = vmatprep.subr.mxu0 0.0
    %1479 = vmatpush1.xpose.msra.mxu0 0.0
    %1480 = vmatprep.subr.mxu0 0.0
    %1481 = vmatpush1.xpose.msra.mxu0 0.0
    %1482 = vmatprep.subr.mxu0 0.0
    %1483 = vmatpush1.xpose.msra.mxu0 0.0
    %1484 = vmatprep.subr.mxu0 0.0
    %1485 = vmatpush1.xpose.msra.mxu0 0.0
    %1486 = vmatprep.subr.mxu0 0.0
    %1487 = vmatpush1.xpose.msra.mxu0 0.0
    %1488 = vmatprep.subr.mxu0 0.0
    %1489 = vmatpush1.xpose.msra.mxu0 0.0
    %1490 = vmatprep.mubr.f32.mxu0 0.0
    %1491 = vmatmul.mubr.f32.gmra.mrb[0].mxu0 %v1422
    %v1492 = vpop.f32.mrb[0].mxu0
    %v1493 = vadd.f32 0.0, %v1492
    %v1494 = vpop.f32.mrb[0].mxu0
    %1495 = vdwg.mxu0
    %1496 = vrot.lane.b32.xlu0 %v1419, 96
    %v1497 = vpop.permute.xlu0 %1496
    %v1498 = vsel %vm240, %v1419, 0
    %v1500 = vsel %vm240, %v1497, 0
    %1502 = vmatprep.subr.mxu0 0.0
    %1503 = vmatpush1.xpose.msra.mxu0 %v1500
    %1504 = vmatprep.subr.mxu0 0.0
    %1505 = vmatpush1.xpose.msra.mxu0 0.0
    %1506 = vmatprep.subr.mxu0 0.0
    %1507 = vmatpush1.xpose.msra.mxu0 0.0
    %1508 = vmatprep.subr.mxu0 0.0
    %1509 = vmatpush1.xpose.msra.mxu0 0.0
    %1510 = vmatprep.subr.mxu0 0.0
    %1511 = vmatpush1.xpose.msra.mxu0 0.0
    %1512 = vmatprep.subr.mxu0 0.0
    %1513 = vmatpush1.xpose.msra.mxu0 0.0
    %1514 = vmatprep.subr.mxu0 0.0
    %1515 = vmatpush1.xpose.msra.mxu0 0.0
    %1516 = vmatprep.subr.mxu0 0.0
    %1517 = vmatpush1.xpose.msra.mxu0 0.0
    %1518 = vmatprep.subr.mxu0 0.0
    %1519 = vmatpush1.xpose.msra.mxu0 0.0
    %1520 = vmatprep.subr.mxu0 0.0
    %1521 = vmatpush1.xpose.msra.mxu0 0.0
    %1522 = vmatprep.subr.mxu0 0.0
    %1523 = vmatpush1.xpose.msra.mxu0 0.0
    %1524 = vmatprep.subr.mxu0 0.0
    %1525 = vmatpush1.xpose.msra.mxu0 0.0
    %1526 = vmatprep.subr.mxu0 0.0
    %1527 = vmatpush1.xpose.msra.mxu0 0.0
    %1528 = vmatprep.subr.mxu0 0.0
    %1529 = vmatpush1.xpose.msra.mxu0 0.0
    %1530 = vmatprep.subr.mxu0 0.0
    %1531 = vmatpush1.xpose.msra.mxu0 0.0
    %1532 = vmatprep.subr.mxu0 0.0
    %1533 = vmatpush1.xpose.msra.mxu0 0.0
    %1534 = vmatprep.subr.mxu0 0.0
    %1535 = vmatpush1.xpose.msra.mxu0 0.0
    %1536 = vmatprep.subr.mxu0 0.0
    %1537 = vmatpush1.xpose.msra.mxu0 0.0
    %1538 = vmatprep.subr.mxu0 0.0
    %1539 = vmatpush1.xpose.msra.mxu0 0.0
    %1540 = vmatprep.subr.mxu0 0.0
    %1541 = vmatpush1.xpose.msra.mxu0 0.0
    %1542 = vmatprep.subr.mxu0 0.0
    %1543 = vmatpush1.xpose.msra.mxu0 0.0
    %1544 = vmatprep.subr.mxu0 0.0
    %1545 = vmatpush1.xpose.msra.mxu0 0.0
    %1546 = vmatprep.subr.mxu0 0.0
    %1547 = vmatpush1.xpose.msra.mxu0 0.0
    %1548 = vmatprep.subr.mxu0 0.0
    %1549 = vmatpush1.xpose.msra.mxu0 0.0
    %1550 = vmatprep.subr.mxu0 0.0
    %1551 = vmatpush1.xpose.msra.mxu0 0.0
    %1552 = vmatprep.subr.mxu0 0.0
    %1553 = vmatpush1.xpose.msra.mxu0 0.0
    %1554 = vmatprep.subr.mxu0 0.0
    %1555 = vmatpush1.xpose.msra.mxu0 0.0
    %1556 = vmatprep.subr.mxu0 0.0
    %1557 = vmatpush1.xpose.msra.mxu0 0.0
    %1558 = vmatprep.subr.mxu0 0.0
    %1559 = vmatpush1.xpose.msra.mxu0 0.0
    %1560 = vmatprep.subr.mxu0 0.0
    %1561 = vmatpush1.xpose.msra.mxu0 0.0
    %1562 = vmatprep.subr.mxu0 0.0
    %1563 = vmatpush1.xpose.msra.mxu0 0.0
    %1564 = vmatprep.subr.mxu0 0.0
    %1565 = vmatpush1.xpose.msra.mxu0 0.0
    %1566 = vmatprep.mubr.f32.mxu0 0.0
    %1567 = vmatmul.mubr.f32.gmra.mrb[0].mxu0 %v1498
    %v1568 = vpop.f32.mrb[0].mxu0
    %v1569 = vadd.f32 0.0, %v1568
    %v1570 = vpop.f32.mrb[0].mxu0
    %1571 = vdwg.mxu0
    %v1572 = vmul.f32 %v1493, 0.25
    %v1573 = vmul.f32 %v1569, 0.25
    %v1574 = vadd.f32 %v1572, %v398
    %v1575 = vadd.f32 %v1573, %v402
    %v1576 = vsel %vm407, %v1574, -inf
    %1577 = vmax.xlane.f32.xlu0 %v1576
    %v1578 = vpop.xlane.xlu0 %1577
    %v1579 = vsel %vm407, %v1575, -inf
    %1580 = vmax.xlane.f32.xlu0 %v1579
    %v1581 = vpop.xlane.xlu0 %1580
    %v1582 = vsub.f32 %v1574, %v1578
    %v1583 = vsub.f32 %v1575, %v1581
    %v1584 = vmul.f32 %v1582, 1.442695
    %v1585 = vpow.pop %v1584
    %v1586 = vmul.f32 %v1583, 1.442695
    %v1587 = vpow.pop %v1586
    %v1588 = vsel %vm407, %v1585, 0.0
    %1589 = vadd.xlane.f32.xlu0 %v1588
    %v1590 = vpop.xlane.xlu0 %1589
    %v1591 = vsel %vm407, %v1587, 0.0
    %1592 = vadd.xlane.f32.xlu0 %v1591
    %v1593 = vpop.xlane.xlu0 %1592
    %v1594 = vrcp.pop %v1590
    %v1595 = vrcp.pop %v1593
    %v1596 = vmul.f32 %v1585, %v1594
    %v1597 = vmul.f32 %v1587, %v1595
    %1598 = vrot.lane.b32.xlu0 %v1415, 64
    %v1599 = vpop.permute.xlu0 %1598
    %v1601 = vsel %vm432, %v1596, 0
    %v1603 = vsel %vm436, %v1599, 0
    %1605 = vmatprep.subr.mxu0 0.0
    %1606 = vmatpush1.msra.mxu0 %v1603
    %1607 = vmatprep.subr.mxu0 0.0
    %1608 = vmatpush1.msra.mxu0 0.0
    %1609 = vmatprep.subr.mxu0 0.0
    %1610 = vmatpush1.msra.mxu0 0.0
    %1611 = vmatprep.subr.mxu0 0.0
    %1612 = vmatpush1.msra.mxu0 0.0
    %1613 = vmatprep.subr.mxu0 0.0
    %1614 = vmatpush1.msra.mxu0 0.0
    %1615 = vmatprep.subr.mxu0 0.0
    %1616 = vmatpush1.msra.mxu0 0.0
    %1617 = vmatprep.subr.mxu0 0.0
    %1618 = vmatpush1.msra.mxu0 0.0
    %1619 = vmatprep.subr.mxu0 0.0
    %1620 = vmatpush1.msra.mxu0 0.0
    %1621 = vmatprep.subr.mxu0 0.0
    %1622 = vmatpush1.msra.mxu0 0.0
    %1623 = vmatprep.subr.mxu0 0.0
    %1624 = vmatpush1.msra.mxu0 0.0
    %1625 = vmatprep.subr.mxu0 0.0
    %1626 = vmatpush1.msra.mxu0 0.0
    %1627 = vmatprep.subr.mxu0 0.0
    %1628 = vmatpush1.msra.mxu0 0.0
    %1629 = vmatprep.subr.mxu0 0.0
    %1630 = vmatpush1.msra.mxu0 0.0
    %1631 = vmatprep.subr.mxu0 0.0
    %1632 = vmatpush1.msra.mxu0 0.0
    %1633 = vmatprep.subr.mxu0 0.0
    %1634 = vmatpush1.msra.mxu0 0.0
    %1635 = vmatprep.subr.mxu0 0.0
    %1636 = vmatpush1.msra.mxu0 0.0
    %1637 = vmatprep.subr.mxu0 0.0
    %1638 = vmatpush1.msra.mxu0 0.0
    %1639 = vmatprep.subr.mxu0 0.0
    %1640 = vmatpush1.msra.mxu0 0.0
    %1641 = vmatprep.subr.mxu0 0.0
    %1642 = vmatpush1.msra.mxu0 0.0
    %1643 = vmatprep.subr.mxu0 0.0
    %1644 = vmatpush1.msra.mxu0 0.0
    %1645 = vmatprep.subr.mxu0 0.0
    %1646 = vmatpush1.msra.mxu0 0.0
    %1647 = vmatprep.subr.mxu0 0.0
    %1648 = vmatpush1.msra.mxu0 0.0
    %1649 = vmatprep.subr.mxu0 0.0
    %1650 = vmatpush1.msra.mxu0 0.0
    %1651 = vmatprep.subr.mxu0 0.0
    %1652 = vmatpush1.msra.mxu0 0.0
    %1653 = vmatprep.subr.mxu0 0.0
    %1654 = vmatpush1.msra.mxu0 0.0
    %1655 = vmatprep.subr.mxu0 0.0
    %1656 = vmatpush1.msra.mxu0 0.0
    %1657 = vmatprep.subr.mxu0 0.0
    %1658 = vmatpush1.msra.mxu0 0.0
    %1659 = vmatprep.subr.mxu0 0.0
    %1660 = vmatpush1.msra.mxu0 0.0
    %1661 = vmatprep.subr.mxu0 0.0
    %1662 = vmatpush1.msra.mxu0 0.0
    %1663 = vmatprep.subr.mxu0 0.0
    %1664 = vmatpush1.msra.mxu0 0.0
    %1665 = vmatprep.subr.mxu0 0.0
    %1666 = vmatpush1.msra.mxu0 0.0
    %1667 = vmatprep.subr.mxu0 0.0
    %1668 = vmatpush1.msra.mxu0 0.0
    %1669 = vmatprep.mubr.f32.mxu0 0.0
    %1670 = vmatmul.mubr.f32.gmra.mrb[0].mxu0 %v1601
    %v1671 = vpop.f32.mrb[0].mxu0
    %v1672 = vadd.f32 0.0, %v1671
    %v1673 = vpop.f32.mrb[0].mxu0
    %1674 = vdwg.mxu0
    %1675 = vrot.lane.b32.xlu0 %v1419, 64
    %v1676 = vpop.permute.xlu0 %1675
    %v1678 = vsel %vm432, %v1597, 0
    %v1680 = vsel %vm436, %v1676, 0
    %1682 = vmatprep.subr.mxu0 0.0
    %1683 = vmatpush1.msra.mxu0 %v1680
    %1684 = vmatprep.subr.mxu0 0.0
    %1685 = vmatpush1.msra.mxu0 0.0
    %1686 = vmatprep.subr.mxu0 0.0
    %1687 = vmatpush1.msra.mxu0 0.0
    %1688 = vmatprep.subr.mxu0 0.0
    %1689 = vmatpush1.msra.mxu0 0.0
    %1690 = vmatprep.subr.mxu0 0.0
    %1691 = vmatpush1.msra.mxu0 0.0
    %1692 = vmatprep.subr.mxu0 0.0
    %1693 = vmatpush1.msra.mxu0 0.0
    %1694 = vmatprep.subr.mxu0 0.0
    %1695 = vmatpush1.msra.mxu0 0.0
    %1696 = vmatprep.subr.mxu0 0.0
    %1697 = vmatpush1.msra.mxu0 0.0
    %1698 = vmatprep.subr.mxu0 0.0
    %1699 = vmatpush1.msra.mxu0 0.0
    %1700 = vmatprep.subr.mxu0 0.0
    %1701 = vmatpush1.msra.mxu0 0.0
    %1702 = vmatprep.subr.mxu0 0.0
    %1703 = vmatpush1.msra.mxu0 0.0
    %1704 = vmatprep.subr.mxu0 0.0
    %1705 = vmatpush1.msra.mxu0 0.0
    %1706 = vmatprep.subr.mxu0 0.0
    %1707 = vmatpush1.msra.mxu0 0.0
    %1708 = vmatprep.subr.mxu0 0.0
    %1709 = vmatpush1.msra.mxu0 0.0
    %1710 = vmatprep.subr.mxu0 0.0
    %1711 = vmatpush1.msra.mxu0 0.0
    %1712 = vmatprep.subr.mxu0 0.0
    %1713 = vmatpush1.msra.mxu0 0.0
    %1714 = vmatprep.subr.mxu0 0.0
    %1715 = vmatpush1.msra.mxu0 0.0
    %1716 = vmatprep.subr.mxu0 0.0
    %1717 = vmatpush1.msra.mxu0 0.0
    %1718 = vmatprep.subr.mxu0 0.0
    %1719 = vmatpush1.msra.mxu0 0.0
    %1720 = vmatprep.subr.mxu0 0.0
    %1721 = vmatpush1.msra.mxu0 0.0
    %1722 = vmatprep.subr.mxu0 0.0
    %1723 = vmatpush1.msra.mxu0 0.0
    %1724 = vmatprep.subr.mxu0 0.0
    %1725 = vmatpush1.msra.mxu0 0.0
    %1726 = vmatprep.subr.mxu0 0.0
    %1727 = vmatpush1.msra.mxu0 0.0
    %1728 = vmatprep.subr.mxu0 0.0
    %1729 = vmatpush1.msra.mxu0 0.0
    %1730 = vmatprep.subr.mxu0 0.0
    %1731 = vmatpush1.msra.mxu0 0.0
    %1732 = vmatprep.subr.mxu0 0.0
    %1733 = vmatpush1.msra.mxu0 0.0
    %1734 = vmatprep.subr.mxu0 0.0
    %1735 = vmatpush1.msra.mxu0 0.0
    %1736 = vmatprep.subr.mxu0 0.0
    %1737 = vmatpush1.msra.mxu0 0.0
    %1738 = vmatprep.subr.mxu0 0.0
    %1739 = vmatpush1.msra.mxu0 0.0
    %1740 = vmatprep.subr.mxu0 0.0
    %1741 = vmatpush1.msra.mxu0 0.0
    %1742 = vmatprep.subr.mxu0 0.0
    %1743 = vmatpush1.msra.mxu0 0.0
    %1744 = vmatprep.subr.mxu0 0.0
    %1745 = vmatpush1.msra.mxu0 0.0
    %1746 = vmatprep.mubr.f32.mxu0 0.0
    %1747 = vmatmul.mubr.f32.gmra.mrb[0].mxu0 %v1678
    %v1748 = vpop.f32.mrb[0].mxu0
    %v1749 = vadd.f32 0.0, %v1748
    %v1750 = vpop.f32.mrb[0].mxu0
    %1751 = vdwg.mxu0
    %1752 = vrot.lane.b32.xlu0 %v1415, 112
    %v1753 = vpop.permute.xlu0 %1752
    %1754 = vrot.lane.b32.xlu0 %v1415, 80
    %v1755 = vpop.permute.xlu0 %1754
    %v1756 = vsel %vm240, %v1753, 0
    %v1758 = vsel %vm240, %v1755, 0
    %1760 = vmatprep.subr.mxu0 0.0
    %1761 = vmatpush1.xpose.msra.mxu0 %v1758
    %1762 = vmatprep.subr.mxu0 0.0
    %1763 = vmatpush1.xpose.msra.mxu0 0.0
    %1764 = vmatprep.subr.mxu0 0.0
    %1765 = vmatpush1.xpose.msra.mxu0 0.0
    %1766 = vmatprep.subr.mxu0 0.0
    %1767 = vmatpush1.xpose.msra.mxu0 0.0
    %1768 = vmatprep.subr.mxu0 0.0
    %1769 = vmatpush1.xpose.msra.mxu0 0.0
    %1770 = vmatprep.subr.mxu0 0.0
    %1771 = vmatpush1.xpose.msra.mxu0 0.0
    %1772 = vmatprep.subr.mxu0 0.0
    %1773 = vmatpush1.xpose.msra.mxu0 0.0
    %1774 = vmatprep.subr.mxu0 0.0
    %1775 = vmatpush1.xpose.msra.mxu0 0.0
    %1776 = vmatprep.subr.mxu0 0.0
    %1777 = vmatpush1.xpose.msra.mxu0 0.0
    %1778 = vmatprep.subr.mxu0 0.0
    %1779 = vmatpush1.xpose.msra.mxu0 0.0
    %1780 = vmatprep.subr.mxu0 0.0
    %1781 = vmatpush1.xpose.msra.mxu0 0.0
    %1782 = vmatprep.subr.mxu0 0.0
    %1783 = vmatpush1.xpose.msra.mxu0 0.0
    %1784 = vmatprep.subr.mxu0 0.0
    %1785 = vmatpush1.xpose.msra.mxu0 0.0
    %1786 = vmatprep.subr.mxu0 0.0
    %1787 = vmatpush1.xpose.msra.mxu0 0.0
    %1788 = vmatprep.subr.mxu0 0.0
    %1789 = vmatpush1.xpose.msra.mxu0 0.0
    %1790 = vmatprep.subr.mxu0 0.0
    %1791 = vmatpush1.xpose.msra.mxu0 0.0
    %1792 = vmatprep.subr.mxu0 0.0
    %1793 = vmatpush1.xpose.msra.mxu0 0.0
    %1794 = vmatprep.subr.mxu0 0.0
    %1795 = vmatpush1.xpose.msra.mxu0 0.0
    %1796 = vmatprep.subr.mxu0 0.0
    %1797 = vmatpush1.xpose.msra.mxu0 0.0
    %1798 = vmatprep.subr.mxu0 0.0
    %1799 = vmatpush1.xpose.msra.mxu0 0.0
    %1800 = vmatprep.subr.mxu0 0.0
    %1801 = vmatpush1.xpose.msra.mxu0 0.0
    %1802 = vmatprep.subr.mxu0 0.0
    %1803 = vmatpush1.xpose.msra.mxu0 0.0
    %1804 = vmatprep.subr.mxu0 0.0
    %1805 = vmatpush1.xpose.msra.mxu0 0.0
    %1806 = vmatprep.subr.mxu0 0.0
    %1807 = vmatpush1.xpose.msra.mxu0 0.0
    %1808 = vmatprep.subr.mxu0 0.0
    %1809 = vmatpush1.xpose.msra.mxu0 0.0
    %1810 = vmatprep.subr.mxu0 0.0
    %1811 = vmatpush1.xpose.msra.mxu0 0.0
    %1812 = vmatprep.subr.mxu0 0.0
    %1813 = vmatpush1.xpose.msra.mxu0 0.0
    %1814 = vmatprep.subr.mxu0 0.0
    %1815 = vmatpush1.xpose.msra.mxu0 0.0
    %1816 = vmatprep.subr.mxu0 0.0
    %1817 = vmatpush1.xpose.msra.mxu0 0.0
    %1818 = vmatprep.subr.mxu0 0.0
    %1819 = vmatpush1.xpose.msra.mxu0 0.0
    %1820 = vmatprep.subr.mxu0 0.0
    %1821 = vmatpush1.xpose.msra.mxu0 0.0
    %1822 = vmatprep.subr.mxu0 0.0
    %1823 = vmatpush1.xpose.msra.mxu0 0.0
    %1824 = vmatprep.mubr.f32.mxu0 0.0
    %1825 = vmatmul.mubr.f32.gmra.mrb[0].mxu0 %v1756
    %v1826 = vpop.f32.mrb[0].mxu0
    %v1827 = vadd.f32 0.0, %v1826
    %v1828 = vpop.f32.mrb[0].mxu0
    %1829 = vdwg.mxu0
    %1830 = vrot.lane.b32.xlu0 %v1419, 112
    %v1831 = vpop.permute.xlu0 %1830
    %1832 = vrot.lane.b32.xlu0 %v1419, 80
    %v1833 = vpop.permute.xlu0 %1832
    %v1834 = vsel %vm240, %v1831, 0
    %v1836 = vsel %vm240, %v1833, 0
    %1838 = vmatprep.subr.mxu0 0.0
    %1839 = vmatpush1.xpose.msra.mxu0 %v1836
    %1840 = vmatprep.subr.mxu0 0.0
    %1841 = vmatpush1.xpose.msra.mxu0 0.0
    %1842 = vmatprep.subr.mxu0 0.0
    %1843 = vmatpush1.xpose.msra.mxu0 0.0
    %1844 = vmatprep.subr.mxu0 0.0
    %1845 = vmatpush1.xpose.msra.mxu0 0.0
    %1846 = vmatprep.subr.mxu0 0.0
    %1847 = vmatpush1.xpose.msra.mxu0 0.0
    %1848 = vmatprep.subr.mxu0 0.0
    %1849 = vmatpush1.xpose.msra.mxu0 0.0
    %1850 = vmatprep.subr.mxu0 0.0
    %1851 = vmatpush1.xpose.msra.mxu0 0.0
    %1852 = vmatprep.subr.mxu0 0.0
    %1853 = vmatpush1.xpose.msra.mxu0 0.0
    %1854 = vmatprep.subr.mxu0 0.0
    %1855 = vmatpush1.xpose.msra.mxu0 0.0
    %1856 = vmatprep.subr.mxu0 0.0
    %1857 = vmatpush1.xpose.msra.mxu0 0.0
    %1858 = vmatprep.subr.mxu0 0.0
    %1859 = vmatpush1.xpose.msra.mxu0 0.0
    %1860 = vmatprep.subr.mxu0 0.0
    %1861 = vmatpush1.xpose.msra.mxu0 0.0
    %1862 = vmatprep.subr.mxu0 0.0
    %1863 = vmatpush1.xpose.msra.mxu0 0.0
    %1864 = vmatprep.subr.mxu0 0.0
    %1865 = vmatpush1.xpose.msra.mxu0 0.0
    %1866 = vmatprep.subr.mxu0 0.0
    %1867 = vmatpush1.xpose.msra.mxu0 0.0
    %1868 = vmatprep.subr.mxu0 0.0
    %1869 = vmatpush1.xpose.msra.mxu0 0.0
    %1870 = vmatprep.subr.mxu0 0.0
    %1871 = vmatpush1.xpose.msra.mxu0 0.0
    %1872 = vmatprep.subr.mxu0 0.0
    %1873 = vmatpush1.xpose.msra.mxu0 0.0
    %1874 = vmatprep.subr.mxu0 0.0
    %1875 = vmatpush1.xpose.msra.mxu0 0.0
    %1876 = vmatprep.subr.mxu0 0.0
    %1877 = vmatpush1.xpose.msra.mxu0 0.0
    %1878 = vmatprep.subr.mxu0 0.0
    %1879 = vmatpush1.xpose.msra.mxu0 0.0
    %1880 = vmatprep.subr.mxu0 0.0
    %1881 = vmatpush1.xpose.msra.mxu0 0.0
    %1882 = vmatprep.subr.mxu0 0.0
    %1883 = vmatpush1.xpose.msra.mxu0 0.0
    %1884 = vmatprep.subr.mxu0 0.0
    %1885 = vmatpush1.xpose.msra.mxu0 0.0
    %1886 = vmatprep.subr.mxu0 0.0
    %1887 = vmatpush1.xpose.msra.mxu0 0.0
    %1888 = vmatprep.subr.mxu0 0.0
    %1889 = vmatpush1.xpose.msra.mxu0 0.0
    %1890 = vmatprep.subr.mxu0 0.0
    %1891 = vmatpush1.xpose.msra.mxu0 0.0
    %1892 = vmatprep.subr.mxu0 0.0
    %1893 = vmatpush1.xpose.msra.mxu0 0.0
    %1894 = vmatprep.subr.mxu0 0.0
    %1895 = vmatpush1.xpose.msra.mxu0 0.0
    %1896 = vmatprep.subr.mxu0 0.0
    %1897 = vmatpush1.xpose.msra.mxu0 0.0
    %1898 = vmatprep.subr.mxu0 0.0
    %1899 = vmatpush1.xpose.msra.mxu0 0.0
    %1900 = vmatprep.subr.mxu0 0.0
    %1901 = vmatpush1.xpose.msra.mxu0 0.0
    %1902 = vmatprep.mubr.f32.mxu0 0.0
    %1903 = vmatmul.mubr.f32.gmra.mrb[0].mxu0 %v1834
    %v1904 = vpop.f32.mrb[0].mxu0
    %v1905 = vadd.f32 0.0, %v1904
    %v1906 = vpop.f32.mrb[0].mxu0
    %1907 = vdwg.mxu0
    %v1908 = vmul.f32 %v1827, 0.25
    %v1909 = vmul.f32 %v1905, 0.25
    %v1910 = vadd.f32 %v1908, %v398
    %v1911 = vadd.f32 %v1909, %v402
    %v1912 = vsel %vm407, %v1910, -inf
    %1913 = vmax.xlane.f32.xlu0 %v1912
    %v1914 = vpop.xlane.xlu0 %1913
    %v1915 = vsel %vm407, %v1911, -inf
    %1916 = vmax.xlane.f32.xlu0 %v1915
    %v1917 = vpop.xlane.xlu0 %1916
    %v1918 = vsub.f32 %v1910, %v1914
    %v1919 = vsub.f32 %v1911, %v1917
    %v1920 = vmul.f32 %v1918, 1.442695
    %v1921 = vpow.pop %v1920
    %v1922 = vmul.f32 %v1919, 1.442695
    %v1923 = vpow.pop %v1922
    %v1924 = vsel %vm407, %v1921, 0.0
    %1925 = vadd.xlane.f32.xlu0 %v1924
    %v1926 = vpop.xlane.xlu0 %1925
    %v1927 = vsel %vm407, %v1923, 0.0
    %1928 = vadd.xlane.f32.xlu0 %v1927
    %v1929 = vpop.xlane.xlu0 %1928
    %v1930 = vrcp.pop %v1926
    %v1931 = vrcp.pop %v1929
    %v1932 = vmul.f32 %v1921, %v1930
    %v1933 = vmul.f32 %v1923, %v1931
    %1934 = vrot.lane.b32.xlu0 %v1415, 48
    %v1935 = vpop.permute.xlu0 %1934
    %v1937 = vsel %vm432, %v1932, 0
    %v1939 = vsel %vm436, %v1935, 0
    %1941 = vmatprep.subr.mxu0 0.0
    %1942 = vmatpush1.msra.mxu0 %v1939
    %1943 = vmatprep.subr.mxu0 0.0
    %1944 = vmatpush1.msra.mxu0 0.0
    %1945 = vmatprep.subr.mxu0 0.0
    %1946 = vmatpush1.msra.mxu0 0.0
    %1947 = vmatprep.subr.mxu0 0.0
    %1948 = vmatpush1.msra.mxu0 0.0
    %1949 = vmatprep.subr.mxu0 0.0
    %1950 = vmatpush1.msra.mxu0 0.0
    %1951 = vmatprep.subr.mxu0 0.0
    %1952 = vmatpush1.msra.mxu0 0.0
    %1953 = vmatprep.subr.mxu0 0.0
    %1954 = vmatpush1.msra.mxu0 0.0
    %1955 = vmatprep.subr.mxu0 0.0
    %1956 = vmatpush1.msra.mxu0 0.0
    %1957 = vmatprep.subr.mxu0 0.0
    %1958 = vmatpush1.msra.mxu0 0.0
    %1959 = vmatprep.subr.mxu0 0.0
    %1960 = vmatpush1.msra.mxu0 0.0
    %1961 = vmatprep.subr.mxu0 0.0
    %1962 = vmatpush1.msra.mxu0 0.0
    %1963 = vmatprep.subr.mxu0 0.0
    %1964 = vmatpush1.msra.mxu0 0.0
    %1965 = vmatprep.subr.mxu0 0.0
    %1966 = vmatpush1.msra.mxu0 0.0
    %1967 = vmatprep.subr.mxu0 0.0
    %1968 = vmatpush1.msra.mxu0 0.0
    %1969 = vmatprep.subr.mxu0 0.0
    %1970 = vmatpush1.msra.mxu0 0.0
    %1971 = vmatprep.subr.mxu0 0.0
    %1972 = vmatpush1.msra.mxu0 0.0
    %1973 = vmatprep.subr.mxu0 0.0
    %1974 = vmatpush1.msra.mxu0 0.0
    %1975 = vmatprep.subr.mxu0 0.0
    %1976 = vmatpush1.msra.mxu0 0.0
    %1977 = vmatprep.subr.mxu0 0.0
    %1978 = vmatpush1.msra.mxu0 0.0
    %1979 = vmatprep.subr.mxu0 0.0
    %1980 = vmatpush1.msra.mxu0 0.0
    %1981 = vmatprep.subr.mxu0 0.0
    %1982 = vmatpush1.msra.mxu0 0.0
    %1983 = vmatprep.subr.mxu0 0.0
    %1984 = vmatpush1.msra.mxu0 0.0
    %1985 = vmatprep.subr.mxu0 0.0
    %1986 = vmatpush1.msra.mxu0 0.0
    %1987 = vmatprep.subr.mxu0 0.0
    %1988 = vmatpush1.msra.mxu0 0.0
    %1989 = vmatprep.subr.mxu0 0.0
    %1990 = vmatpush1.msra.mxu0 0.0
    %1991 = vmatprep.subr.mxu0 0.0
    %1992 = vmatpush1.msra.mxu0 0.0
    %1993 = vmatprep.subr.mxu0 0.0
    %1994 = vmatpush1.msra.mxu0 0.0
    %1995 = vmatprep.subr.mxu0 0.0
    %1996 = vmatpush1.msra.mxu0 0.0
    %1997 = vmatprep.subr.mxu0 0.0
    %1998 = vmatpush1.msra.mxu0 0.0
    %1999 = vmatprep.subr.mxu0 0.0
    %2000 = vmatpush1.msra.mxu0 0.0
    %2001 = vmatprep.subr.mxu0 0.0
    %2002 = vmatpush1.msra.mxu0 0.0
    %2003 = vmatprep.subr.mxu0 0.0
    %2004 = vmatpush1.msra.mxu0 0.0
    %2005 = vmatprep.mubr.f32.mxu0 0.0
    %2006 = vmatmul.mubr.f32.gmra.mrb[0].mxu0 %v1937
    %v2007 = vpop.f32.mrb[0].mxu0
    %v2008 = vadd.f32 0.0, %v2007
    %v2009 = vpop.f32.mrb[0].mxu0
    %2010 = vdwg.mxu0
    %2011 = vrot.lane.b32.xlu0 %v1419, 48
    %v2012 = vpop.permute.xlu0 %2011
    %v2014 = vsel %vm432, %v1933, 0
    %v2016 = vsel %vm436, %v2012, 0
    %2018 = vmatprep.subr.mxu0 0.0
    %2019 = vmatpush1.msra.mxu0 %v2016
    %2020 = vmatprep.subr.mxu0 0.0
    %2021 = vmatpush1.msra.mxu0 0.0
    %2022 = vmatprep.subr.mxu0 0.0
    %2023 = vmatpush1.msra.mxu0 0.0
    %2024 = vmatprep.subr.mxu0 0.0
    %2025 = vmatpush1.msra.mxu0 0.0
    %2026 = vmatprep.subr.mxu0 0.0
    %2027 = vmatpush1.msra.mxu0 0.0
    %2028 = vmatprep.subr.mxu0 0.0
    %2029 = vmatpush1.msra.mxu0 0.0
    %2030 = vmatprep.subr.mxu0 0.0
    %2031 = vmatpush1.msra.mxu0 0.0
    %2032 = vmatprep.subr.mxu0 0.0
    %2033 = vmatpush1.msra.mxu0 0.0
    %2034 = vmatprep.subr.mxu0 0.0
    %2035 = vmatpush1.msra.mxu0 0.0
    %2036 = vmatprep.subr.mxu0 0.0
    %2037 = vmatpush1.msra.mxu0 0.0
    %2038 = vmatprep.subr.mxu0 0.0
    %2039 = vmatpush1.msra.mxu0 0.0
    %2040 = vmatprep.subr.mxu0 0.0
    %2041 = vmatpush1.msra.mxu0 0.0
    %2042 = vmatprep.subr.mxu0 0.0
    %2043 = vmatpush1.msra.mxu0 0.0
    %2044 = vmatprep.subr.mxu0 0.0
    %2045 = vmatpush1.msra.mxu0 0.0
    %2046 = vmatprep.subr.mxu0 0.0
    %2047 = vmatpush1.msra.mxu0 0.0
    %2048 = vmatprep.subr.mxu0 0.0
    %2049 = vmatpush1.msra.mxu0 0.0
    %2050 = vmatprep.subr.mxu0 0.0
    %2051 = vmatpush1.msra.mxu0 0.0
    %2052 = vmatprep.subr.mxu0 0.0
    %2053 = vmatpush1.msra.mxu0 0.0
    %2054 = vmatprep.subr.mxu0 0.0
    %2055 = vmatpush1.msra.mxu0 0.0
    %2056 = vmatprep.subr.mxu0 0.0
    %2057 = vmatpush1.msra.mxu0 0.0
    %2058 = vmatprep.subr.mxu0 0.0
    %2059 = vmatpush1.msra.mxu0 0.0
    %2060 = vmatprep.subr.mxu0 0.0
    %2061 = vmatpush1.msra.mxu0 0.0
    %2062 = vmatprep.subr.mxu0 0.0
    %2063 = vmatpush1.msra.mxu0 0.0
    %2064 = vmatprep.subr.mxu0 0.0
    %2065 = vmatpush1.msra.mxu0 0.0
    %2066 = vmatprep.subr.mxu0 0.0
    %2067 = vmatpush1.msra.mxu0 0.0
    %2068 = vmatprep.subr.mxu0 0.0
    %2069 = vmatpush1.msra.mxu0 0.0
    %2070 = vmatprep.subr.mxu0 0.0
    %2071 = vmatpush1.msra.mxu0 0.0
    %2072 = vmatprep.subr.mxu0 0.0
    %2073 = vmatpush1.msra.mxu0 0.0
    %2074 = vmatprep.subr.mxu0 0.0
    %2075 = vmatpush1.msra.mxu0 0.0
    %2076 = vmatprep.subr.mxu0 0.0
    %2077 = vmatpush1.msra.mxu0 0.0
    %2078 = vmatprep.subr.mxu0 0.0
    %2079 = vmatpush1.msra.mxu0 0.0
    %2080 = vmatprep.subr.mxu0 0.0
    %2081 = vmatpush1.msra.mxu0 0.0
    %2082 = vmatprep.mubr.f32.mxu0 0.0
    %2083 = vmatmul.mubr.f32.gmra.mrb[0].mxu0 %v2014
    %v2084 = vpop.f32.mrb[0].mxu0
    %v2085 = vadd.f32 0.0, %v2084
    %v2086 = vpop.f32.mrb[0].mxu0
    %2087 = vdwg.mxu0
    %2090 = vrot.lane.b32.xlu0 %v2008, 16
    %v2091 = vpop.permute.xlu0 %2090
    %2092 = vrot.lane.b32.xlu0 %v2085, 16
    %v2093 = vpop.permute.xlu0 %2092
    %v2096 = vsel %vm240, %v1672, %v2091
    %v2097 = vsel %vm240, %v1749, %v2093
    %v2099 = vlaneseq
    %v2100 = vshrl.u32 %v2099, 7
    %v2101 = vsub.s32 0, %v2100
    %v2102 = vrot.slane %v1258, %v2101
    %v2106 = vcombine.low %v2096, %v2097
    %v2107 = vsel %vm163, %v2106, 0
    %2109 = vmatprep.subr.mxu0 0.0
    %2110 = vmatpush1.msra.mxu0 %v1253
    %2111 = vmatprep.subr.mxu0 0.0
    %2112 = vmatpush1.msra.mxu0 %v1254
    %2113 = vmatprep.subr.mxu0 0.0
    %2114 = vmatpush1.msra.mxu0 %v1255
    %2115 = vmatprep.subr.mxu0 0.0
    %2116 = vmatpush1.msra.mxu0 %v1256
    %2117 = vmatprep.subr.mxu0 0.0
    %2118 = vmatpush1.msra.mxu0 0.0
    %2119 = vmatprep.subr.mxu0 0.0
    %2120 = vmatpush1.msra.mxu0 0.0
    %2121 = vmatprep.subr.mxu0 0.0
    %2122 = vmatpush1.msra.mxu0 0.0
    %2123 = vmatprep.subr.mxu0 0.0
    %2124 = vmatpush1.msra.mxu0 0.0
    %2125 = vmatprep.subr.mxu0 0.0
    %2126 = vmatpush1.msra.mxu0 0.0
    %2127 = vmatprep.subr.mxu0 0.0
    %2128 = vmatpush1.msra.mxu0 0.0
    %2129 = vmatprep.subr.mxu0 0.0
    %2130 = vmatpush1.msra.mxu0 0.0
    %2131 = vmatprep.subr.mxu0 0.0
    %2132 = vmatpush1.msra.mxu0 0.0
    %2133 = vmatprep.subr.mxu0 0.0
    %2134 = vmatpush1.msra.mxu0 0.0
    %2135 = vmatprep.subr.mxu0 0.0
    %2136 = vmatpush1.msra.mxu0 0.0
    %2137 = vmatprep.subr.mxu0 0.0
    %2138 = vmatpush1.msra.mxu0 0.0
    %2139 = vmatprep.subr.mxu0 0.0
    %2140 = vmatpush1.msra.mxu0 0.0
    %2141 = vmatprep.subr.mxu0 0.0
    %2142 = vmatpush1.msra.mxu0 0.0
    %2143 = vmatprep.subr.mxu0 0.0
    %2144 = vmatpush1.msra.mxu0 0.0
    %2145 = vmatprep.subr.mxu0 0.0
    %2146 = vmatpush1.msra.mxu0 0.0
    %2147 = vmatprep.subr.mxu0 0.0
    %2148 = vmatpush1.msra.mxu0 0.0
    %2149 = vmatprep.subr.mxu0 0.0
    %2150 = vmatpush1.msra.mxu0 0.0
    %2151 = vmatprep.subr.mxu0 0.0
    %2152 = vmatpush1.msra.mxu0 0.0
    %2153 = vmatprep.subr.mxu0 0.0
    %2154 = vmatpush1.msra.mxu0 0.0
    %2155 = vmatprep.subr.mxu0 0.0
    %2156 = vmatpush1.msra.mxu0 0.0
    %2157 = vmatprep.subr.mxu0 0.0
    %2158 = vmatpush1.msra.mxu0 0.0
    %2159 = vmatprep.subr.mxu0 0.0
    %2160 = vmatpush1.msra.mxu0 0.0
    %2161 = vmatprep.subr.mxu0 0.0
    %2162 = vmatpush1.msra.mxu0 0.0
    %2163 = vmatprep.subr.mxu0 0.0
    %2164 = vmatpush1.msra.mxu0 0.0
    %2165 = vmatprep.subr.mxu0 0.0
    %2166 = vmatpush1.msra.mxu0 0.0
    %2167 = vmatprep.subr.mxu0 0.0
    %2168 = vmatpush1.msra.mxu0 0.0
    %2169 = vmatprep.subr.mxu0 0.0
    %2170 = vmatpush1.msra.mxu0 0.0
    %2171 = vmatprep.subr.mxu0 0.0
    %2172 = vmatpush1.msra.mxu0 0.0
    %2173 = vmatprep.mubr.f32.mxu0 0.0
    %2174 = vmatmul.mubr.f32.gmra.mrb[0].mxu0 %v2107
    %v2175 = vpop.f32.mrb[0].mxu0
    %v2176 = vadd.f32 %v2102, %v2175
    %v2177 = vpop.f32.mrb[0].mxu0
    %2178 = vdwg.mxu0
    %v2180 = vcombine.high %v2176, %v2176
    %v2182 = vadd.f32 %v1239, %v2176
    %v2183 = vadd.f32 %v1240, %v2180
    %v2184 = vsel %vm96, %v2182, 0.0
    %2185 = vadd.xlane.f32.xlu0 %v2184
    %v2186 = vpop.xlane.xlu0 %2185
    %v2187 = vsel %vm96, %v2183, 0.0
    %2188 = vadd.xlane.f32.xlu0 %v2187
    %v2189 = vpop.xlane.xlu0 %2188
    %v2190 = vmul.f32 %v2186, %v103
    %v2191 = vmul.f32 %v2189, %v103
    %v2192 = vsub.f32 %v2182, %v2190
    %v2193 = vsub.f32 %v2183, %v2191
    %v2194 = vmul.f32 %v2192, %v2192
    %v2195 = vmul.f32 %v2193, %v2193
    %v2196 = vsel %vm96, %v2194, 0.0
    %2197 = vadd.xlane.f32.xlu0 %v2196
    %v2198 = vpop.xlane.xlu0 %2197
    %v2199 = vsel %vm96, %v2195, 0.0
    %2200 = vadd.xlane.f32.xlu0 %v2199
    %v2201 = vpop.xlane.xlu0 %2200
    %v2202 = vmul.f32 %v2198, 0.032258064
    %v2203 = vmul.f32 %v2201, 0.032258064
    %v2204 = vrsqrt.pop %v2202
    %v2205 = vmul.f32 %v2202, %v2204
    %vm2206 = vcmp.eq.f32.partialorder %v2202, inf
    %v2207 = vsel %vm2206, %v2202, %v2205
    %vm2208 = vcmp.eq.f32.partialorder %v2202, 0.0
    %v2209 = vand.u32 %v2202, 2147483648
    %v2210 = vsel %vm2208, %v2209, %v2207
    %v2211 = vrsqrt.pop %v2203
    %v2212 = vmul.f32 %v2203, %v2211
    %vm2213 = vcmp.eq.f32.partialorder %v2203, inf
    %v2214 = vsel %vm2213, %v2203, %v2212
    %vm2215 = vcmp.eq.f32.partialorder %v2203, 0.0
    %v2216 = vand.u32 %v2203, 2147483648
    %v2217 = vsel %vm2215, %v2216, %v2214
    %v2218 = vadd.f32 %v2210, 1e-06
    %v2219 = vadd.f32 %v2217, 1e-06
    %v2220 = vrcp.pop %v2218
    %v2221 = vrcp.pop %v2219
    %v2223 = vlaneseq
    %v2224 = vshrl.u32 %v2223, 7
    %v2225 = vsub.s32 0, %v2224
    %v2226 = vrot.slane %v1260, %v2225
    %v2228 = vmul.f32 %v2226, %v2192
    %v2229 = vmul.f32 %v2226, %v2193
    %v2230 = vmul.f32 %v2228, %v2220
    %v2231 = vmul.f32 %v2229, %v2221
    %v2233 = vlaneseq
    %v2234 = vshrl.u32 %v2233, 7
    %v2235 = vsub.s32 0, %v2234
    %v2236 = vrot.slane %v1262, %v2235
    %v2238 = vadd.f32 %v2230, %v2236
    %v2239 = vadd.f32 %v2231, %v2236
    %v2241 = vlaneseq
    %v2242 = vshrl.u32 %v2241, 7
    %v2243 = vsub.s32 0, %v2242
    %v2244 = vrot.slane %v1269, %v2243
    %v2248 = vcombine.low %v2238, %v2239
    %v2249 = vsel %vm163, %v2248, 0
    %2251 = vmatprep.subr.mxu0 0.0
    %2252 = vmatpush1.msra.mxu0 %v1264
    %2253 = vmatprep.subr.mxu0 0.0
    %2254 = vmatpush1.msra.mxu0 %v1265
    %2255 = vmatprep.subr.mxu0 0.0
    %2256 = vmatpush1.msra.mxu0 %v1266
    %2257 = vmatprep.subr.mxu0 0.0
    %2258 = vmatpush1.msra.mxu0 %v1267
    %2259 = vmatprep.subr.mxu0 0.0
    %2260 = vmatpush1.msra.mxu0 0.0
    %2261 = vmatprep.subr.mxu0 0.0
    %2262 = vmatpush1.msra.mxu0 0.0
    %2263 = vmatprep.subr.mxu0 0.0
    %2264 = vmatpush1.msra.mxu0 0.0
    %2265 = vmatprep.subr.mxu0 0.0
    %2266 = vmatpush1.msra.mxu0 0.0
    %2267 = vmatprep.subr.mxu0 0.0
    %2268 = vmatpush1.msra.mxu0 0.0
    %2269 = vmatprep.subr.mxu0 0.0
    %2270 = vmatpush1.msra.mxu0 0.0
    %2271 = vmatprep.subr.mxu0 0.0
    %2272 = vmatpush1.msra.mxu0 0.0
    %2273 = vmatprep.subr.mxu0 0.0
    %2274 = vmatpush1.msra.mxu0 0.0
    %2275 = vmatprep.subr.mxu0 0.0
    %2276 = vmatpush1.msra.mxu0 0.0
    %2277 = vmatprep.subr.mxu0 0.0
    %2278 = vmatpush1.msra.mxu0 0.0
    %2279 = vmatprep.subr.mxu0 0.0
    %2280 = vmatpush1.msra.mxu0 0.0
    %2281 = vmatprep.subr.mxu0 0.0
    %2282 = vmatpush1.msra.mxu0 0.0
    %2283 = vmatprep.subr.mxu0 0.0
    %2284 = vmatpush1.msra.mxu0 0.0
    %2285 = vmatprep.subr.mxu0 0.0
    %2286 = vmatpush1.msra.mxu0 0.0
    %2287 = vmatprep.subr.mxu0 0.0
    %2288 = vmatpush1.msra.mxu0 0.0
    %2289 = vmatprep.subr.mxu0 0.0
    %2290 = vmatpush1.msra.mxu0 0.0
    %2291 = vmatprep.subr.mxu0 0.0
    %2292 = vmatpush1.msra.mxu0 0.0
    %2293 = vmatprep.subr.mxu0 0.0
    %2294 = vmatpush1.msra.mxu0 0.0
    %2295 = vmatprep.subr.mxu0 0.0
    %2296 = vmatpush1.msra.mxu0 0.0
    %2297 = vmatprep.subr.mxu0 0.0
    %2298 = vmatpush1.msra.mxu0 0.0
    %2299 = vmatprep.subr.mxu0 0.0
    %2300 = vmatpush1.msra.mxu0 0.0
    %2301 = vmatprep.subr.mxu0 0.0
    %2302 = vmatpush1.msra.mxu0 0.0
    %2303 = vmatprep.subr.mxu0 0.0
    %2304 = vmatpush1.msra.mxu0 0.0
    %2305 = vmatprep.subr.mxu0 0.0
    %2306 = vmatpush1.msra.mxu0 0.0
    %2307 = vmatprep.subr.mxu0 0.0
    %2308 = vmatpush1.msra.mxu0 0.0
    %2309 = vmatprep.subr.mxu0 0.0
    %2310 = vmatpush1.msra.mxu0 0.0
    %2311 = vmatprep.subr.mxu0 0.0
    %2312 = vmatpush1.msra.mxu0 0.0
    %2313 = vmatprep.subr.mxu0 0.0
    %2314 = vmatpush1.msra.mxu0 0.0
    %2315 = vmatprep.mubr.f32.mxu0 0.0
    %2316 = vmatmul.mubr.f32.gmra.mrb[0].mxu0 %v2249
    %v2317 = vpop.f32.mrb[0].mxu0
    %v2318 = vadd.f32 %v2244, %v2317
    %v2319 = vpop.f32.mrb[0].mxu0
    %2320 = vdwg.mxu0
    %v2321 = vmax.f32 %v2318, 0.0
    %v2323 = vlaneseq
    %v2324 = vshrl.u32 %v2323, 7
    %v2325 = vsub.s32 0, %v2324
    %v2326 = vrot.slane %v1280, %v2325
    %v2329 = vsel %vm1162, %v2321, 0
    %2331 = vmatprep.subr.mxu0 0.0
    %2332 = vmatpush1.msra.mxu0 %v1271
    %2333 = vmatprep.subr.mxu0 0.0
    %2334 = vmatpush1.msra.mxu0 %v1272
    %2335 = vmatprep.subr.mxu0 0.0
    %2336 = vmatpush1.msra.mxu0 %v1273
    %2337 = vmatprep.subr.mxu0 0.0
    %2338 = vmatpush1.msra.mxu0 %v1274
    %2339 = vmatprep.subr.mxu0 0.0
    %2340 = vmatpush1.msra.mxu0 %v1275
    %2341 = vmatprep.subr.mxu0 0.0
    %2342 = vmatpush1.msra.mxu0 %v1276
    %2343 = vmatprep.subr.mxu0 0.0
    %2344 = vmatpush1.msra.mxu0 %v1277
    %2345 = vmatprep.subr.mxu0 0.0
    %2346 = vmatpush1.msra.mxu0 %v1278
    %2347 = vmatprep.subr.mxu0 0.0
    %2348 = vmatpush1.msra.mxu0 0.0
    %2349 = vmatprep.subr.mxu0 0.0
    %2350 = vmatpush1.msra.mxu0 0.0
    %2351 = vmatprep.subr.mxu0 0.0
    %2352 = vmatpush1.msra.mxu0 0.0
    %2353 = vmatprep.subr.mxu0 0.0
    %2354 = vmatpush1.msra.mxu0 0.0
    %2355 = vmatprep.subr.mxu0 0.0
    %2356 = vmatpush1.msra.mxu0 0.0
    %2357 = vmatprep.subr.mxu0 0.0
    %2358 = vmatpush1.msra.mxu0 0.0
    %2359 = vmatprep.subr.mxu0 0.0
    %2360 = vmatpush1.msra.mxu0 0.0
    %2361 = vmatprep.subr.mxu0 0.0
    %2362 = vmatpush1.msra.mxu0 0.0
    %2363 = vmatprep.subr.mxu0 0.0
    %2364 = vmatpush1.msra.mxu0 0.0
    %2365 = vmatprep.subr.mxu0 0.0
    %2366 = vmatpush1.msra.mxu0 0.0
    %2367 = vmatprep.subr.mxu0 0.0
    %2368 = vmatpush1.msra.mxu0 0.0
    %2369 = vmatprep.subr.mxu0 0.0
    %2370 = vmatpush1.msra.mxu0 0.0
    %2371 = vmatprep.subr.mxu0 0.0
    %2372 = vmatpush1.msra.mxu0 0.0
    %2373 = vmatprep.subr.mxu0 0.0
    %2374 = vmatpush1.msra.mxu0 0.0
    %2375 = vmatprep.subr.mxu0 0.0
    %2376 = vmatpush1.msra.mxu0 0.0
    %2377 = vmatprep.subr.mxu0 0.0
    %2378 = vmatpush1.msra.mxu0 0.0
    %2379 = vmatprep.subr.mxu0 0.0
    %2380 = vmatpush1.msra.mxu0 0.0
    %2381 = vmatprep.subr.mxu0 0.0
    %2382 = vmatpush1.msra.mxu0 0.0
    %2383 = vmatprep.subr.mxu0 0.0
    %2384 = vmatpush1.msra.mxu0 0.0
    %2385 = vmatprep.subr.mxu0 0.0
    %2386 = vmatpush1.msra.mxu0 0.0
    %2387 = vmatprep.subr.mxu0 0.0
    %2388 = vmatpush1.msra.mxu0 0.0
    %2389 = vmatprep.subr.mxu0 0.0
    %2390 = vmatpush1.msra.mxu0 0.0
    %2391 = vmatprep.subr.mxu0 0.0
    %2392 = vmatpush1.msra.mxu0 0.0
    %2393 = vmatprep.subr.mxu0 0.0
    %2394 = vmatpush1.msra.mxu0 0.0
    %2395 = vmatprep.mubr.f32.mxu0 0.0
    %2396 = vmatmul.mubr.f32.gmra.mrb[0].mxu0 %v2329
    %v2397 = vpop.f32.mrb[0].mxu0
    %v2398 = vadd.f32 %v2326, %v2397
    %v2399 = vpop.f32.mrb[0].mxu0
    %2400 = vdwg.mxu0
    %v2402 = vcombine.high %v2398, %v2398
    %v2404 = vadd.f32 %v2182, %v2398
    %v2405 = vadd.f32 %v2183, %v2402
    %v2406 = vld [vmem:[%s14] sm:$0x1]
    %v2407 = vld [vmem:[%s15] sm:$0x1]
    %v2408 = vsel %vm96, %v2404, 0.0
    %2409 = vadd.xlane.f32.xlu0 %v2408
    %v2410 = vpop.xlane.xlu0 %2409
    %v2411 = vsel %vm96, %v2405, 0.0
    %2412 = vadd.xlane.f32.xlu0 %v2411
    %v2413 = vpop.xlane.xlu0 %2412
    %v2414 = vmul.f32 %v2410, %v103
    %v2415 = vmul.f32 %v2413, %v103
    %v2416 = vsub.f32 %v2404, %v2414
    %v2417 = vsub.f32 %v2405, %v2415
    %v2418 = vmul.f32 %v2416, %v2416
    %v2419 = vmul.f32 %v2417, %v2417
    %v2420 = vsel %vm96, %v2418, 0.0
    %2421 = vadd.xlane.f32.xlu0 %v2420
    %v2422 = vpop.xlane.xlu0 %2421
    %v2423 = vsel %vm96, %v2419, 0.0
    %2424 = vadd.xlane.f32.xlu0 %v2423
    %v2425 = vpop.xlane.xlu0 %2424
    %v2426 = vmul.f32 %v2422, 0.032258064
    %v2427 = vmul.f32 %v2425, 0.032258064
    %v2428 = vrsqrt.pop %v2426
    %v2429 = vmul.f32 %v2426, %v2428
    %vm2430 = vcmp.eq.f32.partialorder %v2426, inf
    %v2431 = vsel %vm2430, %v2426, %v2429
    %vm2432 = vcmp.eq.f32.partialorder %v2426, 0.0
    %v2433 = vand.u32 %v2426, 2147483648
    %v2434 = vsel %vm2432, %v2433, %v2431
    %v2435 = vrsqrt.pop %v2427
    %v2436 = vmul.f32 %v2427, %v2435
    %vm2437 = vcmp.eq.f32.partialorder %v2427, inf
    %v2438 = vsel %vm2437, %v2427, %v2436
    %vm2439 = vcmp.eq.f32.partialorder %v2427, 0.0
    %v2440 = vand.u32 %v2427, 2147483648
    %v2441 = vsel %vm2439, %v2440, %v2438
    %v2442 = vadd.f32 %v2434, 1e-06
    %v2443 = vadd.f32 %v2441, 1e-06
    %v2444 = vrcp.pop %v2442
    %v2445 = vrcp.pop %v2443
    %v2447 = vlaneseq
    %v2448 = vshrl.u32 %v2447, 7
    %v2449 = vsub.s32 0, %v2448
    %v2450 = vrot.slane %v2406, %v2449
    %v2452 = vmul.f32 %v2450, %v2416
    %v2453 = vmul.f32 %v2450, %v2417
    %v2454 = vmul.f32 %v2452, %v2444
    %v2455 = vmul.f32 %v2453, %v2445
    %v2457 = vlaneseq
    %v2458 = vshrl.u32 %v2457, 7
    %v2459 = vsub.s32 0, %v2458
    %v2460 = vrot.slane %v2407, %v2459
    %v2462 = vadd.f32 %v2454, %v2460
    %v2463 = vadd.f32 %v2455, %v2460
    %v2464 = vsel %vm96, %v2462, 0.0
    %v2465 = vrot.slane %v2464, 4
    %v2466 = vadd.f32 %v2464, %v2465
    %v2467 = vrot.slane %v2466, 2
    %v2468 = vadd.f32 %v2466, %v2467
    %v2469 = vrot.slane %v2468, 1
    %v2470 = vadd.f32 %v2468, %v2469
    %v2471 = vsel %vm96, %v2463, 0.0
    %v2472 = vrot.slane %v2471, 4
    %v2473 = vadd.f32 %v2471, %v2472
    %v2474 = vrot.slane %v2473, 2
    %v2475 = vadd.f32 %v2473, %v2474
    %v2476 = vrot.slane %v2475, 1
    %v2477 = vadd.f32 %v2475, %v2476
    %v2478 = vrcp.pop 4.0
    %v2479 = vmul.f32 %v2470, %v2478
    %v2480 = vmul.f32 %v2477, %v2478
    %v2481 = vld [vmem:[%s16] sm:$0xff]
    %v2482 = vld [vmem:[%s16 + $0x8] sm:$0xff]
    %v2483 = vld [vmem:[%s16 + $0x10] sm:$0xff]
    %v2484 = vld [vmem:[%s16 + $0x18] sm:$0xff]
    %v2485 = vld [vmem:[%s17] sm:$0x1]
    %v2487 = vlaneseq
    %v2488 = vshrl.u32 %v2487, 7
    %v2489 = vsub.s32 0, %v2488
    %v2490 = vrot.slane %v2485, %v2489
    %vm2494 = vcmask 1041409
    %v2495 = vsel %vm2494, %v2480, %v2479
    %v2496 = vsel %vm163, %v2495, 0
    %2498 = vmatprep.subr.mxu0 0.0
    %2499 = vmatpush1.msra.mxu0 %v2481
    %2500 = vmatprep.subr.mxu0 0.0
    %2501 = vmatpush1.msra.mxu0 %v2482
    %2502 = vmatprep.subr.mxu0 0.0
    %2503 = vmatpush1.msra.mxu0 %v2483
    %2504 = vmatprep.subr.mxu0 0.0
    %2505 = vmatpush1.msra.mxu0 %v2484
    %2506 = vmatprep.subr.mxu0 0.0
    %2507 = vmatpush1.msra.mxu0 0.0
    %2508 = vmatprep.subr.mxu0 0.0
    %2509 = vmatpush1.msra.mxu0 0.0
    %2510 = vmatprep.subr.mxu0 0.0
    %2511 = vmatpush1.msra.mxu0 0.0
    %2512 = vmatprep.subr.mxu0 0.0
    %2513 = vmatpush1.msra.mxu0 0.0
    %2514 = vmatprep.subr.mxu0 0.0
    %2515 = vmatpush1.msra.mxu0 0.0
    %2516 = vmatprep.subr.mxu0 0.0
    %2517 = vmatpush1.msra.mxu0 0.0
    %2518 = vmatprep.subr.mxu0 0.0
    %2519 = vmatpush1.msra.mxu0 0.0
    %2520 = vmatprep.subr.mxu0 0.0
    %2521 = vmatpush1.msra.mxu0 0.0
    %2522 = vmatprep.subr.mxu0 0.0
    %2523 = vmatpush1.msra.mxu0 0.0
    %2524 = vmatprep.subr.mxu0 0.0
    %2525 = vmatpush1.msra.mxu0 0.0
    %2526 = vmatprep.subr.mxu0 0.0
    %2527 = vmatpush1.msra.mxu0 0.0
    %2528 = vmatprep.subr.mxu0 0.0
    %2529 = vmatpush1.msra.mxu0 0.0
    %2530 = vmatprep.subr.mxu0 0.0
    %2531 = vmatpush1.msra.mxu0 0.0
    %2532 = vmatprep.subr.mxu0 0.0
    %2533 = vmatpush1.msra.mxu0 0.0
    %2534 = vmatprep.subr.mxu0 0.0
    %2535 = vmatpush1.msra.mxu0 0.0
    %2536 = vmatprep.subr.mxu0 0.0
    %2537 = vmatpush1.msra.mxu0 0.0
    %2538 = vmatprep.subr.mxu0 0.0
    %2539 = vmatpush1.msra.mxu0 0.0
    %2540 = vmatprep.subr.mxu0 0.0
    %2541 = vmatpush1.msra.mxu0 0.0
    %2542 = vmatprep.subr.mxu0 0.0
    %2543 = vmatpush1.msra.mxu0 0.0
    %2544 = vmatprep.subr.mxu0 0.0
    %2545 = vmatpush1.msra.mxu0 0.0
    %2546 = vmatprep.subr.mxu0 0.0
    %2547 = vmatpush1.msra.mxu0 0.0
    %2548 = vmatprep.subr.mxu0 0.0
    %2549 = vmatpush1.msra.mxu0 0.0
    %2550 = vmatprep.subr.mxu0 0.0
    %2551 = vmatpush1.msra.mxu0 0.0
    %2552 = vmatprep.subr.mxu0 0.0
    %2553 = vmatpush1.msra.mxu0 0.0
    %2554 = vmatprep.subr.mxu0 0.0
    %2555 = vmatpush1.msra.mxu0 0.0
    %2556 = vmatprep.subr.mxu0 0.0
    %2557 = vmatpush1.msra.mxu0 0.0
    %2558 = vmatprep.subr.mxu0 0.0
    %2559 = vmatpush1.msra.mxu0 0.0
    %2560 = vmatprep.subr.mxu0 0.0
    %2561 = vmatpush1.msra.mxu0 0.0
    %2562 = vmatprep.mubr.f32.mxu0 0.0
    %2563 = vmatmul.mubr.f32.gmra.mrb[0].mxu0 %v2496
    %v2564 = vpop.f32.mrb[0].mxu0
    %v2565 = vadd.f32 %v2490, %v2564
    %v2566 = vpop.f32.mrb[0].mxu0
    %2567 = vdwg.mxu0
    %vm2568 = vcmask 17408
    %2569 = vst.msk [vmem:[#allocation2] sm:$0x3] %vm2568, %v2565
    // Predicated region
    $region74: #{hierarchical_transformer_forward.3} parent=1 // pred_check
      _
    $region75: #{hierarchical_transformer_forward.3} parent=1 // pred_check_branch
      %2571 = sbr.rel (0) target = $region77
    $region76: #{hierarchical_transformer_forward.3} parent=1 // pred_region
      %s2573 = ssub.s32 32, 32
      %2574 = vsyncadd [#allocation3], %s2573
      %s2576 = sshll.u32 [#allocation2], 4
      %s2577 = int_to_ptr.vmem [resolvable:$true] %s2576
      %2579 = dma.vmem_to_hbm [thread:$0]  %s2577, 32, %s18, [#allocation3]
    $region77: #{hierarchical_transformer_forward.3} parent=1 // pred_fallthru
      _
    // Predicated region
    $region78: #{hierarchical_transformer_forward.3} parent=1 // pred_check
      _
    $region79: #{hierarchical_transformer_forward.3} parent=1 // pred_check_branch
      %2581 = sbr.rel (0) target = $region81
    $region80: #{hierarchical_transformer_forward.3} parent=1 // pred_region
      %2582 = dma.done [#allocation3], 32
    $region81: #{hierarchical_transformer_forward.3} parent=1 // pred_fallthru
      _
    %2583 = vsyncpa [#allocation3], 1

// kernel: hierarchical_transformer_forward.2
$region0: #{hierarchical_transformer_forward.2}
  #allocation0 [shape = 'u32[]', space=smem, size = 0x4, offset = 0x4, fixed_abs, tag = 'smem constant byte address 0x4 - core index']
  #allocation1 [shape = 'u32[144,128]{1,0:T(1,128)}', space=vmem, size = 0x12000, scoped, tag = 'internal scratch']
  %s0 = inlined_call_operand.vmem [shape: f32[8,8,32], index: 0, kind: input, shape index: {}]
  %s1 = inlined_call_operand.vmem [shape: f32[8,1,8], index: 1, kind: input, shape index: {}]
  %s2 = inlined_call_operand.vmem [shape: f32[2,1,32], index: 2, kind: input, shape index: {}]
  %s3 = inlined_call_operand.vmem [shape: f32[2,1,32], index: 3, kind: input, shape index: {}]
  %s4 = inlined_call_operand.vmem [shape: f32[2,32,96], index: 4, kind: input, shape index: {}]
  %s5 = inlined_call_operand.vmem [shape: f32[2,1,96], index: 5, kind: input, shape index: {}]
  %s6 = inlined_call_operand.vmem [shape: f32[2,32,32], index: 6, kind: input, shape index: {}]
  %s7 = inlined_call_operand.vmem [shape: f32[2,1,32], index: 7, kind: input, shape index: {}]
  %s8 = inlined_call_operand.vmem [shape: f32[2,1,32], index: 8, kind: input, shape index: {}]
  %s9 = inlined_call_operand.vmem [shape: f32[2,1,32], index: 9, kind: input, shape index: {}]
  %s10 = inlined_call_operand.vmem [shape: f32[2,32,64], index: 10, kind: input, shape index: {}]
  %s11 = inlined_call_operand.vmem [shape: f32[2,1,64], index: 11, kind: input, shape index: {}]
  %s12 = inlined_call_operand.vmem [shape: f32[2,64,32], index: 12, kind: input, shape index: {}]
  %s13 = inlined_call_operand.vmem [shape: f32[2,1,32], index: 13, kind: input, shape index: {}]
  %s14 = inlined_call_operand.vmem [shape: f32[1,32], index: 14, kind: input, shape index: {}]
  %s15 = inlined_call_operand.vmem [shape: f32[1,32], index: 15, kind: input, shape index: {}]
  %s16 = inlined_call_operand.vmem [shape: f32[8,32], index: 16, kind: output, shape index: {}]
  %s17 = sld [smem:[#allocation0]]
  $region74: #{hierarchical_transformer_forward.2} parent=0
    _
  %s19 = ssub.s32 1, %s17
  %s20 = scalar_select 0, %s19, %s17
  // Predicated region
  $region2: #{hierarchical_transformer_forward.2} parent=0 // pred_check
    _
  $region3: #{hierarchical_transformer_forward.2} parent=0 // pred_check_branch
    %22 = sbr.rel (0) target = $region5
  $region4: #{hierarchical_transformer_forward.2} parent=0 // pred_region
    _
  $region5: #{hierarchical_transformer_forward.2} parent=0 // pred_fallthru
    _
  // Predicated region
  $region6: #{hierarchical_transformer_forward.2} parent=0 // pred_check
    _
  $region7: #{hierarchical_transformer_forward.2} parent=0 // pred_check_branch
    %24 = sbr.rel (0) target = $region9
  $region8: #{hierarchical_transformer_forward.2} parent=0 // pred_region
    _
  $region9: #{hierarchical_transformer_forward.2} parent=0 // pred_fallthru
    _
  // Predicated region
  $region10: #{hierarchical_transformer_forward.2} parent=0 // pred_check
    _
  $region11: #{hierarchical_transformer_forward.2} parent=0 // pred_check_branch
    %26 = sbr.rel (0) target = $region13
  $region12: #{hierarchical_transformer_forward.2} parent=0 // pred_region
    _
  $region13: #{hierarchical_transformer_forward.2} parent=0 // pred_fallthru
    _
  // Predicated region
  $region14: #{hierarchical_transformer_forward.2} parent=0 // pred_check
    _
  $region15: #{hierarchical_transformer_forward.2} parent=0 // pred_check_branch
    %28 = sbr.rel (0) target = $region17
  $region16: #{hierarchical_transformer_forward.2} parent=0 // pred_region
    _
  $region17: #{hierarchical_transformer_forward.2} parent=0 // pred_fallthru
    _
  // Predicated region
  $region18: #{hierarchical_transformer_forward.2} parent=0 // pred_check
    _
  $region19: #{hierarchical_transformer_forward.2} parent=0 // pred_check_branch
    %30 = sbr.rel (0) target = $region21
  $region20: #{hierarchical_transformer_forward.2} parent=0 // pred_region
    _
  $region21: #{hierarchical_transformer_forward.2} parent=0 // pred_fallthru
    _
  // Predicated region
  $region22: #{hierarchical_transformer_forward.2} parent=0 // pred_check
    _
  $region23: #{hierarchical_transformer_forward.2} parent=0 // pred_check_branch
    %32 = sbr.rel (0) target = $region25
  $region24: #{hierarchical_transformer_forward.2} parent=0 // pred_region
    _
  $region25: #{hierarchical_transformer_forward.2} parent=0 // pred_fallthru
    _
  // Predicated region
  $region26: #{hierarchical_transformer_forward.2} parent=0 // pred_check
    _
  $region27: #{hierarchical_transformer_forward.2} parent=0 // pred_check_branch
    %34 = sbr.rel (0) target = $region29
  $region28: #{hierarchical_transformer_forward.2} parent=0 // pred_region
    _
  $region29: #{hierarchical_transformer_forward.2} parent=0 // pred_fallthru
    _
  // Predicated region
  $region30: #{hierarchical_transformer_forward.2} parent=0 // pred_check
    _
  $region31: #{hierarchical_transformer_forward.2} parent=0 // pred_check_branch
    %36 = sbr.rel (0) target = $region33
  $region32: #{hierarchical_transformer_forward.2} parent=0 // pred_region
    _
  $region33: #{hierarchical_transformer_forward.2} parent=0 // pred_fallthru
    _
  // Predicated region
  $region34: #{hierarchical_transformer_forward.2} parent=0 // pred_check
    _
  $region35: #{hierarchical_transformer_forward.2} parent=0 // pred_check_branch
    %38 = sbr.rel (0) target = $region37
  $region36: #{hierarchical_transformer_forward.2} parent=0 // pred_region
    _
  $region37: #{hierarchical_transformer_forward.2} parent=0 // pred_fallthru
    _
  // Predicated region
  $region38: #{hierarchical_transformer_forward.2} parent=0 // pred_check
    _
  $region39: #{hierarchical_transformer_forward.2} parent=0 // pred_check_branch
    %40 = sbr.rel (0) target = $region41
  $region40: #{hierarchical_transformer_forward.2} parent=0 // pred_region
    _
  $region41: #{hierarchical_transformer_forward.2} parent=0 // pred_fallthru
    _
  // Predicated region
  $region42: #{hierarchical_transformer_forward.2} parent=0 // pred_check
    _
  $region43: #{hierarchical_transformer_forward.2} parent=0 // pred_check_branch
    %42 = sbr.rel (0) target = $region45
  $region44: #{hierarchical_transformer_forward.2} parent=0 // pred_region
    _
  $region45: #{hierarchical_transformer_forward.2} parent=0 // pred_fallthru
    _
  // Predicated region
  $region46: #{hierarchical_transformer_forward.2} parent=0 // pred_check
    _
  $region47: #{hierarchical_transformer_forward.2} parent=0 // pred_check_branch
    %44 = sbr.rel (0) target = $region49
  $region48: #{hierarchical_transformer_forward.2} parent=0 // pred_region
    _
  $region49: #{hierarchical_transformer_forward.2} parent=0 // pred_fallthru
    _
  // Predicated region
  $region50: #{hierarchical_transformer_forward.2} parent=0 // pred_check
    _
  $region51: #{hierarchical_transformer_forward.2} parent=0 // pred_check_branch
    %46 = sbr.rel (0) target = $region53
  $region52: #{hierarchical_transformer_forward.2} parent=0 // pred_region
    _
  $region53: #{hierarchical_transformer_forward.2} parent=0 // pred_fallthru
    _
  // Predicated region
  $region54: #{hierarchical_transformer_forward.2} parent=0 // pred_check
    _
  $region55: #{hierarchical_transformer_forward.2} parent=0 // pred_check_branch
    %48 = sbr.rel (0) target = $region57
  $region56: #{hierarchical_transformer_forward.2} parent=0 // pred_region
    _
  $region57: #{hierarchical_transformer_forward.2} parent=0 // pred_fallthru
    _
  // Predicated region
  $region58: #{hierarchical_transformer_forward.2} parent=0 // pred_check
    _
  $region59: #{hierarchical_transformer_forward.2} parent=0 // pred_check_branch
    %50 = sbr.rel (0) target = $region61
  $region60: #{hierarchical_transformer_forward.2} parent=0 // pred_region
    _
  $region61: #{hierarchical_transformer_forward.2} parent=0 // pred_fallthru
    _
  // Predicated region
  $region62: #{hierarchical_transformer_forward.2} parent=0 // pred_check
    _
  $region63: #{hierarchical_transformer_forward.2} parent=0 // pred_check_branch
    %52 = sbr.rel (0) target = $region65
  $region64: #{hierarchical_transformer_forward.2} parent=0 // pred_region
    _
  $region65: #{hierarchical_transformer_forward.2} parent=0 // pred_fallthru
    _
  %v53 = vld [vmem:[%s0] sm:$0xff]
  %v54 = vld [vmem:[%s0 + $0x8] sm:$0xff]
  %v55 = vld [vmem:[%s0 + $0x10] sm:$0xff]
  %v56 = vld [vmem:[%s0 + $0x18] sm:$0xff]
  %v57 = vld [vmem:[%s0 + $0x20] sm:$0xff]
  %v58 = vld [vmem:[%s0 + $0x28] sm:$0xff]
  %v59 = vld [vmem:[%s0 + $0x30] sm:$0xff]
  %v60 = vld [vmem:[%s0 + $0x38] sm:$0xff]
  %v61 = vld [vmem:[%s1] sm:$0x1]
  %v62 = vld [vmem:[%s1 + $0x1] sm:$0x1]
  %v63 = vld [vmem:[%s1 + $0x2] sm:$0x1]
  %v64 = vld [vmem:[%s1 + $0x3] sm:$0x1]
  %v65 = vld [vmem:[%s1 + $0x4] sm:$0x1]
  %v66 = vld [vmem:[%s1 + $0x5] sm:$0x1]
  %v67 = vld [vmem:[%s1 + $0x6] sm:$0x1]
  %v68 = vld [vmem:[%s1 + $0x7] sm:$0x1]
  %vm69 = vcmp.eq.f32.partialorder %v61, 0.0
  %vm70 = vcmp.eq.f32.partialorder %v62, 0.0
  %vm71 = vcmp.eq.f32.partialorder %v63, 0.0
  %vm72 = vcmp.eq.f32.partialorder %v64, 0.0
  %vm73 = vcmp.eq.f32.partialorder %v65, 0.0
  %vm74 = vcmp.eq.f32.partialorder %v66, 0.0
  %vm75 = vcmp.eq.f32.partialorder %v67, 0.0
  %vm76 = vcmp.eq.f32.partialorder %v68, 0.0
  %v77 = vsel %vm69, -1e+09, 0.0
  %v78 = vsel %vm70, -1e+09, 0.0
  %v79 = vsel %vm71, -1e+09, 0.0
  %v80 = vsel %vm72, -1e+09, 0.0
  %v81 = vsel %vm73, -1e+09, 0.0
  %v82 = vsel %vm74, -1e+09, 0.0
  %v83 = vsel %vm75, -1e+09, 0.0
  %v84 = vsel %vm76, -1e+09, 0.0
  %v85 = vld [vmem:[%s2] sm:$0x1]
  %v86 = vld [vmem:[%s3] sm:$0x1]
  %v87 = vld [vmem:[%s4] sm:$0xff]
  %v88 = vld [vmem:[%s4 + $0x8] sm:$0xff]
  %v89 = vld [vmem:[%s4 + $0x10] sm:$0xff]
  %v90 = vld [vmem:[%s4 + $0x18] sm:$0xff]
  %v91 = vld [vmem:[%s5] sm:$0x1]
  %v92 = vld [vmem:[%s6] sm:$0xff]
  %v93 = vld [vmem:[%s6 + $0x8] sm:$0xff]
  %v94 = vld [vmem:[%s6 + $0x10] sm:$0xff]
  %v95 = vld [vmem:[%s6 + $0x18] sm:$0xff]
  %v96 = vld [vmem:[%s7] sm:$0x1]
  %v97 = vld [vmem:[%s8] sm:$0x1]
  %v98 = vld [vmem:[%s9] sm:$0x1]
  %v99 = vld [vmem:[%s10] sm:$0xff]
  %v100 = vld [vmem:[%s10 + $0x8] sm:$0xff]
  %v101 = vld [vmem:[%s10 + $0x10] sm:$0xff]
  %v102 = vld [vmem:[%s10 + $0x18] sm:$0xff]
  %v103 = vld [vmem:[%s11] sm:$0x1]
  %v104 = vld [vmem:[%s12] sm:$0xff]
  %v105 = vld [vmem:[%s12 + $0x8] sm:$0xff]
  %v106 = vld [vmem:[%s12 + $0x10] sm:$0xff]
  %v107 = vld [vmem:[%s12 + $0x18] sm:$0xff]
  %v108 = vld [vmem:[%s12 + $0x20] sm:$0xff]
  %v109 = vld [vmem:[%s12 + $0x28] sm:$0xff]
  %v110 = vld [vmem:[%s12 + $0x30] sm:$0xff]
  %v111 = vld [vmem:[%s12 + $0x38] sm:$0xff]
  %v112 = vld [vmem:[%s13] sm:$0x1]
  %vm113 = vcmask 261120
  %v114 = vsel %vm113, %v53, 0.0
  %115 = vadd.xlane.f32.xlu0 %v114
  %v116 = vpop.xlane.xlu0 %115
  %v117 = vsel %vm113, %v54, 0.0
  %118 = vadd.xlane.f32.xlu0 %v117
  %v119 = vpop.xlane.xlu0 %118
  %v120 = vsel %vm113, %v55, 0.0
  %121 = vadd.xlane.f32.xlu0 %v120
  %v122 = vpop.xlane.xlu0 %121
  %v123 = vsel %vm113, %v56, 0.0
  %124 = vadd.xlane.f32.xlu0 %v123
  %v125 = vpop.xlane.xlu0 %124
  %v126 = vsel %vm113, %v57, 0.0
  %127 = vadd.xlane.f32.xlu0 %v126
  %v128 = vpop.xlane.xlu0 %127
  %v129 = vsel %vm113, %v58, 0.0
  %130 = vadd.xlane.f32.xlu0 %v129
  %v131 = vpop.xlane.xlu0 %130
  %v132 = vsel %vm113, %v59, 0.0
  %133 = vadd.xlane.f32.xlu0 %v132
  %v134 = vpop.xlane.xlu0 %133
  %v135 = vsel %vm113, %v60, 0.0
  %136 = vadd.xlane.f32.xlu0 %v135
  %v137 = vpop.xlane.xlu0 %136
  %v138 = vrcp.pop 32.0
  %v139 = vmul.f32 %v116, %v138
  %v140 = vmul.f32 %v119, %v138
  %v141 = vmul.f32 %v122, %v138
  %v142 = vmul.f32 %v125, %v138
  %v143 = vmul.f32 %v128, %v138
  %v144 = vmul.f32 %v131, %v138
  %v145 = vmul.f32 %v134, %v138
  %v146 = vmul.f32 %v137, %v138
  %v147 = vsub.f32 %v53, %v139
  %v148 = vsub.f32 %v54, %v140
  %v149 = vsub.f32 %v55, %v141
  %v150 = vsub.f32 %v56, %v142
  %v151 = vsub.f32 %v57, %v143
  %v152 = vsub.f32 %v58, %v144
  %v153 = vsub.f32 %v59, %v145
  %v154 = vsub.f32 %v60, %v146
  %v155 = vmul.f32 %v147, %v147
  %v156 = vmul.f32 %v148, %v148
  %v157 = vmul.f32 %v149, %v149
  %v158 = vmul.f32 %v150, %v150
  %v159 = vmul.f32 %v151, %v151
  %v160 = vmul.f32 %v152, %v152
  %v161 = vmul.f32 %v153, %v153
  %v162 = vmul.f32 %v154, %v154
  %v163 = vsel %vm113, %v155, 0.0
  %164 = vadd.xlane.f32.xlu0 %v163
  %v165 = vpop.xlane.xlu0 %164
  %v166 = vsel %vm113, %v156, 0.0
  %167 = vadd.xlane.f32.xlu0 %v166
  %v168 = vpop.xlane.xlu0 %167
  %v169 = vsel %vm113, %v157, 0.0
  %170 = vadd.xlane.f32.xlu0 %v169
  %v171 = vpop.xlane.xlu0 %170
  %v172 = vsel %vm113, %v158, 0.0
  %173 = vadd.xlane.f32.xlu0 %v172
  %v174 = vpop.xlane.xlu0 %173
  %v175 = vsel %vm113, %v159, 0.0
  %176 = vadd.xlane.f32.xlu0 %v175
  %v177 = vpop.xlane.xlu0 %176
  %v178 = vsel %vm113, %v160, 0.0
  %179 = vadd.xlane.f32.xlu0 %v178
  %v180 = vpop.xlane.xlu0 %179
  %v181 = vsel %vm113, %v161, 0.0
  %182 = vadd.xlane.f32.xlu0 %v181
  %v183 = vpop.xlane.xlu0 %182
  %v184 = vsel %vm113, %v162, 0.0
  %185 = vadd.xlane.f32.xlu0 %v184
  %v186 = vpop.xlane.xlu0 %185
  %v187 = vmul.f32 %v165, 0.032258064
  %v188 = vmul.f32 %v168, 0.032258064
  %v189 = vmul.f32 %v171, 0.032258064
  %v190 = vmul.f32 %v174, 0.032258064
  %v191 = vmul.f32 %v177, 0.032258064
  %v192 = vmul.f32 %v180, 0.032258064
  %v193 = vmul.f32 %v183, 0.032258064
  %v194 = vmul.f32 %v186, 0.032258064
  %v195 = vrsqrt.pop %v187
  %v196 = vmul.f32 %v187, %v195
  %vm197 = vcmp.eq.f32.partialorder %v187, inf
  %v198 = vsel %vm197, %v187, %v196
  %vm199 = vcmp.eq.f32.partialorder %v187, 0.0
  %v200 = vand.u32 %v187, 2147483648
  %v201 = vsel %vm199, %v200, %v198
  %v202 = vrsqrt.pop %v188
  %v203 = vmul.f32 %v188, %v202
  %vm204 = vcmp.eq.f32.partialorder %v188, inf
  %v205 = vsel %vm204, %v188, %v203
  %vm206 = vcmp.eq.f32.partialorder %v188, 0.0
  %v207 = vand.u32 %v188, 2147483648
  %v208 = vsel %vm206, %v207, %v205
  %v209 = vrsqrt.pop %v189
  %v210 = vmul.f32 %v189, %v209
  %vm211 = vcmp.eq.f32.partialorder %v189, inf
  %v212 = vsel %vm211, %v189, %v210
  %vm213 = vcmp.eq.f32.partialorder %v189, 0.0
  %v214 = vand.u32 %v189, 2147483648
  %v215 = vsel %vm213, %v214, %v212
  %v216 = vrsqrt.pop %v190
  %v217 = vmul.f32 %v190, %v216
  %vm218 = vcmp.eq.f32.partialorder %v190, inf
  %v219 = vsel %vm218, %v190, %v217
  %vm220 = vcmp.eq.f32.partialorder %v190, 0.0
  %v221 = vand.u32 %v190, 2147483648
  %v222 = vsel %vm220, %v221, %v219
  %v223 = vrsqrt.pop %v191
  %v224 = vmul.f32 %v191, %v223
  %vm225 = vcmp.eq.f32.partialorder %v191, inf
  %v226 = vsel %vm225, %v191, %v224
  %vm227 = vcmp.eq.f32.partialorder %v191, 0.0
  %v228 = vand.u32 %v191, 2147483648
  %v229 = vsel %vm227, %v228, %v226
  %v230 = vrsqrt.pop %v192
  %v231 = vmul.f32 %v192, %v230
  %vm232 = vcmp.eq.f32.partialorder %v192, inf
  %v233 = vsel %vm232, %v192, %v231
  %vm234 = vcmp.eq.f32.partialorder %v192, 0.0
  %v235 = vand.u32 %v192, 2147483648
  %v236 = vsel %vm234, %v235, %v233
  %v237 = vrsqrt.pop %v193
  %v238 = vmul.f32 %v193, %v237
  %vm239 = vcmp.eq.f32.partialorder %v193, inf
  %v240 = vsel %vm239, %v193, %v238
  %vm241 = vcmp.eq.f32.partialorder %v193, 0.0
  %v242 = vand.u32 %v193, 2147483648
  %v243 = vsel %vm241, %v242, %v240
  %v244 = vrsqrt.pop %v194
  %v245 = vmul.f32 %v194, %v244
  %vm246 = vcmp.eq.f32.partialorder %v194, inf
  %v247 = vsel %vm246, %v194, %v245
  %vm248 = vcmp.eq.f32.partialorder %v194, 0.0
  %v249 = vand.u32 %v194, 2147483648
  %v250 = vsel %vm248, %v249, %v247
  %v251 = vadd.f32 %v201, 1e-06
  %v252 = vadd.f32 %v208, 1e-06
  %v253 = vadd.f32 %v215, 1e-06
  %v254 = vadd.f32 %v222, 1e-06
  %v255 = vadd.f32 %v229, 1e-06
  %v256 = vadd.f32 %v236, 1e-06
  %v257 = vadd.f32 %v243, 1e-06
  %v258 = vadd.f32 %v250, 1e-06
  %v259 = vrcp.pop %v251
  %v260 = vrcp.pop %v252
  %v261 = vrcp.pop %v253
  %v262 = vrcp.pop %v254
  %v263 = vrcp.pop %v255
  %v264 = vrcp.pop %v256
  %v265 = vrcp.pop %v257
  %v266 = vrcp.pop %v258
  %v268 = vlaneseq
  %v269 = vshrl.u32 %v268, 7
  %v270 = vsub.s32 0, %v269
  %v271 = vrot.slane %v85, %v270
  %v273 = vmul.f32 %v271, %v147
  %v274 = vmul.f32 %v271, %v148
  %v275 = vmul.f32 %v271, %v149
  %v276 = vmul.f32 %v271, %v150
  %v277 = vmul.f32 %v271, %v151
  %v278 = vmul.f32 %v271, %v152
  %v279 = vmul.f32 %v271, %v153
  %v280 = vmul.f32 %v271, %v154
  %v281 = vmul.f32 %v273, %v259
  %v282 = vmul.f32 %v274, %v260
  %v283 = vmul.f32 %v275, %v261
  %v284 = vmul.f32 %v276, %v262
  %v285 = vmul.f32 %v277, %v263
  %v286 = vmul.f32 %v278, %v264
  %v287 = vmul.f32 %v279, %v265
  %v288 = vmul.f32 %v280, %v266
  %v290 = vlaneseq
  %v291 = vshrl.u32 %v290, 7
  %v292 = vsub.s32 0, %v291
  %v293 = vrot.slane %v86, %v292
  %v295 = vadd.f32 %v281, %v293
  %v296 = vadd.f32 %v282, %v293
  %v297 = vadd.f32 %v283, %v293
  %v298 = vadd.f32 %v284, %v293
  %v299 = vadd.f32 %v285, %v293
  %v300 = vadd.f32 %v286, %v293
  %v301 = vadd.f32 %v287, %v293
  %v302 = vadd.f32 %v288, %v293
  %v304 = vlaneseq
  %v305 = vshrl.u32 %v304, 7
  %v306 = vsub.s32 0, %v305
  %v307 = vrot.slane %v91, %v306
  %v310 = vsel %vm113, %v295, 0
  %v313 = vsel %vm113, %v296, 0
  %v316 = vsel %vm113, %v297, 0
  %v319 = vsel %vm113, %v298, 0
  %v322 = vsel %vm113, %v299, 0
  %v325 = vsel %vm113, %v300, 0
  %v328 = vsel %vm113, %v301, 0
  %v331 = vsel %vm113, %v302, 0
  %333 = vmatprep.subr.mxu0 0.0
  %334 = vmatpush1.msra.mxu0 %v87
  %335 = vmatprep.subr.mxu0 0.0
  %336 = vmatpush1.msra.mxu0 %v88
  %337 = vmatprep.subr.mxu0 0.0
  %338 = vmatpush1.msra.mxu0 %v89
  %339 = vmatprep.subr.mxu0 0.0
  %340 = vmatpush1.msra.mxu0 %v90
  %341 = vmatprep.subr.mxu0 0.0
  %342 = vmatpush1.msra.mxu0 0.0
  %343 = vmatprep.subr.mxu0 0.0
  %344 = vmatpush1.msra.mxu0 0.0
  %345 = vmatprep.subr.mxu0 0.0
  %346 = vmatpush1.msra.mxu0 0.0
  %347 = vmatprep.subr.mxu0 0.0
  %348 = vmatpush1.msra.mxu0 0.0
  %349 = vmatprep.subr.mxu0 0.0
  %350 = vmatpush1.msra.mxu0 0.0
  %351 = vmatprep.subr.mxu0 0.0
  %352 = vmatpush1.msra.mxu0 0.0
  %353 = vmatprep.subr.mxu0 0.0
  %354 = vmatpush1.msra.mxu0 0.0
  %355 = vmatprep.subr.mxu0 0.0
  %356 = vmatpush1.msra.mxu0 0.0
  %357 = vmatprep.subr.mxu0 0.0
  %358 = vmatpush1.msra.mxu0 0.0
  %359 = vmatprep.subr.mxu0 0.0
  %360 = vmatpush1.msra.mxu0 0.0
  %361 = vmatprep.subr.mxu0 0.0
  %362 = vmatpush1.msra.mxu0 0.0
  %363 = vmatprep.subr.mxu0 0.0
  %364 = vmatpush1.msra.mxu0 0.0
  %365 = vmatprep.subr.mxu0 0.0
  %366 = vmatpush1.msra.mxu0 0.0
  %367 = vmatprep.subr.mxu0 0.0
  %368 = vmatpush1.msra.mxu0 0.0
  %369 = vmatprep.subr.mxu0 0.0
  %370 = vmatpush1.msra.mxu0 0.0
  %371 = vmatprep.subr.mxu0 0.0
  %372 = vmatpush1.msra.mxu0 0.0
  %373 = vmatprep.subr.mxu0 0.0
  %374 = vmatpush1.msra.mxu0 0.0
  %375 = vmatprep.subr.mxu0 0.0
  %376 = vmatpush1.msra.mxu0 0.0
  %377 = vmatprep.subr.mxu0 0.0
  %378 = vmatpush1.msra.mxu0 0.0
  %379 = vmatprep.subr.mxu0 0.0
  %380 = vmatpush1.msra.mxu0 0.0
  %381 = vmatprep.subr.mxu0 0.0
  %382 = vmatpush1.msra.mxu0 0.0
  %383 = vmatprep.subr.mxu0 0.0
  %384 = vmatpush1.msra.mxu0 0.0
  %385 = vmatprep.subr.mxu0 0.0
  %386 = vmatpush1.msra.mxu0 0.0
  %387 = vmatprep.subr.mxu0 0.0
  %388 = vmatpush1.msra.mxu0 0.0
  %389 = vmatprep.subr.mxu0 0.0
  %390 = vmatpush1.msra.mxu0 0.0
  %391 = vmatprep.subr.mxu0 0.0
  %392 = vmatpush1.msra.mxu0 0.0
  %393 = vmatprep.subr.mxu0 0.0
  %394 = vmatpush1.msra.mxu0 0.0
  %395 = vmatprep.subr.mxu0 0.0
  %396 = vmatpush1.msra.mxu0 0.0
  %397 = vmatprep.mubr.f32.mxu0 0.0
  %398 = vmatmul.mubr.f32.gmra.mrb[0].mxu0 %v310
  %v399 = vpop.f32.mrb[0].mxu0
  %v400 = vadd.f32 %v307, %v399
  %v401 = vpop.f32.mrb[0].mxu0
  %402 = vmatprep.mubr.f32.mxu0 0.0
  %403 = vmatmul.mubr.f32.gmra.mrb[0].mxu0 %v313
  %v404 = vpop.f32.mrb[0].mxu0
  %v405 = vadd.f32 %v307, %v404
  %v406 = vpop.f32.mrb[0].mxu0
  %407 = vmatprep.mubr.f32.mxu0 0.0
  %408 = vmatmul.mubr.f32.gmra.mrb[0].mxu0 %v316
  %v409 = vpop.f32.mrb[0].mxu0
  %v410 = vadd.f32 %v307, %v409
  %v411 = vpop.f32.mrb[0].mxu0
  %412 = vmatprep.mubr.f32.mxu0 0.0
  %413 = vmatmul.mubr.f32.gmra.mrb[0].mxu0 %v319
  %v414 = vpop.f32.mrb[0].mxu0
  %v415 = vadd.f32 %v307, %v414
  %v416 = vpop.f32.mrb[0].mxu0
  %417 = vmatprep.mubr.f32.mxu0 0.0
  %418 = vmatmul.mubr.f32.gmra.mrb[0].mxu0 %v322
  %v419 = vpop.f32.mrb[0].mxu0
  %v420 = vadd.f32 %v307, %v419
  %v421 = vpop.f32.mrb[0].mxu0
  %422 = vmatprep.mubr.f32.mxu0 0.0
  %423 = vmatmul.mubr.f32.gmra.mrb[0].mxu0 %v325
  %v424 = vpop.f32.mrb[0].mxu0
  %v425 = vadd.f32 %v307, %v424
  %v426 = vpop.f32.mrb[0].mxu0
  %427 = vmatprep.mubr.f32.mxu0 0.0
  %428 = vmatmul.mubr.f32.gmra.mrb[0].mxu0 %v328
  %v429 = vpop.f32.mrb[0].mxu0
  %v430 = vadd.f32 %v307, %v429
  %v431 = vpop.f32.mrb[0].mxu0
  %432 = vmatprep.mubr.f32.mxu0 0.0
  %433 = vmatmul.mubr.f32.gmra.mrb[0].mxu0 %v331
  %v434 = vpop.f32.mrb[0].mxu0
  %v435 = vadd.f32 %v307, %v434
  %v436 = vpop.f32.mrb[0].mxu0
  %437 = vdwg.mxu0
  %439 = vrot.lane.b32.xlu0 %v400, 96
  %v440 = vpop.permute.xlu0 %439
  %vm441 = vcmask 130048
  %v442 = vsel %vm441, %v400, 0
  %v444 = vsel %vm441, %v440, 0
  %446 = vmatprep.subr.mxu0 0.0
  %447 = vmatpush1.xpose.msra.mxu0 %v444
  %448 = vmatprep.subr.mxu0 0.0
  %449 = vmatpush1.xpose.msra.mxu0 0.0
  %450 = vmatprep.subr.mxu0 0.0
  %451 = vmatpush1.xpose.msra.mxu0 0.0
  %452 = vmatprep.subr.mxu0 0.0
  %453 = vmatpush1.xpose.msra.mxu0 0.0
  %454 = vmatprep.subr.mxu0 0.0
  %455 = vmatpush1.xpose.msra.mxu0 0.0
  %456 = vmatprep.subr.mxu0 0.0
  %457 = vmatpush1.xpose.msra.mxu0 0.0
  %458 = vmatprep.subr.mxu0 0.0
  %459 = vmatpush1.xpose.msra.mxu0 0.0
  %460 = vmatprep.subr.mxu0 0.0
  %461 = vmatpush1.xpose.msra.mxu0 0.0
  %462 = vmatprep.subr.mxu0 0.0
  %463 = vmatpush1.xpose.msra.mxu0 0.0
  %464 = vmatprep.subr.mxu0 0.0
  %465 = vmatpush1.xpose.msra.mxu0 0.0
  %466 = vmatprep.subr.mxu0 0.0
  %467 = vmatpush1.xpose.msra.mxu0 0.0
  %468 = vmatprep.subr.mxu0 0.0
  %469 = vmatpush1.xpose.msra.mxu0 0.0
  %470 = vmatprep.subr.mxu0 0.0
  %471 = vmatpush1.xpose.msra.mxu0 0.0
  %472 = vmatprep.subr.mxu0 0.0
  %473 = vmatpush1.xpose.msra.mxu0 0.0
  %474 = vmatprep.subr.mxu0 0.0
  %475 = vmatpush1.xpose.msra.mxu0 0.0
  %476 = vmatprep.subr.mxu0 0.0
  %477 = vmatpush1.xpose.msra.mxu0 0.0
  %478 = vmatprep.subr.mxu0 0.0
  %479 = vmatpush1.xpose.msra.mxu0 0.0
  %480 = vmatprep.subr.mxu0 0.0
  %481 = vmatpush1.xpose.msra.mxu0 0.0
  %482 = vmatprep.subr.mxu0 0.0
  %483 = vmatpush1.xpose.msra.mxu0 0.0
  %484 = vmatprep.subr.mxu0 0.0
  %485 = vmatpush1.xpose.msra.mxu0 0.0
  %486 = vmatprep.subr.mxu0 0.0
  %487 = vmatpush1.xpose.msra.mxu0 0.0
  %488 = vmatprep.subr.mxu0 0.0
  %489 = vmatpush1.xpose.msra.mxu0 0.0
  %490 = vmatprep.subr.mxu0 0.0
  %491 = vmatpush1.xpose.msra.mxu0 0.0
  %492 = vmatprep.subr.mxu0 0.0
  %493 = vmatpush1.xpose.msra.mxu0 0.0
  %494 = vmatprep.subr.mxu0 0.0
  %495 = vmatpush1.xpose.msra.mxu0 0.0
  %496 = vmatprep.subr.mxu0 0.0
  %497 = vmatpush1.xpose.msra.mxu0 0.0
  %498 = vmatprep.subr.mxu0 0.0
  %499 = vmatpush1.xpose.msra.mxu0 0.0
  %500 = vmatprep.subr.mxu0 0.0
  %501 = vmatpush1.xpose.msra.mxu0 0.0
  %502 = vmatprep.subr.mxu0 0.0
  %503 = vmatpush1.xpose.msra.mxu0 0.0
  %504 = vmatprep.subr.mxu0 0.0
  %505 = vmatpush1.xpose.msra.mxu0 0.0
  %506 = vmatprep.subr.mxu0 0.0
  %507 = vmatpush1.xpose.msra.mxu0 0.0
  %508 = vmatprep.subr.mxu0 0.0
  %509 = vmatpush1.xpose.msra.mxu0 0.0
  %510 = vmatprep.mubr.f32.mxu0 0.0
  %511 = vmatmul.mubr.f32.gmra.mrb[0].mxu0 %v442
  %v512 = vpop.f32.mrb[0].mxu0
  %v513 = vadd.f32 0.0, %v512
  %v514 = vpop.f32.mrb[0].mxu0
  %515 = vdwg.mxu0
  %517 = vrot.lane.b32.xlu0 %v405, 96
  %v518 = vpop.permute.xlu0 %517
  %v519 = vsel %vm441, %v405, 0
  %v521 = vsel %vm441, %v518, 0
  %523 = vmatprep.subr.mxu0 0.0
  %524 = vmatpush1.xpose.msra.mxu0 %v521
  %525 = vmatprep.subr.mxu0 0.0
  %526 = vmatpush1.xpose.msra.mxu0 0.0
  %527 = vmatprep.subr.mxu0 0.0
  %528 = vmatpush1.xpose.msra.mxu0 0.0
  %529 = vmatprep.subr.mxu0 0.0
  %530 = vmatpush1.xpose.msra.mxu0 0.0
  %531 = vmatprep.subr.mxu0 0.0
  %532 = vmatpush1.xpose.msra.mxu0 0.0
  %533 = vmatprep.subr.mxu0 0.0
  %534 = vmatpush1.xpose.msra.mxu0 0.0
  %535 = vmatprep.subr.mxu0 0.0
  %536 = vmatpush1.xpose.msra.mxu0 0.0
  %537 = vmatprep.subr.mxu0 0.0
  %538 = vmatpush1.xpose.msra.mxu0 0.0
  %539 = vmatprep.subr.mxu0 0.0
  %540 = vmatpush1.xpose.msra.mxu0 0.0
  %541 = vmatprep.subr.mxu0 0.0
  %542 = vmatpush1.xpose.msra.mxu0 0.0
  %543 = vmatprep.subr.mxu0 0.0
  %544 = vmatpush1.xpose.msra.mxu0 0.0
  %545 = vmatprep.subr.mxu0 0.0
  %546 = vmatpush1.xpose.msra.mxu0 0.0
  %547 = vmatprep.subr.mxu0 0.0
  %548 = vmatpush1.xpose.msra.mxu0 0.0
  %549 = vmatprep.subr.mxu0 0.0
  %550 = vmatpush1.xpose.msra.mxu0 0.0
  %551 = vmatprep.subr.mxu0 0.0
  %552 = vmatpush1.xpose.msra.mxu0 0.0
  %553 = vmatprep.subr.mxu0 0.0
  %554 = vmatpush1.xpose.msra.mxu0 0.0
  %555 = vmatprep.subr.mxu0 0.0
  %556 = vmatpush1.xpose.msra.mxu0 0.0
  %557 = vmatprep.subr.mxu0 0.0
  %558 = vmatpush1.xpose.msra.mxu0 0.0
  %559 = vmatprep.subr.mxu0 0.0
  %560 = vmatpush1.xpose.msra.mxu0 0.0
  %561 = vmatprep.subr.mxu0 0.0
  %562 = vmatpush1.xpose.msra.mxu0 0.0
  %563 = vmatprep.subr.mxu0 0.0
  %564 = vmatpush1.xpose.msra.mxu0 0.0
  %565 = vmatprep.subr.mxu0 0.0
  %566 = vmatpush1.xpose.msra.mxu0 0.0
  %567 = vmatprep.subr.mxu0 0.0
  %568 = vmatpush1.xpose.msra.mxu0 0.0
  %569 = vmatprep.subr.mxu0 0.0
  %570 = vmatpush1.xpose.msra.mxu0 0.0
  %571 = vmatprep.subr.mxu0 0.0
  %572 = vmatpush1.xpose.msra.mxu0 0.0
  %573 = vmatprep.subr.mxu0 0.0
  %574 = vmatpush1.xpose.msra.mxu0 0.0
  %575 = vmatprep.subr.mxu0 0.0
  %576 = vmatpush1.xpose.msra.mxu0 0.0
  %577 = vmatprep.subr.mxu0 0.0
  %578 = vmatpush1.xpose.msra.mxu0 0.0
  %579 = vmatprep.subr.mxu0 0.0
  %580 = vmatpush1.xpose.msra.mxu0 0.0
  %581 = vmatprep.subr.mxu0 0.0
  %582 = vmatpush1.xpose.msra.mxu0 0.0
  %583 = vmatprep.subr.mxu0 0.0
  %584 = vmatpush1.xpose.msra.mxu0 0.0
  %585 = vmatprep.subr.mxu0 0.0
  %586 = vmatpush1.xpose.msra.mxu0 0.0
  %587 = vmatprep.mubr.f32.mxu0 0.0
  %588 = vmatmul.mubr.f32.gmra.mrb[0].mxu0 %v519
  %v589 = vpop.f32.mrb[0].mxu0
  %v590 = vadd.f32 0.0, %v589
  %v591 = vpop.f32.mrb[0].mxu0
  %592 = vdwg.mxu0
  %594 = vrot.lane.b32.xlu0 %v410, 96
  %v595 = vpop.permute.xlu0 %594
  %v596 = vsel %vm441, %v410, 0
  %v598 = vsel %vm441, %v595, 0
  %600 = vmatprep.subr.mxu0 0.0
  %601 = vmatpush1.xpose.msra.mxu0 %v598
  %602 = vmatprep.subr.mxu0 0.0
  %603 = vmatpush1.xpose.msra.mxu0 0.0
  %604 = vmatprep.subr.mxu0 0.0
  %605 = vmatpush1.xpose.msra.mxu0 0.0
  %606 = vmatprep.subr.mxu0 0.0
  %607 = vmatpush1.xpose.msra.mxu0 0.0
  %608 = vmatprep.subr.mxu0 0.0
  %609 = vmatpush1.xpose.msra.mxu0 0.0
  %610 = vmatprep.subr.mxu0 0.0
  %611 = vmatpush1.xpose.msra.mxu0 0.0
  %612 = vmatprep.subr.mxu0 0.0
  %613 = vmatpush1.xpose.msra.mxu0 0.0
  %614 = vmatprep.subr.mxu0 0.0
  %615 = vmatpush1.xpose.msra.mxu0 0.0
  %616 = vmatprep.subr.mxu0 0.0
  %617 = vmatpush1.xpose.msra.mxu0 0.0
  %618 = vmatprep.subr.mxu0 0.0
  %619 = vmatpush1.xpose.msra.mxu0 0.0
  %620 = vmatprep.subr.mxu0 0.0
  %621 = vmatpush1.xpose.msra.mxu0 0.0
  %622 = vmatprep.subr.mxu0 0.0
  %623 = vmatpush1.xpose.msra.mxu0 0.0
  %624 = vmatprep.subr.mxu0 0.0
  %625 = vmatpush1.xpose.msra.mxu0 0.0
  %626 = vmatprep.subr.mxu0 0.0
  %627 = vmatpush1.xpose.msra.mxu0 0.0
  %628 = vmatprep.subr.mxu0 0.0
  %629 = vmatpush1.xpose.msra.mxu0 0.0
  %630 = vmatprep.subr.mxu0 0.0
  %631 = vmatpush1.xpose.msra.mxu0 0.0
  %632 = vmatprep.subr.mxu0 0.0
  %633 = vmatpush1.xpose.msra.mxu0 0.0
  %634 = vmatprep.subr.mxu0 0.0
  %635 = vmatpush1.xpose.msra.mxu0 0.0
  %636 = vmatprep.subr.mxu0 0.0
  %637 = vmatpush1.xpose.msra.mxu0 0.0
  %638 = vmatprep.subr.mxu0 0.0
  %639 = vmatpush1.xpose.msra.mxu0 0.0
  %640 = vmatprep.subr.mxu0 0.0
  %641 = vmatpush1.xpose.msra.mxu0 0.0
  %642 = vmatprep.subr.mxu0 0.0
  %643 = vmatpush1.xpose.msra.mxu0 0.0
  %644 = vmatprep.subr.mxu0 0.0
  %645 = vmatpush1.xpose.msra.mxu0 0.0
  %646 = vmatprep.subr.mxu0 0.0
  %647 = vmatpush1.xpose.msra.mxu0 0.0
  %648 = vmatprep.subr.mxu0 0.0
  %649 = vmatpush1.xpose.msra.mxu0 0.0
  %650 = vmatprep.subr.mxu0 0.0
  %651 = vmatpush1.xpose.msra.mxu0 0.0
  %652 = vmatprep.subr.mxu0 0.0
  %653 = vmatpush1.xpose.msra.mxu0 0.0
  %654 = vmatprep.subr.mxu0 0.0
  %655 = vmatpush1.xpose.msra.mxu0 0.0
  %656 = vmatprep.subr.mxu0 0.0
  %657 = vmatpush1.xpose.msra.mxu0 0.0
  %658 = vmatprep.subr.mxu0 0.0
  %659 = vmatpush1.xpose.msra.mxu0 0.0
  %660 = vmatprep.subr.mxu0 0.0
  %661 = vmatpush1.xpose.msra.mxu0 0.0
  %662 = vmatprep.subr.mxu0 0.0
  %663 = vmatpush1.xpose.msra.mxu0 0.0
  %664 = vmatprep.mubr.f32.mxu0 0.0
  %665 = vmatmul.mubr.f32.gmra.mrb[0].mxu0 %v596
  %v666 = vpop.f32.mrb[0].mxu0
  %v667 = vadd.f32 0.0, %v666
  %v668 = vpop.f32.mrb[0].mxu0
  %669 = vdwg.mxu0
  %671 = vrot.lane.b32.xlu0 %v415, 96
  %v672 = vpop.permute.xlu0 %671
  %v673 = vsel %vm441, %v415, 0
  %v675 = vsel %vm441, %v672, 0
  %677 = vmatprep.subr.mxu0 0.0
  %678 = vmatpush1.xpose.msra.mxu0 %v675
  %679 = vmatprep.subr.mxu0 0.0
  %680 = vmatpush1.xpose.msra.mxu0 0.0
  %681 = vmatprep.subr.mxu0 0.0
  %682 = vmatpush1.xpose.msra.mxu0 0.0
  %683 = vmatprep.subr.mxu0 0.0
  %684 = vmatpush1.xpose.msra.mxu0 0.0
  %685 = vmatprep.subr.mxu0 0.0
  %686 = vmatpush1.xpose.msra.mxu0 0.0
  %687 = vmatprep.subr.mxu0 0.0
  %688 = vmatpush1.xpose.msra.mxu0 0.0
  %689 = vmatprep.subr.mxu0 0.0
  %690 = vmatpush1.xpose.msra.mxu0 0.0
  %691 = vmatprep.subr.mxu0 0.0
  %692 = vmatpush1.xpose.msra.mxu0 0.0
  %693 = vmatprep.subr.mxu0 0.0
  %694 = vmatpush1.xpose.msra.mxu0 0.0
  %695 = vmatprep.subr.mxu0 0.0
  %696 = vmatpush1.xpose.msra.mxu0 0.0
  %697 = vmatprep.subr.mxu0 0.0
  %698 = vmatpush1.xpose.msra.mxu0 0.0
  %699 = vmatprep.subr.mxu0 0.0
  %700 = vmatpush1.xpose.msra.mxu0 0.0
  %701 = vmatprep.subr.mxu0 0.0
  %702 = vmatpush1.xpose.msra.mxu0 0.0
  %703 = vmatprep.subr.mxu0 0.0
  %704 = vmatpush1.xpose.msra.mxu0 0.0
  %705 = vmatprep.subr.mxu0 0.0
  %706 = vmatpush1.xpose.msra.mxu0 0.0
  %707 = vmatprep.subr.mxu0 0.0
  %708 = vmatpush1.xpose.msra.mxu0 0.0
  %709 = vmatprep.subr.mxu0 0.0
  %710 = vmatpush1.xpose.msra.mxu0 0.0
  %711 = vmatprep.subr.mxu0 0.0
  %712 = vmatpush1.xpose.msra.mxu0 0.0
  %713 = vmatprep.subr.mxu0 0.0
  %714 = vmatpush1.xpose.msra.mxu0 0.0
  %715 = vmatprep.subr.mxu0 0.0
  %716 = vmatpush1.xpose.msra.mxu0 0.0
  %717 = vmatprep.subr.mxu0 0.0
  %718 = vmatpush1.xpose.msra.mxu0 0.0
  %719 = vmatprep.subr.mxu0 0.0
  %720 = vmatpush1.xpose.msra.mxu0 0.0
  %721 = vmatprep.subr.mxu0 0.0
  %722 = vmatpush1.xpose.msra.mxu0 0.0
  %723 = vmatprep.subr.mxu0 0.0
  %724 = vmatpush1.xpose.msra.mxu0 0.0
  %725 = vmatprep.subr.mxu0 0.0
  %726 = vmatpush1.xpose.msra.mxu0 0.0
  %727 = vmatprep.subr.mxu0 0.0
  %728 = vmatpush1.xpose.msra.mxu0 0.0
  %729 = vmatprep.subr.mxu0 0.0
  %730 = vmatpush1.xpose.msra.mxu0 0.0
  %731 = vmatprep.subr.mxu0 0.0
  %732 = vmatpush1.xpose.msra.mxu0 0.0
  %733 = vmatprep.subr.mxu0 0.0
  %734 = vmatpush1.xpose.msra.mxu0 0.0
  %735 = vmatprep.subr.mxu0 0.0
  %736 = vmatpush1.xpose.msra.mxu0 0.0
  %737 = vmatprep.subr.mxu0 0.0
  %738 = vmatpush1.xpose.msra.mxu0 0.0
  %739 = vmatprep.subr.mxu0 0.0
  %740 = vmatpush1.xpose.msra.mxu0 0.0
  %741 = vmatprep.mubr.f32.mxu0 0.0
  %742 = vmatmul.mubr.f32.gmra.mrb[0].mxu0 %v673
  %v743 = vpop.f32.mrb[0].mxu0
  %v744 = vadd.f32 0.0, %v743
  %v745 = vpop.f32.mrb[0].mxu0
  %746 = vdwg.mxu0
  %748 = vrot.lane.b32.xlu0 %v420, 96
  %v749 = vpop.permute.xlu0 %748
  %v750 = vsel %vm441, %v420, 0
  %v752 = vsel %vm441, %v749, 0
  %754 = vmatprep.subr.mxu0 0.0
  %755 = vmatpush1.xpose.msra.mxu0 %v752
  %756 = vmatprep.subr.mxu0 0.0
  %757 = vmatpush1.xpose.msra.mxu0 0.0
  %758 = vmatprep.subr.mxu0 0.0
  %759 = vmatpush1.xpose.msra.mxu0 0.0
  %760 = vmatprep.subr.mxu0 0.0
  %761 = vmatpush1.xpose.msra.mxu0 0.0
  %762 = vmatprep.subr.mxu0 0.0
  %763 = vmatpush1.xpose.msra.mxu0 0.0
  %764 = vmatprep.subr.mxu0 0.0
  %765 = vmatpush1.xpose.msra.mxu0 0.0
  %766 = vmatprep.subr.mxu0 0.0
  %767 = vmatpush1.xpose.msra.mxu0 0.0
  %768 = vmatprep.subr.mxu0 0.0
  %769 = vmatpush1.xpose.msra.mxu0 0.0
  %770 = vmatprep.subr.mxu0 0.0
  %771 = vmatpush1.xpose.msra.mxu0 0.0
  %772 = vmatprep.subr.mxu0 0.0
  %773 = vmatpush1.xpose.msra.mxu0 0.0
  %774 = vmatprep.subr.mxu0 0.0
  %775 = vmatpush1.xpose.msra.mxu0 0.0
  %776 = vmatprep.subr.mxu0 0.0
  %777 = vmatpush1.xpose.msra.mxu0 0.0
  %778 = vmatprep.subr.mxu0 0.0
  %779 = vmatpush1.xpose.msra.mxu0 0.0
  %780 = vmatprep.subr.mxu0 0.0
  %781 = vmatpush1.xpose.msra.mxu0 0.0
  %782 = vmatprep.subr.mxu0 0.0
  %783 = vmatpush1.xpose.msra.mxu0 0.0
  %784 = vmatprep.subr.mxu0 0.0
  %785 = vmatpush1.xpose.msra.mxu0 0.0
  %786 = vmatprep.subr.mxu0 0.0
  %787 = vmatpush1.xpose.msra.mxu0 0.0
  %788 = vmatprep.subr.mxu0 0.0
  %789 = vmatpush1.xpose.msra.mxu0 0.0
  %790 = vmatprep.subr.mxu0 0.0
  %791 = vmatpush1.xpose.msra.mxu0 0.0
  %792 = vmatprep.subr.mxu0 0.0
  %793 = vmatpush1.xpose.msra.mxu0 0.0
  %794 = vmatprep.subr.mxu0 0.0
  %795 = vmatpush1.xpose.msra.mxu0 0.0
  %796 = vmatprep.subr.mxu0 0.0
  %797 = vmatpush1.xpose.msra.mxu0 0.0
  %798 = vmatprep.subr.mxu0 0.0
  %799 = vmatpush1.xpose.msra.mxu0 0.0
  %800 = vmatprep.subr.mxu0 0.0
  %801 = vmatpush1.xpose.msra.mxu0 0.0
  %802 = vmatprep.subr.mxu0 0.0
  %803 = vmatpush1.xpose.msra.mxu0 0.0
  %804 = vmatprep.subr.mxu0 0.0
  %805 = vmatpush1.xpose.msra.mxu0 0.0
  %806 = vmatprep.subr.mxu0 0.0
  %807 = vmatpush1.xpose.msra.mxu0 0.0
  %808 = vmatprep.subr.mxu0 0.0
  %809 = vmatpush1.xpose.msra.mxu0 0.0
  %810 = vmatprep.subr.mxu0 0.0
  %811 = vmatpush1.xpose.msra.mxu0 0.0
  %812 = vmatprep.subr.mxu0 0.0
  %813 = vmatpush1.xpose.msra.mxu0 0.0
  %814 = vmatprep.subr.mxu0 0.0
  %815 = vmatpush1.xpose.msra.mxu0 0.0
  %816 = vmatprep.subr.mxu0 0.0
  %817 = vmatpush1.xpose.msra.mxu0 0.0
  %818 = vmatprep.mubr.f32.mxu0 0.0
  %819 = vmatmul.mubr.f32.gmra.mrb[0].mxu0 %v750
  %v820 = vpop.f32.mrb[0].mxu0
  %v821 = vadd.f32 0.0, %v820
  %v822 = vpop.f32.mrb[0].mxu0
  %823 = vdwg.mxu0
  %825 = vrot.lane.b32.xlu0 %v425, 96
  %v826 = vpop.permute.xlu0 %825
  %v827 = vsel %vm441, %v425, 0
  %v829 = vsel %vm441, %v826, 0
  %831 = vmatprep.subr.mxu0 0.0
  %832 = vmatpush1.xpose.msra.mxu0 %v829
  %833 = vmatprep.subr.mxu0 0.0
  %834 = vmatpush1.xpose.msra.mxu0 0.0
  %835 = vmatprep.subr.mxu0 0.0
  %836 = vmatpush1.xpose.msra.mxu0 0.0
  %837 = vmatprep.subr.mxu0 0.0
  %838 = vmatpush1.xpose.msra.mxu0 0.0
  %839 = vmatprep.subr.mxu0 0.0
  %840 = vmatpush1.xpose.msra.mxu0 0.0
  %841 = vmatprep.subr.mxu0 0.0
  %842 = vmatpush1.xpose.msra.mxu0 0.0
  %843 = vmatprep.subr.mxu0 0.0
  %844 = vmatpush1.xpose.msra.mxu0 0.0
  %845 = vmatprep.subr.mxu0 0.0
  %846 = vmatpush1.xpose.msra.mxu0 0.0
  %847 = vmatprep.subr.mxu0 0.0
  %848 = vmatpush1.xpose.msra.mxu0 0.0
  %849 = vmatprep.subr.mxu0 0.0
  %850 = vmatpush1.xpose.msra.mxu0 0.0
  %851 = vmatprep.subr.mxu0 0.0
  %852 = vmatpush1.xpose.msra.mxu0 0.0
  %853 = vmatprep.subr.mxu0 0.0
  %854 = vmatpush1.xpose.msra.mxu0 0.0
  %855 = vmatprep.subr.mxu0 0.0
  %856 = vmatpush1.xpose.msra.mxu0 0.0
  %857 = vmatprep.subr.mxu0 0.0
  %858 = vmatpush1.xpose.msra.mxu0 0.0
  %859 = vmatprep.subr.mxu0 0.0
  %860 = vmatpush1.xpose.msra.mxu0 0.0
  %861 = vmatprep.subr.mxu0 0.0
  %862 = vmatpush1.xpose.msra.mxu0 0.0
  %863 = vmatprep.subr.mxu0 0.0
  %864 = vmatpush1.xpose.msra.mxu0 0.0
  %865 = vmatprep.subr.mxu0 0.0
  %866 = vmatpush1.xpose.msra.mxu0 0.0
  %867 = vmatprep.subr.mxu0 0.0
  %868 = vmatpush1.xpose.msra.mxu0 0.0
  %869 = vmatprep.subr.mxu0 0.0
  %870 = vmatpush1.xpose.msra.mxu0 0.0
  %871 = vmatprep.subr.mxu0 0.0
  %872 = vmatpush1.xpose.msra.mxu0 0.0
  %873 = vmatprep.subr.mxu0 0.0
  %874 = vmatpush1.xpose.msra.mxu0 0.0
  %875 = vmatprep.subr.mxu0 0.0
  %876 = vmatpush1.xpose.msra.mxu0 0.0
  %877 = vmatprep.subr.mxu0 0.0
  %878 = vmatpush1.xpose.msra.mxu0 0.0
  %879 = vmatprep.subr.mxu0 0.0
  %880 = vmatpush1.xpose.msra.mxu0 0.0
  %881 = vmatprep.subr.mxu0 0.0
  %882 = vmatpush1.xpose.msra.mxu0 0.0
  %883 = vmatprep.subr.mxu0 0.0
  %884 = vmatpush1.xpose.msra.mxu0 0.0
  %885 = vmatprep.subr.mxu0 0.0
  %886 = vmatpush1.xpose.msra.mxu0 0.0
  %887 = vmatprep.subr.mxu0 0.0
  %888 = vmatpush1.xpose.msra.mxu0 0.0
  %889 = vmatprep.subr.mxu0 0.0
  %890 = vmatpush1.xpose.msra.mxu0 0.0
  %891 = vmatprep.subr.mxu0 0.0
  %892 = vmatpush1.xpose.msra.mxu0 0.0
  %893 = vmatprep.subr.mxu0 0.0
  %894 = vmatpush1.xpose.msra.mxu0 0.0
  %895 = vmatprep.mubr.f32.mxu0 0.0
  %896 = vmatmul.mubr.f32.gmra.mrb[0].mxu0 %v827
  %v897 = vpop.f32.mrb[0].mxu0
  %v898 = vadd.f32 0.0, %v897
  %v899 = vpop.f32.mrb[0].mxu0
  %900 = vdwg.mxu0
  %902 = vrot.lane.b32.xlu0 %v430, 96
  %v903 = vpop.permute.xlu0 %902
  %v904 = vsel %vm441, %v430, 0
  %v906 = vsel %vm441, %v903, 0
  %908 = vmatprep.subr.mxu0 0.0
  %909 = vmatpush1.xpose.msra.mxu0 %v906
  %910 = vmatprep.subr.mxu0 0.0
  %911 = vmatpush1.xpose.msra.mxu0 0.0
  %912 = vmatprep.subr.mxu0 0.0
  %913 = vmatpush1.xpose.msra.mxu0 0.0
  %914 = vmatprep.subr.mxu0 0.0
  %915 = vmatpush1.xpose.msra.mxu0 0.0
  %916 = vmatprep.subr.mxu0 0.0
  %917 = vmatpush1.xpose.msra.mxu0 0.0
  %918 = vmatprep.subr.mxu0 0.0
  %919 = vmatpush1.xpose.msra.mxu0 0.0
  %920 = vmatprep.subr.mxu0 0.0
  %921 = vmatpush1.xpose.msra.mxu0 0.0
  %922 = vmatprep.subr.mxu0 0.0
  %923 = vmatpush1.xpose.msra.mxu0 0.0
  %924 = vmatprep.subr.mxu0 0.0
  %925 = vmatpush1.xpose.msra.mxu0 0.0
  %926 = vmatprep.subr.mxu0 0.0
  %927 = vmatpush1.xpose.msra.mxu0 0.0
  %928 = vmatprep.subr.mxu0 0.0
  %929 = vmatpush1.xpose.msra.mxu0 0.0
  %930 = vmatprep.subr.mxu0 0.0
  %931 = vmatpush1.xpose.msra.mxu0 0.0
  %932 = vmatprep.subr.mxu0 0.0
  %933 = vmatpush1.xpose.msra.mxu0 0.0
  %934 = vmatprep.subr.mxu0 0.0
  %935 = vmatpush1.xpose.msra.mxu0 0.0
  %936 = vmatprep.subr.mxu0 0.0
  %937 = vmatpush1.xpose.msra.mxu0 0.0
  %938 = vmatprep.subr.mxu0 0.0
  %939 = vmatpush1.xpose.msra.mxu0 0.0
  %940 = vmatprep.subr.mxu0 0.0
  %941 = vmatpush1.xpose.msra.mxu0 0.0
  %942 = vmatprep.subr.mxu0 0.0
  %943 = vmatpush1.xpose.msra.mxu0 0.0
  %944 = vmatprep.subr.mxu0 0.0
  %945 = vmatpush1.xpose.msra.mxu0 0.0
  %946 = vmatprep.subr.mxu0 0.0
  %947 = vmatpush1.xpose.msra.mxu0 0.0
  %948 = vmatprep.subr.mxu0 0.0
  %949 = vmatpush1.xpose.msra.mxu0 0.0
  %950 = vmatprep.subr.mxu0 0.0
  %951 = vmatpush1.xpose.msra.mxu0 0.0
  %952 = vmatprep.subr.mxu0 0.0
  %953 = vmatpush1.xpose.msra.mxu0 0.0
  %954 = vmatprep.subr.mxu0 0.0
  %955 = vmatpush1.xpose.msra.mxu0 0.0
  %956 = vmatprep.subr.mxu0 0.0
  %957 = vmatpush1.xpose.msra.mxu0 0.0
  %958 = vmatprep.subr.mxu0 0.0
  %959 = vmatpush1.xpose.msra.mxu0 0.0
  %960 = vmatprep.subr.mxu0 0.0
  %961 = vmatpush1.xpose.msra.mxu0 0.0
  %962 = vmatprep.subr.mxu0 0.0
  %963 = vmatpush1.xpose.msra.mxu0 0.0
  %964 = vmatprep.subr.mxu0 0.0
  %965 = vmatpush1.xpose.msra.mxu0 0.0
  %966 = vmatprep.subr.mxu0 0.0
  %967 = vmatpush1.xpose.msra.mxu0 0.0
  %968 = vmatprep.subr.mxu0 0.0
  %969 = vmatpush1.xpose.msra.mxu0 0.0
  %970 = vmatprep.subr.mxu0 0.0
  %971 = vmatpush1.xpose.msra.mxu0 0.0
  %972 = vmatprep.mubr.f32.mxu0 0.0
  %973 = vmatmul.mubr.f32.gmra.mrb[0].mxu0 %v904
  %v974 = vpop.f32.mrb[0].mxu0
  %v975 = vadd.f32 0.0, %v974
  %v976 = vpop.f32.mrb[0].mxu0
  %977 = vdwg.mxu0
  %979 = vrot.lane.b32.xlu0 %v435, 96
  %v980 = vpop.permute.xlu0 %979
  %v981 = vsel %vm441, %v435, 0
  %v983 = vsel %vm441, %v980, 0
  %985 = vmatprep.subr.mxu0 0.0
  %986 = vmatpush1.xpose.msra.mxu0 %v983
  %987 = vmatprep.subr.mxu0 0.0
  %988 = vmatpush1.xpose.msra.mxu0 0.0
  %989 = vmatprep.subr.mxu0 0.0
  %990 = vmatpush1.xpose.msra.mxu0 0.0
  %991 = vmatprep.subr.mxu0 0.0
  %992 = vmatpush1.xpose.msra.mxu0 0.0
  %993 = vmatprep.subr.mxu0 0.0
  %994 = vmatpush1.xpose.msra.mxu0 0.0
  %995 = vmatprep.subr.mxu0 0.0
  %996 = vmatpush1.xpose.msra.mxu0 0.0
  %997 = vmatprep.subr.mxu0 0.0
  %998 = vmatpush1.xpose.msra.mxu0 0.0
  %999 = vmatprep.subr.mxu0 0.0
  %1000 = vmatpush1.xpose.msra.mxu0 0.0
  %1001 = vmatprep.subr.mxu0 0.0
  %1002 = vmatpush1.xpose.msra.mxu0 0.0
  %1003 = vmatprep.subr.mxu0 0.0
  %1004 = vmatpush1.xpose.msra.mxu0 0.0
  %1005 = vmatprep.subr.mxu0 0.0
  %1006 = vmatpush1.xpose.msra.mxu0 0.0
  %1007 = vmatprep.subr.mxu0 0.0
  %1008 = vmatpush1.xpose.msra.mxu0 0.0
  %1009 = vmatprep.subr.mxu0 0.0
  %1010 = vmatpush1.xpose.msra.mxu0 0.0
  %1011 = vmatprep.subr.mxu0 0.0
  %1012 = vmatpush1.xpose.msra.mxu0 0.0
  %1013 = vmatprep.subr.mxu0 0.0
  %1014 = vmatpush1.xpose.msra.mxu0 0.0
  %1015 = vmatprep.subr.mxu0 0.0
  %1016 = vmatpush1.xpose.msra.mxu0 0.0
  %1017 = vmatprep.subr.mxu0 0.0
  %1018 = vmatpush1.xpose.msra.mxu0 0.0
  %1019 = vmatprep.subr.mxu0 0.0
  %1020 = vmatpush1.xpose.msra.mxu0 0.0
  %1021 = vmatprep.subr.mxu0 0.0
  %1022 = vmatpush1.xpose.msra.mxu0 0.0
  %1023 = vmatprep.subr.mxu0 0.0
  %1024 = vmatpush1.xpose.msra.mxu0 0.0
  %1025 = vmatprep.subr.mxu0 0.0
  %1026 = vmatpush1.xpose.msra.mxu0 0.0
  %1027 = vmatprep.subr.mxu0 0.0
  %1028 = vmatpush1.xpose.msra.mxu0 0.0
  %1029 = vmatprep.subr.mxu0 0.0
  %1030 = vmatpush1.xpose.msra.mxu0 0.0
  %1031 = vmatprep.subr.mxu0 0.0
  %1032 = vmatpush1.xpose.msra.mxu0 0.0
  %1033 = vmatprep.subr.mxu0 0.0
  %1034 = vmatpush1.xpose.msra.mxu0 0.0
  %1035 = vmatprep.subr.mxu0 0.0
  %1036 = vmatpush1.xpose.msra.mxu0 0.0
  %1037 = vmatprep.subr.mxu0 0.0
  %1038 = vmatpush1.xpose.msra.mxu0 0.0
  %1039 = vmatprep.subr.mxu0 0.0
  %1040 = vmatpush1.xpose.msra.mxu0 0.0
  %1041 = vmatprep.subr.mxu0 0.0
  %1042 = vmatpush1.xpose.msra.mxu0 0.0
  %1043 = vmatprep.subr.mxu0 0.0
  %1044 = vmatpush1.xpose.msra.mxu0 0.0
  %1045 = vmatprep.subr.mxu0 0.0
  %1046 = vmatpush1.xpose.msra.mxu0 0.0
  %1047 = vmatprep.subr.mxu0 0.0
  %1048 = vmatpush1.xpose.msra.mxu0 0.0
  %1049 = vmatprep.mubr.f32.mxu0 0.0
  %1050 = vmatmul.mubr.f32.gmra.mrb[0].mxu0 %v981
  %v1051 = vpop.f32.mrb[0].mxu0
  %v1052 = vadd.f32 0.0, %v1051
  %v1053 = vpop.f32.mrb[0].mxu0
  %1054 = vdwg.mxu0
  %v1055 = vmul.f32 %v513, 0.25
  %v1056 = vmul.f32 %v590, 0.25
  %v1057 = vmul.f32 %v667, 0.25
  %v1058 = vmul.f32 %v744, 0.25
  %v1059 = vmul.f32 %v821, 0.25
  %v1060 = vmul.f32 %v898, 0.25
  %v1061 = vmul.f32 %v975, 0.25
  %v1062 = vmul.f32 %v1052, 0.25
  %v1071 = vlaneseq
  %v1072 = vshrl.u32 %v1071, 7
  %v1073 = vsub.s32 0, %v1072
  %v1074 = vrot.slane %v77, %v1073
  %v1075 = vlaneseq
  %v1076 = vshrl.u32 %v1075, 7
  %v1077 = vsub.s32 0, %v1076
  %v1078 = vrot.slane %v78, %v1077
  %v1079 = vlaneseq
  %v1080 = vshrl.u32 %v1079, 7
  %v1081 = vsub.s32 0, %v1080
  %v1082 = vrot.slane %v79, %v1081
  %v1083 = vlaneseq
  %v1084 = vshrl.u32 %v1083, 7
  %v1085 = vsub.s32 0, %v1084
  %v1086 = vrot.slane %v80, %v1085
  %v1087 = vlaneseq
  %v1088 = vshrl.u32 %v1087, 7
  %v1089 = vsub.s32 0, %v1088
  %v1090 = vrot.slane %v81, %v1089
  %v1091 = vlaneseq
  %v1092 = vshrl.u32 %v1091, 7
  %v1093 = vsub.s32 0, %v1092
  %v1094 = vrot.slane %v82, %v1093
  %v1095 = vlaneseq
  %v1096 = vshrl.u32 %v1095, 7
  %v1097 = vsub.s32 0, %v1096
  %v1098 = vrot.slane %v83, %v1097
  %v1099 = vlaneseq
  %v1100 = vshrl.u32 %v1099, 7
  %v1101 = vsub.s32 0, %v1100
  %v1102 = vrot.slane %v84, %v1101
  %v1111 = vadd.f32 %v1055, %v1074
  %v1112 = vadd.f32 %v1056, %v1078
  %v1113 = vadd.f32 %v1057, %v1082
  %v1114 = vadd.f32 %v1058, %v1086
  %v1115 = vadd.f32 %v1059, %v1090
  %v1116 = vadd.f32 %v1060, %v1094
  %v1117 = vadd.f32 %v1061, %v1098
  %v1118 = vadd.f32 %v1062, %v1102
  %vm1119 = vcmask 64512
  %v1120 = vsel %vm1119, %v1111, -inf
  %1121 = vmax.xlane.f32.xlu0 %v1120
  %v1122 = vpop.xlane.xlu0 %1121
  %v1123 = vsel %vm1119, %v1112, -inf
  %1124 = vmax.xlane.f32.xlu0 %v1123
  %v1125 = vpop.xlane.xlu0 %1124
  %v1126 = vsel %vm1119, %v1113, -inf
  %1127 = vmax.xlane.f32.xlu0 %v1126
  %v1128 = vpop.xlane.xlu0 %1127
  %v1129 = vsel %vm1119, %v1114, -inf
  %1130 = vmax.xlane.f32.xlu0 %v1129
  %v1131 = vpop.xlane.xlu0 %1130
  %v1132 = vsel %vm1119, %v1115, -inf
  %1133 = vmax.xlane.f32.xlu0 %v1132
  %v1134 = vpop.xlane.xlu0 %1133
  %v1135 = vsel %vm1119, %v1116, -inf
  %1136 = vmax.xlane.f32.xlu0 %v1135
  %v1137 = vpop.xlane.xlu0 %1136
  %v1138 = vsel %vm1119, %v1117, -inf
  %1139 = vmax.xlane.f32.xlu0 %v1138
  %v1140 = vpop.xlane.xlu0 %1139
  %v1141 = vsel %vm1119, %v1118, -inf
  %1142 = vmax.xlane.f32.xlu0 %v1141
  %v1143 = vpop.xlane.xlu0 %1142
  %v1144 = vsub.f32 %v1111, %v1122
  %v1145 = vsub.f32 %v1112, %v1125
  %v1146 = vsub.f32 %v1113, %v1128
  %v1147 = vsub.f32 %v1114, %v1131
  %v1148 = vsub.f32 %v1115, %v1134
  %v1149 = vsub.f32 %v1116, %v1137
  %v1150 = vsub.f32 %v1117, %v1140
  %v1151 = vsub.f32 %v1118, %v1143
  %v1152 = vmul.f32 %v1144, 1.442695
  %v1153 = vpow.pop %v1152
  %v1154 = vmul.f32 %v1145, 1.442695
  %v1155 = vpow.pop %v1154
  %v1156 = vmul.f32 %v1146, 1.442695
  %v1157 = vpow.pop %v1156
  %v1158 = vmul.f32 %v1147, 1.442695
  %v1159 = vpow.pop %v1158
  %v1160 = vmul.f32 %v1148, 1.442695
  %v1161 = vpow.pop %v1160
  %v1162 = vmul.f32 %v1149, 1.442695
  %v1163 = vpow.pop %v1162
  %v1164 = vmul.f32 %v1150, 1.442695
  %v1165 = vpow.pop %v1164
  %v1166 = vmul.f32 %v1151, 1.442695
  %v1167 = vpow.pop %v1166
  %v1168 = vsel %vm1119, %v1153, 0.0
  %1169 = vadd.xlane.f32.xlu0 %v1168
  %v1170 = vpop.xlane.xlu0 %1169
  %v1171 = vsel %vm1119, %v1155, 0.0
  %1172 = vadd.xlane.f32.xlu0 %v1171
  %v1173 = vpop.xlane.xlu0 %1172
  %v1174 = vsel %vm1119, %v1157, 0.0
  %1175 = vadd.xlane.f32.xlu0 %v1174
  %v1176 = vpop.xlane.xlu0 %1175
  %v1177 = vsel %vm1119, %v1159, 0.0
  %1178 = vadd.xlane.f32.xlu0 %v1177
  %v1179 = vpop.xlane.xlu0 %1178
  %v1180 = vsel %vm1119, %v1161, 0.0
  %1181 = vadd.xlane.f32.xlu0 %v1180
  %v1182 = vpop.xlane.xlu0 %1181
  %v1183 = vsel %vm1119, %v1163, 0.0
  %1184 = vadd.xlane.f32.xlu0 %v1183
  %v1185 = vpop.xlane.xlu0 %1184
  %v1186 = vsel %vm1119, %v1165, 0.0
  %1187 = vadd.xlane.f32.xlu0 %v1186
  %v1188 = vpop.xlane.xlu0 %1187
  %v1189 = vsel %vm1119, %v1167, 0.0
  %1190 = vadd.xlane.f32.xlu0 %v1189
  %v1191 = vpop.xlane.xlu0 %1190
  %v1192 = vrcp.pop %v1170
  %v1193 = vrcp.pop %v1173
  %v1194 = vrcp.pop %v1176
  %v1195 = vrcp.pop %v1179
  %v1196 = vrcp.pop %v1182
  %v1197 = vrcp.pop %v1185
  %v1198 = vrcp.pop %v1188
  %v1199 = vrcp.pop %v1191
  %v1200 = vmul.f32 %v1153, %v1192
  %v1201 = vmul.f32 %v1155, %v1193
  %v1202 = vmul.f32 %v1157, %v1194
  %v1203 = vmul.f32 %v1159, %v1195
  %v1204 = vmul.f32 %v1161, %v1196
  %v1205 = vmul.f32 %v1163, %v1197
  %v1206 = vmul.f32 %v1165, %v1198
  %v1207 = vmul.f32 %v1167, %v1199
  %1208 = vrot.lane.b32.xlu0 %v400, 64
  %v1209 = vpop.permute.xlu0 %1208
  %v1212 = vsel %vm1119, %v1200, 0
  %1214 = vmatprep.subr.mxu0 0.0
  %1215 = vmatpush1.msra.mxu0 %v1209
  %1216 = vmatprep.subr.mxu0 0.0
  %1217 = vmatpush1.msra.mxu0 0.0
  %1218 = vmatprep.subr.mxu0 0.0
  %1219 = vmatpush1.msra.mxu0 0.0
  %1220 = vmatprep.subr.mxu0 0.0
  %1221 = vmatpush1.msra.mxu0 0.0
  %1222 = vmatprep.subr.mxu0 0.0
  %1223 = vmatpush1.msra.mxu0 0.0
  %1224 = vmatprep.subr.mxu0 0.0
  %1225 = vmatpush1.msra.mxu0 0.0
  %1226 = vmatprep.subr.mxu0 0.0
  %1227 = vmatpush1.msra.mxu0 0.0
  %1228 = vmatprep.subr.mxu0 0.0
  %1229 = vmatpush1.msra.mxu0 0.0
  %1230 = vmatprep.subr.mxu0 0.0
  %1231 = vmatpush1.msra.mxu0 0.0
  %1232 = vmatprep.subr.mxu0 0.0
  %1233 = vmatpush1.msra.mxu0 0.0
  %1234 = vmatprep.subr.mxu0 0.0
  %1235 = vmatpush1.msra.mxu0 0.0
  %1236 = vmatprep.subr.mxu0 0.0
  %1237 = vmatpush1.msra.mxu0 0.0
  %1238 = vmatprep.subr.mxu0 0.0
  %1239 = vmatpush1.msra.mxu0 0.0
  %1240 = vmatprep.subr.mxu0 0.0
  %1241 = vmatpush1.msra.mxu0 0.0
  %1242 = vmatprep.subr.mxu0 0.0
  %1243 = vmatpush1.msra.mxu0 0.0
  %1244 = vmatprep.subr.mxu0 0.0
  %1245 = vmatpush1.msra.mxu0 0.0
  %1246 = vmatprep.subr.mxu0 0.0
  %1247 = vmatpush1.msra.mxu0 0.0
  %1248 = vmatprep.subr.mxu0 0.0
  %1249 = vmatpush1.msra.mxu0 0.0
  %1250 = vmatprep.subr.mxu0 0.0
  %1251 = vmatpush1.msra.mxu0 0.0
  %1252 = vmatprep.subr.mxu0 0.0
  %1253 = vmatpush1.msra.mxu0 0.0
  %1254 = vmatprep.subr.mxu0 0.0
  %1255 = vmatpush1.msra.mxu0 0.0
  %1256 = vmatprep.subr.mxu0 0.0
  %1257 = vmatpush1.msra.mxu0 0.0
  %1258 = vmatprep.subr.mxu0 0.0
  %1259 = vmatpush1.msra.mxu0 0.0
  %1260 = vmatprep.subr.mxu0 0.0
  %1261 = vmatpush1.msra.mxu0 0.0
  %1262 = vmatprep.subr.mxu0 0.0
  %1263 = vmatpush1.msra.mxu0 0.0
  %1264 = vmatprep.subr.mxu0 0.0
  %1265 = vmatpush1.msra.mxu0 0.0
  %1266 = vmatprep.subr.mxu0 0.0
  %1267 = vmatpush1.msra.mxu0 0.0
  %1268 = vmatprep.subr.mxu0 0.0
  %1269 = vmatpush1.msra.mxu0 0.0
  %1270 = vmatprep.subr.mxu0 0.0
  %1271 = vmatpush1.msra.mxu0 0.0
  %1272 = vmatprep.subr.mxu0 0.0
  %1273 = vmatpush1.msra.mxu0 0.0
  %1274 = vmatprep.subr.mxu0 0.0
  %1275 = vmatpush1.msra.mxu0 0.0
  %1276 = vmatprep.subr.mxu0 0.0
  %1277 = vmatpush1.msra.mxu0 0.0
  %1278 = vmatprep.mubr.f32.mxu0 0.0
  %1279 = vmatmul.mubr.f32.gmra.mrb[0].mxu0 %v1212
  %v1280 = vpop.f32.mrb[0].mxu0
  %v1281 = vadd.f32 0.0, %v1280
  %v1282 = vpop.f32.mrb[0].mxu0
  %1283 = vdwg.mxu0
  %1284 = vrot.lane.b32.xlu0 %v405, 64
  %v1285 = vpop.permute.xlu0 %1284
  %v1288 = vsel %vm1119, %v1201, 0
  %1290 = vmatprep.subr.mxu0 0.0
  %1291 = vmatpush1.msra.mxu0 %v1285
  %1292 = vmatprep.subr.mxu0 0.0
  %1293 = vmatpush1.msra.mxu0 0.0
  %1294 = vmatprep.subr.mxu0 0.0
  %1295 = vmatpush1.msra.mxu0 0.0
  %1296 = vmatprep.subr.mxu0 0.0
  %1297 = vmatpush1.msra.mxu0 0.0
  %1298 = vmatprep.subr.mxu0 0.0
  %1299 = vmatpush1.msra.mxu0 0.0
  %1300 = vmatprep.subr.mxu0 0.0
  %1301 = vmatpush1.msra.mxu0 0.0
  %1302 = vmatprep.subr.mxu0 0.0
  %1303 = vmatpush1.msra.mxu0 0.0
  %1304 = vmatprep.subr.mxu0 0.0
  %1305 = vmatpush1.msra.mxu0 0.0
  %1306 = vmatprep.subr.mxu0 0.0
  %1307 = vmatpush1.msra.mxu0 0.0
  %1308 = vmatprep.subr.mxu0 0.0
  %1309 = vmatpush1.msra.mxu0 0.0
  %1310 = vmatprep.subr.mxu0 0.0
  %1311 = vmatpush1.msra.mxu0 0.0
  %1312 = vmatprep.subr.mxu0 0.0
  %1313 = vmatpush1.msra.mxu0 0.0
  %1314 = vmatprep.subr.mxu0 0.0
  %1315 = vmatpush1.msra.mxu0 0.0
  %1316 = vmatprep.subr.mxu0 0.0
  %1317 = vmatpush1.msra.mxu0 0.0
  %1318 = vmatprep.subr.mxu0 0.0
  %1319 = vmatpush1.msra.mxu0 0.0
  %1320 = vmatprep.subr.mxu0 0.0
  %1321 = vmatpush1.msra.mxu0 0.0
  %1322 = vmatprep.subr.mxu0 0.0
  %1323 = vmatpush1.msra.mxu0 0.0
  %1324 = vmatprep.subr.mxu0 0.0
  %1325 = vmatpush1.msra.mxu0 0.0
  %1326 = vmatprep.subr.mxu0 0.0
  %1327 = vmatpush1.msra.mxu0 0.0
  %1328 = vmatprep.subr.mxu0 0.0
  %1329 = vmatpush1.msra.mxu0 0.0
  %1330 = vmatprep.subr.mxu0 0.0
  %1331 = vmatpush1.msra.mxu0 0.0
  %1332 = vmatprep.subr.mxu0 0.0
  %1333 = vmatpush1.msra.mxu0 0.0
  %1334 = vmatprep.subr.mxu0 0.0
  %1335 = vmatpush1.msra.mxu0 0.0
  %1336 = vmatprep.subr.mxu0 0.0
  %1337 = vmatpush1.msra.mxu0 0.0
  %1338 = vmatprep.subr.mxu0 0.0
  %1339 = vmatpush1.msra.mxu0 0.0
  %1340 = vmatprep.subr.mxu0 0.0
  %1341 = vmatpush1.msra.mxu0 0.0
  %1342 = vmatprep.subr.mxu0 0.0
  %1343 = vmatpush1.msra.mxu0 0.0
  %1344 = vmatprep.subr.mxu0 0.0
  %1345 = vmatpush1.msra.mxu0 0.0
  %1346 = vmatprep.subr.mxu0 0.0
  %1347 = vmatpush1.msra.mxu0 0.0
  %1348 = vmatprep.subr.mxu0 0.0
  %1349 = vmatpush1.msra.mxu0 0.0
  %1350 = vmatprep.subr.mxu0 0.0
  %1351 = vmatpush1.msra.mxu0 0.0
  %1352 = vmatprep.subr.mxu0 0.0
  %1353 = vmatpush1.msra.mxu0 0.0
  %1354 = vmatprep.mubr.f32.mxu0 0.0
  %1355 = vmatmul.mubr.f32.gmra.mrb[0].mxu0 %v1288
  %v1356 = vpop.f32.mrb[0].mxu0
  %v1357 = vadd.f32 0.0, %v1356
  %v1358 = vpop.f32.mrb[0].mxu0
  %1359 = vdwg.mxu0
  %1360 = vrot.lane.b32.xlu0 %v410, 64
  %v1361 = vpop.permute.xlu0 %1360
  %v1364 = vsel %vm1119, %v1202, 0
  %1366 = vmatprep.subr.mxu0 0.0
  %1367 = vmatpush1.msra.mxu0 %v1361
  %1368 = vmatprep.subr.mxu0 0.0
  %1369 = vmatpush1.msra.mxu0 0.0
  %1370 = vmatprep.subr.mxu0 0.0
  %1371 = vmatpush1.msra.mxu0 0.0
  %1372 = vmatprep.subr.mxu0 0.0
  %1373 = vmatpush1.msra.mxu0 0.0
  %1374 = vmatprep.subr.mxu0 0.0
  %1375 = vmatpush1.msra.mxu0 0.0
  %1376 = vmatprep.subr.mxu0 0.0
  %1377 = vmatpush1.msra.mxu0 0.0
  %1378 = vmatprep.subr.mxu0 0.0
  %1379 = vmatpush1.msra.mxu0 0.0
  %1380 = vmatprep.subr.mxu0 0.0
  %1381 = vmatpush1.msra.mxu0 0.0
  %1382 = vmatprep.subr.mxu0 0.0
  %1383 = vmatpush1.msra.mxu0 0.0
  %1384 = vmatprep.subr.mxu0 0.0
  %1385 = vmatpush1.msra.mxu0 0.0
  %1386 = vmatprep.subr.mxu0 0.0
  %1387 = vmatpush1.msra.mxu0 0.0
  %1388 = vmatprep.subr.mxu0 0.0
  %1389 = vmatpush1.msra.mxu0 0.0
  %1390 = vmatprep.subr.mxu0 0.0
  %1391 = vmatpush1.msra.mxu0 0.0
  %1392 = vmatprep.subr.mxu0 0.0
  %1393 = vmatpush1.msra.mxu0 0.0
  %1394 = vmatprep.subr.mxu0 0.0
  %1395 = vmatpush1.msra.mxu0 0.0
  %1396 = vmatprep.subr.mxu0 0.0
  %1397 = vmatpush1.msra.mxu0 0.0
  %1398 = vmatprep.subr.mxu0 0.0
  %1399 = vmatpush1.msra.mxu0 0.0
  %1400 = vmatprep.subr.mxu0 0.0
  %1401 = vmatpush1.msra.mxu0 0.0
  %1402 = vmatprep.subr.mxu0 0.0
  %1403 = vmatpush1.msra.mxu0 0.0
  %1404 = vmatprep.subr.mxu0 0.0
  %1405 = vmatpush1.msra.mxu0 0.0
  %1406 = vmatprep.subr.mxu0 0.0
  %1407 = vmatpush1.msra.mxu0 0.0
  %1408 = vmatprep.subr.mxu0 0.0
  %1409 = vmatpush1.msra.mxu0 0.0
  %1410 = vmatprep.subr.mxu0 0.0
  %1411 = vmatpush1.msra.mxu0 0.0
  %1412 = vmatprep.subr.mxu0 0.0
  %1413 = vmatpush1.msra.mxu0 0.0
  %1414 = vmatprep.subr.mxu0 0.0
  %1415 = vmatpush1.msra.mxu0 0.0
  %1416 = vmatprep.subr.mxu0 0.0
  %1417 = vmatpush1.msra.mxu0 0.0
  %1418 = vmatprep.subr.mxu0 0.0
  %1419 = vmatpush1.msra.mxu0 0.0
  %1420 = vmatprep.subr.mxu0 0.0
  %1421 = vmatpush1.msra.mxu0 0.0
  %1422 = vmatprep.subr.mxu0 0.0
  %1423 = vmatpush1.msra.mxu0 0.0
  %1424 = vmatprep.subr.mxu0 0.0
  %1425 = vmatpush1.msra.mxu0 0.0
  %1426 = vmatprep.subr.mxu0 0.0
  %1427 = vmatpush1.msra.mxu0 0.0
  %1428 = vmatprep.subr.mxu0 0.0
  %1429 = vmatpush1.msra.mxu0 0.0
  %1430 = vmatprep.mubr.f32.mxu0 0.0
  %1431 = vmatmul.mubr.f32.gmra.mrb[0].mxu0 %v1364
  %v1432 = vpop.f32.mrb[0].mxu0
  %v1433 = vadd.f32 0.0, %v1432
  %v1434 = vpop.f32.mrb[0].mxu0
  %1435 = vdwg.mxu0
  %1436 = vrot.lane.b32.xlu0 %v415, 64
  %v1437 = vpop.permute.xlu0 %1436
  %v1440 = vsel %vm1119, %v1203, 0
  %1442 = vmatprep.subr.mxu0 0.0
  %1443 = vmatpush1.msra.mxu0 %v1437
  %1444 = vmatprep.subr.mxu0 0.0
  %1445 = vmatpush1.msra.mxu0 0.0
  %1446 = vmatprep.subr.mxu0 0.0
  %1447 = vmatpush1.msra.mxu0 0.0
  %1448 = vmatprep.subr.mxu0 0.0
  %1449 = vmatpush1.msra.mxu0 0.0
  %1450 = vmatprep.subr.mxu0 0.0
  %1451 = vmatpush1.msra.mxu0 0.0
  %1452 = vmatprep.subr.mxu0 0.0
  %1453 = vmatpush1.msra.mxu0 0.0
  %1454 = vmatprep.subr.mxu0 0.0
  %1455 = vmatpush1.msra.mxu0 0.0
  %1456 = vmatprep.subr.mxu0 0.0
  %1457 = vmatpush1.msra.mxu0 0.0
  %1458 = vmatprep.subr.mxu0 0.0
  %1459 = vmatpush1.msra.mxu0 0.0
  %1460 = vmatprep.subr.mxu0 0.0
  %1461 = vmatpush1.msra.mxu0 0.0
  %1462 = vmatprep.subr.mxu0 0.0
  %1463 = vmatpush1.msra.mxu0 0.0
  %1464 = vmatprep.subr.mxu0 0.0
  %1465 = vmatpush1.msra.mxu0 0.0
  %1466 = vmatprep.subr.mxu0 0.0
  %1467 = vmatpush1.msra.mxu0 0.0
  %1468 = vmatprep.subr.mxu0 0.0
  %1469 = vmatpush1.msra.mxu0 0.0
  %1470 = vmatprep.subr.mxu0 0.0
  %1471 = vmatpush1.msra.mxu0 0.0
  %1472 = vmatprep.subr.mxu0 0.0
  %1473 = vmatpush1.msra.mxu0 0.0
  %1474 = vmatprep.subr.mxu0 0.0
  %1475 = vmatpush1.msra.mxu0 0.0
  %1476 = vmatprep.subr.mxu0 0.0
  %1477 = vmatpush1.msra.mxu0 0.0
  %1478 = vmatprep.subr.mxu0 0.0
  %1479 = vmatpush1.msra.mxu0 0.0
  %1480 = vmatprep.subr.mxu0 0.0
  %1481 = vmatpush1.msra.mxu0 0.0
  %1482 = vmatprep.subr.mxu0 0.0
  %1483 = vmatpush1.msra.mxu0 0.0
  %1484 = vmatprep.subr.mxu0 0.0
  %1485 = vmatpush1.msra.mxu0 0.0
  %1486 = vmatprep.subr.mxu0 0.0
  %1487 = vmatpush1.msra.mxu0 0.0
  %1488 = vmatprep.subr.mxu0 0.0
  %1489 = vmatpush1.msra.mxu0 0.0
  %1490 = vmatprep.subr.mxu0 0.0
  %1491 = vmatpush1.msra.mxu0 0.0
  %1492 = vmatprep.subr.mxu0 0.0
  %1493 = vmatpush1.msra.mxu0 0.0
  %1494 = vmatprep.subr.mxu0 0.0
  %1495 = vmatpush1.msra.mxu0 0.0
  %1496 = vmatprep.subr.mxu0 0.0
  %1497 = vmatpush1.msra.mxu0 0.0
  %1498 = vmatprep.subr.mxu0 0.0
  %1499 = vmatpush1.msra.mxu0 0.0
  %1500 = vmatprep.subr.mxu0 0.0
  %1501 = vmatpush1.msra.mxu0 0.0
  %1502 = vmatprep.subr.mxu0 0.0
  %1503 = vmatpush1.msra.mxu0 0.0
  %1504 = vmatprep.subr.mxu0 0.0
  %1505 = vmatpush1.msra.mxu0 0.0
  %1506 = vmatprep.mubr.f32.mxu0 0.0
  %1507 = vmatmul.mubr.f32.gmra.mrb[0].mxu0 %v1440
  %v1508 = vpop.f32.mrb[0].mxu0
  %v1509 = vadd.f32 0.0, %v1508
  %v1510 = vpop.f32.mrb[0].mxu0
  %1511 = vdwg.mxu0
  %1512 = vrot.lane.b32.xlu0 %v420, 64
  %v1513 = vpop.permute.xlu0 %1512
  %v1516 = vsel %vm1119, %v1204, 0
  %1518 = vmatprep.subr.mxu0 0.0
  %1519 = vmatpush1.msra.mxu0 %v1513
  %1520 = vmatprep.subr.mxu0 0.0
  %1521 = vmatpush1.msra.mxu0 0.0
  %1522 = vmatprep.subr.mxu0 0.0
  %1523 = vmatpush1.msra.mxu0 0.0
  %1524 = vmatprep.subr.mxu0 0.0
  %1525 = vmatpush1.msra.mxu0 0.0
  %1526 = vmatprep.subr.mxu0 0.0
  %1527 = vmatpush1.msra.mxu0 0.0
  %1528 = vmatprep.subr.mxu0 0.0
  %1529 = vmatpush1.msra.mxu0 0.0
  %1530 = vmatprep.subr.mxu0 0.0
  %1531 = vmatpush1.msra.mxu0 0.0
  %1532 = vmatprep.subr.mxu0 0.0
  %1533 = vmatpush1.msra.mxu0 0.0
  %1534 = vmatprep.subr.mxu0 0.0
  %1535 = vmatpush1.msra.mxu0 0.0
  %1536 = vmatprep.subr.mxu0 0.0
  %1537 = vmatpush1.msra.mxu0 0.0
  %1538 = vmatprep.subr.mxu0 0.0
  %1539 = vmatpush1.msra.mxu0 0.0
  %1540 = vmatprep.subr.mxu0 0.0
  %1541 = vmatpush1.msra.mxu0 0.0
  %1542 = vmatprep.subr.mxu0 0.0
  %1543 = vmatpush1.msra.mxu0 0.0
  %1544 = vmatprep.subr.mxu0 0.0
  %1545 = vmatpush1.msra.mxu0 0.0
  %1546 = vmatprep.subr.mxu0 0.0
  %1547 = vmatpush1.msra.mxu0 0.0
  %1548 = vmatprep.subr.mxu0 0.0
  %1549 = vmatpush1.msra.mxu0 0.0
  %1550 = vmatprep.subr.mxu0 0.0
  %1551 = vmatpush1.msra.mxu0 0.0
  %1552 = vmatprep.subr.mxu0 0.0
  %1553 = vmatpush1.msra.mxu0 0.0
  %1554 = vmatprep.subr.mxu0 0.0
  %1555 = vmatpush1.msra.mxu0 0.0
  %1556 = vmatprep.subr.mxu0 0.0
  %1557 = vmatpush1.msra.mxu0 0.0
  %1558 = vmatprep.subr.mxu0 0.0
  %1559 = vmatpush1.msra.mxu0 0.0
  %1560 = vmatprep.subr.mxu0 0.0
  %1561 = vmatpush1.msra.mxu0 0.0
  %1562 = vmatprep.subr.mxu0 0.0
  %1563 = vmatpush1.msra.mxu0 0.0
  %1564 = vmatprep.subr.mxu0 0.0
  %1565 = vmatpush1.msra.mxu0 0.0
  %1566 = vmatprep.subr.mxu0 0.0
  %1567 = vmatpush1.msra.mxu0 0.0
  %1568 = vmatprep.subr.mxu0 0.0
  %1569 = vmatpush1.msra.mxu0 0.0
  %1570 = vmatprep.subr.mxu0 0.0
  %1571 = vmatpush1.msra.mxu0 0.0
  %1572 = vmatprep.subr.mxu0 0.0
  %1573 = vmatpush1.msra.mxu0 0.0
  %1574 = vmatprep.subr.mxu0 0.0
  %1575 = vmatpush1.msra.mxu0 0.0
  %1576 = vmatprep.subr.mxu0 0.0
  %1577 = vmatpush1.msra.mxu0 0.0
  %1578 = vmatprep.subr.mxu0 0.0
  %1579 = vmatpush1.msra.mxu0 0.0
  %1580 = vmatprep.subr.mxu0 0.0
  %1581 = vmatpush1.msra.mxu0 0.0
  %1582 = vmatprep.mubr.f32.mxu0 0.0
  %1583 = vmatmul.mubr.f32.gmra.mrb[0].mxu0 %v1516
  %v1584 = vpop.f32.mrb[0].mxu0
  %v1585 = vadd.f32 0.0, %v1584
  %v1586 = vpop.f32.mrb[0].mxu0
  %1587 = vdwg.mxu0
  %1588 = vrot.lane.b32.xlu0 %v425, 64
  %v1589 = vpop.permute.xlu0 %1588
  %v1592 = vsel %vm1119, %v1205, 0
  %1594 = vmatprep.subr.mxu0 0.0
  %1595 = vmatpush1.msra.mxu0 %v1589
  %1596 = vmatprep.subr.mxu0 0.0
  %1597 = vmatpush1.msra.mxu0 0.0
  %1598 = vmatprep.subr.mxu0 0.0
  %1599 = vmatpush1.msra.mxu0 0.0
  %1600 = vmatprep.subr.mxu0 0.0
  %1601 = vmatpush1.msra.mxu0 0.0
  %1602 = vmatprep.subr.mxu0 0.0
  %1603 = vmatpush1.msra.mxu0 0.0
  %1604 = vmatprep.subr.mxu0 0.0
  %1605 = vmatpush1.msra.mxu0 0.0
  %1606 = vmatprep.subr.mxu0 0.0
  %1607 = vmatpush1.msra.mxu0 0.0
  %1608 = vmatprep.subr.mxu0 0.0
  %1609 = vmatpush1.msra.mxu0 0.0
  %1610 = vmatprep.subr.mxu0 0.0
  %1611 = vmatpush1.msra.mxu0 0.0
  %1612 = vmatprep.subr.mxu0 0.0
  %1613 = vmatpush1.msra.mxu0 0.0
  %1614 = vmatprep.subr.mxu0 0.0
  %1615 = vmatpush1.msra.mxu0 0.0
  %1616 = vmatprep.subr.mxu0 0.0
  %1617 = vmatpush1.msra.mxu0 0.0
  %1618 = vmatprep.subr.mxu0 0.0
  %1619 = vmatpush1.msra.mxu0 0.0
  %1620 = vmatprep.subr.mxu0 0.0
  %1621 = vmatpush1.msra.mxu0 0.0
  %1622 = vmatprep.subr.mxu0 0.0
  %1623 = vmatpush1.msra.mxu0 0.0
  %1624 = vmatprep.subr.mxu0 0.0
  %1625 = vmatpush1.msra.mxu0 0.0
  %1626 = vmatprep.subr.mxu0 0.0
  %1627 = vmatpush1.msra.mxu0 0.0
  %1628 = vmatprep.subr.mxu0 0.0
  %1629 = vmatpush1.msra.mxu0 0.0
  %1630 = vmatprep.subr.mxu0 0.0
  %1631 = vmatpush1.msra.mxu0 0.0
  %1632 = vmatprep.subr.mxu0 0.0
  %1633 = vmatpush1.msra.mxu0 0.0
  %1634 = vmatprep.subr.mxu0 0.0
  %1635 = vmatpush1.msra.mxu0 0.0
  %1636 = vmatprep.subr.mxu0 0.0
  %1637 = vmatpush1.msra.mxu0 0.0
  %1638 = vmatprep.subr.mxu0 0.0
  %1639 = vmatpush1.msra.mxu0 0.0
  %1640 = vmatprep.subr.mxu0 0.0
  %1641 = vmatpush1.msra.mxu0 0.0
  %1642 = vmatprep.subr.mxu0 0.0
  %1643 = vmatpush1.msra.mxu0 0.0
  %1644 = vmatprep.subr.mxu0 0.0
  %1645 = vmatpush1.msra.mxu0 0.0
  %1646 = vmatprep.subr.mxu0 0.0
  %1647 = vmatpush1.msra.mxu0 0.0
  %1648 = vmatprep.subr.mxu0 0.0
  %1649 = vmatpush1.msra.mxu0 0.0
  %1650 = vmatprep.subr.mxu0 0.0
  %1651 = vmatpush1.msra.mxu0 0.0
  %1652 = vmatprep.subr.mxu0 0.0
  %1653 = vmatpush1.msra.mxu0 0.0
  %1654 = vmatprep.subr.mxu0 0.0
  %1655 = vmatpush1.msra.mxu0 0.0
  %1656 = vmatprep.subr.mxu0 0.0
  %1657 = vmatpush1.msra.mxu0 0.0
  %1658 = vmatprep.mubr.f32.mxu0 0.0
  %1659 = vmatmul.mubr.f32.gmra.mrb[0].mxu0 %v1592
  %v1660 = vpop.f32.mrb[0].mxu0
  %v1661 = vadd.f32 0.0, %v1660
  %v1662 = vpop.f32.mrb[0].mxu0
  %1663 = vdwg.mxu0
  %1664 = vrot.lane.b32.xlu0 %v430, 64
  %v1665 = vpop.permute.xlu0 %1664
  %v1668 = vsel %vm1119, %v1206, 0
  %1670 = vmatprep.subr.mxu0 0.0
  %1671 = vmatpush1.msra.mxu0 %v1665
  %1672 = vmatprep.subr.mxu0 0.0
  %1673 = vmatpush1.msra.mxu0 0.0
  %1674 = vmatprep.subr.mxu0 0.0
  %1675 = vmatpush1.msra.mxu0 0.0
  %1676 = vmatprep.subr.mxu0 0.0
  %1677 = vmatpush1.msra.mxu0 0.0
  %1678 = vmatprep.subr.mxu0 0.0
  %1679 = vmatpush1.msra.mxu0 0.0
  %1680 = vmatprep.subr.mxu0 0.0
  %1681 = vmatpush1.msra.mxu0 0.0
  %1682 = vmatprep.subr.mxu0 0.0
  %1683 = vmatpush1.msra.mxu0 0.0
  %1684 = vmatprep.subr.mxu0 0.0
  %1685 = vmatpush1.msra.mxu0 0.0
  %1686 = vmatprep.subr.mxu0 0.0
  %1687 = vmatpush1.msra.mxu0 0.0
  %1688 = vmatprep.subr.mxu0 0.0
  %1689 = vmatpush1.msra.mxu0 0.0
  %1690 = vmatprep.subr.mxu0 0.0
  %1691 = vmatpush1.msra.mxu0 0.0
  %1692 = vmatprep.subr.mxu0 0.0
  %1693 = vmatpush1.msra.mxu0 0.0
  %1694 = vmatprep.subr.mxu0 0.0
  %1695 = vmatpush1.msra.mxu0 0.0
  %1696 = vmatprep.subr.mxu0 0.0
  %1697 = vmatpush1.msra.mxu0 0.0
  %1698 = vmatprep.subr.mxu0 0.0
  %1699 = vmatpush1.msra.mxu0 0.0
  %1700 = vmatprep.subr.mxu0 0.0
  %1701 = vmatpush1.msra.mxu0 0.0
  %1702 = vmatprep.subr.mxu0 0.0
  %1703 = vmatpush1.msra.mxu0 0.0
  %1704 = vmatprep.subr.mxu0 0.0
  %1705 = vmatpush1.msra.mxu0 0.0
  %1706 = vmatprep.subr.mxu0 0.0
  %1707 = vmatpush1.msra.mxu0 0.0
  %1708 = vmatprep.subr.mxu0 0.0
  %1709 = vmatpush1.msra.mxu0 0.0
  %1710 = vmatprep.subr.mxu0 0.0
  %1711 = vmatpush1.msra.mxu0 0.0
  %1712 = vmatprep.subr.mxu0 0.0
  %1713 = vmatpush1.msra.mxu0 0.0
  %1714 = vmatprep.subr.mxu0 0.0
  %1715 = vmatpush1.msra.mxu0 0.0
  %1716 = vmatprep.subr.mxu0 0.0
  %1717 = vmatpush1.msra.mxu0 0.0
  %1718 = vmatprep.subr.mxu0 0.0
  %1719 = vmatpush1.msra.mxu0 0.0
  %1720 = vmatprep.subr.mxu0 0.0
  %1721 = vmatpush1.msra.mxu0 0.0
  %1722 = vmatprep.subr.mxu0 0.0
  %1723 = vmatpush1.msra.mxu0 0.0
  %1724 = vmatprep.subr.mxu0 0.0
  %1725 = vmatpush1.msra.mxu0 0.0
  %1726 = vmatprep.subr.mxu0 0.0
  %1727 = vmatpush1.msra.mxu0 0.0
  %1728 = vmatprep.subr.mxu0 0.0
  %1729 = vmatpush1.msra.mxu0 0.0
  %1730 = vmatprep.subr.mxu0 0.0
  %1731 = vmatpush1.msra.mxu0 0.0
  %1732 = vmatprep.subr.mxu0 0.0
  %1733 = vmatpush1.msra.mxu0 0.0
  %1734 = vmatprep.mubr.f32.mxu0 0.0
  %1735 = vmatmul.mubr.f32.gmra.mrb[0].mxu0 %v1668
  %v1736 = vpop.f32.mrb[0].mxu0
  %v1737 = vadd.f32 0.0, %v1736
  %v1738 = vpop.f32.mrb[0].mxu0
  %1739 = vdwg.mxu0
  %1740 = vrot.lane.b32.xlu0 %v435, 64
  %v1741 = vpop.permute.xlu0 %1740
  %v1744 = vsel %vm1119, %v1207, 0
  %1746 = vmatprep.subr.mxu0 0.0
  %1747 = vmatpush1.msra.mxu0 %v1741
  %1748 = vmatprep.subr.mxu0 0.0
  %1749 = vmatpush1.msra.mxu0 0.0
  %1750 = vmatprep.subr.mxu0 0.0
  %1751 = vmatpush1.msra.mxu0 0.0
  %1752 = vmatprep.subr.mxu0 0.0
  %1753 = vmatpush1.msra.mxu0 0.0
  %1754 = vmatprep.subr.mxu0 0.0
  %1755 = vmatpush1.msra.mxu0 0.0
  %1756 = vmatprep.subr.mxu0 0.0
  %1757 = vmatpush1.msra.mxu0 0.0
  %1758 = vmatprep.subr.mxu0 0.0
  %1759 = vmatpush1.msra.mxu0 0.0
  %1760 = vmatprep.subr.mxu0 0.0
  %1761 = vmatpush1.msra.mxu0 0.0
  %1762 = vmatprep.subr.mxu0 0.0
  %1763 = vmatpush1.msra.mxu0 0.0
  %1764 = vmatprep.subr.mxu0 0.0
  %1765 = vmatpush1.msra.mxu0 0.0
  %1766 = vmatprep.subr.mxu0 0.0
  %1767 = vmatpush1.msra.mxu0 0.0
  %1768 = vmatprep.subr.mxu0 0.0
  %1769 = vmatpush1.msra.mxu0 0.0
  %1770 = vmatprep.subr.mxu0 0.0
  %1771 = vmatpush1.msra.mxu0 0.0
  %1772 = vmatprep.subr.mxu0 0.0
  %1773 = vmatpush1.msra.mxu0 0.0
  %1774 = vmatprep.subr.mxu0 0.0
  %1775 = vmatpush1.msra.mxu0 0.0
  %1776 = vmatprep.subr.mxu0 0.0
  %1777 = vmatpush1.msra.mxu0 0.0
  %1778 = vmatprep.subr.mxu0 0.0
  %1779 = vmatpush1.msra.mxu0 0.0
  %1780 = vmatprep.subr.mxu0 0.0
  %1781 = vmatpush1.msra.mxu0 0.0
  %1782 = vmatprep.subr.mxu0 0.0
  %1783 = vmatpush1.msra.mxu0 0.0
  %1784 = vmatprep.subr.mxu0 0.0
  %1785 = vmatpush1.msra.mxu0 0.0
  %1786 = vmatprep.subr.mxu0 0.0
  %1787 = vmatpush1.msra.mxu0 0.0
  %1788 = vmatprep.subr.mxu0 0.0
  %1789 = vmatpush1.msra.mxu0 0.0
  %1790 = vmatprep.subr.mxu0 0.0
  %1791 = vmatpush1.msra.mxu0 0.0
  %1792 = vmatprep.subr.mxu0 0.0
  %1793 = vmatpush1.msra.mxu0 0.0
  %1794 = vmatprep.subr.mxu0 0.0
  %1795 = vmatpush1.msra.mxu0 0.0
  %1796 = vmatprep.subr.mxu0 0.0
  %1797 = vmatpush1.msra.mxu0 0.0
  %1798 = vmatprep.subr.mxu0 0.0
  %1799 = vmatpush1.msra.mxu0 0.0
  %1800 = vmatprep.subr.mxu0 0.0
  %1801 = vmatpush1.msra.mxu0 0.0
  %1802 = vmatprep.subr.mxu0 0.0
  %1803 = vmatpush1.msra.mxu0 0.0
  %1804 = vmatprep.subr.mxu0 0.0
  %1805 = vmatpush1.msra.mxu0 0.0
  %1806 = vmatprep.subr.mxu0 0.0
  %1807 = vmatpush1.msra.mxu0 0.0
  %1808 = vmatprep.subr.mxu0 0.0
  %1809 = vmatpush1.msra.mxu0 0.0
  %1810 = vmatprep.mubr.f32.mxu0 0.0
  %1811 = vmatmul.mubr.f32.gmra.mrb[0].mxu0 %v1744
  %v1812 = vpop.f32.mrb[0].mxu0
  %v1813 = vadd.f32 0.0, %v1812
  %v1814 = vpop.f32.mrb[0].mxu0
  %1815 = vdwg.mxu0
  %1816 = vrot.lane.b32.xlu0 %v400, 112
  %v1817 = vpop.permute.xlu0 %1816
  %1818 = vrot.lane.b32.xlu0 %v400, 80
  %v1819 = vpop.permute.xlu0 %1818
  %v1820 = vsel %vm441, %v1817, 0
  %v1822 = vsel %vm441, %v1819, 0
  %1824 = vmatprep.subr.mxu0 0.0
  %1825 = vmatpush1.xpose.msra.mxu0 %v1822
  %1826 = vmatprep.subr.mxu0 0.0
  %1827 = vmatpush1.xpose.msra.mxu0 0.0
  %1828 = vmatprep.subr.mxu0 0.0
  %1829 = vmatpush1.xpose.msra.mxu0 0.0
  %1830 = vmatprep.subr.mxu0 0.0
  %1831 = vmatpush1.xpose.msra.mxu0 0.0
  %1832 = vmatprep.subr.mxu0 0.0
  %1833 = vmatpush1.xpose.msra.mxu0 0.0
  %1834 = vmatprep.subr.mxu0 0.0
  %1835 = vmatpush1.xpose.msra.mxu0 0.0
  %1836 = vmatprep.subr.mxu0 0.0
  %1837 = vmatpush1.xpose.msra.mxu0 0.0
  %1838 = vmatprep.subr.mxu0 0.0
  %1839 = vmatpush1.xpose.msra.mxu0 0.0
  %1840 = vmatprep.subr.mxu0 0.0
  %1841 = vmatpush1.xpose.msra.mxu0 0.0
  %1842 = vmatprep.subr.mxu0 0.0
  %1843 = vmatpush1.xpose.msra.mxu0 0.0
  %1844 = vmatprep.subr.mxu0 0.0
  %1845 = vmatpush1.xpose.msra.mxu0 0.0
  %1846 = vmatprep.subr.mxu0 0.0
  %1847 = vmatpush1.xpose.msra.mxu0 0.0
  %1848 = vmatprep.subr.mxu0 0.0
  %1849 = vmatpush1.xpose.msra.mxu0 0.0
  %1850 = vmatprep.subr.mxu0 0.0
  %1851 = vmatpush1.xpose.msra.mxu0 0.0
  %1852 = vmatprep.subr.mxu0 0.0
  %1853 = vmatpush1.xpose.msra.mxu0 0.0
  %1854 = vmatprep.subr.mxu0 0.0
  %1855 = vmatpush1.xpose.msra.mxu0 0.0
  %1856 = vmatprep.subr.mxu0 0.0
  %1857 = vmatpush1.xpose.msra.mxu0 0.0
  %1858 = vmatprep.subr.mxu0 0.0
  %1859 = vmatpush1.xpose.msra.mxu0 0.0
  %1860 = vmatprep.subr.mxu0 0.0
  %1861 = vmatpush1.xpose.msra.mxu0 0.0
  %1862 = vmatprep.subr.mxu0 0.0
  %1863 = vmatpush1.xpose.msra.mxu0 0.0
  %1864 = vmatprep.subr.mxu0 0.0
  %1865 = vmatpush1.xpose.msra.mxu0 0.0
  %1866 = vmatprep.subr.mxu0 0.0
  %1867 = vmatpush1.xpose.msra.mxu0 0.0
  %1868 = vmatprep.subr.mxu0 0.0
  %1869 = vmatpush1.xpose.msra.mxu0 0.0
  %1870 = vmatprep.subr.mxu0 0.0
  %1871 = vmatpush1.xpose.msra.mxu0 0.0
  %1872 = vmatprep.subr.mxu0 0.0
  %1873 = vmatpush1.xpose.msra.mxu0 0.0
  %1874 = vmatprep.subr.mxu0 0.0
  %1875 = vmatpush1.xpose.msra.mxu0 0.0
  %1876 = vmatprep.subr.mxu0 0.0
  %1877 = vmatpush1.xpose.msra.mxu0 0.0
  %1878 = vmatprep.subr.mxu0 0.0
  %1879 = vmatpush1.xpose.msra.mxu0 0.0
  %1880 = vmatprep.subr.mxu0 0.0
  %1881 = vmatpush1.xpose.msra.mxu0 0.0
  %1882 = vmatprep.subr.mxu0 0.0
  %1883 = vmatpush1.xpose.msra.mxu0 0.0
  %1884 = vmatprep.subr.mxu0 0.0
  %1885 = vmatpush1.xpose.msra.mxu0 0.0
  %1886 = vmatprep.subr.mxu0 0.0
  %1887 = vmatpush1.xpose.msra.mxu0 0.0
  %1888 = vmatprep.mubr.f32.mxu0 0.0
  %1889 = vmatmul.mubr.f32.gmra.mrb[0].mxu0 %v1820
  %v1890 = vpop.f32.mrb[0].mxu0
  %v1891 = vadd.f32 0.0, %v1890
  %v1892 = vpop.f32.mrb[0].mxu0
  %1893 = vdwg.mxu0
  %1894 = vrot.lane.b32.xlu0 %v405, 112
  %v1895 = vpop.permute.xlu0 %1894
  %1896 = vrot.lane.b32.xlu0 %v405, 80
  %v1897 = vpop.permute.xlu0 %1896
  %v1898 = vsel %vm441, %v1895, 0
  %v1900 = vsel %vm441, %v1897, 0
  %1902 = vmatprep.subr.mxu0 0.0
  %1903 = vmatpush1.xpose.msra.mxu0 %v1900
  %1904 = vmatprep.subr.mxu0 0.0
  %1905 = vmatpush1.xpose.msra.mxu0 0.0
  %1906 = vmatprep.subr.mxu0 0.0
  %1907 = vmatpush1.xpose.msra.mxu0 0.0
  %1908 = vmatprep.subr.mxu0 0.0
  %1909 = vmatpush1.xpose.msra.mxu0 0.0
  %1910 = vmatprep.subr.mxu0 0.0
  %1911 = vmatpush1.xpose.msra.mxu0 0.0
  %1912 = vmatprep.subr.mxu0 0.0
  %1913 = vmatpush1.xpose.msra.mxu0 0.0
  %1914 = vmatprep.subr.mxu0 0.0
  %1915 = vmatpush1.xpose.msra.mxu0 0.0
  %1916 = vmatprep.subr.mxu0 0.0
  %1917 = vmatpush1.xpose.msra.mxu0 0.0
  %1918 = vmatprep.subr.mxu0 0.0
  %1919 = vmatpush1.xpose.msra.mxu0 0.0
  %1920 = vmatprep.subr.mxu0 0.0
  %1921 = vmatpush1.xpose.msra.mxu0 0.0
  %1922 = vmatprep.subr.mxu0 0.0
  %1923 = vmatpush1.xpose.msra.mxu0 0.0
  %1924 = vmatprep.subr.mxu0 0.0
  %1925 = vmatpush1.xpose.msra.mxu0 0.0
  %1926 = vmatprep.subr.mxu0 0.0
  %1927 = vmatpush1.xpose.msra.mxu0 0.0
  %1928 = vmatprep.subr.mxu0 0.0
  %1929 = vmatpush1.xpose.msra.mxu0 0.0
  %1930 = vmatprep.subr.mxu0 0.0
  %1931 = vmatpush1.xpose.msra.mxu0 0.0
  %1932 = vmatprep.subr.mxu0 0.0
  %1933 = vmatpush1.xpose.msra.mxu0 0.0
  %1934 = vmatprep.subr.mxu0 0.0
  %1935 = vmatpush1.xpose.msra.mxu0 0.0
  %1936 = vmatprep.subr.mxu0 0.0
  %1937 = vmatpush1.xpose.msra.mxu0 0.0
  %1938 = vmatprep.subr.mxu0 0.0
  %1939 = vmatpush1.xpose.msra.mxu0 0.0
  %1940 = vmatprep.subr.mxu0 0.0
  %1941 = vmatpush1.xpose.msra.mxu0 0.0
  %1942 = vmatprep.subr.mxu0 0.0
  %1943 = vmatpush1.xpose.msra.mxu0 0.0
  %1944 = vmatprep.subr.mxu0 0.0
  %1945 = vmatpush1.xpose.msra.mxu0 0.0
  %1946 = vmatprep.subr.mxu0 0.0
  %1947 = vmatpush1.xpose.msra.mxu0 0.0
  %1948 = vmatprep.subr.mxu0 0.0
  %1949 = vmatpush1.xpose.msra.mxu0 0.0
  %1950 = vmatprep.subr.mxu0 0.0
  %1951 = vmatpush1.xpose.msra.mxu0 0.0
  %1952 = vmatprep.subr.mxu0 0.0
  %1953 = vmatpush1.xpose.msra.mxu0 0.0
  %1954 = vmatprep.subr.mxu0 0.0
  %1955 = vmatpush1.xpose.msra.mxu0 0.0
  %1956 = vmatprep.subr.mxu0 0.0
  %1957 = vmatpush1.xpose.msra.mxu0 0.0
  %1958 = vmatprep.subr.mxu0 0.0
  %1959 = vmatpush1.xpose.msra.mxu0 0.0
  %1960 = vmatprep.subr.mxu0 0.0
  %1961 = vmatpush1.xpose.msra.mxu0 0.0
  %1962 = vmatprep.subr.mxu0 0.0
  %1963 = vmatpush1.xpose.msra.mxu0 0.0
  %1964 = vmatprep.subr.mxu0 0.0
  %1965 = vmatpush1.xpose.msra.mxu0 0.0
  %1966 = vmatprep.mubr.f32.mxu0 0.0
  %1967 = vmatmul.mubr.f32.gmra.mrb[0].mxu0 %v1898
  %v1968 = vpop.f32.mrb[0].mxu0
  %v1969 = vadd.f32 0.0, %v1968
  %v1970 = vpop.f32.mrb[0].mxu0
  %1971 = vdwg.mxu0
  %1972 = vrot.lane.b32.xlu0 %v410, 112
  %v1973 = vpop.permute.xlu0 %1972
  %1974 = vrot.lane.b32.xlu0 %v410, 80
  %v1975 = vpop.permute.xlu0 %1974
  %v1976 = vsel %vm441, %v1973, 0
  %v1978 = vsel %vm441, %v1975, 0
  %1980 = vmatprep.subr.mxu0 0.0
  %1981 = vmatpush1.xpose.msra.mxu0 %v1978
  %1982 = vmatprep.subr.mxu0 0.0
  %1983 = vmatpush1.xpose.msra.mxu0 0.0
  %1984 = vmatprep.subr.mxu0 0.0
  %1985 = vmatpush1.xpose.msra.mxu0 0.0
  %1986 = vmatprep.subr.mxu0 0.0
  %1987 = vmatpush1.xpose.msra.mxu0 0.0
  %1988 = vmatprep.subr.mxu0 0.0
  %1989 = vmatpush1.xpose.msra.mxu0 0.0
  %1990 = vmatprep.subr.mxu0 0.0
  %1991 = vmatpush1.xpose.msra.mxu0 0.0
  %1992 = vmatprep.subr.mxu0 0.0
  %1993 = vmatpush1.xpose.msra.mxu0 0.0
  %1994 = vmatprep.subr.mxu0 0.0
  %1995 = vmatpush1.xpose.msra.mxu0 0.0
  %1996 = vmatprep.subr.mxu0 0.0
  %1997 = vmatpush1.xpose.msra.mxu0 0.0
  %1998 = vmatprep.subr.mxu0 0.0
  %1999 = vmatpush1.xpose.msra.mxu0 0.0
  %2000 = vmatprep.subr.mxu0 0.0
  %2001 = vmatpush1.xpose.msra.mxu0 0.0
  %2002 = vmatprep.subr.mxu0 0.0
  %2003 = vmatpush1.xpose.msra.mxu0 0.0
  %2004 = vmatprep.subr.mxu0 0.0
  %2005 = vmatpush1.xpose.msra.mxu0 0.0
  %2006 = vmatprep.subr.mxu0 0.0
  %2007 = vmatpush1.xpose.msra.mxu0 0.0
  %2008 = vmatprep.subr.mxu0 0.0
  %2009 = vmatpush1.xpose.msra.mxu0 0.0
  %2010 = vmatprep.subr.mxu0 0.0
  %2011 = vmatpush1.xpose.msra.mxu0 0.0
  %2012 = vmatprep.subr.mxu0 0.0
  %2013 = vmatpush1.xpose.msra.mxu0 0.0
  %2014 = vmatprep.subr.mxu0 0.0
  %2015 = vmatpush1.xpose.msra.mxu0 0.0
  %2016 = vmatprep.subr.mxu0 0.0
  %2017 = vmatpush1.xpose.msra.mxu0 0.0
  %2018 = vmatprep.subr.mxu0 0.0
  %2019 = vmatpush1.xpose.msra.mxu0 0.0
  %2020 = vmatprep.subr.mxu0 0.0
  %2021 = vmatpush1.xpose.msra.mxu0 0.0
  %2022 = vmatprep.subr.mxu0 0.0
  %2023 = vmatpush1.xpose.msra.mxu0 0.0
  %2024 = vmatprep.subr.mxu0 0.0
  %2025 = vmatpush1.xpose.msra.mxu0 0.0
  %2026 = vmatprep.subr.mxu0 0.0
  %2027 = vmatpush1.xpose.msra.mxu0 0.0
  %2028 = vmatprep.subr.mxu0 0.0
  %2029 = vmatpush1.xpose.msra.mxu0 0.0
  %2030 = vmatprep.subr.mxu0 0.0
  %2031 = vmatpush1.xpose.msra.mxu0 0.0
  %2032 = vmatprep.subr.mxu0 0.0
  %2033 = vmatpush1.xpose.msra.mxu0 0.0
  %2034 = vmatprep.subr.mxu0 0.0
  %2035 = vmatpush1.xpose.msra.mxu0 0.0
  %2036 = vmatprep.subr.mxu0 0.0
  %2037 = vmatpush1.xpose.msra.mxu0 0.0
  %2038 = vmatprep.subr.mxu0 0.0
  %2039 = vmatpush1.xpose.msra.mxu0 0.0
  %2040 = vmatprep.subr.mxu0 0.0
  %2041 = vmatpush1.xpose.msra.mxu0 0.0
  %2042 = vmatprep.subr.mxu0 0.0
  %2043 = vmatpush1.xpose.msra.mxu0 0.0
  %2044 = vmatprep.mubr.f32.mxu0 0.0
  %2045 = vmatmul.mubr.f32.gmra.mrb[0].mxu0 %v1976
  %v2046 = vpop.f32.mrb[0].mxu0
  %v2047 = vadd.f32 0.0, %v2046
  %v2048 = vpop.f32.mrb[0].mxu0
  %2049 = vdwg.mxu0
  %2050 = vrot.lane.b32.xlu0 %v415, 112
  %v2051 = vpop.permute.xlu0 %2050
  %2052 = vrot.lane.b32.xlu0 %v415, 80
  %v2053 = vpop.permute.xlu0 %2052
  %v2054 = vsel %vm441, %v2051, 0
  %v2056 = vsel %vm441, %v2053, 0
  %2058 = vmatprep.subr.mxu0 0.0
  %2059 = vmatpush1.xpose.msra.mxu0 %v2056
  %2060 = vmatprep.subr.mxu0 0.0
  %2061 = vmatpush1.xpose.msra.mxu0 0.0
  %2062 = vmatprep.subr.mxu0 0.0
  %2063 = vmatpush1.xpose.msra.mxu0 0.0
  %2064 = vmatprep.subr.mxu0 0.0
  %2065 = vmatpush1.xpose.msra.mxu0 0.0
  %2066 = vmatprep.subr.mxu0 0.0
  %2067 = vmatpush1.xpose.msra.mxu0 0.0
  %2068 = vmatprep.subr.mxu0 0.0
  %2069 = vmatpush1.xpose.msra.mxu0 0.0
  %2070 = vmatprep.subr.mxu0 0.0
  %2071 = vmatpush1.xpose.msra.mxu0 0.0
  %2072 = vmatprep.subr.mxu0 0.0
  %2073 = vmatpush1.xpose.msra.mxu0 0.0
  %2074 = vmatprep.subr.mxu0 0.0
  %2075 = vmatpush1.xpose.msra.mxu0 0.0
  %2076 = vmatprep.subr.mxu0 0.0
  %2077 = vmatpush1.xpose.msra.mxu0 0.0
  %2078 = vmatprep.subr.mxu0 0.0
  %2079 = vmatpush1.xpose.msra.mxu0 0.0
  %2080 = vmatprep.subr.mxu0 0.0
  %2081 = vmatpush1.xpose.msra.mxu0 0.0
  %2082 = vmatprep.subr.mxu0 0.0
  %2083 = vmatpush1.xpose.msra.mxu0 0.0
  %2084 = vmatprep.subr.mxu0 0.0
  %2085 = vmatpush1.xpose.msra.mxu0 0.0
  %2086 = vmatprep.subr.mxu0 0.0
  %2087 = vmatpush1.xpose.msra.mxu0 0.0
  %2088 = vmatprep.subr.mxu0 0.0
  %2089 = vmatpush1.xpose.msra.mxu0 0.0
  %2090 = vmatprep.subr.mxu0 0.0
  %2091 = vmatpush1.xpose.msra.mxu0 0.0
  %2092 = vmatprep.subr.mxu0 0.0
  %2093 = vmatpush1.xpose.msra.mxu0 0.0
  %2094 = vmatprep.subr.mxu0 0.0
  %2095 = vmatpush1.xpose.msra.mxu0 0.0
  %2096 = vmatprep.subr.mxu0 0.0
  %2097 = vmatpush1.xpose.msra.mxu0 0.0
  %2098 = vmatprep.subr.mxu0 0.0
  %2099 = vmatpush1.xpose.msra.mxu0 0.0
  %2100 = vmatprep.subr.mxu0 0.0
  %2101 = vmatpush1.xpose.msra.mxu0 0.0
  %2102 = vmatprep.subr.mxu0 0.0
  %2103 = vmatpush1.xpose.msra.mxu0 0.0
  %2104 = vmatprep.subr.mxu0 0.0
  %2105 = vmatpush1.xpose.msra.mxu0 0.0
  %2106 = vmatprep.subr.mxu0 0.0
  %2107 = vmatpush1.xpose.msra.mxu0 0.0
  %2108 = vmatprep.subr.mxu0 0.0
  %2109 = vmatpush1.xpose.msra.mxu0 0.0
  %2110 = vmatprep.subr.mxu0 0.0
  %2111 = vmatpush1.xpose.msra.mxu0 0.0
  %2112 = vmatprep.subr.mxu0 0.0
  %2113 = vmatpush1.xpose.msra.mxu0 0.0
  %2114 = vmatprep.subr.mxu0 0.0
  %2115 = vmatpush1.xpose.msra.mxu0 0.0
  %2116 = vmatprep.subr.mxu0 0.0
  %2117 = vmatpush1.xpose.msra.mxu0 0.0
  %2118 = vmatprep.subr.mxu0 0.0
  %2119 = vmatpush1.xpose.msra.mxu0 0.0
  %2120 = vmatprep.subr.mxu0 0.0
  %2121 = vmatpush1.xpose.msra.mxu0 0.0
  %2122 = vmatprep.mubr.f32.mxu0 0.0
  %2123 = vmatmul.mubr.f32.gmra.mrb[0].mxu0 %v2054
  %v2124 = vpop.f32.mrb[0].mxu0
  %v2125 = vadd.f32 0.0, %v2124
  %v2126 = vpop.f32.mrb[0].mxu0
  %2127 = vdwg.mxu0
  %2128 = vrot.lane.b32.xlu0 %v420, 112
  %v2129 = vpop.permute.xlu0 %2128
  %2130 = vrot.lane.b32.xlu0 %v420, 80
  %v2131 = vpop.permute.xlu0 %2130
  %v2132 = vsel %vm441, %v2129, 0
  %v2134 = vsel %vm441, %v2131, 0
  %2136 = vmatprep.subr.mxu0 0.0
  %2137 = vmatpush1.xpose.msra.mxu0 %v2134
  %2138 = vmatprep.subr.mxu0 0.0
  %2139 = vmatpush1.xpose.msra.mxu0 0.0
  %2140 = vmatprep.subr.mxu0 0.0
  %2141 = vmatpush1.xpose.msra.mxu0 0.0
  %2142 = vmatprep.subr.mxu0 0.0
  %2143 = vmatpush1.xpose.msra.mxu0 0.0
  %2144 = vmatprep.subr.mxu0 0.0
  %2145 = vmatpush1.xpose.msra.mxu0 0.0
  %2146 = vmatprep.subr.mxu0 0.0
  %2147 = vmatpush1.xpose.msra.mxu0 0.0
  %2148 = vmatprep.subr.mxu0 0.0
  %2149 = vmatpush1.xpose.msra.mxu0 0.0
  %2150 = vmatprep.subr.mxu0 0.0
  %2151 = vmatpush1.xpose.msra.mxu0 0.0
  %2152 = vmatprep.subr.mxu0 0.0
  %2153 = vmatpush1.xpose.msra.mxu0 0.0
  %2154 = vmatprep.subr.mxu0 0.0
  %2155 = vmatpush1.xpose.msra.mxu0 0.0
  %2156 = vmatprep.subr.mxu0 0.0
  %2157 = vmatpush1.xpose.msra.mxu0 0.0
  %2158 = vmatprep.subr.mxu0 0.0
  %2159 = vmatpush1.xpose.msra.mxu0 0.0
  %2160 = vmatprep.subr.mxu0 0.0
  %2161 = vmatpush1.xpose.msra.mxu0 0.0
  %2162 = vmatprep.subr.mxu0 0.0
  %2163 = vmatpush1.xpose.msra.mxu0 0.0
  %2164 = vmatprep.subr.mxu0 0.0
  %2165 = vmatpush1.xpose.msra.mxu0 0.0
  %2166 = vmatprep.subr.mxu0 0.0
  %2167 = vmatpush1.xpose.msra.mxu0 0.0
  %2168 = vmatprep.subr.mxu0 0.0
  %2169 = vmatpush1.xpose.msra.mxu0 0.0
  %2170 = vmatprep.subr.mxu0 0.0
  %2171 = vmatpush1.xpose.msra.mxu0 0.0
  %2172 = vmatprep.subr.mxu0 0.0
  %2173 = vmatpush1.xpose.msra.mxu0 0.0
  %2174 = vmatprep.subr.mxu0 0.0
  %2175 = vmatpush1.xpose.msra.mxu0 0.0
  %2176 = vmatprep.subr.mxu0 0.0
  %2177 = vmatpush1.xpose.msra.mxu0 0.0
  %2178 = vmatprep.subr.mxu0 0.0
  %2179 = vmatpush1.xpose.msra.mxu0 0.0
  %2180 = vmatprep.subr.mxu0 0.0
  %2181 = vmatpush1.xpose.msra.mxu0 0.0
  %2182 = vmatprep.subr.mxu0 0.0
  %2183 = vmatpush1.xpose.msra.mxu0 0.0
  %2184 = vmatprep.subr.mxu0 0.0
  %2185 = vmatpush1.xpose.msra.mxu0 0.0
  %2186 = vmatprep.subr.mxu0 0.0
  %2187 = vmatpush1.xpose.msra.mxu0 0.0
  %2188 = vmatprep.subr.mxu0 0.0
  %2189 = vmatpush1.xpose.msra.mxu0 0.0
  %2190 = vmatprep.subr.mxu0 0.0
  %2191 = vmatpush1.xpose.msra.mxu0 0.0
  %2192 = vmatprep.subr.mxu0 0.0
  %2193 = vmatpush1.xpose.msra.mxu0 0.0
  %2194 = vmatprep.subr.mxu0 0.0
  %2195 = vmatpush1.xpose.msra.mxu0 0.0
  %2196 = vmatprep.subr.mxu0 0.0
  %2197 = vmatpush1.xpose.msra.mxu0 0.0
  %2198 = vmatprep.subr.mxu0 0.0
  %2199 = vmatpush1.xpose.msra.mxu0 0.0
  %2200 = vmatprep.mubr.f32.mxu0 0.0
  %2201 = vmatmul.mubr.f32.gmra.mrb[0].mxu0 %v2132
  %v2202 = vpop.f32.mrb[0].mxu0
  %v2203 = vadd.f32 0.0, %v2202
  %v2204 = vpop.f32.mrb[0].mxu0
  %2205 = vdwg.mxu0
  %2206 = vrot.lane.b32.xlu0 %v425, 112
  %v2207 = vpop.permute.xlu0 %2206
  %2208 = vrot.lane.b32.xlu0 %v425, 80
  %v2209 = vpop.permute.xlu0 %2208
  %v2210 = vsel %vm441, %v2207, 0
  %v2212 = vsel %vm441, %v2209, 0
  %2214 = vmatprep.subr.mxu0 0.0
  %2215 = vmatpush1.xpose.msra.mxu0 %v2212
  %2216 = vmatprep.subr.mxu0 0.0
  %2217 = vmatpush1.xpose.msra.mxu0 0.0
  %2218 = vmatprep.subr.mxu0 0.0
  %2219 = vmatpush1.xpose.msra.mxu0 0.0
  %2220 = vmatprep.subr.mxu0 0.0
  %2221 = vmatpush1.xpose.msra.mxu0 0.0
  %2222 = vmatprep.subr.mxu0 0.0
  %2223 = vmatpush1.xpose.msra.mxu0 0.0
  %2224 = vmatprep.subr.mxu0 0.0
  %2225 = vmatpush1.xpose.msra.mxu0 0.0
  %2226 = vmatprep.subr.mxu0 0.0
  %2227 = vmatpush1.xpose.msra.mxu0 0.0
  %2228 = vmatprep.subr.mxu0 0.0
  %2229 = vmatpush1.xpose.msra.mxu0 0.0
  %2230 = vmatprep.subr.mxu0 0.0
  %2231 = vmatpush1.xpose.msra.mxu0 0.0
  %2232 = vmatprep.subr.mxu0 0.0
  %2233 = vmatpush1.xpose.msra.mxu0 0.0
  %2234 = vmatprep.subr.mxu0 0.0
  %2235 = vmatpush1.xpose.msra.mxu0 0.0
  %2236 = vmatprep.subr.mxu0 0.0
  %2237 = vmatpush1.xpose.msra.mxu0 0.0
  %2238 = vmatprep.subr.mxu0 0.0
  %2239 = vmatpush1.xpose.msra.mxu0 0.0
  %2240 = vmatprep.subr.mxu0 0.0
  %2241 = vmatpush1.xpose.msra.mxu0 0.0
  %2242 = vmatprep.subr.mxu0 0.0
  %2243 = vmatpush1.xpose.msra.mxu0 0.0
  %2244 = vmatprep.subr.mxu0 0.0
  %2245 = vmatpush1.xpose.msra.mxu0 0.0
  %2246 = vmatprep.subr.mxu0 0.0
  %2247 = vmatpush1.xpose.msra.mxu0 0.0
  %2248 = vmatprep.subr.mxu0 0.0
  %2249 = vmatpush1.xpose.msra.mxu0 0.0
  %2250 = vmatprep.subr.mxu0 0.0
  %2251 = vmatpush1.xpose.msra.mxu0 0.0
  %2252 = vmatprep.subr.mxu0 0.0
  %2253 = vmatpush1.xpose.msra.mxu0 0.0
  %2254 = vmatprep.subr.mxu0 0.0
  %2255 = vmatpush1.xpose.msra.mxu0 0.0
  %2256 = vmatprep.subr.mxu0 0.0
  %2257 = vmatpush1.xpose.msra.mxu0 0.0
  %2258 = vmatprep.subr.mxu0 0.0
  %2259 = vmatpush1.xpose.msra.mxu0 0.0
  %2260 = vmatprep.subr.mxu0 0.0
  %2261 = vmatpush1.xpose.msra.mxu0 0.0
  %2262 = vmatprep.subr.mxu0 0.0
  %2263 = vmatpush1.xpose.msra.mxu0 0.0
  %2264 = vmatprep.subr.mxu0 0.0
  %2265 = vmatpush1.xpose.msra.mxu0 0.0
  %2266 = vmatprep.subr.mxu0 0.0
  %2267 = vmatpush1.xpose.msra.mxu0 0.0
  %2268 = vmatprep.subr.mxu0 0.0
  %2269 = vmatpush1.xpose.msra.mxu0 0.0
  %2270 = vmatprep.subr.mxu0 0.0
  %2271 = vmatpush1.xpose.msra.mxu0 0.0
  %2272 = vmatprep.subr.mxu0 0.0
  %2273 = vmatpush1.xpose.msra.mxu0 0.0
  %2274 = vmatprep.subr.mxu0 0.0
  %2275 = vmatpush1.xpose.msra.mxu0 0.0
  %2276 = vmatprep.subr.mxu0 0.0
  %2277 = vmatpush1.xpose.msra.mxu0 0.0
  %2278 = vmatprep.mubr.f32.mxu0 0.0
  %2279 = vmatmul.mubr.f32.gmra.mrb[0].mxu0 %v2210
  %v2280 = vpop.f32.mrb[0].mxu0
  %v2281 = vadd.f32 0.0, %v2280
  %v2282 = vpop.f32.mrb[0].mxu0
  %2283 = vdwg.mxu0
  %2284 = vrot.lane.b32.xlu0 %v430, 112
  %v2285 = vpop.permute.xlu0 %2284
  %2286 = vrot.lane.b32.xlu0 %v430, 80
  %v2287 = vpop.permute.xlu0 %2286
  %v2288 = vsel %vm441, %v2285, 0
  %v2290 = vsel %vm441, %v2287, 0
  %2292 = vmatprep.subr.mxu0 0.0
  %2293 = vmatpush1.xpose.msra.mxu0 %v2290
  %2294 = vmatprep.subr.mxu0 0.0
  %2295 = vmatpush1.xpose.msra.mxu0 0.0
  %2296 = vmatprep.subr.mxu0 0.0
  %2297 = vmatpush1.xpose.msra.mxu0 0.0
  %2298 = vmatprep.subr.mxu0 0.0
  %2299 = vmatpush1.xpose.msra.mxu0 0.0
  %2300 = vmatprep.subr.mxu0 0.0
  %2301 = vmatpush1.xpose.msra.mxu0 0.0
  %2302 = vmatprep.subr.mxu0 0.0
  %2303 = vmatpush1.xpose.msra.mxu0 0.0
  %2304 = vmatprep.subr.mxu0 0.0
  %2305 = vmatpush1.xpose.msra.mxu0 0.0
  %2306 = vmatprep.subr.mxu0 0.0
  %2307 = vmatpush1.xpose.msra.mxu0 0.0
  %2308 = vmatprep.subr.mxu0 0.0
  %2309 = vmatpush1.xpose.msra.mxu0 0.0
  %2310 = vmatprep.subr.mxu0 0.0
  %2311 = vmatpush1.xpose.msra.mxu0 0.0
  %2312 = vmatprep.subr.mxu0 0.0
  %2313 = vmatpush1.xpose.msra.mxu0 0.0
  %2314 = vmatprep.subr.mxu0 0.0
  %2315 = vmatpush1.xpose.msra.mxu0 0.0
  %2316 = vmatprep.subr.mxu0 0.0
  %2317 = vmatpush1.xpose.msra.mxu0 0.0
  %2318 = vmatprep.subr.mxu0 0.0
  %2319 = vmatpush1.xpose.msra.mxu0 0.0
  %2320 = vmatprep.subr.mxu0 0.0
  %2321 = vmatpush1.xpose.msra.mxu0 0.0
  %2322 = vmatprep.subr.mxu0 0.0
  %2323 = vmatpush1.xpose.msra.mxu0 0.0
  %2324 = vmatprep.subr.mxu0 0.0
  %2325 = vmatpush1.xpose.msra.mxu0 0.0
  %2326 = vmatprep.subr.mxu0 0.0
  %2327 = vmatpush1.xpose.msra.mxu0 0.0
  %2328 = vmatprep.subr.mxu0 0.0
  %2329 = vmatpush1.xpose.msra.mxu0 0.0
  %2330 = vmatprep.subr.mxu0 0.0
  %2331 = vmatpush1.xpose.msra.mxu0 0.0
  %2332 = vmatprep.subr.mxu0 0.0
  %2333 = vmatpush1.xpose.msra.mxu0 0.0
  %2334 = vmatprep.subr.mxu0 0.0
  %2335 = vmatpush1.xpose.msra.mxu0 0.0
  %2336 = vmatprep.subr.mxu0 0.0
  %2337 = vmatpush1.xpose.msra.mxu0 0.0
  %2338 = vmatprep.subr.mxu0 0.0
  %2339 = vmatpush1.xpose.msra.mxu0 0.0
  %2340 = vmatprep.subr.mxu0 0.0
  %2341 = vmatpush1.xpose.msra.mxu0 0.0
  %2342 = vmatprep.subr.mxu0 0.0
  %2343 = vmatpush1.xpose.msra.mxu0 0.0
  %2344 = vmatprep.subr.mxu0 0.0
  %2345 = vmatpush1.xpose.msra.mxu0 0.0
  %2346 = vmatprep.subr.mxu0 0.0
  %2347 = vmatpush1.xpose.msra.mxu0 0.0
  %2348 = vmatprep.subr.mxu0 0.0
  %2349 = vmatpush1.xpose.msra.mxu0 0.0
  %2350 = vmatprep.subr.mxu0 0.0
  %2351 = vmatpush1.xpose.msra.mxu0 0.0
  %2352 = vmatprep.subr.mxu0 0.0
  %2353 = vmatpush1.xpose.msra.mxu0 0.0
  %2354 = vmatprep.subr.mxu0 0.0
  %2355 = vmatpush1.xpose.msra.mxu0 0.0
  %2356 = vmatprep.mubr.f32.mxu0 0.0
  %2357 = vmatmul.mubr.f32.gmra.mrb[0].mxu0 %v2288
  %v2358 = vpop.f32.mrb[0].mxu0
  %v2359 = vadd.f32 0.0, %v2358
  %v2360 = vpop.f32.mrb[0].mxu0
  %2361 = vdwg.mxu0
  %2362 = vrot.lane.b32.xlu0 %v435, 112
  %v2363 = vpop.permute.xlu0 %2362
  %2364 = vrot.lane.b32.xlu0 %v435, 80
  %v2365 = vpop.permute.xlu0 %2364
  %v2366 = vsel %vm441, %v2363, 0
  %v2368 = vsel %vm441, %v2365, 0
  %2370 = vmatprep.subr.mxu0 0.0
  %2371 = vmatpush1.xpose.msra.mxu0 %v2368
  %2372 = vmatprep.subr.mxu0 0.0
  %2373 = vmatpush1.xpose.msra.mxu0 0.0
  %2374 = vmatprep.subr.mxu0 0.0
  %2375 = vmatpush1.xpose.msra.mxu0 0.0
  %2376 = vmatprep.subr.mxu0 0.0
  %2377 = vmatpush1.xpose.msra.mxu0 0.0
  %2378 = vmatprep.subr.mxu0 0.0
  %2379 = vmatpush1.xpose.msra.mxu0 0.0
  %2380 = vmatprep.subr.mxu0 0.0
  %2381 = vmatpush1.xpose.msra.mxu0 0.0
  %2382 = vmatprep.subr.mxu0 0.0
  %2383 = vmatpush1.xpose.msra.mxu0 0.0
  %2384 = vmatprep.subr.mxu0 0.0
  %2385 = vmatpush1.xpose.msra.mxu0 0.0
  %2386 = vmatprep.subr.mxu0 0.0
  %2387 = vmatpush1.xpose.msra.mxu0 0.0
  %2388 = vmatprep.subr.mxu0 0.0
  %2389 = vmatpush1.xpose.msra.mxu0 0.0
  %2390 = vmatprep.subr.mxu0 0.0
  %2391 = vmatpush1.xpose.msra.mxu0 0.0
  %2392 = vmatprep.subr.mxu0 0.0
  %2393 = vmatpush1.xpose.msra.mxu0 0.0
  %2394 = vmatprep.subr.mxu0 0.0
  %2395 = vmatpush1.xpose.msra.mxu0 0.0
  %2396 = vmatprep.subr.mxu0 0.0
  %2397 = vmatpush1.xpose.msra.mxu0 0.0
  %2398 = vmatprep.subr.mxu0 0.0
  %2399 = vmatpush1.xpose.msra.mxu0 0.0
  %2400 = vmatprep.subr.mxu0 0.0
  %2401 = vmatpush1.xpose.msra.mxu0 0.0
  %2402 = vmatprep.subr.mxu0 0.0
  %2403 = vmatpush1.xpose.msra.mxu0 0.0
  %2404 = vmatprep.subr.mxu0 0.0
  %2405 = vmatpush1.xpose.msra.mxu0 0.0
  %2406 = vmatprep.subr.mxu0 0.0
  %2407 = vmatpush1.xpose.msra.mxu0 0.0
  %2408 = vmatprep.subr.mxu0 0.0
  %2409 = vmatpush1.xpose.msra.mxu0 0.0
  %2410 = vmatprep.subr.mxu0 0.0
  %2411 = vmatpush1.xpose.msra.mxu0 0.0
  %2412 = vmatprep.subr.mxu0 0.0
  %2413 = vmatpush1.xpose.msra.mxu0 0.0
  %2414 = vmatprep.subr.mxu0 0.0
  %2415 = vmatpush1.xpose.msra.mxu0 0.0
  %2416 = vmatprep.subr.mxu0 0.0
  %2417 = vmatpush1.xpose.msra.mxu0 0.0
  %2418 = vmatprep.subr.mxu0 0.0
  %2419 = vmatpush1.xpose.msra.mxu0 0.0
  %2420 = vmatprep.subr.mxu0 0.0
  %2421 = vmatpush1.xpose.msra.mxu0 0.0
  %2422 = vmatprep.subr.mxu0 0.0
  %2423 = vmatpush1.xpose.msra.mxu0 0.0
  %2424 = vmatprep.subr.mxu0 0.0
  %2425 = vmatpush1.xpose.msra.mxu0 0.0
  %2426 = vmatprep.subr.mxu0 0.0
  %2427 = vmatpush1.xpose.msra.mxu0 0.0
  %2428 = vmatprep.subr.mxu0 0.0
  %2429 = vmatpush1.xpose.msra.mxu0 0.0
  %2430 = vmatprep.subr.mxu0 0.0
  %2431 = vmatpush1.xpose.msra.mxu0 0.0
  %2432 = vmatprep.subr.mxu0 0.0
  %2433 = vmatpush1.xpose.msra.mxu0 0.0
  %2434 = vmatprep.mubr.f32.mxu0 0.0
  %2435 = vmatmul.mubr.f32.gmra.mrb[0].mxu0 %v2366
  %v2436 = vpop.f32.mrb[0].mxu0
  %v2437 = vadd.f32 0.0, %v2436
  %v2438 = vpop.f32.mrb[0].mxu0
  %2439 = vdwg.mxu0
  %v2440 = vmul.f32 %v1891, 0.25
  %v2441 = vmul.f32 %v1969, 0.25
  %v2442 = vmul.f32 %v2047, 0.25
  %v2443 = vmul.f32 %v2125, 0.25
  %v2444 = vmul.f32 %v2203, 0.25
  %v2445 = vmul.f32 %v2281, 0.25
  %v2446 = vmul.f32 %v2359, 0.25
  %v2447 = vmul.f32 %v2437, 0.25
  %v2448 = vadd.f32 %v2440, %v1074
  %v2449 = vadd.f32 %v2441, %v1078
  %v2450 = vadd.f32 %v2442, %v1082
  %v2451 = vadd.f32 %v2443, %v1086
  %v2452 = vadd.f32 %v2444, %v1090
  %v2453 = vadd.f32 %v2445, %v1094
  %v2454 = vadd.f32 %v2446, %v1098
  %v2455 = vadd.f32 %v2447, %v1102
  %v2456 = vsel %vm1119, %v2448, -inf
  %2457 = vmax.xlane.f32.xlu0 %v2456
  %v2458 = vpop.xlane.xlu0 %2457
  %v2459 = vsel %vm1119, %v2449, -inf
  %2460 = vmax.xlane.f32.xlu0 %v2459
  %v2461 = vpop.xlane.xlu0 %2460
  %v2462 = vsel %vm1119, %v2450, -inf
  %2463 = vmax.xlane.f32.xlu0 %v2462
  %v2464 = vpop.xlane.xlu0 %2463
  %v2465 = vsel %vm1119, %v2451, -inf
  %2466 = vmax.xlane.f32.xlu0 %v2465
  %v2467 = vpop.xlane.xlu0 %2466
  %v2468 = vsel %vm1119, %v2452, -inf
  %2469 = vmax.xlane.f32.xlu0 %v2468
  %v2470 = vpop.xlane.xlu0 %2469
  %v2471 = vsel %vm1119, %v2453, -inf
  %2472 = vmax.xlane.f32.xlu0 %v2471
  %v2473 = vpop.xlane.xlu0 %2472
  %v2474 = vsel %vm1119, %v2454, -inf
  %2475 = vmax.xlane.f32.xlu0 %v2474
  %v2476 = vpop.xlane.xlu0 %2475
  %v2477 = vsel %vm1119, %v2455, -inf
  %2478 = vmax.xlane.f32.xlu0 %v2477
  %v2479 = vpop.xlane.xlu0 %2478
  %v2480 = vsub.f32 %v2448, %v2458
  %v2481 = vsub.f32 %v2449, %v2461
  %v2482 = vsub.f32 %v2450, %v2464
  %v2483 = vsub.f32 %v2451, %v2467
  %v2484 = vsub.f32 %v2452, %v2470
  %v2485 = vsub.f32 %v2453, %v2473
  %v2486 = vsub.f32 %v2454, %v2476
  %v2487 = vsub.f32 %v2455, %v2479
  %v2488 = vmul.f32 %v2480, 1.442695
  %v2489 = vpow.pop %v2488
  %v2490 = vmul.f32 %v2481, 1.442695
  %v2491 = vpow.pop %v2490
  %v2492 = vmul.f32 %v2482, 1.442695
  %v2493 = vpow.pop %v2492
  %v2494 = vmul.f32 %v2483, 1.442695
  %v2495 = vpow.pop %v2494
  %v2496 = vmul.f32 %v2484, 1.442695
  %v2497 = vpow.pop %v2496
  %v2498 = vmul.f32 %v2485, 1.442695
  %v2499 = vpow.pop %v2498
  %v2500 = vmul.f32 %v2486, 1.442695
  %v2501 = vpow.pop %v2500
  %v2502 = vmul.f32 %v2487, 1.442695
  %v2503 = vpow.pop %v2502
  %v2504 = vsel %vm1119, %v2489, 0.0
  %2505 = vadd.xlane.f32.xlu0 %v2504
  %v2506 = vpop.xlane.xlu0 %2505
  %v2507 = vsel %vm1119, %v2491, 0.0
  %2508 = vadd.xlane.f32.xlu0 %v2507
  %v2509 = vpop.xlane.xlu0 %2508
  %v2510 = vsel %vm1119, %v2493, 0.0
  %2511 = vadd.xlane.f32.xlu0 %v2510
  %v2512 = vpop.xlane.xlu0 %2511
  %v2513 = vsel %vm1119, %v2495, 0.0
  %2514 = vadd.xlane.f32.xlu0 %v2513
  %v2515 = vpop.xlane.xlu0 %2514
  %v2516 = vsel %vm1119, %v2497, 0.0
  %2517 = vadd.xlane.f32.xlu0 %v2516
  %v2518 = vpop.xlane.xlu0 %2517
  %v2519 = vsel %vm1119, %v2499, 0.0
  %2520 = vadd.xlane.f32.xlu0 %v2519
  %v2521 = vpop.xlane.xlu0 %2520
  %v2522 = vsel %vm1119, %v2501, 0.0
  %2523 = vadd.xlane.f32.xlu0 %v2522
  %v2524 = vpop.xlane.xlu0 %2523
  %v2525 = vsel %vm1119, %v2503, 0.0
  %2526 = vadd.xlane.f32.xlu0 %v2525
  %v2527 = vpop.xlane.xlu0 %2526
  %v2528 = vrcp.pop %v2506
  %v2529 = vrcp.pop %v2509
  %v2530 = vrcp.pop %v2512
  %v2531 = vrcp.pop %v2515
  %v2532 = vrcp.pop %v2518
  %v2533 = vrcp.pop %v2521
  %v2534 = vrcp.pop %v2524
  %v2535 = vrcp.pop %v2527
  %v2536 = vmul.f32 %v2489, %v2528
  %v2537 = vmul.f32 %v2491, %v2529
  %v2538 = vmul.f32 %v2493, %v2530
  %v2539 = vmul.f32 %v2495, %v2531
  %v2540 = vmul.f32 %v2497, %v2532
  %v2541 = vmul.f32 %v2499, %v2533
  %v2542 = vmul.f32 %v2501, %v2534
  %v2543 = vmul.f32 %v2503, %v2535
  %2544 = vrot.lane.b32.xlu0 %v400, 48
  %v2545 = vpop.permute.xlu0 %2544
  %v2548 = vsel %vm1119, %v2536, 0
  %2550 = vmatprep.subr.mxu0 0.0
  %2551 = vmatpush1.msra.mxu0 %v2545
  %2552 = vmatprep.subr.mxu0 0.0
  %2553 = vmatpush1.msra.mxu0 0.0
  %2554 = vmatprep.subr.mxu0 0.0
  %2555 = vmatpush1.msra.mxu0 0.0
  %2556 = vmatprep.subr.mxu0 0.0
  %2557 = vmatpush1.msra.mxu0 0.0
  %2558 = vmatprep.subr.mxu0 0.0
  %2559 = vmatpush1.msra.mxu0 0.0
  %2560 = vmatprep.subr.mxu0 0.0
  %2561 = vmatpush1.msra.mxu0 0.0
  %2562 = vmatprep.subr.mxu0 0.0
  %2563 = vmatpush1.msra.mxu0 0.0
  %2564 = vmatprep.subr.mxu0 0.0
  %2565 = vmatpush1.msra.mxu0 0.0
  %2566 = vmatprep.subr.mxu0 0.0
  %2567 = vmatpush1.msra.mxu0 0.0
  %2568 = vmatprep.subr.mxu0 0.0
  %2569 = vmatpush1.msra.mxu0 0.0
  %2570 = vmatprep.subr.mxu0 0.0
  %2571 = vmatpush1.msra.mxu0 0.0
  %2572 = vmatprep.subr.mxu0 0.0
  %2573 = vmatpush1.msra.mxu0 0.0
  %2574 = vmatprep.subr.mxu0 0.0
  %2575 = vmatpush1.msra.mxu0 0.0
  %2576 = vmatprep.subr.mxu0 0.0
  %2577 = vmatpush1.msra.mxu0 0.0
  %2578 = vmatprep.subr.mxu0 0.0
  %2579 = vmatpush1.msra.mxu0 0.0
  %2580 = vmatprep.subr.mxu0 0.0
  %2581 = vmatpush1.msra.mxu0 0.0
  %2582 = vmatprep.subr.mxu0 0.0
  %2583 = vmatpush1.msra.mxu0 0.0
  %2584 = vmatprep.subr.mxu0 0.0
  %2585 = vmatpush1.msra.mxu0 0.0
  %2586 = vmatprep.subr.mxu0 0.0
  %2587 = vmatpush1.msra.mxu0 0.0
  %2588 = vmatprep.subr.mxu0 0.0
  %2589 = vmatpush1.msra.mxu0 0.0
  %2590 = vmatprep.subr.mxu0 0.0
  %2591 = vmatpush1.msra.mxu0 0.0
  %2592 = vmatprep.subr.mxu0 0.0
  %2593 = vmatpush1.msra.mxu0 0.0
  %2594 = vmatprep.subr.mxu0 0.0
  %2595 = vmatpush1.msra.mxu0 0.0
  %2596 = vmatprep.subr.mxu0 0.0
  %2597 = vmatpush1.msra.mxu0 0.0
  %2598 = vmatprep.subr.mxu0 0.0
  %2599 = vmatpush1.msra.mxu0 0.0
  %2600 = vmatprep.subr.mxu0 0.0
  %2601 = vmatpush1.msra.mxu0 0.0
  %2602 = vmatprep.subr.mxu0 0.0
  %2603 = vmatpush1.msra.mxu0 0.0
  %2604 = vmatprep.subr.mxu0 0.0
  %2605 = vmatpush1.msra.mxu0 0.0
  %2606 = vmatprep.subr.mxu0 0.0
  %2607 = vmatpush1.msra.mxu0 0.0
  %2608 = vmatprep.subr.mxu0 0.0
  %2609 = vmatpush1.msra.mxu0 0.0
  %2610 = vmatprep.subr.mxu0 0.0
  %2611 = vmatpush1.msra.mxu0 0.0
  %2612 = vmatprep.subr.mxu0 0.0
  %2613 = vmatpush1.msra.mxu0 0.0
  %2614 = vmatprep.mubr.f32.mxu0 0.0
  %2615 = vmatmul.mubr.f32.gmra.mrb[0].mxu0 %v2548
  %v2616 = vpop.f32.mrb[0].mxu0
  %v2617 = vadd.f32 0.0, %v2616
  %v2618 = vpop.f32.mrb[0].mxu0
  %2619 = vdwg.mxu0
  %2620 = vrot.lane.b32.xlu0 %v405, 48
  %v2621 = vpop.permute.xlu0 %2620
  %v2624 = vsel %vm1119, %v2537, 0
  %2626 = vmatprep.subr.mxu0 0.0
  %2627 = vmatpush1.msra.mxu0 %v2621
  %2628 = vmatprep.subr.mxu0 0.0
  %2629 = vmatpush1.msra.mxu0 0.0
  %2630 = vmatprep.subr.mxu0 0.0
  %2631 = vmatpush1.msra.mxu0 0.0
  %2632 = vmatprep.subr.mxu0 0.0
  %2633 = vmatpush1.msra.mxu0 0.0
  %2634 = vmatprep.subr.mxu0 0.0
  %2635 = vmatpush1.msra.mxu0 0.0
  %2636 = vmatprep.subr.mxu0 0.0
  %2637 = vmatpush1.msra.mxu0 0.0
  %2638 = vmatprep.subr.mxu0 0.0
  %2639 = vmatpush1.msra.mxu0 0.0
  %2640 = vmatprep.subr.mxu0 0.0
  %2641 = vmatpush1.msra.mxu0 0.0
  %2642 = vmatprep.subr.mxu0 0.0
  %2643 = vmatpush1.msra.mxu0 0.0
  %2644 = vmatprep.subr.mxu0 0.0
  %2645 = vmatpush1.msra.mxu0 0.0
  %2646 = vmatprep.subr.mxu0 0.0
  %2647 = vmatpush1.msra.mxu0 0.0
  %2648 = vmatprep.subr.mxu0 0.0
  %2649 = vmatpush1.msra.mxu0 0.0
  %2650 = vmatprep.subr.mxu0 0.0
  %2651 = vmatpush1.msra.mxu0 0.0
  %2652 = vmatprep.subr.mxu0 0.0
  %2653 = vmatpush1.msra.mxu0 0.0
  %2654 = vmatprep.subr.mxu0 0.0
  %2655 = vmatpush1.msra.mxu0 0.0
  %2656 = vmatprep.subr.mxu0 0.0
  %2657 = vmatpush1.msra.mxu0 0.0
  %2658 = vmatprep.subr.mxu0 0.0
  %2659 = vmatpush1.msra.mxu0 0.0
  %2660 = vmatprep.subr.mxu0 0.0
  %2661 = vmatpush1.msra.mxu0 0.0
  %2662 = vmatprep.subr.mxu0 0.0
  %2663 = vmatpush1.msra.mxu0 0.0
  %2664 = vmatprep.subr.mxu0 0.0
  %2665 = vmatpush1.msra.mxu0 0.0
  %2666 = vmatprep.subr.mxu0 0.0
  %2667 = vmatpush1.msra.mxu0 0.0
  %2668 = vmatprep.subr.mxu0 0.0
  %2669 = vmatpush1.msra.mxu0 0.0
  %2670 = vmatprep.subr.mxu0 0.0
  %2671 = vmatpush1.msra.mxu0 0.0
  %2672 = vmatprep.subr.mxu0 0.0
  %2673 = vmatpush1.msra.mxu0 0.0
  %2674 = vmatprep.subr.mxu0 0.0
  %2675 = vmatpush1.msra.mxu0 0.0
  %2676 = vmatprep.subr.mxu0 0.0
  %2677 = vmatpush1.msra.mxu0 0.0
  %2678 = vmatprep.subr.mxu0 0.0
  %2679 = vmatpush1.msra.mxu0 0.0
  %2680 = vmatprep.subr.mxu0 0.0
  %2681 = vmatpush1.msra.mxu0 0.0
  %2682 = vmatprep.subr.mxu0 0.0
  %2683 = vmatpush1.msra.mxu0 0.0
  %2684 = vmatprep.subr.mxu0 0.0
  %2685 = vmatpush1.msra.mxu0 0.0
  %2686 = vmatprep.subr.mxu0 0.0
  %2687 = vmatpush1.msra.mxu0 0.0
  %2688 = vmatprep.subr.mxu0 0.0
  %2689 = vmatpush1.msra.mxu0 0.0
  %2690 = vmatprep.mubr.f32.mxu0 0.0
  %2691 = vmatmul.mubr.f32.gmra.mrb[0].mxu0 %v2624
  %v2692 = vpop.f32.mrb[0].mxu0
  %v2693 = vadd.f32 0.0, %v2692
  %v2694 = vpop.f32.mrb[0].mxu0
  %2695 = vdwg.mxu0
  %2696 = vrot.lane.b32.xlu0 %v410, 48
  %v2697 = vpop.permute.xlu0 %2696
  %v2700 = vsel %vm1119, %v2538, 0
  %2702 = vmatprep.subr.mxu0 0.0
  %2703 = vmatpush1.msra.mxu0 %v2697
  %2704 = vmatprep.subr.mxu0 0.0
  %2705 = vmatpush1.msra.mxu0 0.0
  %2706 = vmatprep.subr.mxu0 0.0
  %2707 = vmatpush1.msra.mxu0 0.0
  %2708 = vmatprep.subr.mxu0 0.0
  %2709 = vmatpush1.msra.mxu0 0.0
  %2710 = vmatprep.subr.mxu0 0.0
  %2711 = vmatpush1.msra.mxu0 0.0
  %2712 = vmatprep.subr.mxu0 0.0
  %2713 = vmatpush1.msra.mxu0 0.0
  %2714 = vmatprep.subr.mxu0 0.0
  %2715 = vmatpush1.msra.mxu0 0.0
  %2716 = vmatprep.subr.mxu0 0.0
  %2717 = vmatpush1.msra.mxu0 0.0
  %2718 = vmatprep.subr.mxu0 0.0
  %2719 = vmatpush1.msra.mxu0 0.0
  %2720 = vmatprep.subr.mxu0 0.0
  %2721 = vmatpush1.msra.mxu0 0.0
  %2722 = vmatprep.subr.mxu0 0.0
  %2723 = vmatpush1.msra.mxu0 0.0
  %2724 = vmatprep.subr.mxu0 0.0
  %2725 = vmatpush1.msra.mxu0 0.0
  %2726 = vmatprep.subr.mxu0 0.0
  %2727 = vmatpush1.msra.mxu0 0.0
  %2728 = vmatprep.subr.mxu0 0.0
  %2729 = vmatpush1.msra.mxu0 0.0
  %2730 = vmatprep.subr.mxu0 0.0
  %2731 = vmatpush1.msra.mxu0 0.0
  %2732 = vmatprep.subr.mxu0 0.0
  %2733 = vmatpush1.msra.mxu0 0.0
  %2734 = vmatprep.subr.mxu0 0.0
  %2735 = vmatpush1.msra.mxu0 0.0
  %2736 = vmatprep.subr.mxu0 0.0
  %2737 = vmatpush1.msra.mxu0 0.0
  %2738 = vmatprep.subr.mxu0 0.0
  %2739 = vmatpush1.msra.mxu0 0.0
  %2740 = vmatprep.subr.mxu0 0.0
  %2741 = vmatpush1.msra.mxu0 0.0
  %2742 = vmatprep.subr.mxu0 0.0
  %2743 = vmatpush1.msra.mxu0 0.0
  %2744 = vmatprep.subr.mxu0 0.0
  %2745 = vmatpush1.msra.mxu0 0.0
  %2746 = vmatprep.subr.mxu0 0.0
  %2747 = vmatpush1.msra.mxu0 0.0
  %2748 = vmatprep.subr.mxu0 0.0
  %2749 = vmatpush1.msra.mxu0 0.0
  %2750 = vmatprep.subr.mxu0 0.0
  %2751 = vmatpush1.msra.mxu0 0.0
  %2752 = vmatprep.subr.mxu0 0.0
  %2753 = vmatpush1.msra.mxu0 0.0
  %2754 = vmatprep.subr.mxu0 0.0
  %2755 = vmatpush1.msra.mxu0 0.0
  %2756 = vmatprep.subr.mxu0 0.0
  %2757 = vmatpush1.msra.mxu0 0.0
  %2758 = vmatprep.subr.mxu0 0.0
  %2759 = vmatpush1.msra.mxu0 0.0
  %2760 = vmatprep.subr.mxu0 0.0
  %2761 = vmatpush1.msra.mxu0 0.0
  %2762 = vmatprep.subr.mxu0 0.0
  %2763 = vmatpush1.msra.mxu0 0.0
  %2764 = vmatprep.subr.mxu0 0.0
  %2765 = vmatpush1.msra.mxu0 0.0
  %2766 = vmatprep.mubr.f32.mxu0 0.0
  %2767 = vmatmul.mubr.f32.gmra.mrb[0].mxu0 %v2700
  %v2768 = vpop.f32.mrb[0].mxu0
  %v2769 = vadd.f32 0.0, %v2768
  %v2770 = vpop.f32.mrb[0].mxu0
  %2771 = vdwg.mxu0
  %2772 = vrot.lane.b32.xlu0 %v415, 48
  %v2773 = vpop.permute.xlu0 %2772
  %v2776 = vsel %vm1119, %v2539, 0
  %2778 = vmatprep.subr.mxu0 0.0
  %2779 = vmatpush1.msra.mxu0 %v2773
  %2780 = vmatprep.subr.mxu0 0.0
  %2781 = vmatpush1.msra.mxu0 0.0
  %2782 = vmatprep.subr.mxu0 0.0
  %2783 = vmatpush1.msra.mxu0 0.0
  %2784 = vmatprep.subr.mxu0 0.0
  %2785 = vmatpush1.msra.mxu0 0.0
  %2786 = vmatprep.subr.mxu0 0.0
  %2787 = vmatpush1.msra.mxu0 0.0
  %2788 = vmatprep.subr.mxu0 0.0
  %2789 = vmatpush1.msra.mxu0 0.0
  %2790 = vmatprep.subr.mxu0 0.0
  %2791 = vmatpush1.msra.mxu0 0.0
  %2792 = vmatprep.subr.mxu0 0.0
  %2793 = vmatpush1.msra.mxu0 0.0
  %2794 = vmatprep.subr.mxu0 0.0
  %2795 = vmatpush1.msra.mxu0 0.0
  %2796 = vmatprep.subr.mxu0 0.0
  %2797 = vmatpush1.msra.mxu0 0.0
  %2798 = vmatprep.subr.mxu0 0.0
  %2799 = vmatpush1.msra.mxu0 0.0
  %2800 = vmatprep.subr.mxu0 0.0
  %2801 = vmatpush1.msra.mxu0 0.0
  %2802 = vmatprep.subr.mxu0 0.0
  %2803 = vmatpush1.msra.mxu0 0.0
  %2804 = vmatprep.subr.mxu0 0.0
  %2805 = vmatpush1.msra.mxu0 0.0
  %2806 = vmatprep.subr.mxu0 0.0
  %2807 = vmatpush1.msra.mxu0 0.0
  %2808 = vmatprep.subr.mxu0 0.0
  %2809 = vmatpush1.msra.mxu0 0.0
  %2810 = vmatprep.subr.mxu0 0.0
  %2811 = vmatpush1.msra.mxu0 0.0
  %2812 = vmatprep.subr.mxu0 0.0
  %2813 = vmatpush1.msra.mxu0 0.0
  %2814 = vmatprep.subr.mxu0 0.0
  %2815 = vmatpush1.msra.mxu0 0.0
  %2816 = vmatprep.subr.mxu0 0.0
  %2817 = vmatpush1.msra.mxu0 0.0
  %2818 = vmatprep.subr.mxu0 0.0
  %2819 = vmatpush1.msra.mxu0 0.0
  %2820 = vmatprep.subr.mxu0 0.0
  %2821 = vmatpush1.msra.mxu0 0.0
  %2822 = vmatprep.subr.mxu0 0.0
  %2823 = vmatpush1.msra.mxu0 0.0
  %2824 = vmatprep.subr.mxu0 0.0
  %2825 = vmatpush1.msra.mxu0 0.0
  %2826 = vmatprep.subr.mxu0 0.0
  %2827 = vmatpush1.msra.mxu0 0.0
  %2828 = vmatprep.subr.mxu0 0.0
  %2829 = vmatpush1.msra.mxu0 0.0
  %2830 = vmatprep.subr.mxu0 0.0
  %2831 = vmatpush1.msra.mxu0 0.0
  %2832 = vmatprep.subr.mxu0 0.0
  %2833 = vmatpush1.msra.mxu0 0.0
  %2834 = vmatprep.subr.mxu0 0.0
  %2835 = vmatpush1.msra.mxu0 0.0
  %2836 = vmatprep.subr.mxu0 0.0
  %2837 = vmatpush1.msra.mxu0 0.0
  %2838 = vmatprep.subr.mxu0 0.0
  %2839 = vmatpush1.msra.mxu0 0.0
  %2840 = vmatprep.subr.mxu0 0.0
  %2841 = vmatpush1.msra.mxu0 0.0
  %2842 = vmatprep.mubr.f32.mxu0 0.0
  %2843 = vmatmul.mubr.f32.gmra.mrb[0].mxu0 %v2776
  %v2844 = vpop.f32.mrb[0].mxu0
  %v2845 = vadd.f32 0.0, %v2844
  %v2846 = vpop.f32.mrb[0].mxu0
  %2847 = vdwg.mxu0
  %2848 = vrot.lane.b32.xlu0 %v420, 48
  %v2849 = vpop.permute.xlu0 %2848
  %v2852 = vsel %vm1119, %v2540, 0
  %2854 = vmatprep.subr.mxu0 0.0
  %2855 = vmatpush1.msra.mxu0 %v2849
  %2856 = vmatprep.subr.mxu0 0.0
  %2857 = vmatpush1.msra.mxu0 0.0
  %2858 = vmatprep.subr.mxu0 0.0
  %2859 = vmatpush1.msra.mxu0 0.0
  %2860 = vmatprep.subr.mxu0 0.0
  %2861 = vmatpush1.msra.mxu0 0.0
  %2862 = vmatprep.subr.mxu0 0.0
  %2863 = vmatpush1.msra.mxu0 0.0
  %2864 = vmatprep.subr.mxu0 0.0
  %2865 = vmatpush1.msra.mxu0 0.0
  %2866 = vmatprep.subr.mxu0 0.0
  %2867 = vmatpush1.msra.mxu0 0.0
  %2868 = vmatprep.subr.mxu0 0.0
  %2869 = vmatpush1.msra.mxu0 0.0
  %2870 = vmatprep.subr.mxu0 0.0
  %2871 = vmatpush1.msra.mxu0 0.0
  %2872 = vmatprep.subr.mxu0 0.0
  %2873 = vmatpush1.msra.mxu0 0.0
  %2874 = vmatprep.subr.mxu0 0.0
  %2875 = vmatpush1.msra.mxu0 0.0
  %2876 = vmatprep.subr.mxu0 0.0
  %2877 = vmatpush1.msra.mxu0 0.0
  %2878 = vmatprep.subr.mxu0 0.0
  %2879 = vmatpush1.msra.mxu0 0.0
  %2880 = vmatprep.subr.mxu0 0.0
  %2881 = vmatpush1.msra.mxu0 0.0
  %2882 = vmatprep.subr.mxu0 0.0
  %2883 = vmatpush1.msra.mxu0 0.0
  %2884 = vmatprep.subr.mxu0 0.0
  %2885 = vmatpush1.msra.mxu0 0.0
  %2886 = vmatprep.subr.mxu0 0.0
  %2887 = vmatpush1.msra.mxu0 0.0
  %2888 = vmatprep.subr.mxu0 0.0
  %2889 = vmatpush1.msra.mxu0 0.0
  %2890 = vmatprep.subr.mxu0 0.0
  %2891 = vmatpush1.msra.mxu0 0.0
  %2892 = vmatprep.subr.mxu0 0.0
  %2893 = vmatpush1.msra.mxu0 0.0
  %2894 = vmatprep.subr.mxu0 0.0
  %2895 = vmatpush1.msra.mxu0 0.0
  %2896 = vmatprep.subr.mxu0 0.0
  %2897 = vmatpush1.msra.mxu0 0.0
  %2898 = vmatprep.subr.mxu0 0.0
  %2899 = vmatpush1.msra.mxu0 0.0
  %2900 = vmatprep.subr.mxu0 0.0
  %2901 = vmatpush1.msra.mxu0 0.0
  %2902 = vmatprep.subr.mxu0 0.0
  %2903 = vmatpush1.msra.mxu0 0.0
  %2904 = vmatprep.subr.mxu0 0.0
  %2905 = vmatpush1.msra.mxu0 0.0
  %2906 = vmatprep.subr.mxu0 0.0
  %2907 = vmatpush1.msra.mxu0 0.0
  %2908 = vmatprep.subr.mxu0 0.0
  %2909 = vmatpush1.msra.mxu0 0.0
  %2910 = vmatprep.subr.mxu0 0.0
  %2911 = vmatpush1.msra.mxu0 0.0
  %2912 = vmatprep.subr.mxu0 0.0
  %2913 = vmatpush1.msra.mxu0 0.0
  %2914 = vmatprep.subr.mxu0 0.0
  %2915 = vmatpush1.msra.mxu0 0.0
  %2916 = vmatprep.subr.mxu0 0.0
  %2917 = vmatpush1.msra.mxu0 0.0
  %2918 = vmatprep.mubr.f32.mxu0 0.0
  %2919 = vmatmul.mubr.f32.gmra.mrb[0].mxu0 %v2852
  %v2920 = vpop.f32.mrb[0].mxu0
  %v2921 = vadd.f32 0.0, %v2920
  %v2922 = vpop.f32.mrb[0].mxu0
  %2923 = vdwg.mxu0
  %2924 = vrot.lane.b32.xlu0 %v425, 48
  %v2925 = vpop.permute.xlu0 %2924
  %v2928 = vsel %vm1119, %v2541, 0
  %2930 = vmatprep.subr.mxu0 0.0
  %2931 = vmatpush1.msra.mxu0 %v2925
  %2932 = vmatprep.subr.mxu0 0.0
  %2933 = vmatpush1.msra.mxu0 0.0
  %2934 = vmatprep.subr.mxu0 0.0
  %2935 = vmatpush1.msra.mxu0 0.0
  %2936 = vmatprep.subr.mxu0 0.0
  %2937 = vmatpush1.msra.mxu0 0.0
  %2938 = vmatprep.subr.mxu0 0.0
  %2939 = vmatpush1.msra.mxu0 0.0
  %2940 = vmatprep.subr.mxu0 0.0
  %2941 = vmatpush1.msra.mxu0 0.0
  %2942 = vmatprep.subr.mxu0 0.0
  %2943 = vmatpush1.msra.mxu0 0.0
  %2944 = vmatprep.subr.mxu0 0.0
  %2945 = vmatpush1.msra.mxu0 0.0
  %2946 = vmatprep.subr.mxu0 0.0
  %2947 = vmatpush1.msra.mxu0 0.0
  %2948 = vmatprep.subr.mxu0 0.0
  %2949 = vmatpush1.msra.mxu0 0.0
  %2950 = vmatprep.subr.mxu0 0.0
  %2951 = vmatpush1.msra.mxu0 0.0
  %2952 = vmatprep.subr.mxu0 0.0
  %2953 = vmatpush1.msra.mxu0 0.0
  %2954 = vmatprep.subr.mxu0 0.0
  %2955 = vmatpush1.msra.mxu0 0.0
  %2956 = vmatprep.subr.mxu0 0.0
  %2957 = vmatpush1.msra.mxu0 0.0
  %2958 = vmatprep.subr.mxu0 0.0
  %2959 = vmatpush1.msra.mxu0 0.0
  %2960 = vmatprep.subr.mxu0 0.0
  %2961 = vmatpush1.msra.mxu0 0.0
  %2962 = vmatprep.subr.mxu0 0.0
  %2963 = vmatpush1.msra.mxu0 0.0
  %2964 = vmatprep.subr.mxu0 0.0
  %2965 = vmatpush1.msra.mxu0 0.0
  %2966 = vmatprep.subr.mxu0 0.0
  %2967 = vmatpush1.msra.mxu0 0.0
  %2968 = vmatprep.subr.mxu0 0.0
  %2969 = vmatpush1.msra.mxu0 0.0
  %2970 = vmatprep.subr.mxu0 0.0
  %2971 = vmatpush1.msra.mxu0 0.0
  %2972 = vmatprep.subr.mxu0 0.0
  %2973 = vmatpush1.msra.mxu0 0.0
  %2974 = vmatprep.subr.mxu0 0.0
  %2975 = vmatpush1.msra.mxu0 0.0
  %2976 = vmatprep.subr.mxu0 0.0
  %2977 = vmatpush1.msra.mxu0 0.0
  %2978 = vmatprep.subr.mxu0 0.0
  %2979 = vmatpush1.msra.mxu0 0.0
  %2980 = vmatprep.subr.mxu0 0.0
  %2981 = vmatpush1.msra.mxu0 0.0
  %2982 = vmatprep.subr.mxu0 0.0
  %2983 = vmatpush1.msra.mxu0 0.0
  %2984 = vmatprep.subr.mxu0 0.0
  %2985 = vmatpush1.msra.mxu0 0.0
  %2986 = vmatprep.subr.mxu0 0.0
  %2987 = vmatpush1.msra.mxu0 0.0
  %2988 = vmatprep.subr.mxu0 0.0
  %2989 = vmatpush1.msra.mxu0 0.0
  %2990 = vmatprep.subr.mxu0 0.0
  %2991 = vmatpush1.msra.mxu0 0.0
  %2992 = vmatprep.subr.mxu0 0.0
  %2993 = vmatpush1.msra.mxu0 0.0
  %2994 = vmatprep.mubr.f32.mxu0 0.0
  %2995 = vmatmul.mubr.f32.gmra.mrb[0].mxu0 %v2928
  %v2996 = vpop.f32.mrb[0].mxu0
  %v2997 = vadd.f32 0.0, %v2996
  %v2998 = vpop.f32.mrb[0].mxu0
  %2999 = vdwg.mxu0
  %3000 = vrot.lane.b32.xlu0 %v430, 48
  %v3001 = vpop.permute.xlu0 %3000
  %v3004 = vsel %vm1119, %v2542, 0
  %3006 = vmatprep.subr.mxu0 0.0
  %3007 = vmatpush1.msra.mxu0 %v3001
  %3008 = vmatprep.subr.mxu0 0.0
  %3009 = vmatpush1.msra.mxu0 0.0
  %3010 = vmatprep.subr.mxu0 0.0
  %3011 = vmatpush1.msra.mxu0 0.0
  %3012 = vmatprep.subr.mxu0 0.0
  %3013 = vmatpush1.msra.mxu0 0.0
  %3014 = vmatprep.subr.mxu0 0.0
  %3015 = vmatpush1.msra.mxu0 0.0
  %3016 = vmatprep.subr.mxu0 0.0
  %3017 = vmatpush1.msra.mxu0 0.0
  %3018 = vmatprep.subr.mxu0 0.0
  %3019 = vmatpush1.msra.mxu0 0.0
  %3020 = vmatprep.subr.mxu0 0.0
  %3021 = vmatpush1.msra.mxu0 0.0
  %3022 = vmatprep.subr.mxu0 0.0
  %3023 = vmatpush1.msra.mxu0 0.0
  %3024 = vmatprep.subr.mxu0 0.0
  %3025 = vmatpush1.msra.mxu0 0.0
  %3026 = vmatprep.subr.mxu0 0.0
  %3027 = vmatpush1.msra.mxu0 0.0
  %3028 = vmatprep.subr.mxu0 0.0
  %3029 = vmatpush1.msra.mxu0 0.0
  %3030 = vmatprep.subr.mxu0 0.0
  %3031 = vmatpush1.msra.mxu0 0.0
  %3032 = vmatprep.subr.mxu0 0.0
  %3033 = vmatpush1.msra.mxu0 0.0
  %3034 = vmatprep.subr.mxu0 0.0
  %3035 = vmatpush1.msra.mxu0 0.0
  %3036 = vmatprep.subr.mxu0 0.0
  %3037 = vmatpush1.msra.mxu0 0.0
  %3038 = vmatprep.subr.mxu0 0.0
  %3039 = vmatpush1.msra.mxu0 0.0
  %3040 = vmatprep.subr.mxu0 0.0
  %3041 = vmatpush1.msra.mxu0 0.0
  %3042 = vmatprep.subr.mxu0 0.0
  %3043 = vmatpush1.msra.mxu0 0.0
  %3044 = vmatprep.subr.mxu0 0.0
  %3045 = vmatpush1.msra.mxu0 0.0
  %3046 = vmatprep.subr.mxu0 0.0
  %3047 = vmatpush1.msra.mxu0 0.0
  %3048 = vmatprep.subr.mxu0 0.0
  %3049 = vmatpush1.msra.mxu0 0.0
  %3050 = vmatprep.subr.mxu0 0.0
  %3051 = vmatpush1.msra.mxu0 0.0
  %3052 = vmatprep.subr.mxu0 0.0
  %3053 = vmatpush1.msra.mxu0 0.0
  %3054 = vmatprep.subr.mxu0 0.0
  %3055 = vmatpush1.msra.mxu0 0.0
  %3056 = vmatprep.subr.mxu0 0.0
  %3057 = vmatpush1.msra.mxu0 0.0
  %3058 = vmatprep.subr.mxu0 0.0
  %3059 = vmatpush1.msra.mxu0 0.0
  %3060 = vmatprep.subr.mxu0 0.0
  %3061 = vmatpush1.msra.mxu0 0.0
  %3062 = vmatprep.subr.mxu0 0.0
  %3063 = vmatpush1.msra.mxu0 0.0
  %3064 = vmatprep.subr.mxu0 0.0
  %3065 = vmatpush1.msra.mxu0 0.0
  %3066 = vmatprep.subr.mxu0 0.0
  %3067 = vmatpush1.msra.mxu0 0.0
  %3068 = vmatprep.subr.mxu0 0.0
  %3069 = vmatpush1.msra.mxu0 0.0
  %3070 = vmatprep.mubr.f32.mxu0 0.0
  %3071 = vmatmul.mubr.f32.gmra.mrb[0].mxu0 %v3004
  %v3072 = vpop.f32.mrb[0].mxu0
  %v3073 = vadd.f32 0.0, %v3072
  %v3074 = vpop.f32.mrb[0].mxu0
  %3075 = vdwg.mxu0
  %3076 = vrot.lane.b32.xlu0 %v435, 48
  %v3077 = vpop.permute.xlu0 %3076
  %v3080 = vsel %vm1119, %v2543, 0
  %3082 = vmatprep.subr.mxu0 0.0
  %3083 = vmatpush1.msra.mxu0 %v3077
  %3084 = vmatprep.subr.mxu0 0.0
  %3085 = vmatpush1.msra.mxu0 0.0
  %3086 = vmatprep.subr.mxu0 0.0
  %3087 = vmatpush1.msra.mxu0 0.0
  %3088 = vmatprep.subr.mxu0 0.0
  %3089 = vmatpush1.msra.mxu0 0.0
  %3090 = vmatprep.subr.mxu0 0.0
  %3091 = vmatpush1.msra.mxu0 0.0
  %3092 = vmatprep.subr.mxu0 0.0
  %3093 = vmatpush1.msra.mxu0 0.0
  %3094 = vmatprep.subr.mxu0 0.0
  %3095 = vmatpush1.msra.mxu0 0.0
  %3096 = vmatprep.subr.mxu0 0.0
  %3097 = vmatpush1.msra.mxu0 0.0
  %3098 = vmatprep.subr.mxu0 0.0
  %3099 = vmatpush1.msra.mxu0 0.0
  %3100 = vmatprep.subr.mxu0 0.0
  %3101 = vmatpush1.msra.mxu0 0.0
  %3102 = vmatprep.subr.mxu0 0.0
  %3103 = vmatpush1.msra.mxu0 0.0
  %3104 = vmatprep.subr.mxu0 0.0
  %3105 = vmatpush1.msra.mxu0 0.0
  %3106 = vmatprep.subr.mxu0 0.0
  %3107 = vmatpush1.msra.mxu0 0.0
  %3108 = vmatprep.subr.mxu0 0.0
  %3109 = vmatpush1.msra.mxu0 0.0
  %3110 = vmatprep.subr.mxu0 0.0
  %3111 = vmatpush1.msra.mxu0 0.0
  %3112 = vmatprep.subr.mxu0 0.0
  %3113 = vmatpush1.msra.mxu0 0.0
  %3114 = vmatprep.subr.mxu0 0.0
  %3115 = vmatpush1.msra.mxu0 0.0
  %3116 = vmatprep.subr.mxu0 0.0
  %3117 = vmatpush1.msra.mxu0 0.0
  %3118 = vmatprep.subr.mxu0 0.0
  %3119 = vmatpush1.msra.mxu0 0.0
  %3120 = vmatprep.subr.mxu0 0.0
  %3121 = vmatpush1.msra.mxu0 0.0
  %3122 = vmatprep.subr.mxu0 0.0
  %3123 = vmatpush1.msra.mxu0 0.0
  %3124 = vmatprep.subr.mxu0 0.0
  %3125 = vmatpush1.msra.mxu0 0.0
  %3126 = vmatprep.subr.mxu0 0.0
  %3127 = vmatpush1.msra.mxu0 0.0
  %3128 = vmatprep.subr.mxu0 0.0
  %3129 = vmatpush1.msra.mxu0 0.0
  %3130 = vmatprep.subr.mxu0 0.0
  %3131 = vmatpush1.msra.mxu0 0.0
  %3132 = vmatprep.subr.mxu0 0.0
  %3133 = vmatpush1.msra.mxu0 0.0
  %3134 = vmatprep.subr.mxu0 0.0
  %3135 = vmatpush1.msra.mxu0 0.0
  %3136 = vmatprep.subr.mxu0 0.0
  %3137 = vmatpush1.msra.mxu0 0.0
  %3138 = vmatprep.subr.mxu0 0.0
  %3139 = vmatpush1.msra.mxu0 0.0
  %3140 = vmatprep.subr.mxu0 0.0
  %3141 = vmatpush1.msra.mxu0 0.0
  %3142 = vmatprep.subr.mxu0 0.0
  %3143 = vmatpush1.msra.mxu0 0.0
  %3144 = vmatprep.subr.mxu0 0.0
  %3145 = vmatpush1.msra.mxu0 0.0
  %3146 = vmatprep.mubr.f32.mxu0 0.0
  %3147 = vmatmul.mubr.f32.gmra.mrb[0].mxu0 %v3080
  %v3148 = vpop.f32.mrb[0].mxu0
  %v3149 = vadd.f32 0.0, %v3148
  %v3150 = vpop.f32.mrb[0].mxu0
  %3151 = vdwg.mxu0
  %3160 = vrot.lane.b32.xlu0 %v2617, 16
  %v3161 = vpop.permute.xlu0 %3160
  %3162 = vrot.lane.b32.xlu0 %v2693, 16
  %v3163 = vpop.permute.xlu0 %3162
  %3164 = vrot.lane.b32.xlu0 %v2769, 16
  %v3165 = vpop.permute.xlu0 %3164
  %3166 = vrot.lane.b32.xlu0 %v2845, 16
  %v3167 = vpop.permute.xlu0 %3166
  %3168 = vrot.lane.b32.xlu0 %v2921, 16
  %v3169 = vpop.permute.xlu0 %3168
  %3170 = vrot.lane.b32.xlu0 %v2997, 16
  %v3171 = vpop.permute.xlu0 %3170
  %3172 = vrot.lane.b32.xlu0 %v3073, 16
  %v3173 = vpop.permute.xlu0 %3172
  %3174 = vrot.lane.b32.xlu0 %v3149, 16
  %v3175 = vpop.permute.xlu0 %3174
  %v3184 = vsel %vm441, %v1281, %v3161
  %v3185 = vsel %vm441, %v1357, %v3163
  %v3186 = vsel %vm441, %v1433, %v3165
  %v3187 = vsel %vm441, %v1509, %v3167
  %v3188 = vsel %vm441, %v1585, %v3169
  %v3189 = vsel %vm441, %v1661, %v3171
  %v3190 = vsel %vm441, %v1737, %v3173
  %v3191 = vsel %vm441, %v1813, %v3175
  %v3193 = vlaneseq
  %v3194 = vshrl.u32 %v3193, 7
  %v3195 = vsub.s32 0, %v3194
  %v3196 = vrot.slane %v96, %v3195
  %v3199 = vsel %vm113, %v3184, 0
  %v3202 = vsel %vm113, %v3185, 0
  %v3205 = vsel %vm113, %v3186, 0
  %v3208 = vsel %vm113, %v3187, 0
  %v3211 = vsel %vm113, %v3188, 0
  %v3214 = vsel %vm113, %v3189, 0
  %v3217 = vsel %vm113, %v3190, 0
  %v3220 = vsel %vm113, %v3191, 0
  %3222 = vmatprep.subr.mxu0 0.0
  %3223 = vmatpush1.msra.mxu0 %v92
  %3224 = vmatprep.subr.mxu0 0.0
  %3225 = vmatpush1.msra.mxu0 %v93
  %3226 = vmatprep.subr.mxu0 0.0
  %3227 = vmatpush1.msra.mxu0 %v94
  %3228 = vmatprep.subr.mxu0 0.0
  %3229 = vmatpush1.msra.mxu0 %v95
  %3230 = vmatprep.subr.mxu0 0.0
  %3231 = vmatpush1.msra.mxu0 0.0
  %3232 = vmatprep.subr.mxu0 0.0
  %3233 = vmatpush1.msra.mxu0 0.0
  %3234 = vmatprep.subr.mxu0 0.0
  %3235 = vmatpush1.msra.mxu0 0.0
  %3236 = vmatprep.subr.mxu0 0.0
  %3237 = vmatpush1.msra.mxu0 0.0
  %3238 = vmatprep.subr.mxu0 0.0
  %3239 = vmatpush1.msra.mxu0 0.0
  %3240 = vmatprep.subr.mxu0 0.0
  %3241 = vmatpush1.msra.mxu0 0.0
  %3242 = vmatprep.subr.mxu0 0.0
  %3243 = vmatpush1.msra.mxu0 0.0
  %3244 = vmatprep.subr.mxu0 0.0
  %3245 = vmatpush1.msra.mxu0 0.0
  %3246 = vmatprep.subr.mxu0 0.0
  %3247 = vmatpush1.msra.mxu0 0.0
  %3248 = vmatprep.subr.mxu0 0.0
  %3249 = vmatpush1.msra.mxu0 0.0
  %3250 = vmatprep.subr.mxu0 0.0
  %3251 = vmatpush1.msra.mxu0 0.0
  %3252 = vmatprep.subr.mxu0 0.0
  %3253 = vmatpush1.msra.mxu0 0.0
  %3254 = vmatprep.subr.mxu0 0.0
  %3255 = vmatpush1.msra.mxu0 0.0
  %3256 = vmatprep.subr.mxu0 0.0
  %3257 = vmatpush1.msra.mxu0 0.0
  %3258 = vmatprep.subr.mxu0 0.0
  %3259 = vmatpush1.msra.mxu0 0.0
  %3260 = vmatprep.subr.mxu0 0.0
  %3261 = vmatpush1.msra.mxu0 0.0
  %3262 = vmatprep.subr.mxu0 0.0
  %3263 = vmatpush1.msra.mxu0 0.0
  %3264 = vmatprep.subr.mxu0 0.0
  %3265 = vmatpush1.msra.mxu0 0.0
  %3266 = vmatprep.subr.mxu0 0.0
  %3267 = vmatpush1.msra.mxu0 0.0
  %3268 = vmatprep.subr.mxu0 0.0
  %3269 = vmatpush1.msra.mxu0 0.0
  %3270 = vmatprep.subr.mxu0 0.0
  %3271 = vmatpush1.msra.mxu0 0.0
  %3272 = vmatprep.subr.mxu0 0.0
  %3273 = vmatpush1.msra.mxu0 0.0
  %3274 = vmatprep.subr.mxu0 0.0
  %3275 = vmatpush1.msra.mxu0 0.0
  %3276 = vmatprep.subr.mxu0 0.0
  %3277 = vmatpush1.msra.mxu0 0.0
  %3278 = vmatprep.subr.mxu0 0.0
  %3279 = vmatpush1.msra.mxu0 0.0
  %3280 = vmatprep.subr.mxu0 0.0
  %3281 = vmatpush1.msra.mxu0 0.0
  %3282 = vmatprep.subr.mxu0 0.0
  %3283 = vmatpush1.msra.mxu0 0.0
  %3284 = vmatprep.subr.mxu0 0.0
  %3285 = vmatpush1.msra.mxu0 0.0
  %3286 = vmatprep.mubr.f32.mxu0 0.0
  %3287 = vmatmul.mubr.f32.gmra.mrb[0].mxu0 %v3199
  %v3288 = vpop.f32.mrb[0].mxu0
  %v3289 = vadd.f32 %v3196, %v3288
  %v3290 = vpop.f32.mrb[0].mxu0
  %3291 = vmatprep.mubr.f32.mxu0 0.0
  %3292 = vmatmul.mubr.f32.gmra.mrb[0].mxu0 %v3202
  %v3293 = vpop.f32.mrb[0].mxu0
  %v3294 = vadd.f32 %v3196, %v3293
  %v3295 = vpop.f32.mrb[0].mxu0
  %3296 = vmatprep.mubr.f32.mxu0 0.0
  %3297 = vmatmul.mubr.f32.gmra.mrb[0].mxu0 %v3205
  %v3298 = vpop.f32.mrb[0].mxu0
  %v3299 = vadd.f32 %v3196, %v3298
  %v3300 = vpop.f32.mrb[0].mxu0
  %3301 = vmatprep.mubr.f32.mxu0 0.0
  %3302 = vmatmul.mubr.f32.gmra.mrb[0].mxu0 %v3208
  %v3303 = vpop.f32.mrb[0].mxu0
  %v3304 = vadd.f32 %v3196, %v3303
  %v3305 = vpop.f32.mrb[0].mxu0
  %3306 = vmatprep.mubr.f32.mxu0 0.0
  %3307 = vmatmul.mubr.f32.gmra.mrb[0].mxu0 %v3211
  %v3308 = vpop.f32.mrb[0].mxu0
  %v3309 = vadd.f32 %v3196, %v3308
  %v3310 = vpop.f32.mrb[0].mxu0
  %3311 = vmatprep.mubr.f32.mxu0 0.0
  %3312 = vmatmul.mubr.f32.gmra.mrb[0].mxu0 %v3214
  %v3313 = vpop.f32.mrb[0].mxu0
  %v3314 = vadd.f32 %v3196, %v3313
  %v3315 = vpop.f32.mrb[0].mxu0
  %3316 = vmatprep.mubr.f32.mxu0 0.0
  %3317 = vmatmul.mubr.f32.gmra.mrb[0].mxu0 %v3217
  %v3318 = vpop.f32.mrb[0].mxu0
  %v3319 = vadd.f32 %v3196, %v3318
  %v3320 = vpop.f32.mrb[0].mxu0
  %3321 = vmatprep.mubr.f32.mxu0 0.0
  %3322 = vmatmul.mubr.f32.gmra.mrb[0].mxu0 %v3220
  %v3323 = vpop.f32.mrb[0].mxu0
  %v3324 = vadd.f32 %v3196, %v3323
  %v3325 = vpop.f32.mrb[0].mxu0
  %3326 = vdwg.mxu0
  %v3327 = vadd.f32 %v53, %v3289
  %v3328 = vadd.f32 %v54, %v3294
  %v3329 = vadd.f32 %v55, %v3299
  %v3330 = vadd.f32 %v56, %v3304
  %v3331 = vadd.f32 %v57, %v3309
  %v3332 = vadd.f32 %v58, %v3314
  %v3333 = vadd.f32 %v59, %v3319
  %v3334 = vadd.f32 %v60, %v3324
  %v3335 = vsel %vm113, %v3327, 0.0
  %3336 = vadd.xlane.f32.xlu0 %v3335
  %v3337 = vpop.xlane.xlu0 %3336
  %v3338 = vsel %vm113, %v3328, 0.0
  %3339 = vadd.xlane.f32.xlu0 %v3338
  %v3340 = vpop.xlane.xlu0 %3339
  %v3341 = vsel %vm113, %v3329, 0.0
  %3342 = vadd.xlane.f32.xlu0 %v3341
  %v3343 = vpop.xlane.xlu0 %3342
  %v3344 = vsel %vm113, %v3330, 0.0
  %3345 = vadd.xlane.f32.xlu0 %v3344
  %v3346 = vpop.xlane.xlu0 %3345
  %v3347 = vsel %vm113, %v3331, 0.0
  %3348 = vadd.xlane.f32.xlu0 %v3347
  %v3349 = vpop.xlane.xlu0 %3348
  %v3350 = vsel %vm113, %v3332, 0.0
  %3351 = vadd.xlane.f32.xlu0 %v3350
  %v3352 = vpop.xlane.xlu0 %3351
  %v3353 = vsel %vm113, %v3333, 0.0
  %3354 = vadd.xlane.f32.xlu0 %v3353
  %v3355 = vpop.xlane.xlu0 %3354
  %v3356 = vsel %vm113, %v3334, 0.0
  %3357 = vadd.xlane.f32.xlu0 %v3356
  %v3358 = vpop.xlane.xlu0 %3357
  %v3359 = vmul.f32 %v3337, %v138
  %v3360 = vmul.f32 %v3340, %v138
  %v3361 = vmul.f32 %v3343, %v138
  %v3362 = vmul.f32 %v3346, %v138
  %v3363 = vmul.f32 %v3349, %v138
  %v3364 = vmul.f32 %v3352, %v138
  %v3365 = vmul.f32 %v3355, %v138
  %v3366 = vmul.f32 %v3358, %v138
  %v3367 = vsub.f32 %v3327, %v3359
  %v3368 = vsub.f32 %v3328, %v3360
  %v3369 = vsub.f32 %v3329, %v3361
  %v3370 = vsub.f32 %v3330, %v3362
  %v3371 = vsub.f32 %v3331, %v3363
  %v3372 = vsub.f32 %v3332, %v3364
  %v3373 = vsub.f32 %v3333, %v3365
  %v3374 = vsub.f32 %v3334, %v3366
  %v3375 = vmul.f32 %v3367, %v3367
  %v3376 = vmul.f32 %v3368, %v3368
  %v3377 = vmul.f32 %v3369, %v3369
  %v3378 = vmul.f32 %v3370, %v3370
  %v3379 = vmul.f32 %v3371, %v3371
  %v3380 = vmul.f32 %v3372, %v3372
  %v3381 = vmul.f32 %v3373, %v3373
  %v3382 = vmul.f32 %v3374, %v3374
  %v3383 = vsel %vm113, %v3375, 0.0
  %3384 = vadd.xlane.f32.xlu0 %v3383
  %v3385 = vpop.xlane.xlu0 %3384
  %v3386 = vsel %vm113, %v3376, 0.0
  %3387 = vadd.xlane.f32.xlu0 %v3386
  %v3388 = vpop.xlane.xlu0 %3387
  %v3389 = vsel %vm113, %v3377, 0.0
  %3390 = vadd.xlane.f32.xlu0 %v3389
  %v3391 = vpop.xlane.xlu0 %3390
  %v3392 = vsel %vm113, %v3378, 0.0
  %3393 = vadd.xlane.f32.xlu0 %v3392
  %v3394 = vpop.xlane.xlu0 %3393
  %v3395 = vsel %vm113, %v3379, 0.0
  %3396 = vadd.xlane.f32.xlu0 %v3395
  %v3397 = vpop.xlane.xlu0 %3396
  %v3398 = vsel %vm113, %v3380, 0.0
  %3399 = vadd.xlane.f32.xlu0 %v3398
  %v3400 = vpop.xlane.xlu0 %3399
  %v3401 = vsel %vm113, %v3381, 0.0
  %3402 = vadd.xlane.f32.xlu0 %v3401
  %v3403 = vpop.xlane.xlu0 %3402
  %v3404 = vsel %vm113, %v3382, 0.0
  %3405 = vadd.xlane.f32.xlu0 %v3404
  %v3406 = vpop.xlane.xlu0 %3405
  %v3407 = vmul.f32 %v3385, 0.032258064
  %v3408 = vmul.f32 %v3388, 0.032258064
  %v3409 = vmul.f32 %v3391, 0.032258064
  %v3410 = vmul.f32 %v3394, 0.032258064
  %v3411 = vmul.f32 %v3397, 0.032258064
  %v3412 = vmul.f32 %v3400, 0.032258064
  %v3413 = vmul.f32 %v3403, 0.032258064
  %v3414 = vmul.f32 %v3406, 0.032258064
  %v3415 = vrsqrt.pop %v3407
  %v3416 = vmul.f32 %v3407, %v3415
  %vm3417 = vcmp.eq.f32.partialorder %v3407, inf
  %v3418 = vsel %vm3417, %v3407, %v3416
  %vm3419 = vcmp.eq.f32.partialorder %v3407, 0.0
  %v3420 = vand.u32 %v3407, 2147483648
  %v3421 = vsel %vm3419, %v3420, %v3418
  %v3422 = vrsqrt.pop %v3408
  %v3423 = vmul.f32 %v3408, %v3422
  %vm3424 = vcmp.eq.f32.partialorder %v3408, inf
  %v3425 = vsel %vm3424, %v3408, %v3423
  %vm3426 = vcmp.eq.f32.partialorder %v3408, 0.0
  %v3427 = vand.u32 %v3408, 2147483648
  %v3428 = vsel %vm3426, %v3427, %v3425
  %v3429 = vrsqrt.pop %v3409
  %v3430 = vmul.f32 %v3409, %v3429
  %vm3431 = vcmp.eq.f32.partialorder %v3409, inf
  %v3432 = vsel %vm3431, %v3409, %v3430
  %vm3433 = vcmp.eq.f32.partialorder %v3409, 0.0
  %v3434 = vand.u32 %v3409, 2147483648
  %v3435 = vsel %vm3433, %v3434, %v3432
  %v3436 = vrsqrt.pop %v3410
  %v3437 = vmul.f32 %v3410, %v3436
  %vm3438 = vcmp.eq.f32.partialorder %v3410, inf
  %v3439 = vsel %vm3438, %v3410, %v3437
  %vm3440 = vcmp.eq.f32.partialorder %v3410, 0.0
  %v3441 = vand.u32 %v3410, 2147483648
  %v3442 = vsel %vm3440, %v3441, %v3439
  %v3443 = vrsqrt.pop %v3411
  %v3444 = vmul.f32 %v3411, %v3443
  %vm3445 = vcmp.eq.f32.partialorder %v3411, inf
  %v3446 = vsel %vm3445, %v3411, %v3444
  %vm3447 = vcmp.eq.f32.partialorder %v3411, 0.0
  %v3448 = vand.u32 %v3411, 2147483648
  %v3449 = vsel %vm3447, %v3448, %v3446
  %v3450 = vrsqrt.pop %v3412
  %v3451 = vmul.f32 %v3412, %v3450
  %vm3452 = vcmp.eq.f32.partialorder %v3412, inf
  %v3453 = vsel %vm3452, %v3412, %v3451
  %vm3454 = vcmp.eq.f32.partialorder %v3412, 0.0
  %v3455 = vand.u32 %v3412, 2147483648
  %v3456 = vsel %vm3454, %v3455, %v3453
  %v3457 = vrsqrt.pop %v3413
  %v3458 = vmul.f32 %v3413, %v3457
  %vm3459 = vcmp.eq.f32.partialorder %v3413, inf
  %v3460 = vsel %vm3459, %v3413, %v3458
  %vm3461 = vcmp.eq.f32.partialorder %v3413, 0.0
  %v3462 = vand.u32 %v3413, 2147483648
  %v3463 = vsel %vm3461, %v3462, %v3460
  %v3464 = vrsqrt.pop %v3414
  %v3465 = vmul.f32 %v3414, %v3464
  %vm3466 = vcmp.eq.f32.partialorder %v3414, inf
  %v3467 = vsel %vm3466, %v3414, %v3465
  %vm3468 = vcmp.eq.f32.partialorder %v3414, 0.0
  %v3469 = vand.u32 %v3414, 2147483648
  %v3470 = vsel %vm3468, %v3469, %v3467
  %v3471 = vadd.f32 %v3421, 1e-06
  %v3472 = vadd.f32 %v3428, 1e-06
  %v3473 = vadd.f32 %v3435, 1e-06
  %v3474 = vadd.f32 %v3442, 1e-06
  %v3475 = vadd.f32 %v3449, 1e-06
  %v3476 = vadd.f32 %v3456, 1e-06
  %v3477 = vadd.f32 %v3463, 1e-06
  %v3478 = vadd.f32 %v3470, 1e-06
  %v3479 = vrcp.pop %v3471
  %v3480 = vrcp.pop %v3472
  %v3481 = vrcp.pop %v3473
  %v3482 = vrcp.pop %v3474
  %v3483 = vrcp.pop %v3475
  %v3484 = vrcp.pop %v3476
  %v3485 = vrcp.pop %v3477
  %v3486 = vrcp.pop %v3478
  %v3488 = vlaneseq
  %v3489 = vshrl.u32 %v3488, 7
  %v3490 = vsub.s32 0, %v3489
  %v3491 = vrot.slane %v97, %v3490
  %v3493 = vmul.f32 %v3491, %v3367
  %v3494 = vmul.f32 %v3491, %v3368
  %v3495 = vmul.f32 %v3491, %v3369
  %v3496 = vmul.f32 %v3491, %v3370
  %v3497 = vmul.f32 %v3491, %v3371
  %v3498 = vmul.f32 %v3491, %v3372
  %v3499 = vmul.f32 %v3491, %v3373
  %v3500 = vmul.f32 %v3491, %v3374
  %v3501 = vmul.f32 %v3493, %v3479
  %v3502 = vmul.f32 %v3494, %v3480
  %v3503 = vmul.f32 %v3495, %v3481
  %v3504 = vmul.f32 %v3496, %v3482
  %v3505 = vmul.f32 %v3497, %v3483
  %v3506 = vmul.f32 %v3498, %v3484
  %v3507 = vmul.f32 %v3499, %v3485
  %v3508 = vmul.f32 %v3500, %v3486
  %v3510 = vlaneseq
  %v3511 = vshrl.u32 %v3510, 7
  %v3512 = vsub.s32 0, %v3511
  %v3513 = vrot.slane %v98, %v3512
  %v3515 = vadd.f32 %v3501, %v3513
  %v3516 = vadd.f32 %v3502, %v3513
  %v3517 = vadd.f32 %v3503, %v3513
  %v3518 = vadd.f32 %v3504, %v3513
  %v3519 = vadd.f32 %v3505, %v3513
  %v3520 = vadd.f32 %v3506, %v3513
  %v3521 = vadd.f32 %v3507, %v3513
  %v3522 = vadd.f32 %v3508, %v3513
  %v3524 = vlaneseq
  %v3525 = vshrl.u32 %v3524, 7
  %v3526 = vsub.s32 0, %v3525
  %v3527 = vrot.slane %v103, %v3526
  %v3530 = vsel %vm113, %v3515, 0
  %v3533 = vsel %vm113, %v3516, 0
  %v3536 = vsel %vm113, %v3517, 0
  %v3539 = vsel %vm113, %v3518, 0
  %v3542 = vsel %vm113, %v3519, 0
  %v3545 = vsel %vm113, %v3520, 0
  %v3548 = vsel %vm113, %v3521, 0
  %v3551 = vsel %vm113, %v3522, 0
  %3553 = vmatprep.subr.mxu0 0.0
  %3554 = vmatpush1.msra.mxu0 %v99
  %3555 = vmatprep.subr.mxu0 0.0
  %3556 = vmatpush1.msra.mxu0 %v100
  %3557 = vmatprep.subr.mxu0 0.0
  %3558 = vmatpush1.msra.mxu0 %v101
  %3559 = vmatprep.subr.mxu0 0.0
  %3560 = vmatpush1.msra.mxu0 %v102
  %3561 = vmatprep.subr.mxu0 0.0
  %3562 = vmatpush1.msra.mxu0 0.0
  %3563 = vmatprep.subr.mxu0 0.0
  %3564 = vmatpush1.msra.mxu0 0.0
  %3565 = vmatprep.subr.mxu0 0.0
  %3566 = vmatpush1.msra.mxu0 0.0
  %3567 = vmatprep.subr.mxu0 0.0
  %3568 = vmatpush1.msra.mxu0 0.0
  %3569 = vmatprep.subr.mxu0 0.0
  %3570 = vmatpush1.msra.mxu0 0.0
  %3571 = vmatprep.subr.mxu0 0.0
  %3572 = vmatpush1.msra.mxu0 0.0
  %3573 = vmatprep.subr.mxu0 0.0
  %3574 = vmatpush1.msra.mxu0 0.0
  %3575 = vmatprep.subr.mxu0 0.0
  %3576 = vmatpush1.msra.mxu0 0.0
  %3577 = vmatprep.subr.mxu0 0.0
  %3578 = vmatpush1.msra.mxu0 0.0
  %3579 = vmatprep.subr.mxu0 0.0
  %3580 = vmatpush1.msra.mxu0 0.0
  %3581 = vmatprep.subr.mxu0 0.0
  %3582 = vmatpush1.msra.mxu0 0.0
  %3583 = vmatprep.subr.mxu0 0.0
  %3584 = vmatpush1.msra.mxu0 0.0
  %3585 = vmatprep.subr.mxu0 0.0
  %3586 = vmatpush1.msra.mxu0 0.0
  %3587 = vmatprep.subr.mxu0 0.0
  %3588 = vmatpush1.msra.mxu0 0.0
  %3589 = vmatprep.subr.mxu0 0.0
  %3590 = vmatpush1.msra.mxu0 0.0
  %3591 = vmatprep.subr.mxu0 0.0
  %3592 = vmatpush1.msra.mxu0 0.0
  %3593 = vmatprep.subr.mxu0 0.0
  %3594 = vmatpush1.msra.mxu0 0.0
  %3595 = vmatprep.subr.mxu0 0.0
  %3596 = vmatpush1.msra.mxu0 0.0
  %3597 = vmatprep.subr.mxu0 0.0
  %3598 = vmatpush1.msra.mxu0 0.0
  %3599 = vmatprep.subr.mxu0 0.0
  %3600 = vmatpush1.msra.mxu0 0.0
  %3601 = vmatprep.subr.mxu0 0.0
  %3602 = vmatpush1.msra.mxu0 0.0
  %3603 = vmatprep.subr.mxu0 0.0
  %3604 = vmatpush1.msra.mxu0 0.0
  %3605 = vmatprep.subr.mxu0 0.0
  %3606 = vmatpush1.msra.mxu0 0.0
  %3607 = vmatprep.subr.mxu0 0.0
  %3608 = vmatpush1.msra.mxu0 0.0
  %3609 = vmatprep.subr.mxu0 0.0
  %3610 = vmatpush1.msra.mxu0 0.0
  %3611 = vmatprep.subr.mxu0 0.0
  %3612 = vmatpush1.msra.mxu0 0.0
  %3613 = vmatprep.subr.mxu0 0.0
  %3614 = vmatpush1.msra.mxu0 0.0
  %3615 = vmatprep.subr.mxu0 0.0
  %3616 = vmatpush1.msra.mxu0 0.0
  %3617 = vmatprep.mubr.f32.mxu0 0.0
  %3618 = vmatmul.mubr.f32.gmra.mrb[0].mxu0 %v3530
  %v3619 = vpop.f32.mrb[0].mxu0
  %v3620 = vadd.f32 %v3527, %v3619
  %v3621 = vpop.f32.mrb[0].mxu0
  %3622 = vmatprep.mubr.f32.mxu0 0.0
  %3623 = vmatmul.mubr.f32.gmra.mrb[0].mxu0 %v3533
  %v3624 = vpop.f32.mrb[0].mxu0
  %v3625 = vadd.f32 %v3527, %v3624
  %v3626 = vpop.f32.mrb[0].mxu0
  %3627 = vmatprep.mubr.f32.mxu0 0.0
  %3628 = vmatmul.mubr.f32.gmra.mrb[0].mxu0 %v3536
  %v3629 = vpop.f32.mrb[0].mxu0
  %v3630 = vadd.f32 %v3527, %v3629
  %v3631 = vpop.f32.mrb[0].mxu0
  %3632 = vmatprep.mubr.f32.mxu0 0.0
  %3633 = vmatmul.mubr.f32.gmra.mrb[0].mxu0 %v3539
  %v3634 = vpop.f32.mrb[0].mxu0
  %v3635 = vadd.f32 %v3527, %v3634
  %v3636 = vpop.f32.mrb[0].mxu0
  %3637 = vmatprep.mubr.f32.mxu0 0.0
  %3638 = vmatmul.mubr.f32.gmra.mrb[0].mxu0 %v3542
  %v3639 = vpop.f32.mrb[0].mxu0
  %v3640 = vadd.f32 %v3527, %v3639
  %v3641 = vpop.f32.mrb[0].mxu0
  %3642 = vmatprep.mubr.f32.mxu0 0.0
  %3643 = vmatmul.mubr.f32.gmra.mrb[0].mxu0 %v3545
  %v3644 = vpop.f32.mrb[0].mxu0
  %v3645 = vadd.f32 %v3527, %v3644
  %v3646 = vpop.f32.mrb[0].mxu0
  %3647 = vmatprep.mubr.f32.mxu0 0.0
  %3648 = vmatmul.mubr.f32.gmra.mrb[0].mxu0 %v3548
  %v3649 = vpop.f32.mrb[0].mxu0
  %v3650 = vadd.f32 %v3527, %v3649
  %v3651 = vpop.f32.mrb[0].mxu0
  %3652 = vmatprep.mubr.f32.mxu0 0.0
  %3653 = vmatmul.mubr.f32.gmra.mrb[0].mxu0 %v3551
  %v3654 = vpop.f32.mrb[0].mxu0
  %v3655 = vadd.f32 %v3527, %v3654
  %v3656 = vpop.f32.mrb[0].mxu0
  %3657 = vdwg.mxu0
  %v3658 = vmax.f32 %v3620, 0.0
  %v3659 = vmax.f32 %v3625, 0.0
  %v3660 = vmax.f32 %v3630, 0.0
  %v3661 = vmax.f32 %v3635, 0.0
  %v3662 = vmax.f32 %v3640, 0.0
  %v3663 = vmax.f32 %v3645, 0.0
  %v3664 = vmax.f32 %v3650, 0.0
  %v3665 = vmax.f32 %v3655, 0.0
  %v3667 = vlaneseq
  %v3668 = vshrl.u32 %v3667, 7
  %v3669 = vsub.s32 0, %v3668
  %v3670 = vrot.slane %v112, %v3669
  %vm3672 = vcmask 523264
  %v3674 = vsel %vm3672, %v3658, 0
  %v3677 = vsel %vm3672, %v3659, 0
  %v3680 = vsel %vm3672, %v3660, 0
  %v3683 = vsel %vm3672, %v3661, 0
  %v3686 = vsel %vm3672, %v3662, 0
  %v3689 = vsel %vm3672, %v3663, 0
  %v3692 = vsel %vm3672, %v3664, 0
  %v3695 = vsel %vm3672, %v3665, 0
  %3697 = vmatprep.subr.mxu0 0.0
  %3698 = vmatpush1.msra.mxu0 %v104
  %3699 = vmatprep.subr.mxu0 0.0
  %3700 = vmatpush1.msra.mxu0 %v105
  %3701 = vmatprep.subr.mxu0 0.0
  %3702 = vmatpush1.msra.mxu0 %v106
  %3703 = vmatprep.subr.mxu0 0.0
  %3704 = vmatpush1.msra.mxu0 %v107
  %3705 = vmatprep.subr.mxu0 0.0
  %3706 = vmatpush1.msra.mxu0 %v108
  %3707 = vmatprep.subr.mxu0 0.0
  %3708 = vmatpush1.msra.mxu0 %v109
  %3709 = vmatprep.subr.mxu0 0.0
  %3710 = vmatpush1.msra.mxu0 %v110
  %3711 = vmatprep.subr.mxu0 0.0
  %3712 = vmatpush1.msra.mxu0 %v111
  %3713 = vmatprep.subr.mxu0 0.0
  %3714 = vmatpush1.msra.mxu0 0.0
  %3715 = vmatprep.subr.mxu0 0.0
  %3716 = vmatpush1.msra.mxu0 0.0
  %3717 = vmatprep.subr.mxu0 0.0
  %3718 = vmatpush1.msra.mxu0 0.0
  %3719 = vmatprep.subr.mxu0 0.0
  %3720 = vmatpush1.msra.mxu0 0.0
  %3721 = vmatprep.subr.mxu0 0.0
  %3722 = vmatpush1.msra.mxu0 0.0
  %3723 = vmatprep.subr.mxu0 0.0
  %3724 = vmatpush1.msra.mxu0 0.0
  %3725 = vmatprep.subr.mxu0 0.0
  %3726 = vmatpush1.msra.mxu0 0.0
  %3727 = vmatprep.subr.mxu0 0.0
  %3728 = vmatpush1.msra.mxu0 0.0
  %3729 = vmatprep.subr.mxu0 0.0
  %3730 = vmatpush1.msra.mxu0 0.0
  %3731 = vmatprep.subr.mxu0 0.0
  %3732 = vmatpush1.msra.mxu0 0.0
  %3733 = vmatprep.subr.mxu0 0.0
  %3734 = vmatpush1.msra.mxu0 0.0
  %3735 = vmatprep.subr.mxu0 0.0
  %3736 = vmatpush1.msra.mxu0 0.0
  %3737 = vmatprep.subr.mxu0 0.0
  %3738 = vmatpush1.msra.mxu0 0.0
  %3739 = vmatprep.subr.mxu0 0.0
  %3740 = vmatpush1.msra.mxu0 0.0
  %3741 = vmatprep.subr.mxu0 0.0
  %3742 = vmatpush1.msra.mxu0 0.0
  %3743 = vmatprep.subr.mxu0 0.0
  %3744 = vmatpush1.msra.mxu0 0.0
  %3745 = vmatprep.subr.mxu0 0.0
  %3746 = vmatpush1.msra.mxu0 0.0
  %3747 = vmatprep.subr.mxu0 0.0
  %3748 = vmatpush1.msra.mxu0 0.0
  %3749 = vmatprep.subr.mxu0 0.0
  %3750 = vmatpush1.msra.mxu0 0.0
  %3751 = vmatprep.subr.mxu0 0.0
  %3752 = vmatpush1.msra.mxu0 0.0
  %3753 = vmatprep.subr.mxu0 0.0
  %3754 = vmatpush1.msra.mxu0 0.0
  %3755 = vmatprep.subr.mxu0 0.0
  %3756 = vmatpush1.msra.mxu0 0.0
  %3757 = vmatprep.subr.mxu0 0.0
  %3758 = vmatpush1.msra.mxu0 0.0
  %3759 = vmatprep.subr.mxu0 0.0
  %3760 = vmatpush1.msra.mxu0 0.0
  %3761 = vmatprep.mubr.f32.mxu0 0.0
  %3762 = vmatmul.mubr.f32.gmra.mrb[0].mxu0 %v3674
  %v3763 = vpop.f32.mrb[0].mxu0
  %v3764 = vadd.f32 %v3670, %v3763
  %v3765 = vpop.f32.mrb[0].mxu0
  %3766 = vmatprep.mubr.f32.mxu0 0.0
  %3767 = vmatmul.mubr.f32.gmra.mrb[0].mxu0 %v3677
  %v3768 = vpop.f32.mrb[0].mxu0
  %v3769 = vadd.f32 %v3670, %v3768
  %v3770 = vpop.f32.mrb[0].mxu0
  %3771 = vmatprep.mubr.f32.mxu0 0.0
  %3772 = vmatmul.mubr.f32.gmra.mrb[0].mxu0 %v3680
  %v3773 = vpop.f32.mrb[0].mxu0
  %v3774 = vadd.f32 %v3670, %v3773
  %v3775 = vpop.f32.mrb[0].mxu0
  %3776 = vmatprep.mubr.f32.mxu0 0.0
  %3777 = vmatmul.mubr.f32.gmra.mrb[0].mxu0 %v3683
  %v3778 = vpop.f32.mrb[0].mxu0
  %v3779 = vadd.f32 %v3670, %v3778
  %v3780 = vpop.f32.mrb[0].mxu0
  %3781 = vmatprep.mubr.f32.mxu0 0.0
  %3782 = vmatmul.mubr.f32.gmra.mrb[0].mxu0 %v3686
  %v3783 = vpop.f32.mrb[0].mxu0
  %v3784 = vadd.f32 %v3670, %v3783
  %v3785 = vpop.f32.mrb[0].mxu0
  %3786 = vmatprep.mubr.f32.mxu0 0.0
  %3787 = vmatmul.mubr.f32.gmra.mrb[0].mxu0 %v3689
  %v3788 = vpop.f32.mrb[0].mxu0
  %v3789 = vadd.f32 %v3670, %v3788
  %v3790 = vpop.f32.mrb[0].mxu0
  %3791 = vmatprep.mubr.f32.mxu0 0.0
  %3792 = vmatmul.mubr.f32.gmra.mrb[0].mxu0 %v3692
  %v3793 = vpop.f32.mrb[0].mxu0
  %v3794 = vadd.f32 %v3670, %v3793
  %v3795 = vpop.f32.mrb[0].mxu0
  %3796 = vmatprep.mubr.f32.mxu0 0.0
  %3797 = vmatmul.mubr.f32.gmra.mrb[0].mxu0 %v3695
  %v3798 = vpop.f32.mrb[0].mxu0
  %v3799 = vadd.f32 %v3670, %v3798
  %v3800 = vpop.f32.mrb[0].mxu0
  %3801 = vdwg.mxu0
  %v3802 = vadd.f32 %v3327, %v3764
  %v3803 = vadd.f32 %v3328, %v3769
  %v3804 = vadd.f32 %v3329, %v3774
  %v3805 = vadd.f32 %v3330, %v3779
  %v3806 = vadd.f32 %v3331, %v3784
  %v3807 = vadd.f32 %v3332, %v3789
  %v3808 = vadd.f32 %v3333, %v3794
  %v3809 = vadd.f32 %v3334, %v3799
  %s3810 = scalar_lea.vmem %s2, 1
  %v3811 = vld [vmem:[%s3810] sm:$0x1]
  %s3812 = scalar_lea.vmem %s3, 1
  %v3813 = vld [vmem:[%s3812] sm:$0x1]
  %s3814 = scalar_lea.vmem %s4, 32
  %v3815 = vld [vmem:[%s3814] sm:$0xff]
  %v3816 = vld [vmem:[%s3814 + $0x8] sm:$0xff]
  %v3817 = vld [vmem:[%s3814 + $0x10] sm:$0xff]
  %v3818 = vld [vmem:[%s3814 + $0x18] sm:$0xff]
  %s3819 = scalar_lea.vmem %s5, 1
  %v3820 = vld [vmem:[%s3819] sm:$0x1]
  %s3821 = scalar_lea.vmem %s6, 32
  %v3822 = vld [vmem:[%s3821] sm:$0xff]
  %v3823 = vld [vmem:[%s3821 + $0x8] sm:$0xff]
  %v3824 = vld [vmem:[%s3821 + $0x10] sm:$0xff]
  %v3825 = vld [vmem:[%s3821 + $0x18] sm:$0xff]
  %s3826 = scalar_lea.vmem %s7, 1
  %v3827 = vld [vmem:[%s3826] sm:$0x1]
  %s3828 = scalar_lea.vmem %s8, 1
  %v3829 = vld [vmem:[%s3828] sm:$0x1]
  %s3830 = scalar_lea.vmem %s9, 1
  %v3831 = vld [vmem:[%s3830] sm:$0x1]
  %s3832 = scalar_lea.vmem %s10, 32
  %v3833 = vld [vmem:[%s3832] sm:$0xff]
  %v3834 = vld [vmem:[%s3832 + $0x8] sm:$0xff]
  %v3835 = vld [vmem:[%s3832 + $0x10] sm:$0xff]
  %v3836 = vld [vmem:[%s3832 + $0x18] sm:$0xff]
  %s3837 = scalar_lea.vmem %s11, 1
  %v3838 = vld [vmem:[%s3837] sm:$0x1]
  %s3839 = scalar_lea.vmem %s12, 64
  %v3840 = vld [vmem:[%s3839] sm:$0xff]
  %v3841 = vld [vmem:[%s3839 + $0x8] sm:$0xff]
  %v3842 = vld [vmem:[%s3839 + $0x10] sm:$0xff]
  %v3843 = vld [vmem:[%s3839 + $0x18] sm:$0xff]
  %v3844 = vld [vmem:[%s3839 + $0x20] sm:$0xff]
  %v3845 = vld [vmem:[%s3839 + $0x28] sm:$0xff]
  %v3846 = vld [vmem:[%s3839 + $0x30] sm:$0xff]
  %v3847 = vld [vmem:[%s3839 + $0x38] sm:$0xff]
  %s3848 = scalar_lea.vmem %s13, 1
  %v3849 = vld [vmem:[%s3848] sm:$0x1]
  %v3850 = vsel %vm113, %v3802, 0.0
  %3851 = vadd.xlane.f32.xlu0 %v3850
  %v3852 = vpop.xlane.xlu0 %3851
  %v3853 = vsel %vm113, %v3803, 0.0
  %3854 = vadd.xlane.f32.xlu0 %v3853
  %v3855 = vpop.xlane.xlu0 %3854
  %v3856 = vsel %vm113, %v3804, 0.0
  %3857 = vadd.xlane.f32.xlu0 %v3856
  %v3858 = vpop.xlane.xlu0 %3857
  %v3859 = vsel %vm113, %v3805, 0.0
  %3860 = vadd.xlane.f32.xlu0 %v3859
  %v3861 = vpop.xlane.xlu0 %3860
  %v3862 = vsel %vm113, %v3806, 0.0
  %3863 = vadd.xlane.f32.xlu0 %v3862
  %v3864 = vpop.xlane.xlu0 %3863
  %v3865 = vsel %vm113, %v3807, 0.0
  %3866 = vadd.xlane.f32.xlu0 %v3865
  %v3867 = vpop.xlane.xlu0 %3866
  %v3868 = vsel %vm113, %v3808, 0.0
  %3869 = vadd.xlane.f32.xlu0 %v3868
  %v3870 = vpop.xlane.xlu0 %3869
  %v3871 = vsel %vm113, %v3809, 0.0
  %3872 = vadd.xlane.f32.xlu0 %v3871
  %v3873 = vpop.xlane.xlu0 %3872
  %v3874 = vmul.f32 %v3852, %v138
  %v3875 = vmul.f32 %v3855, %v138
  %v3876 = vmul.f32 %v3858, %v138
  %v3877 = vmul.f32 %v3861, %v138
  %v3878 = vmul.f32 %v3864, %v138
  %v3879 = vmul.f32 %v3867, %v138
  %v3880 = vmul.f32 %v3870, %v138
  %v3881 = vmul.f32 %v3873, %v138
  %v3882 = vsub.f32 %v3802, %v3874
  %v3883 = vsub.f32 %v3803, %v3875
  %v3884 = vsub.f32 %v3804, %v3876
  %v3885 = vsub.f32 %v3805, %v3877
  %v3886 = vsub.f32 %v3806, %v3878
  %v3887 = vsub.f32 %v3807, %v3879
  %v3888 = vsub.f32 %v3808, %v3880
  %v3889 = vsub.f32 %v3809, %v3881
  %v3890 = vmul.f32 %v3882, %v3882
  %v3891 = vmul.f32 %v3883, %v3883
  %v3892 = vmul.f32 %v3884, %v3884
  %v3893 = vmul.f32 %v3885, %v3885
  %v3894 = vmul.f32 %v3886, %v3886
  %v3895 = vmul.f32 %v3887, %v3887
  %v3896 = vmul.f32 %v3888, %v3888
  %v3897 = vmul.f32 %v3889, %v3889
  %v3898 = vsel %vm113, %v3890, 0.0
  %3899 = vadd.xlane.f32.xlu0 %v3898
  %v3900 = vpop.xlane.xlu0 %3899
  %v3901 = vsel %vm113, %v3891, 0.0
  %3902 = vadd.xlane.f32.xlu0 %v3901
  %v3903 = vpop.xlane.xlu0 %3902
  %v3904 = vsel %vm113, %v3892, 0.0
  %3905 = vadd.xlane.f32.xlu0 %v3904
  %v3906 = vpop.xlane.xlu0 %3905
  %v3907 = vsel %vm113, %v3893, 0.0
  %3908 = vadd.xlane.f32.xlu0 %v3907
  %v3909 = vpop.xlane.xlu0 %3908
  %v3910 = vsel %vm113, %v3894, 0.0
  %3911 = vadd.xlane.f32.xlu0 %v3910
  %v3912 = vpop.xlane.xlu0 %3911
  %v3913 = vsel %vm113, %v3895, 0.0
  %3914 = vadd.xlane.f32.xlu0 %v3913
  %v3915 = vpop.xlane.xlu0 %3914
  %v3916 = vsel %vm113, %v3896, 0.0
  %3917 = vadd.xlane.f32.xlu0 %v3916
  %v3918 = vpop.xlane.xlu0 %3917
  %v3919 = vsel %vm113, %v3897, 0.0
  %3920 = vadd.xlane.f32.xlu0 %v3919
  %v3921 = vpop.xlane.xlu0 %3920
  %v3922 = vmul.f32 %v3900, 0.032258064
  %v3923 = vmul.f32 %v3903, 0.032258064
  %v3924 = vmul.f32 %v3906, 0.032258064
  %v3925 = vmul.f32 %v3909, 0.032258064
  %v3926 = vmul.f32 %v3912, 0.032258064
  %v3927 = vmul.f32 %v3915, 0.032258064
  %v3928 = vmul.f32 %v3918, 0.032258064
  %v3929 = vmul.f32 %v3921, 0.032258064
  %v3930 = vrsqrt.pop %v3922
  %v3931 = vmul.f32 %v3922, %v3930
  %vm3932 = vcmp.eq.f32.partialorder %v3922, inf
  %v3933 = vsel %vm3932, %v3922, %v3931
  %vm3934 = vcmp.eq.f32.partialorder %v3922, 0.0
  %v3935 = vand.u32 %v3922, 2147483648
  %v3936 = vsel %vm3934, %v3935, %v3933
  %v3937 = vrsqrt.pop %v3923
  %v3938 = vmul.f32 %v3923, %v3937
  %vm3939 = vcmp.eq.f32.partialorder %v3923, inf
  %v3940 = vsel %vm3939, %v3923, %v3938
  %vm3941 = vcmp.eq.f32.partialorder %v3923, 0.0
  %v3942 = vand.u32 %v3923, 2147483648
  %v3943 = vsel %vm3941, %v3942, %v3940
  %v3944 = vrsqrt.pop %v3924
  %v3945 = vmul.f32 %v3924, %v3944
  %vm3946 = vcmp.eq.f32.partialorder %v3924, inf
  %v3947 = vsel %vm3946, %v3924, %v3945
  %vm3948 = vcmp.eq.f32.partialorder %v3924, 0.0
  %v3949 = vand.u32 %v3924, 2147483648
  %v3950 = vsel %vm3948, %v3949, %v3947
  %v3951 = vrsqrt.pop %v3925
  %v3952 = vmul.f32 %v3925, %v3951
  %vm3953 = vcmp.eq.f32.partialorder %v3925, inf
  %v3954 = vsel %vm3953, %v3925, %v3952
  %vm3955 = vcmp.eq.f32.partialorder %v3925, 0.0
  %v3956 = vand.u32 %v3925, 2147483648
  %v3957 = vsel %vm3955, %v3956, %v3954
  %v3958 = vrsqrt.pop %v3926
  %v3959 = vmul.f32 %v3926, %v3958
  %vm3960 = vcmp.eq.f32.partialorder %v3926, inf
  %v3961 = vsel %vm3960, %v3926, %v3959
  %vm3962 = vcmp.eq.f32.partialorder %v3926, 0.0
  %v3963 = vand.u32 %v3926, 2147483648
  %v3964 = vsel %vm3962, %v3963, %v3961
  %v3965 = vrsqrt.pop %v3927
  %v3966 = vmul.f32 %v3927, %v3965
  %vm3967 = vcmp.eq.f32.partialorder %v3927, inf
  %v3968 = vsel %vm3967, %v3927, %v3966
  %vm3969 = vcmp.eq.f32.partialorder %v3927, 0.0
  %v3970 = vand.u32 %v3927, 2147483648
  %v3971 = vsel %vm3969, %v3970, %v3968
  %v3972 = vrsqrt.pop %v3928
  %v3973 = vmul.f32 %v3928, %v3972
  %vm3974 = vcmp.eq.f32.partialorder %v3928, inf
  %v3975 = vsel %vm3974, %v3928, %v3973
  %vm3976 = vcmp.eq.f32.partialorder %v3928, 0.0
  %v3977 = vand.u32 %v3928, 2147483648
  %v3978 = vsel %vm3976, %v3977, %v3975
  %v3979 = vrsqrt.pop %v3929
  %v3980 = vmul.f32 %v3929, %v3979
  %vm3981 = vcmp.eq.f32.partialorder %v3929, inf
  %v3982 = vsel %vm3981, %v3929, %v3980
  %vm3983 = vcmp.eq.f32.partialorder %v3929, 0.0
  %v3984 = vand.u32 %v3929, 2147483648
  %v3985 = vsel %vm3983, %v3984, %v3982
  %v3986 = vadd.f32 %v3936, 1e-06
  %v3987 = vadd.f32 %v3943, 1e-06
  %v3988 = vadd.f32 %v3950, 1e-06
  %v3989 = vadd.f32 %v3957, 1e-06
  %v3990 = vadd.f32 %v3964, 1e-06
  %v3991 = vadd.f32 %v3971, 1e-06
  %v3992 = vadd.f32 %v3978, 1e-06
  %v3993 = vadd.f32 %v3985, 1e-06
  %v3994 = vrcp.pop %v3986
  %v3995 = vrcp.pop %v3987
  %v3996 = vrcp.pop %v3988
  %v3997 = vrcp.pop %v3989
  %v3998 = vrcp.pop %v3990
  %v3999 = vrcp.pop %v3991
  %v4000 = vrcp.pop %v3992
  %v4001 = vrcp.pop %v3993
  %v4003 = vlaneseq
  %v4004 = vshrl.u32 %v4003, 7
  %v4005 = vsub.s32 0, %v4004
  %v4006 = vrot.slane %v3811, %v4005
  %v4008 = vmul.f32 %v4006, %v3882
  %v4009 = vmul.f32 %v4006, %v3883
  %v4010 = vmul.f32 %v4006, %v3884
  %v4011 = vmul.f32 %v4006, %v3885
  %v4012 = vmul.f32 %v4006, %v3886
  %v4013 = vmul.f32 %v4006, %v3887
  %v4014 = vmul.f32 %v4006, %v3888
  %v4015 = vmul.f32 %v4006, %v3889
  %v4016 = vmul.f32 %v4008, %v3994
  %v4017 = vmul.f32 %v4009, %v3995
  %v4018 = vmul.f32 %v4010, %v3996
  %v4019 = vmul.f32 %v4011, %v3997
  %v4020 = vmul.f32 %v4012, %v3998
  %v4021 = vmul.f32 %v4013, %v3999
  %v4022 = vmul.f32 %v4014, %v4000
  %v4023 = vmul.f32 %v4015, %v4001
  %v4025 = vlaneseq
  %v4026 = vshrl.u32 %v4025, 7
  %v4027 = vsub.s32 0, %v4026
  %v4028 = vrot.slane %v3813, %v4027
  %v4030 = vadd.f32 %v4016, %v4028
  %v4031 = vadd.f32 %v4017, %v4028
  %v4032 = vadd.f32 %v4018, %v4028
  %v4033 = vadd.f32 %v4019, %v4028
  %v4034 = vadd.f32 %v4020, %v4028
  %v4035 = vadd.f32 %v4021, %v4028
  %v4036 = vadd.f32 %v4022, %v4028
  %v4037 = vadd.f32 %v4023, %v4028
  %v4039 = vlaneseq
  %v4040 = vshrl.u32 %v4039, 7
  %v4041 = vsub.s32 0, %v4040
  %v4042 = vrot.slane %v3820, %v4041
  %v4045 = vsel %vm113, %v4030, 0
  %v4048 = vsel %vm113, %v4031, 0
  %v4051 = vsel %vm113, %v4032, 0
  %v4054 = vsel %vm113, %v4033, 0
  %v4057 = vsel %vm113, %v4034, 0
  %v4060 = vsel %vm113, %v4035, 0
  %v4063 = vsel %vm113, %v4036, 0
  %v4066 = vsel %vm113, %v4037, 0
  %4068 = vmatprep.subr.mxu0 0.0
  %4069 = vmatpush1.msra.mxu0 %v3815
  %4070 = vmatprep.subr.mxu0 0.0
  %4071 = vmatpush1.msra.mxu0 %v3816
  %4072 = vmatprep.subr.mxu0 0.0
  %4073 = vmatpush1.msra.mxu0 %v3817
  %4074 = vmatprep.subr.mxu0 0.0
  %4075 = vmatpush1.msra.mxu0 %v3818
  %4076 = vmatprep.subr.mxu0 0.0
  %4077 = vmatpush1.msra.mxu0 0.0
  %4078 = vmatprep.subr.mxu0 0.0
  %4079 = vmatpush1.msra.mxu0 0.0
  %4080 = vmatprep.subr.mxu0 0.0
  %4081 = vmatpush1.msra.mxu0 0.0
  %4082 = vmatprep.subr.mxu0 0.0
  %4083 = vmatpush1.msra.mxu0 0.0
  %4084 = vmatprep.subr.mxu0 0.0
  %4085 = vmatpush1.msra.mxu0 0.0
  %4086 = vmatprep.subr.mxu0 0.0
  %4087 = vmatpush1.msra.mxu0 0.0
  %4088 = vmatprep.subr.mxu0 0.0
  %4089 = vmatpush1.msra.mxu0 0.0
  %4090 = vmatprep.subr.mxu0 0.0
  %4091 = vmatpush1.msra.mxu0 0.0
  %4092 = vmatprep.subr.mxu0 0.0
  %4093 = vmatpush1.msra.mxu0 0.0
  %4094 = vmatprep.subr.mxu0 0.0
  %4095 = vmatpush1.msra.mxu0 0.0
  %4096 = vmatprep.subr.mxu0 0.0
  %4097 = vmatpush1.msra.mxu0 0.0
  %4098 = vmatprep.subr.mxu0 0.0
  %4099 = vmatpush1.msra.mxu0 0.0
  %4100 = vmatprep.subr.mxu0 0.0
  %4101 = vmatpush1.msra.mxu0 0.0
  %4102 = vmatprep.subr.mxu0 0.0
  %4103 = vmatpush1.msra.mxu0 0.0
  %4104 = vmatprep.subr.mxu0 0.0
  %4105 = vmatpush1.msra.mxu0 0.0
  %4106 = vmatprep.subr.mxu0 0.0
  %4107 = vmatpush1.msra.mxu0 0.0
  %4108 = vmatprep.subr.mxu0 0.0
  %4109 = vmatpush1.msra.mxu0 0.0
  %4110 = vmatprep.subr.mxu0 0.0
  %4111 = vmatpush1.msra.mxu0 0.0
  %4112 = vmatprep.subr.mxu0 0.0
  %4113 = vmatpush1.msra.mxu0 0.0
  %4114 = vmatprep.subr.mxu0 0.0
  %4115 = vmatpush1.msra.mxu0 0.0
  %4116 = vmatprep.subr.mxu0 0.0
  %4117 = vmatpush1.msra.mxu0 0.0
  %4118 = vmatprep.subr.mxu0 0.0
  %4119 = vmatpush1.msra.mxu0 0.0
  %4120 = vmatprep.subr.mxu0 0.0
  %4121 = vmatpush1.msra.mxu0 0.0
  %4122 = vmatprep.subr.mxu0 0.0
  %4123 = vmatpush1.msra.mxu0 0.0
  %4124 = vmatprep.subr.mxu0 0.0
  %4125 = vmatpush1.msra.mxu0 0.0
  %4126 = vmatprep.subr.mxu0 0.0
  %4127 = vmatpush1.msra.mxu0 0.0
  %4128 = vmatprep.subr.mxu0 0.0
  %4129 = vmatpush1.msra.mxu0 0.0
  %4130 = vmatprep.subr.mxu0 0.0
  %4131 = vmatpush1.msra.mxu0 0.0
  %4132 = vmatprep.mubr.f32.mxu0 0.0
  %4133 = vmatmul.mubr.f32.gmra.mrb[0].mxu0 %v4045
  %v4134 = vpop.f32.mrb[0].mxu0
  %v4135 = vadd.f32 %v4042, %v4134
  %v4136 = vpop.f32.mrb[0].mxu0
  %4137 = vmatprep.mubr.f32.mxu0 0.0
  %4138 = vmatmul.mubr.f32.gmra.mrb[0].mxu0 %v4048
  %v4139 = vpop.f32.mrb[0].mxu0
  %v4140 = vadd.f32 %v4042, %v4139
  %v4141 = vpop.f32.mrb[0].mxu0
  %4142 = vmatprep.mubr.f32.mxu0 0.0
  %4143 = vmatmul.mubr.f32.gmra.mrb[0].mxu0 %v4051
  %v4144 = vpop.f32.mrb[0].mxu0
  %v4145 = vadd.f32 %v4042, %v4144
  %v4146 = vpop.f32.mrb[0].mxu0
  %4147 = vmatprep.mubr.f32.mxu0 0.0
  %4148 = vmatmul.mubr.f32.gmra.mrb[0].mxu0 %v4054
  %v4149 = vpop.f32.mrb[0].mxu0
  %v4150 = vadd.f32 %v4042, %v4149
  %v4151 = vpop.f32.mrb[0].mxu0
  %4152 = vmatprep.mubr.f32.mxu0 0.0
  %4153 = vmatmul.mubr.f32.gmra.mrb[0].mxu0 %v4057
  %v4154 = vpop.f32.mrb[0].mxu0
  %v4155 = vadd.f32 %v4042, %v4154
  %v4156 = vpop.f32.mrb[0].mxu0
  %4157 = vmatprep.mubr.f32.mxu0 0.0
  %4158 = vmatmul.mubr.f32.gmra.mrb[0].mxu0 %v4060
  %v4159 = vpop.f32.mrb[0].mxu0
  %v4160 = vadd.f32 %v4042, %v4159
  %v4161 = vpop.f32.mrb[0].mxu0
  %4162 = vmatprep.mubr.f32.mxu0 0.0
  %4163 = vmatmul.mubr.f32.gmra.mrb[0].mxu0 %v4063
  %v4164 = vpop.f32.mrb[0].mxu0
  %v4165 = vadd.f32 %v4042, %v4164
  %v4166 = vpop.f32.mrb[0].mxu0
  %4167 = vmatprep.mubr.f32.mxu0 0.0
  %4168 = vmatmul.mubr.f32.gmra.mrb[0].mxu0 %v4066
  %v4169 = vpop.f32.mrb[0].mxu0
  %v4170 = vadd.f32 %v4042, %v4169
  %v4171 = vpop.f32.mrb[0].mxu0
  %4172 = vdwg.mxu0
  %4174 = vrot.lane.b32.xlu0 %v4135, 96
  %v4175 = vpop.permute.xlu0 %4174
  %v4176 = vsel %vm441, %v4135, 0
  %v4178 = vsel %vm441, %v4175, 0
  %4180 = vmatprep.subr.mxu0 0.0
  %4181 = vmatpush1.xpose.msra.mxu0 %v4178
  %4182 = vmatprep.subr.mxu0 0.0
  %4183 = vmatpush1.xpose.msra.mxu0 0.0
  %4184 = vmatprep.subr.mxu0 0.0
  %4185 = vmatpush1.xpose.msra.mxu0 0.0
  %4186 = vmatprep.subr.mxu0 0.0
  %4187 = vmatpush1.xpose.msra.mxu0 0.0
  %4188 = vmatprep.subr.mxu0 0.0
  %4189 = vmatpush1.xpose.msra.mxu0 0.0
  %4190 = vmatprep.subr.mxu0 0.0
  %4191 = vmatpush1.xpose.msra.mxu0 0.0
  %4192 = vmatprep.subr.mxu0 0.0
  %4193 = vmatpush1.xpose.msra.mxu0 0.0
  %4194 = vmatprep.subr.mxu0 0.0
  %4195 = vmatpush1.xpose.msra.mxu0 0.0
  %4196 = vmatprep.subr.mxu0 0.0
  %4197 = vmatpush1.xpose.msra.mxu0 0.0
  %4198 = vmatprep.subr.mxu0 0.0
  %4199 = vmatpush1.xpose.msra.mxu0 0.0
  %4200 = vmatprep.subr.mxu0 0.0
  %4201 = vmatpush1.xpose.msra.mxu0 0.0
  %4202 = vmatprep.subr.mxu0 0.0
  %4203 = vmatpush1.xpose.msra.mxu0 0.0
  %4204 = vmatprep.subr.mxu0 0.0
  %4205 = vmatpush1.xpose.msra.mxu0 0.0
  %4206 = vmatprep.subr.mxu0 0.0
  %4207 = vmatpush1.xpose.msra.mxu0 0.0
  %4208 = vmatprep.subr.mxu0 0.0
  %4209 = vmatpush1.xpose.msra.mxu0 0.0
  %4210 = vmatprep.subr.mxu0 0.0
  %4211 = vmatpush1.xpose.msra.mxu0 0.0
  %4212 = vmatprep.subr.mxu0 0.0
  %4213 = vmatpush1.xpose.msra.mxu0 0.0
  %4214 = vmatprep.subr.mxu0 0.0
  %4215 = vmatpush1.xpose.msra.mxu0 0.0
  %4216 = vmatprep.subr.mxu0 0.0
  %4217 = vmatpush1.xpose.msra.mxu0 0.0
  %4218 = vmatprep.subr.mxu0 0.0
  %4219 = vmatpush1.xpose.msra.mxu0 0.0
  %4220 = vmatprep.subr.mxu0 0.0
  %4221 = vmatpush1.xpose.msra.mxu0 0.0
  %4222 = vmatprep.subr.mxu0 0.0
  %4223 = vmatpush1.xpose.msra.mxu0 0.0
  %4224 = vmatprep.subr.mxu0 0.0
  %4225 = vmatpush1.xpose.msra.mxu0 0.0
  %4226 = vmatprep.subr.mxu0 0.0
  %4227 = vmatpush1.xpose.msra.mxu0 0.0
  %4228 = vmatprep.subr.mxu0 0.0
  %4229 = vmatpush1.xpose.msra.mxu0 0.0
  %4230 = vmatprep.subr.mxu0 0.0
  %4231 = vmatpush1.xpose.msra.mxu0 0.0
  %4232 = vmatprep.subr.mxu0 0.0
  %4233 = vmatpush1.xpose.msra.mxu0 0.0
  %4234 = vmatprep.subr.mxu0 0.0
  %4235 = vmatpush1.xpose.msra.mxu0 0.0
  %4236 = vmatprep.subr.mxu0 0.0
  %4237 = vmatpush1.xpose.msra.mxu0 0.0
  %4238 = vmatprep.subr.mxu0 0.0
  %4239 = vmatpush1.xpose.msra.mxu0 0.0
  %4240 = vmatprep.subr.mxu0 0.0
  %4241 = vmatpush1.xpose.msra.mxu0 0.0
  %4242 = vmatprep.subr.mxu0 0.0
  %4243 = vmatpush1.xpose.msra.mxu0 0.0
  %4244 = vmatprep.mubr.f32.mxu0 0.0
  %4245 = vmatmul.mubr.f32.gmra.mrb[0].mxu0 %v4176
  %v4246 = vpop.f32.mrb[0].mxu0
  %v4247 = vadd.f32 0.0, %v4246
  %v4248 = vpop.f32.mrb[0].mxu0
  %4249 = vdwg.mxu0
  %4251 = vrot.lane.b32.xlu0 %v4140, 96
  %v4252 = vpop.permute.xlu0 %4251
  %v4253 = vsel %vm441, %v4140, 0
  %v4255 = vsel %vm441, %v4252, 0
  %4257 = vmatprep.subr.mxu0 0.0
  %4258 = vmatpush1.xpose.msra.mxu0 %v4255
  %4259 = vmatprep.subr.mxu0 0.0
  %4260 = vmatpush1.xpose.msra.mxu0 0.0
  %4261 = vmatprep.subr.mxu0 0.0
  %4262 = vmatpush1.xpose.msra.mxu0 0.0
  %4263 = vmatprep.subr.mxu0 0.0
  %4264 = vmatpush1.xpose.msra.mxu0 0.0
  %4265 = vmatprep.subr.mxu0 0.0
  %4266 = vmatpush1.xpose.msra.mxu0 0.0
  %4267 = vmatprep.subr.mxu0 0.0
  %4268 = vmatpush1.xpose.msra.mxu0 0.0
  %4269 = vmatprep.subr.mxu0 0.0
  %4270 = vmatpush1.xpose.msra.mxu0 0.0
  %4271 = vmatprep.subr.mxu0 0.0
  %4272 = vmatpush1.xpose.msra.mxu0 0.0
  %4273 = vmatprep.subr.mxu0 0.0
  %4274 = vmatpush1.xpose.msra.mxu0 0.0
  %4275 = vmatprep.subr.mxu0 0.0
  %4276 = vmatpush1.xpose.msra.mxu0 0.0
  %4277 = vmatprep.subr.mxu0 0.0
  %4278 = vmatpush1.xpose.msra.mxu0 0.0
  %4279 = vmatprep.subr.mxu0 0.0
  %4280 = vmatpush1.xpose.msra.mxu0 0.0
  %4281 = vmatprep.subr.mxu0 0.0
  %4282 = vmatpush1.xpose.msra.mxu0 0.0
  %4283 = vmatprep.subr.mxu0 0.0
  %4284 = vmatpush1.xpose.msra.mxu0 0.0
  %4285 = vmatprep.subr.mxu0 0.0
  %4286 = vmatpush1.xpose.msra.mxu0 0.0
  %4287 = vmatprep.subr.mxu0 0.0
  %4288 = vmatpush1.xpose.msra.mxu0 0.0
  %4289 = vmatprep.subr.mxu0 0.0
  %4290 = vmatpush1.xpose.msra.mxu0 0.0
  %4291 = vmatprep.subr.mxu0 0.0
  %4292 = vmatpush1.xpose.msra.mxu0 0.0
  %4293 = vmatprep.subr.mxu0 0.0
  %4294 = vmatpush1.xpose.msra.mxu0 0.0
  %4295 = vmatprep.subr.mxu0 0.0
  %4296 = vmatpush1.xpose.msra.mxu0 0.0
  %4297 = vmatprep.subr.mxu0 0.0
  %4298 = vmatpush1.xpose.msra.mxu0 0.0
  %4299 = vmatprep.subr.mxu0 0.0
  %4300 = vmatpush1.xpose.msra.mxu0 0.0
  %4301 = vmatprep.subr.mxu0 0.0
  %4302 = vmatpush1.xpose.msra.mxu0 0.0
  %4303 = vmatprep.subr.mxu0 0.0
  %4304 = vmatpush1.xpose.msra.mxu0 0.0
  %4305 = vmatprep.subr.mxu0 0.0
  %4306 = vmatpush1.xpose.msra.mxu0 0.0
  %4307 = vmatprep.subr.mxu0 0.0
  %4308 = vmatpush1.xpose.msra.mxu0 0.0
  %4309 = vmatprep.subr.mxu0 0.0
  %4310 = vmatpush1.xpose.msra.mxu0 0.0
  %4311 = vmatprep.subr.mxu0 0.0
  %4312 = vmatpush1.xpose.msra.mxu0 0.0
  %4313 = vmatprep.subr.mxu0 0.0
  %4314 = vmatpush1.xpose.msra.mxu0 0.0
  %4315 = vmatprep.subr.mxu0 0.0
  %4316 = vmatpush1.xpose.msra.mxu0 0.0
  %4317 = vmatprep.subr.mxu0 0.0
  %4318 = vmatpush1.xpose.msra.mxu0 0.0
  %4319 = vmatprep.subr.mxu0 0.0
  %4320 = vmatpush1.xpose.msra.mxu0 0.0
  %4321 = vmatprep.mubr.f32.mxu0 0.0
  %4322 = vmatmul.mubr.f32.gmra.mrb[0].mxu0 %v4253
  %v4323 = vpop.f32.mrb[0].mxu0
  %v4324 = vadd.f32 0.0, %v4323
  %v4325 = vpop.f32.mrb[0].mxu0
  %4326 = vdwg.mxu0
  %4328 = vrot.lane.b32.xlu0 %v4145, 96
  %v4329 = vpop.permute.xlu0 %4328
  %v4330 = vsel %vm441, %v4145, 0
  %v4332 = vsel %vm441, %v4329, 0
  %4334 = vmatprep.subr.mxu0 0.0
  %4335 = vmatpush1.xpose.msra.mxu0 %v4332
  %4336 = vmatprep.subr.mxu0 0.0
  %4337 = vmatpush1.xpose.msra.mxu0 0.0
  %4338 = vmatprep.subr.mxu0 0.0
  %4339 = vmatpush1.xpose.msra.mxu0 0.0
  %4340 = vmatprep.subr.mxu0 0.0
  %4341 = vmatpush1.xpose.msra.mxu0 0.0
  %4342 = vmatprep.subr.mxu0 0.0
  %4343 = vmatpush1.xpose.msra.mxu0 0.0
  %4344 = vmatprep.subr.mxu0 0.0
  %4345 = vmatpush1.xpose.msra.mxu0 0.0
  %4346 = vmatprep.subr.mxu0 0.0
  %4347 = vmatpush1.xpose.msra.mxu0 0.0
  %4348 = vmatprep.subr.mxu0 0.0
  %4349 = vmatpush1.xpose.msra.mxu0 0.0
  %4350 = vmatprep.subr.mxu0 0.0
  %4351 = vmatpush1.xpose.msra.mxu0 0.0
  %4352 = vmatprep.subr.mxu0 0.0
  %4353 = vmatpush1.xpose.msra.mxu0 0.0
  %4354 = vmatprep.subr.mxu0 0.0
  %4355 = vmatpush1.xpose.msra.mxu0 0.0
  %4356 = vmatprep.subr.mxu0 0.0
  %4357 = vmatpush1.xpose.msra.mxu0 0.0
  %4358 = vmatprep.subr.mxu0 0.0
  %4359 = vmatpush1.xpose.msra.mxu0 0.0
  %4360 = vmatprep.subr.mxu0 0.0
  %4361 = vmatpush1.xpose.msra.mxu0 0.0
  %4362 = vmatprep.subr.mxu0 0.0
  %4363 = vmatpush1.xpose.msra.mxu0 0.0
  %4364 = vmatprep.subr.mxu0 0.0
  %4365 = vmatpush1.xpose.msra.mxu0 0.0
  %4366 = vmatprep.subr.mxu0 0.0
  %4367 = vmatpush1.xpose.msra.mxu0 0.0
  %4368 = vmatprep.subr.mxu0 0.0
  %4369 = vmatpush1.xpose.msra.mxu0 0.0
  %4370 = vmatprep.subr.mxu0 0.0
  %4371 = vmatpush1.xpose.msra.mxu0 0.0
  %4372 = vmatprep.subr.mxu0 0.0
  %4373 = vmatpush1.xpose.msra.mxu0 0.0
  %4374 = vmatprep.subr.mxu0 0.0
  %4375 = vmatpush1.xpose.msra.mxu0 0.0
  %4376 = vmatprep.subr.mxu0 0.0
  %4377 = vmatpush1.xpose.msra.mxu0 0.0
  %4378 = vmatprep.subr.mxu0 0.0
  %4379 = vmatpush1.xpose.msra.mxu0 0.0
  %4380 = vmatprep.subr.mxu0 0.0
  %4381 = vmatpush1.xpose.msra.mxu0 0.0
  %4382 = vmatprep.subr.mxu0 0.0
  %4383 = vmatpush1.xpose.msra.mxu0 0.0
  %4384 = vmatprep.subr.mxu0 0.0
  %4385 = vmatpush1.xpose.msra.mxu0 0.0
  %4386 = vmatprep.subr.mxu0 0.0
  %4387 = vmatpush1.xpose.msra.mxu0 0.0
  %4388 = vmatprep.subr.mxu0 0.0
  %4389 = vmatpush1.xpose.msra.mxu0 0.0
  %4390 = vmatprep.subr.mxu0 0.0
  %4391 = vmatpush1.xpose.msra.mxu0 0.0
  %4392 = vmatprep.subr.mxu0 0.0
  %4393 = vmatpush1.xpose.msra.mxu0 0.0
  %4394 = vmatprep.subr.mxu0 0.0
  %4395 = vmatpush1.xpose.msra.mxu0 0.0
  %4396 = vmatprep.subr.mxu0 0.0
  %4397 = vmatpush1.xpose.msra.mxu0 0.0
  %4398 = vmatprep.mubr.f32.mxu0 0.0
  %4399 = vmatmul.mubr.f32.gmra.mrb[0].mxu0 %v4330
  %v4400 = vpop.f32.mrb[0].mxu0
  %v4401 = vadd.f32 0.0, %v4400
  %v4402 = vpop.f32.mrb[0].mxu0
  %4403 = vdwg.mxu0
  %4405 = vrot.lane.b32.xlu0 %v4150, 96
  %v4406 = vpop.permute.xlu0 %4405
  %v4407 = vsel %vm441, %v4150, 0
  %v4409 = vsel %vm441, %v4406, 0
  %4411 = vmatprep.subr.mxu0 0.0
  %4412 = vmatpush1.xpose.msra.mxu0 %v4409
  %4413 = vmatprep.subr.mxu0 0.0
  %4414 = vmatpush1.xpose.msra.mxu0 0.0
  %4415 = vmatprep.subr.mxu0 0.0
  %4416 = vmatpush1.xpose.msra.mxu0 0.0
  %4417 = vmatprep.subr.mxu0 0.0
  %4418 = vmatpush1.xpose.msra.mxu0 0.0
  %4419 = vmatprep.subr.mxu0 0.0
  %4420 = vmatpush1.xpose.msra.mxu0 0.0
  %4421 = vmatprep.subr.mxu0 0.0
  %4422 = vmatpush1.xpose.msra.mxu0 0.0
  %4423 = vmatprep.subr.mxu0 0.0
  %4424 = vmatpush1.xpose.msra.mxu0 0.0
  %4425 = vmatprep.subr.mxu0 0.0
  %4426 = vmatpush1.xpose.msra.mxu0 0.0
  %4427 = vmatprep.subr.mxu0 0.0
  %4428 = vmatpush1.xpose.msra.mxu0 0.0
  %4429 = vmatprep.subr.mxu0 0.0
  %4430 = vmatpush1.xpose.msra.mxu0 0.0
  %4431 = vmatprep.subr.mxu0 0.0
  %4432 = vmatpush1.xpose.msra.mxu0 0.0
  %4433 = vmatprep.subr.mxu0 0.0
  %4434 = vmatpush1.xpose.msra.mxu0 0.0
  %4435 = vmatprep.subr.mxu0 0.0
  %4436 = vmatpush1.xpose.msra.mxu0 0.0
  %4437 = vmatprep.subr.mxu0 0.0
  %4438 = vmatpush1.xpose.msra.mxu0 0.0
  %4439 = vmatprep.subr.mxu0 0.0
  %4440 = vmatpush1.xpose.msra.mxu0 0.0
  %4441 = vmatprep.subr.mxu0 0.0
  %4442 = vmatpush1.xpose.msra.mxu0 0.0
  %4443 = vmatprep.subr.mxu0 0.0
  %4444 = vmatpush1.xpose.msra.mxu0 0.0
  %4445 = vmatprep.subr.mxu0 0.0
  %4446 = vmatpush1.xpose.msra.mxu0 0.0
  %4447 = vmatprep.subr.mxu0 0.0
  %4448 = vmatpush1.xpose.msra.mxu0 0.0
  %4449 = vmatprep.subr.mxu0 0.0
  %4450 = vmatpush1.xpose.msra.mxu0 0.0
  %4451 = vmatprep.subr.mxu0 0.0
  %4452 = vmatpush1.xpose.msra.mxu0 0.0
  %4453 = vmatprep.subr.mxu0 0.0
  %4454 = vmatpush1.xpose.msra.mxu0 0.0
  %4455 = vmatprep.subr.mxu0 0.0
  %4456 = vmatpush1.xpose.msra.mxu0 0.0
  %4457 = vmatprep.subr.mxu0 0.0
  %4458 = vmatpush1.xpose.msra.mxu0 0.0
  %4459 = vmatprep.subr.mxu0 0.0
  %4460 = vmatpush1.xpose.msra.mxu0 0.0
  %4461 = vmatprep.subr.mxu0 0.0
  %4462 = vmatpush1.xpose.msra.mxu0 0.0
  %4463 = vmatprep.subr.mxu0 0.0
  %4464 = vmatpush1.xpose.msra.mxu0 0.0
  %4465 = vmatprep.subr.mxu0 0.0
  %4466 = vmatpush1.xpose.msra.mxu0 0.0
  %4467 = vmatprep.subr.mxu0 0.0
  %4468 = vmatpush1.xpose.msra.mxu0 0.0
  %4469 = vmatprep.subr.mxu0 0.0
  %4470 = vmatpush1.xpose.msra.mxu0 0.0
  %4471 = vmatprep.subr.mxu0 0.0
  %4472 = vmatpush1.xpose.msra.mxu0 0.0
  %4473 = vmatprep.subr.mxu0 0.0
  %4474 = vmatpush1.xpose.msra.mxu0 0.0
  %4475 = vmatprep.mubr.f32.mxu0 0.0
  %4476 = vmatmul.mubr.f32.gmra.mrb[0].mxu0 %v4407
  %v4477 = vpop.f32.mrb[0].mxu0
  %v4478 = vadd.f32 0.0, %v4477
  %v4479 = vpop.f32.mrb[0].mxu0
  %4480 = vdwg.mxu0
  %4482 = vrot.lane.b32.xlu0 %v4155, 96
  %v4483 = vpop.permute.xlu0 %4482
  %v4484 = vsel %vm441, %v4155, 0
  %v4486 = vsel %vm441, %v4483, 0
  %4488 = vmatprep.subr.mxu0 0.0
  %4489 = vmatpush1.xpose.msra.mxu0 %v4486
  %4490 = vmatprep.subr.mxu0 0.0
  %4491 = vmatpush1.xpose.msra.mxu0 0.0
  %4492 = vmatprep.subr.mxu0 0.0
  %4493 = vmatpush1.xpose.msra.mxu0 0.0
  %4494 = vmatprep.subr.mxu0 0.0
  %4495 = vmatpush1.xpose.msra.mxu0 0.0
  %4496 = vmatprep.subr.mxu0 0.0
  %4497 = vmatpush1.xpose.msra.mxu0 0.0
  %4498 = vmatprep.subr.mxu0 0.0
  %4499 = vmatpush1.xpose.msra.mxu0 0.0
  %4500 = vmatprep.subr.mxu0 0.0
  %4501 = vmatpush1.xpose.msra.mxu0 0.0
  %4502 = vmatprep.subr.mxu0 0.0
  %4503 = vmatpush1.xpose.msra.mxu0 0.0
  %4504 = vmatprep.subr.mxu0 0.0
  %4505 = vmatpush1.xpose.msra.mxu0 0.0
  %4506 = vmatprep.subr.mxu0 0.0
  %4507 = vmatpush1.xpose.msra.mxu0 0.0
  %4508 = vmatprep.subr.mxu0 0.0
  %4509 = vmatpush1.xpose.msra.mxu0 0.0
  %4510 = vmatprep.subr.mxu0 0.0
  %4511 = vmatpush1.xpose.msra.mxu0 0.0
  %4512 = vmatprep.subr.mxu0 0.0
  %4513 = vmatpush1.xpose.msra.mxu0 0.0
  %4514 = vmatprep.subr.mxu0 0.0
  %4515 = vmatpush1.xpose.msra.mxu0 0.0
  %4516 = vmatprep.subr.mxu0 0.0
  %4517 = vmatpush1.xpose.msra.mxu0 0.0
  %4518 = vmatprep.subr.mxu0 0.0
  %4519 = vmatpush1.xpose.msra.mxu0 0.0
  %4520 = vmatprep.subr.mxu0 0.0
  %4521 = vmatpush1.xpose.msra.mxu0 0.0
  %4522 = vmatprep.subr.mxu0 0.0
  %4523 = vmatpush1.xpose.msra.mxu0 0.0
  %4524 = vmatprep.subr.mxu0 0.0
  %4525 = vmatpush1.xpose.msra.mxu0 0.0
  %4526 = vmatprep.subr.mxu0 0.0
  %4527 = vmatpush1.xpose.msra.mxu0 0.0
  %4528 = vmatprep.subr.mxu0 0.0
  %4529 = vmatpush1.xpose.msra.mxu0 0.0
  %4530 = vmatprep.subr.mxu0 0.0
  %4531 = vmatpush1.xpose.msra.mxu0 0.0
  %4532 = vmatprep.subr.mxu0 0.0
  %4533 = vmatpush1.xpose.msra.mxu0 0.0
  %4534 = vmatprep.subr.mxu0 0.0
  %4535 = vmatpush1.xpose.msra.mxu0 0.0
  %4536 = vmatprep.subr.mxu0 0.0
  %4537 = vmatpush1.xpose.msra.mxu0 0.0
  %4538 = vmatprep.subr.mxu0 0.0
  %4539 = vmatpush1.xpose.msra.mxu0 0.0
  %4540 = vmatprep.subr.mxu0 0.0
  %4541 = vmatpush1.xpose.msra.mxu0 0.0
  %4542 = vmatprep.subr.mxu0 0.0
  %4543 = vmatpush1.xpose.msra.mxu0 0.0
  %4544 = vmatprep.subr.mxu0 0.0
  %4545 = vmatpush1.xpose.msra.mxu0 0.0
  %4546 = vmatprep.subr.mxu0 0.0
  %4547 = vmatpush1.xpose.msra.mxu0 0.0
  %4548 = vmatprep.subr.mxu0 0.0
  %4549 = vmatpush1.xpose.msra.mxu0 0.0
  %4550 = vmatprep.subr.mxu0 0.0
  %4551 = vmatpush1.xpose.msra.mxu0 0.0
  %4552 = vmatprep.mubr.f32.mxu0 0.0
  %4553 = vmatmul.mubr.f32.gmra.mrb[0].mxu0 %v4484
  %v4554 = vpop.f32.mrb[0].mxu0
  %v4555 = vadd.f32 0.0, %v4554
  %v4556 = vpop.f32.mrb[0].mxu0
  %4557 = vdwg.mxu0
  %4559 = vrot.lane.b32.xlu0 %v4160, 96
  %v4560 = vpop.permute.xlu0 %4559
  %v4561 = vsel %vm441, %v4160, 0
  %v4563 = vsel %vm441, %v4560, 0
  %4565 = vmatprep.subr.mxu0 0.0
  %4566 = vmatpush1.xpose.msra.mxu0 %v4563
  %4567 = vmatprep.subr.mxu0 0.0
  %4568 = vmatpush1.xpose.msra.mxu0 0.0
  %4569 = vmatprep.subr.mxu0 0.0
  %4570 = vmatpush1.xpose.msra.mxu0 0.0
  %4571 = vmatprep.subr.mxu0 0.0
  %4572 = vmatpush1.xpose.msra.mxu0 0.0
  %4573 = vmatprep.subr.mxu0 0.0
  %4574 = vmatpush1.xpose.msra.mxu0 0.0
  %4575 = vmatprep.subr.mxu0 0.0
  %4576 = vmatpush1.xpose.msra.mxu0 0.0
  %4577 = vmatprep.subr.mxu0 0.0
  %4578 = vmatpush1.xpose.msra.mxu0 0.0
  %4579 = vmatprep.subr.mxu0 0.0
  %4580 = vmatpush1.xpose.msra.mxu0 0.0
  %4581 = vmatprep.subr.mxu0 0.0
  %4582 = vmatpush1.xpose.msra.mxu0 0.0
  %4583 = vmatprep.subr.mxu0 0.0
  %4584 = vmatpush1.xpose.msra.mxu0 0.0
  %4585 = vmatprep.subr.mxu0 0.0
  %4586 = vmatpush1.xpose.msra.mxu0 0.0
  %4587 = vmatprep.subr.mxu0 0.0
  %4588 = vmatpush1.xpose.msra.mxu0 0.0
  %4589 = vmatprep.subr.mxu0 0.0
  %4590 = vmatpush1.xpose.msra.mxu0 0.0
  %4591 = vmatprep.subr.mxu0 0.0
  %4592 = vmatpush1.xpose.msra.mxu0 0.0
  %4593 = vmatprep.subr.mxu0 0.0
  %4594 = vmatpush1.xpose.msra.mxu0 0.0
  %4595 = vmatprep.subr.mxu0 0.0
  %4596 = vmatpush1.xpose.msra.mxu0 0.0
  %4597 = vmatprep.subr.mxu0 0.0
  %4598 = vmatpush1.xpose.msra.mxu0 0.0
  %4599 = vmatprep.subr.mxu0 0.0
  %4600 = vmatpush1.xpose.msra.mxu0 0.0
  %4601 = vmatprep.subr.mxu0 0.0
  %4602 = vmatpush1.xpose.msra.mxu0 0.0
  %4603 = vmatprep.subr.mxu0 0.0
  %4604 = vmatpush1.xpose.msra.mxu0 0.0
  %4605 = vmatprep.subr.mxu0 0.0
  %4606 = vmatpush1.xpose.msra.mxu0 0.0
  %4607 = vmatprep.subr.mxu0 0.0
  %4608 = vmatpush1.xpose.msra.mxu0 0.0
  %4609 = vmatprep.subr.mxu0 0.0
  %4610 = vmatpush1.xpose.msra.mxu0 0.0
  %4611 = vmatprep.subr.mxu0 0.0
  %4612 = vmatpush1.xpose.msra.mxu0 0.0
  %4613 = vmatprep.subr.mxu0 0.0
  %4614 = vmatpush1.xpose.msra.mxu0 0.0
  %4615 = vmatprep.subr.mxu0 0.0
  %4616 = vmatpush1.xpose.msra.mxu0 0.0
  %4617 = vmatprep.subr.mxu0 0.0
  %4618 = vmatpush1.xpose.msra.mxu0 0.0
  %4619 = vmatprep.subr.mxu0 0.0
  %4620 = vmatpush1.xpose.msra.mxu0 0.0
  %4621 = vmatprep.subr.mxu0 0.0
  %4622 = vmatpush1.xpose.msra.mxu0 0.0
  %4623 = vmatprep.subr.mxu0 0.0
  %4624 = vmatpush1.xpose.msra.mxu0 0.0
  %4625 = vmatprep.subr.mxu0 0.0
  %4626 = vmatpush1.xpose.msra.mxu0 0.0
  %4627 = vmatprep.subr.mxu0 0.0
  %4628 = vmatpush1.xpose.msra.mxu0 0.0
  %4629 = vmatprep.mubr.f32.mxu0 0.0
  %4630 = vmatmul.mubr.f32.gmra.mrb[0].mxu0 %v4561
  %v4631 = vpop.f32.mrb[0].mxu0
  %v4632 = vadd.f32 0.0, %v4631
  %v4633 = vpop.f32.mrb[0].mxu0
  %4634 = vdwg.mxu0
  %4636 = vrot.lane.b32.xlu0 %v4165, 96
  %v4637 = vpop.permute.xlu0 %4636
  %v4638 = vsel %vm441, %v4165, 0
  %v4640 = vsel %vm441, %v4637, 0
  %4642 = vmatprep.subr.mxu0 0.0
  %4643 = vmatpush1.xpose.msra.mxu0 %v4640
  %4644 = vmatprep.subr.mxu0 0.0
  %4645 = vmatpush1.xpose.msra.mxu0 0.0
  %4646 = vmatprep.subr.mxu0 0.0
  %4647 = vmatpush1.xpose.msra.mxu0 0.0
  %4648 = vmatprep.subr.mxu0 0.0
  %4649 = vmatpush1.xpose.msra.mxu0 0.0
  %4650 = vmatprep.subr.mxu0 0.0
  %4651 = vmatpush1.xpose.msra.mxu0 0.0
  %4652 = vmatprep.subr.mxu0 0.0
  %4653 = vmatpush1.xpose.msra.mxu0 0.0
  %4654 = vmatprep.subr.mxu0 0.0
  %4655 = vmatpush1.xpose.msra.mxu0 0.0
  %4656 = vmatprep.subr.mxu0 0.0
  %4657 = vmatpush1.xpose.msra.mxu0 0.0
  %4658 = vmatprep.subr.mxu0 0.0
  %4659 = vmatpush1.xpose.msra.mxu0 0.0
  %4660 = vmatprep.subr.mxu0 0.0
  %4661 = vmatpush1.xpose.msra.mxu0 0.0
  %4662 = vmatprep.subr.mxu0 0.0
  %4663 = vmatpush1.xpose.msra.mxu0 0.0
  %4664 = vmatprep.subr.mxu0 0.0
  %4665 = vmatpush1.xpose.msra.mxu0 0.0
  %4666 = vmatprep.subr.mxu0 0.0
  %4667 = vmatpush1.xpose.msra.mxu0 0.0
  %4668 = vmatprep.subr.mxu0 0.0
  %4669 = vmatpush1.xpose.msra.mxu0 0.0
  %4670 = vmatprep.subr.mxu0 0.0
  %4671 = vmatpush1.xpose.msra.mxu0 0.0
  %4672 = vmatprep.subr.mxu0 0.0
  %4673 = vmatpush1.xpose.msra.mxu0 0.0
  %4674 = vmatprep.subr.mxu0 0.0
  %4675 = vmatpush1.xpose.msra.mxu0 0.0
  %4676 = vmatprep.subr.mxu0 0.0
  %4677 = vmatpush1.xpose.msra.mxu0 0.0
  %4678 = vmatprep.subr.mxu0 0.0
  %4679 = vmatpush1.xpose.msra.mxu0 0.0
  %4680 = vmatprep.subr.mxu0 0.0
  %4681 = vmatpush1.xpose.msra.mxu0 0.0
  %4682 = vmatprep.subr.mxu0 0.0
  %4683 = vmatpush1.xpose.msra.mxu0 0.0
  %4684 = vmatprep.subr.mxu0 0.0
  %4685 = vmatpush1.xpose.msra.mxu0 0.0
  %4686 = vmatprep.subr.mxu0 0.0
  %4687 = vmatpush1.xpose.msra.mxu0 0.0
  %4688 = vmatprep.subr.mxu0 0.0
  %4689 = vmatpush1.xpose.msra.mxu0 0.0
  %4690 = vmatprep.subr.mxu0 0.0
  %4691 = vmatpush1.xpose.msra.mxu0 0.0
  %4692 = vmatprep.subr.mxu0 0.0
  %4693 = vmatpush1.xpose.msra.mxu0 0.0
  %4694 = vmatprep.subr.mxu0 0.0
  %4695 = vmatpush1.xpose.msra.mxu0 0.0
  %4696 = vmatprep.subr.mxu0 0.0
  %4697 = vmatpush1.xpose.msra.mxu0 0.0
  %4698 = vmatprep.subr.mxu0 0.0
  %4699 = vmatpush1.xpose.msra.mxu0 0.0
  %4700 = vmatprep.subr.mxu0 0.0
  %4701 = vmatpush1.xpose.msra.mxu0 0.0
  %4702 = vmatprep.subr.mxu0 0.0
  %4703 = vmatpush1.xpose.msra.mxu0 0.0
  %4704 = vmatprep.subr.mxu0 0.0
  %4705 = vmatpush1.xpose.msra.mxu0 0.0
  %4706 = vmatprep.mubr.f32.mxu0 0.0
  %4707 = vmatmul.mubr.f32.gmra.mrb[0].mxu0 %v4638
  %v4708 = vpop.f32.mrb[0].mxu0
  %v4709 = vadd.f32 0.0, %v4708
  %v4710 = vpop.f32.mrb[0].mxu0
  %4711 = vdwg.mxu0
  %4713 = vrot.lane.b32.xlu0 %v4170, 96
  %v4714 = vpop.permute.xlu0 %4713
  %v4715 = vsel %vm441, %v4170, 0
  %v4717 = vsel %vm441, %v4714, 0
  %4719 = vmatprep.subr.mxu0 0.0
  %4720 = vmatpush1.xpose.msra.mxu0 %v4717
  %4721 = vmatprep.subr.mxu0 0.0
  %4722 = vmatpush1.xpose.msra.mxu0 0.0
  %4723 = vmatprep.subr.mxu0 0.0
  %4724 = vmatpush1.xpose.msra.mxu0 0.0
  %4725 = vmatprep.subr.mxu0 0.0
  %4726 = vmatpush1.xpose.msra.mxu0 0.0
  %4727 = vmatprep.subr.mxu0 0.0
  %4728 = vmatpush1.xpose.msra.mxu0 0.0
  %4729 = vmatprep.subr.mxu0 0.0
  %4730 = vmatpush1.xpose.msra.mxu0 0.0
  %4731 = vmatprep.subr.mxu0 0.0
  %4732 = vmatpush1.xpose.msra.mxu0 0.0
  %4733 = vmatprep.subr.mxu0 0.0
  %4734 = vmatpush1.xpose.msra.mxu0 0.0
  %4735 = vmatprep.subr.mxu0 0.0
  %4736 = vmatpush1.xpose.msra.mxu0 0.0
  %4737 = vmatprep.subr.mxu0 0.0
  %4738 = vmatpush1.xpose.msra.mxu0 0.0
  %4739 = vmatprep.subr.mxu0 0.0
  %4740 = vmatpush1.xpose.msra.mxu0 0.0
  %4741 = vmatprep.subr.mxu0 0.0
  %4742 = vmatpush1.xpose.msra.mxu0 0.0
  %4743 = vmatprep.subr.mxu0 0.0
  %4744 = vmatpush1.xpose.msra.mxu0 0.0
  %4745 = vmatprep.subr.mxu0 0.0
  %4746 = vmatpush1.xpose.msra.mxu0 0.0
  %4747 = vmatprep.subr.mxu0 0.0
  %4748 = vmatpush1.xpose.msra.mxu0 0.0
  %4749 = vmatprep.subr.mxu0 0.0
  %4750 = vmatpush1.xpose.msra.mxu0 0.0
  %4751 = vmatprep.subr.mxu0 0.0
  %4752 = vmatpush1.xpose.msra.mxu0 0.0
  %4753 = vmatprep.subr.mxu0 0.0
  %4754 = vmatpush1.xpose.msra.mxu0 0.0
  %4755 = vmatprep.subr.mxu0 0.0
  %4756 = vmatpush1.xpose.msra.mxu0 0.0
  %4757 = vmatprep.subr.mxu0 0.0
  %4758 = vmatpush1.xpose.msra.mxu0 0.0
  %4759 = vmatprep.subr.mxu0 0.0
  %4760 = vmatpush1.xpose.msra.mxu0 0.0
  %4761 = vmatprep.subr.mxu0 0.0
  %4762 = vmatpush1.xpose.msra.mxu0 0.0
  %4763 = vmatprep.subr.mxu0 0.0
  %4764 = vmatpush1.xpose.msra.mxu0 0.0
  %4765 = vmatprep.subr.mxu0 0.0
  %4766 = vmatpush1.xpose.msra.mxu0 0.0
  %4767 = vmatprep.subr.mxu0 0.0
  %4768 = vmatpush1.xpose.msra.mxu0 0.0
  %4769 = vmatprep.subr.mxu0 0.0
  %4770 = vmatpush1.xpose.msra.mxu0 0.0
  %4771 = vmatprep.subr.mxu0 0.0
  %4772 = vmatpush1.xpose.msra.mxu0 0.0
  %4773 = vmatprep.subr.mxu0 0.0
  %4774 = vmatpush1.xpose.msra.mxu0 0.0
  %4775 = vmatprep.subr.mxu0 0.0
  %4776 = vmatpush1.xpose.msra.mxu0 0.0
  %4777 = vmatprep.subr.mxu0 0.0
  %4778 = vmatpush1.xpose.msra.mxu0 0.0
  %4779 = vmatprep.subr.mxu0 0.0
  %4780 = vmatpush1.xpose.msra.mxu0 0.0
  %4781 = vmatprep.subr.mxu0 0.0
  %4782 = vmatpush1.xpose.msra.mxu0 0.0
  %4783 = vmatprep.mubr.f32.mxu0 0.0
  %4784 = vmatmul.mubr.f32.gmra.mrb[0].mxu0 %v4715
  %v4785 = vpop.f32.mrb[0].mxu0
  %v4786 = vadd.f32 0.0, %v4785
  %v4787 = vpop.f32.mrb[0].mxu0
  %4788 = vdwg.mxu0
  %v4789 = vmul.f32 %v4247, 0.25
  %v4790 = vmul.f32 %v4324, 0.25
  %v4791 = vmul.f32 %v4401, 0.25
  %v4792 = vmul.f32 %v4478, 0.25
  %v4793 = vmul.f32 %v4555, 0.25
  %v4794 = vmul.f32 %v4632, 0.25
  %v4795 = vmul.f32 %v4709, 0.25
  %v4796 = vmul.f32 %v4786, 0.25
  %v4797 = vadd.f32 %v4789, %v1074
  %v4798 = vadd.f32 %v4790, %v1078
  %v4799 = vadd.f32 %v4791, %v1082
  %v4800 = vadd.f32 %v4792, %v1086
  %v4801 = vadd.f32 %v4793, %v1090
  %v4802 = vadd.f32 %v4794, %v1094
  %v4803 = vadd.f32 %v4795, %v1098
  %v4804 = vadd.f32 %v4796, %v1102
  %v4805 = vsel %vm1119, %v4797, -inf
  %4806 = vmax.xlane.f32.xlu0 %v4805
  %v4807 = vpop.xlane.xlu0 %4806
  %v4808 = vsel %vm1119, %v4798, -inf
  %4809 = vmax.xlane.f32.xlu0 %v4808
  %v4810 = vpop.xlane.xlu0 %4809
  %v4811 = vsel %vm1119, %v4799, -inf
  %4812 = vmax.xlane.f32.xlu0 %v4811
  %v4813 = vpop.xlane.xlu0 %4812
  %v4814 = vsel %vm1119, %v4800, -inf
  %4815 = vmax.xlane.f32.xlu0 %v4814
  %v4816 = vpop.xlane.xlu0 %4815
  %v4817 = vsel %vm1119, %v4801, -inf
  %4818 = vmax.xlane.f32.xlu0 %v4817
  %v4819 = vpop.xlane.xlu0 %4818
  %v4820 = vsel %vm1119, %v4802, -inf
  %4821 = vmax.xlane.f32.xlu0 %v4820
  %v4822 = vpop.xlane.xlu0 %4821
  %v4823 = vsel %vm1119, %v4803, -inf
  %4824 = vmax.xlane.f32.xlu0 %v4823
  %v4825 = vpop.xlane.xlu0 %4824
  %v4826 = vsel %vm1119, %v4804, -inf
  %4827 = vmax.xlane.f32.xlu0 %v4826
  %v4828 = vpop.xlane.xlu0 %4827
  %v4829 = vsub.f32 %v4797, %v4807
  %v4830 = vsub.f32 %v4798, %v4810
  %v4831 = vsub.f32 %v4799, %v4813
  %v4832 = vsub.f32 %v4800, %v4816
  %v4833 = vsub.f32 %v4801, %v4819
  %v4834 = vsub.f32 %v4802, %v4822
  %v4835 = vsub.f32 %v4803, %v4825
  %v4836 = vsub.f32 %v4804, %v4828
  %v4837 = vmul.f32 %v4829, 1.442695
  %v4838 = vpow.pop %v4837
  %v4839 = vmul.f32 %v4830, 1.442695
  %v4840 = vpow.pop %v4839
  %v4841 = vmul.f32 %v4831, 1.442695
  %v4842 = vpow.pop %v4841
  %v4843 = vmul.f32 %v4832, 1.442695
  %v4844 = vpow.pop %v4843
  %v4845 = vmul.f32 %v4833, 1.442695
  %v4846 = vpow.pop %v4845
  %v4847 = vmul.f32 %v4834, 1.442695
  %v4848 = vpow.pop %v4847
  %v4849 = vmul.f32 %v4835, 1.442695
  %v4850 = vpow.pop %v4849
  %v4851 = vmul.f32 %v4836, 1.442695
  %v4852 = vpow.pop %v4851
  %v4853 = vsel %vm1119, %v4838, 0.0
  %4854 = vadd.xlane.f32.xlu0 %v4853
  %v4855 = vpop.xlane.xlu0 %4854
  %v4856 = vsel %vm1119, %v4840, 0.0
  %4857 = vadd.xlane.f32.xlu0 %v4856
  %v4858 = vpop.xlane.xlu0 %4857
  %v4859 = vsel %vm1119, %v4842, 0.0
  %4860 = vadd.xlane.f32.xlu0 %v4859
  %v4861 = vpop.xlane.xlu0 %4860
  %v4862 = vsel %vm1119, %v4844, 0.0
  %4863 = vadd.xlane.f32.xlu0 %v4862
  %v4864 = vpop.xlane.xlu0 %4863
  %v4865 = vsel %vm1119, %v4846, 0.0
  %4866 = vadd.xlane.f32.xlu0 %v4865
  %v4867 = vpop.xlane.xlu0 %4866
  %v4868 = vsel %vm1119, %v4848, 0.0
  %4869 = vadd.xlane.f32.xlu0 %v4868
  %v4870 = vpop.xlane.xlu0 %4869
  %v4871 = vsel %vm1119, %v4850, 0.0
  %4872 = vadd.xlane.f32.xlu0 %v4871
  %v4873 = vpop.xlane.xlu0 %4872
  %v4874 = vsel %vm1119, %v4852, 0.0
  %4875 = vadd.xlane.f32.xlu0 %v4874
  %v4876 = vpop.xlane.xlu0 %4875
  %v4877 = vrcp.pop %v4855
  %v4878 = vrcp.pop %v4858
  %v4879 = vrcp.pop %v4861
  %v4880 = vrcp.pop %v4864
  %v4881 = vrcp.pop %v4867
  %v4882 = vrcp.pop %v4870
  %v4883 = vrcp.pop %v4873
  %v4884 = vrcp.pop %v4876
  %v4885 = vmul.f32 %v4838, %v4877
  %v4886 = vmul.f32 %v4840, %v4878
  %v4887 = vmul.f32 %v4842, %v4879
  %v4888 = vmul.f32 %v4844, %v4880
  %v4889 = vmul.f32 %v4846, %v4881
  %v4890 = vmul.f32 %v4848, %v4882
  %v4891 = vmul.f32 %v4850, %v4883
  %v4892 = vmul.f32 %v4852, %v4884
  %4893 = vrot.lane.b32.xlu0 %v4135, 64
  %v4894 = vpop.permute.xlu0 %4893
  %v4897 = vsel %vm1119, %v4885, 0
  %4899 = vmatprep.subr.mxu0 0.0
  %4900 = vmatpush1.msra.mxu0 %v4894
  %4901 = vmatprep.subr.mxu0 0.0
  %4902 = vmatpush1.msra.mxu0 0.0
  %4903 = vmatprep.subr.mxu0 0.0
  %4904 = vmatpush1.msra.mxu0 0.0
  %4905 = vmatprep.subr.mxu0 0.0
  %4906 = vmatpush1.msra.mxu0 0.0
  %4907 = vmatprep.subr.mxu0 0.0
  %4908 = vmatpush1.msra.mxu0 0.0
  %4909 = vmatprep.subr.mxu0 0.0
  %4910 = vmatpush1.msra.mxu0 0.0
  %4911 = vmatprep.subr.mxu0 0.0
  %4912 = vmatpush1.msra.mxu0 0.0
  %4913 = vmatprep.subr.mxu0 0.0
  %4914 = vmatpush1.msra.mxu0 0.0
  %4915 = vmatprep.subr.mxu0 0.0
  %4916 = vmatpush1.msra.mxu0 0.0
  %4917 = vmatprep.subr.mxu0 0.0
  %4918 = vmatpush1.msra.mxu0 0.0
  %4919 = vmatprep.subr.mxu0 0.0
  %4920 = vmatpush1.msra.mxu0 0.0
  %4921 = vmatprep.subr.mxu0 0.0
  %4922 = vmatpush1.msra.mxu0 0.0
  %4923 = vmatprep.subr.mxu0 0.0
  %4924 = vmatpush1.msra.mxu0 0.0
  %4925 = vmatprep.subr.mxu0 0.0
  %4926 = vmatpush1.msra.mxu0 0.0
  %4927 = vmatprep.subr.mxu0 0.0
  %4928 = vmatpush1.msra.mxu0 0.0
  %4929 = vmatprep.subr.mxu0 0.0
  %4930 = vmatpush1.msra.mxu0 0.0
  %4931 = vmatprep.subr.mxu0 0.0
  %4932 = vmatpush1.msra.mxu0 0.0
  %4933 = vmatprep.subr.mxu0 0.0
  %4934 = vmatpush1.msra.mxu0 0.0
  %4935 = vmatprep.subr.mxu0 0.0
  %4936 = vmatpush1.msra.mxu0 0.0
  %4937 = vmatprep.subr.mxu0 0.0
  %4938 = vmatpush1.msra.mxu0 0.0
  %4939 = vmatprep.subr.mxu0 0.0
  %4940 = vmatpush1.msra.mxu0 0.0
  %4941 = vmatprep.subr.mxu0 0.0
  %4942 = vmatpush1.msra.mxu0 0.0
  %4943 = vmatprep.subr.mxu0 0.0
  %4944 = vmatpush1.msra.mxu0 0.0
  %4945 = vmatprep.subr.mxu0 0.0
  %4946 = vmatpush1.msra.mxu0 0.0
  %4947 = vmatprep.subr.mxu0 0.0
  %4948 = vmatpush1.msra.mxu0 0.0
  %4949 = vmatprep.subr.mxu0 0.0
  %4950 = vmatpush1.msra.mxu0 0.0
  %4951 = vmatprep.subr.mxu0 0.0
  %4952 = vmatpush1.msra.mxu0 0.0
  %4953 = vmatprep.subr.mxu0 0.0
  %4954 = vmatpush1.msra.mxu0 0.0
  %4955 = vmatprep.subr.mxu0 0.0
  %4956 = vmatpush1.msra.mxu0 0.0
  %4957 = vmatprep.subr.mxu0 0.0
  %4958 = vmatpush1.msra.mxu0 0.0
  %4959 = vmatprep.subr.mxu0 0.0
  %4960 = vmatpush1.msra.mxu0 0.0
  %4961 = vmatprep.subr.mxu0 0.0
  %4962 = vmatpush1.msra.mxu0 0.0
  %4963 = vmatprep.mubr.f32.mxu0 0.0
  %4964 = vmatmul.mubr.f32.gmra.mrb[0].mxu0 %v4897
  %v4965 = vpop.f32.mrb[0].mxu0
  %v4966 = vadd.f32 0.0, %v4965
  %v4967 = vpop.f32.mrb[0].mxu0
  %4968 = vdwg.mxu0
  %4969 = vrot.lane.b32.xlu0 %v4140, 64
  %v4970 = vpop.permute.xlu0 %4969
  %v4973 = vsel %vm1119, %v4886, 0
  %4975 = vmatprep.subr.mxu0 0.0
  %4976 = vmatpush1.msra.mxu0 %v4970
  %4977 = vmatprep.subr.mxu0 0.0
  %4978 = vmatpush1.msra.mxu0 0.0
  %4979 = vmatprep.subr.mxu0 0.0
  %4980 = vmatpush1.msra.mxu0 0.0
  %4981 = vmatprep.subr.mxu0 0.0
  %4982 = vmatpush1.msra.mxu0 0.0
  %4983 = vmatprep.subr.mxu0 0.0
  %4984 = vmatpush1.msra.mxu0 0.0
  %4985 = vmatprep.subr.mxu0 0.0
  %4986 = vmatpush1.msra.mxu0 0.0
  %4987 = vmatprep.subr.mxu0 0.0
  %4988 = vmatpush1.msra.mxu0 0.0
  %4989 = vmatprep.subr.mxu0 0.0
  %4990 = vmatpush1.msra.mxu0 0.0
  %4991 = vmatprep.subr.mxu0 0.0
  %4992 = vmatpush1.msra.mxu0 0.0
  %4993 = vmatprep.subr.mxu0 0.0
  %4994 = vmatpush1.msra.mxu0 0.0
  %4995 = vmatprep.subr.mxu0 0.0
  %4996 = vmatpush1.msra.mxu0 0.0
  %4997 = vmatprep.subr.mxu0 0.0
  %4998 = vmatpush1.msra.mxu0 0.0
  %4999 = vmatprep.subr.mxu0 0.0
  %5000 = vmatpush1.msra.mxu0 0.0
  %5001 = vmatprep.subr.mxu0 0.0
  %5002 = vmatpush1.msra.mxu0 0.0
  %5003 = vmatprep.subr.mxu0 0.0
  %5004 = vmatpush1.msra.mxu0 0.0
  %5005 = vmatprep.subr.mxu0 0.0
  %5006 = vmatpush1.msra.mxu0 0.0
  %5007 = vmatprep.subr.mxu0 0.0
  %5008 = vmatpush1.msra.mxu0 0.0
  %5009 = vmatprep.subr.mxu0 0.0
  %5010 = vmatpush1.msra.mxu0 0.0
  %5011 = vmatprep.subr.mxu0 0.0
  %5012 = vmatpush1.msra.mxu0 0.0
  %5013 = vmatprep.subr.mxu0 0.0
  %5014 = vmatpush1.msra.mxu0 0.0
  %5015 = vmatprep.subr.mxu0 0.0
  %5016 = vmatpush1.msra.mxu0 0.0
  %5017 = vmatprep.subr.mxu0 0.0
  %5018 = vmatpush1.msra.mxu0 0.0
  %5019 = vmatprep.subr.mxu0 0.0
  %5020 = vmatpush1.msra.mxu0 0.0
  %5021 = vmatprep.subr.mxu0 0.0
  %5022 = vmatpush1.msra.mxu0 0.0
  %5023 = vmatprep.subr.mxu0 0.0
  %5024 = vmatpush1.msra.mxu0 0.0
  %5025 = vmatprep.subr.mxu0 0.0
  %5026 = vmatpush1.msra.mxu0 0.0
  %5027 = vmatprep.subr.mxu0 0.0
  %5028 = vmatpush1.msra.mxu0 0.0
  %5029 = vmatprep.subr.mxu0 0.0
  %5030 = vmatpush1.msra.mxu0 0.0
  %5031 = vmatprep.subr.mxu0 0.0
  %5032 = vmatpush1.msra.mxu0 0.0
  %5033 = vmatprep.subr.mxu0 0.0
  %5034 = vmatpush1.msra.mxu0 0.0
  %5035 = vmatprep.subr.mxu0 0.0
  %5036 = vmatpush1.msra.mxu0 0.0
  %5037 = vmatprep.subr.mxu0 0.0
  %5038 = vmatpush1.msra.mxu0 0.0
  %5039 = vmatprep.mubr.f32.mxu0 0.0
  %5040 = vmatmul.mubr.f32.gmra.mrb[0].mxu0 %v4973
  %v5041 = vpop.f32.mrb[0].mxu0
  %v5042 = vadd.f32 0.0, %v5041
  %v5043 = vpop.f32.mrb[0].mxu0
  %5044 = vdwg.mxu0
  %5045 = vrot.lane.b32.xlu0 %v4145, 64
  %v5046 = vpop.permute.xlu0 %5045
  %v5049 = vsel %vm1119, %v4887, 0
  %5051 = vmatprep.subr.mxu0 0.0
  %5052 = vmatpush1.msra.mxu0 %v5046
  %5053 = vmatprep.subr.mxu0 0.0
  %5054 = vmatpush1.msra.mxu0 0.0
  %5055 = vmatprep.subr.mxu0 0.0
  %5056 = vmatpush1.msra.mxu0 0.0
  %5057 = vmatprep.subr.mxu0 0.0
  %5058 = vmatpush1.msra.mxu0 0.0
  %5059 = vmatprep.subr.mxu0 0.0
  %5060 = vmatpush1.msra.mxu0 0.0
  %5061 = vmatprep.subr.mxu0 0.0
  %5062 = vmatpush1.msra.mxu0 0.0
  %5063 = vmatprep.subr.mxu0 0.0
  %5064 = vmatpush1.msra.mxu0 0.0
  %5065 = vmatprep.subr.mxu0 0.0
  %5066 = vmatpush1.msra.mxu0 0.0
  %5067 = vmatprep.subr.mxu0 0.0
  %5068 = vmatpush1.msra.mxu0 0.0
  %5069 = vmatprep.subr.mxu0 0.0
  %5070 = vmatpush1.msra.mxu0 0.0
  %5071 = vmatprep.subr.mxu0 0.0
  %5072 = vmatpush1.msra.mxu0 0.0
  %5073 = vmatprep.subr.mxu0 0.0
  %5074 = vmatpush1.msra.mxu0 0.0
  %5075 = vmatprep.subr.mxu0 0.0
  %5076 = vmatpush1.msra.mxu0 0.0
  %5077 = vmatprep.subr.mxu0 0.0
  %5078 = vmatpush1.msra.mxu0 0.0
  %5079 = vmatprep.subr.mxu0 0.0
  %5080 = vmatpush1.msra.mxu0 0.0
  %5081 = vmatprep.subr.mxu0 0.0
  %5082 = vmatpush1.msra.mxu0 0.0
  %5083 = vmatprep.subr.mxu0 0.0
  %5084 = vmatpush1.msra.mxu0 0.0
  %5085 = vmatprep.subr.mxu0 0.0
  %5086 = vmatpush1.msra.mxu0 0.0
  %5087 = vmatprep.subr.mxu0 0.0
  %5088 = vmatpush1.msra.mxu0 0.0
  %5089 = vmatprep.subr.mxu0 0.0
  %5090 = vmatpush1.msra.mxu0 0.0
  %5091 = vmatprep.subr.mxu0 0.0
  %5092 = vmatpush1.msra.mxu0 0.0
  %5093 = vmatprep.subr.mxu0 0.0
  %5094 = vmatpush1.msra.mxu0 0.0
  %5095 = vmatprep.subr.mxu0 0.0
  %5096 = vmatpush1.msra.mxu0 0.0
  %5097 = vmatprep.subr.mxu0 0.0
  %5098 = vmatpush1.msra.mxu0 0.0
  %5099 = vmatprep.subr.mxu0 0.0
  %5100 = vmatpush1.msra.mxu0 0.0
  %5101 = vmatprep.subr.mxu0 0.0
  %5102 = vmatpush1.msra.mxu0 0.0
  %5103 = vmatprep.subr.mxu0 0.0
  %5104 = vmatpush1.msra.mxu0 0.0
  %5105 = vmatprep.subr.mxu0 0.0
  %5106 = vmatpush1.msra.mxu0 0.0
  %5107 = vmatprep.subr.mxu0 0.0
  %5108 = vmatpush1.msra.mxu0 0.0
  %5109 = vmatprep.subr.mxu0 0.0
  %5110 = vmatpush1.msra.mxu0 0.0
  %5111 = vmatprep.subr.mxu0 0.0
  %5112 = vmatpush1.msra.mxu0 0.0
  %5113 = vmatprep.subr.mxu0 0.0
  %5114 = vmatpush1.msra.mxu0 0.0
  %5115 = vmatprep.mubr.f32.mxu0 0.0
  %5116 = vmatmul.mubr.f32.gmra.mrb[0].mxu0 %v5049
  %v5117 = vpop.f32.mrb[0].mxu0
  %v5118 = vadd.f32 0.0, %v5117
  %v5119 = vpop.f32.mrb[0].mxu0
  %5120 = vdwg.mxu0
  %5121 = vrot.lane.b32.xlu0 %v4150, 64
  %v5122 = vpop.permute.xlu0 %5121
  %v5125 = vsel %vm1119, %v4888, 0
  %5127 = vmatprep.subr.mxu0 0.0
  %5128 = vmatpush1.msra.mxu0 %v5122
  %5129 = vmatprep.subr.mxu0 0.0
  %5130 = vmatpush1.msra.mxu0 0.0
  %5131 = vmatprep.subr.mxu0 0.0
  %5132 = vmatpush1.msra.mxu0 0.0
  %5133 = vmatprep.subr.mxu0 0.0
  %5134 = vmatpush1.msra.mxu0 0.0
  %5135 = vmatprep.subr.mxu0 0.0
  %5136 = vmatpush1.msra.mxu0 0.0
  %5137 = vmatprep.subr.mxu0 0.0
  %5138 = vmatpush1.msra.mxu0 0.0
  %5139 = vmatprep.subr.mxu0 0.0
  %5140 = vmatpush1.msra.mxu0 0.0
  %5141 = vmatprep.subr.mxu0 0.0
  %5142 = vmatpush1.msra.mxu0 0.0
  %5143 = vmatprep.subr.mxu0 0.0
  %5144 = vmatpush1.msra.mxu0 0.0
  %5145 = vmatprep.subr.mxu0 0.0
  %5146 = vmatpush1.msra.mxu0 0.0
  %5147 = vmatprep.subr.mxu0 0.0
  %5148 = vmatpush1.msra.mxu0 0.0
  %5149 = vmatprep.subr.mxu0 0.0
  %5150 = vmatpush1.msra.mxu0 0.0
  %5151 = vmatprep.subr.mxu0 0.0
  %5152 = vmatpush1.msra.mxu0 0.0
  %5153 = vmatprep.subr.mxu0 0.0
  %5154 = vmatpush1.msra.mxu0 0.0
  %5155 = vmatprep.subr.mxu0 0.0
  %5156 = vmatpush1.msra.mxu0 0.0
  %5157 = vmatprep.subr.mxu0 0.0
  %5158 = vmatpush1.msra.mxu0 0.0
  %5159 = vmatprep.subr.mxu0 0.0
  %5160 = vmatpush1.msra.mxu0 0.0
  %5161 = vmatprep.subr.mxu0 0.0
  %5162 = vmatpush1.msra.mxu0 0.0
  %5163 = vmatprep.subr.mxu0 0.0
  %5164 = vmatpush1.msra.mxu0 0.0
  %5165 = vmatprep.subr.mxu0 0.0
  %5166 = vmatpush1.msra.mxu0 0.0
  %5167 = vmatprep.subr.mxu0 0.0
  %5168 = vmatpush1.msra.mxu0 0.0
  %5169 = vmatprep.subr.mxu0 0.0
  %5170 = vmatpush1.msra.mxu0 0.0
  %5171 = vmatprep.subr.mxu0 0.0
  %5172 = vmatpush1.msra.mxu0 0.0
  %5173 = vmatprep.subr.mxu0 0.0
  %5174 = vmatpush1.msra.mxu0 0.0
  %5175 = vmatprep.subr.mxu0 0.0
  %5176 = vmatpush1.msra.mxu0 0.0
  %5177 = vmatprep.subr.mxu0 0.0
  %5178 = vmatpush1.msra.mxu0 0.0
  %5179 = vmatprep.subr.mxu0 0.0
  %5180 = vmatpush1.msra.mxu0 0.0
  %5181 = vmatprep.subr.mxu0 0.0
  %5182 = vmatpush1.msra.mxu0 0.0
  %5183 = vmatprep.subr.mxu0 0.0
  %5184 = vmatpush1.msra.mxu0 0.0
  %5185 = vmatprep.subr.mxu0 0.0
  %5186 = vmatpush1.msra.mxu0 0.0
  %5187 = vmatprep.subr.mxu0 0.0
  %5188 = vmatpush1.msra.mxu0 0.0
  %5189 = vmatprep.subr.mxu0 0.0
  %5190 = vmatpush1.msra.mxu0 0.0
  %5191 = vmatprep.mubr.f32.mxu0 0.0
  %5192 = vmatmul.mubr.f32.gmra.mrb[0].mxu0 %v5125
  %v5193 = vpop.f32.mrb[0].mxu0
  %v5194 = vadd.f32 0.0, %v5193
  %v5195 = vpop.f32.mrb[0].mxu0
  %5196 = vdwg.mxu0
  %5197 = vrot.lane.b32.xlu0 %v4155, 64
  %v5198 = vpop.permute.xlu0 %5197
  %v5201 = vsel %vm1119, %v4889, 0
  %5203 = vmatprep.subr.mxu0 0.0
  %5204 = vmatpush1.msra.mxu0 %v5198
  %5205 = vmatprep.subr.mxu0 0.0
  %5206 = vmatpush1.msra.mxu0 0.0
  %5207 = vmatprep.subr.mxu0 0.0
  %5208 = vmatpush1.msra.mxu0 0.0
  %5209 = vmatprep.subr.mxu0 0.0
  %5210 = vmatpush1.msra.mxu0 0.0
  %5211 = vmatprep.subr.mxu0 0.0
  %5212 = vmatpush1.msra.mxu0 0.0
  %5213 = vmatprep.subr.mxu0 0.0
  %5214 = vmatpush1.msra.mxu0 0.0
  %5215 = vmatprep.subr.mxu0 0.0
  %5216 = vmatpush1.msra.mxu0 0.0
  %5217 = vmatprep.subr.mxu0 0.0
  %5218 = vmatpush1.msra.mxu0 0.0
  %5219 = vmatprep.subr.mxu0 0.0
  %5220 = vmatpush1.msra.mxu0 0.0
  %5221 = vmatprep.subr.mxu0 0.0
  %5222 = vmatpush1.msra.mxu0 0.0
  %5223 = vmatprep.subr.mxu0 0.0
  %5224 = vmatpush1.msra.mxu0 0.0
  %5225 = vmatprep.subr.mxu0 0.0
  %5226 = vmatpush1.msra.mxu0 0.0
  %5227 = vmatprep.subr.mxu0 0.0
  %5228 = vmatpush1.msra.mxu0 0.0
  %5229 = vmatprep.subr.mxu0 0.0
  %5230 = vmatpush1.msra.mxu0 0.0
  %5231 = vmatprep.subr.mxu0 0.0
  %5232 = vmatpush1.msra.mxu0 0.0
  %5233 = vmatprep.subr.mxu0 0.0
  %5234 = vmatpush1.msra.mxu0 0.0
  %5235 = vmatprep.subr.mxu0 0.0
  %5236 = vmatpush1.msra.mxu0 0.0
  %5237 = vmatprep.subr.mxu0 0.0
  %5238 = vmatpush1.msra.mxu0 0.0
  %5239 = vmatprep.subr.mxu0 0.0
  %5240 = vmatpush1.msra.mxu0 0.0
  %5241 = vmatprep.subr.mxu0 0.0
  %5242 = vmatpush1.msra.mxu0 0.0
  %5243 = vmatprep.subr.mxu0 0.0
  %5244 = vmatpush1.msra.mxu0 0.0
  %5245 = vmatprep.subr.mxu0 0.0
  %5246 = vmatpush1.msra.mxu0 0.0
  %5247 = vmatprep.subr.mxu0 0.0
  %5248 = vmatpush1.msra.mxu0 0.0
  %5249 = vmatprep.subr.mxu0 0.0
  %5250 = vmatpush1.msra.mxu0 0.0
  %5251 = vmatprep.subr.mxu0 0.0
  %5252 = vmatpush1.msra.mxu0 0.0
  %5253 = vmatprep.subr.mxu0 0.0
  %5254 = vmatpush1.msra.mxu0 0.0
  %5255 = vmatprep.subr.mxu0 0.0
  %5256 = vmatpush1.msra.mxu0 0.0
  %5257 = vmatprep.subr.mxu0 0.0
  %5258 = vmatpush1.msra.mxu0 0.0
  %5259 = vmatprep.subr.mxu0 0.0
  %5260 = vmatpush1.msra.mxu0 0.0
  %5261 = vmatprep.subr.mxu0 0.0
  %5262 = vmatpush1.msra.mxu0 0.0
  %5263 = vmatprep.subr.mxu0 0.0
  %5264 = vmatpush1.msra.mxu0 0.0
  %5265 = vmatprep.subr.mxu0 0.0
  %5266 = vmatpush1.msra.mxu0 0.0
  %5267 = vmatprep.mubr.f32.mxu0 0.0
  %5268 = vmatmul.mubr.f32.gmra.mrb[0].mxu0 %v5201
  %v5269 = vpop.f32.mrb[0].mxu0
  %v5270 = vadd.f32 0.0, %v5269
  %v5271 = vpop.f32.mrb[0].mxu0
  %5272 = vdwg.mxu0
  %5273 = vrot.lane.b32.xlu0 %v4160, 64
  %v5274 = vpop.permute.xlu0 %5273
  %v5277 = vsel %vm1119, %v4890, 0
  %5279 = vmatprep.subr.mxu0 0.0
  %5280 = vmatpush1.msra.mxu0 %v5274
  %5281 = vmatprep.subr.mxu0 0.0
  %5282 = vmatpush1.msra.mxu0 0.0
  %5283 = vmatprep.subr.mxu0 0.0
  %5284 = vmatpush1.msra.mxu0 0.0
  %5285 = vmatprep.subr.mxu0 0.0
  %5286 = vmatpush1.msra.mxu0 0.0
  %5287 = vmatprep.subr.mxu0 0.0
  %5288 = vmatpush1.msra.mxu0 0.0
  %5289 = vmatprep.subr.mxu0 0.0
  %5290 = vmatpush1.msra.mxu0 0.0
  %5291 = vmatprep.subr.mxu0 0.0
  %5292 = vmatpush1.msra.mxu0 0.0
  %5293 = vmatprep.subr.mxu0 0.0
  %5294 = vmatpush1.msra.mxu0 0.0
  %5295 = vmatprep.subr.mxu0 0.0
  %5296 = vmatpush1.msra.mxu0 0.0
  %5297 = vmatprep.subr.mxu0 0.0
  %5298 = vmatpush1.msra.mxu0 0.0
  %5299 = vmatprep.subr.mxu0 0.0
  %5300 = vmatpush1.msra.mxu0 0.0
  %5301 = vmatprep.subr.mxu0 0.0
  %5302 = vmatpush1.msra.mxu0 0.0
  %5303 = vmatprep.subr.mxu0 0.0
  %5304 = vmatpush1.msra.mxu0 0.0
  %5305 = vmatprep.subr.mxu0 0.0
  %5306 = vmatpush1.msra.mxu0 0.0
  %5307 = vmatprep.subr.mxu0 0.0
  %5308 = vmatpush1.msra.mxu0 0.0
  %5309 = vmatprep.subr.mxu0 0.0
  %5310 = vmatpush1.msra.mxu0 0.0
  %5311 = vmatprep.subr.mxu0 0.0
  %5312 = vmatpush1.msra.mxu0 0.0
  %5313 = vmatprep.subr.mxu0 0.0
  %5314 = vmatpush1.msra.mxu0 0.0
  %5315 = vmatprep.subr.mxu0 0.0
  %5316 = vmatpush1.msra.mxu0 0.0
  %5317 = vmatprep.subr.mxu0 0.0
  %5318 = vmatpush1.msra.mxu0 0.0
  %5319 = vmatprep.subr.mxu0 0.0
  %5320 = vmatpush1.msra.mxu0 0.0
  %5321 = vmatprep.subr.mxu0 0.0
  %5322 = vmatpush1.msra.mxu0 0.0
  %5323 = vmatprep.subr.mxu0 0.0
  %5324 = vmatpush1.msra.mxu0 0.0
  %5325 = vmatprep.subr.mxu0 0.0
  %5326 = vmatpush1.msra.mxu0 0.0
  %5327 = vmatprep.subr.mxu0 0.0
  %5328 = vmatpush1.msra.mxu0 0.0
  %5329 = vmatprep.subr.mxu0 0.0
  %5330 = vmatpush1.msra.mxu0 0.0
  %5331 = vmatprep.subr.mxu0 0.0
  %5332 = vmatpush1.msra.mxu0 0.0
  %5333 = vmatprep.subr.mxu0 0.0
  %5334 = vmatpush1.msra.mxu0 0.0
  %5335 = vmatprep.subr.mxu0 0.0
  %5336 = vmatpush1.msra.mxu0 0.0
  %5337 = vmatprep.subr.mxu0 0.0
  %5338 = vmatpush1.msra.mxu0 0.0
  %5339 = vmatprep.subr.mxu0 0.0
  %5340 = vmatpush1.msra.mxu0 0.0
  %5341 = vmatprep.subr.mxu0 0.0
  %5342 = vmatpush1.msra.mxu0 0.0
  %5343 = vmatprep.mubr.f32.mxu0 0.0
  %5344 = vmatmul.mubr.f32.gmra.mrb[0].mxu0 %v5277
  %v5345 = vpop.f32.mrb[0].mxu0
  %v5346 = vadd.f32 0.0, %v5345
  %v5347 = vpop.f32.mrb[0].mxu0
  %5348 = vdwg.mxu0
  %5349 = vrot.lane.b32.xlu0 %v4165, 64
  %v5350 = vpop.permute.xlu0 %5349
  %v5353 = vsel %vm1119, %v4891, 0
  %5355 = vmatprep.subr.mxu0 0.0
  %5356 = vmatpush1.msra.mxu0 %v5350
  %5357 = vmatprep.subr.mxu0 0.0
  %5358 = vmatpush1.msra.mxu0 0.0
  %5359 = vmatprep.subr.mxu0 0.0
  %5360 = vmatpush1.msra.mxu0 0.0
  %5361 = vmatprep.subr.mxu0 0.0
  %5362 = vmatpush1.msra.mxu0 0.0
  %5363 = vmatprep.subr.mxu0 0.0
  %5364 = vmatpush1.msra.mxu0 0.0
  %5365 = vmatprep.subr.mxu0 0.0
  %5366 = vmatpush1.msra.mxu0 0.0
  %5367 = vmatprep.subr.mxu0 0.0
  %5368 = vmatpush1.msra.mxu0 0.0
  %5369 = vmatprep.subr.mxu0 0.0
  %5370 = vmatpush1.msra.mxu0 0.0
  %5371 = vmatprep.subr.mxu0 0.0
  %5372 = vmatpush1.msra.mxu0 0.0
  %5373 = vmatprep.subr.mxu0 0.0
  %5374 = vmatpush1.msra.mxu0 0.0
  %5375 = vmatprep.subr.mxu0 0.0
  %5376 = vmatpush1.msra.mxu0 0.0
  %5377 = vmatprep.subr.mxu0 0.0
  %5378 = vmatpush1.msra.mxu0 0.0
  %5379 = vmatprep.subr.mxu0 0.0
  %5380 = vmatpush1.msra.mxu0 0.0
  %5381 = vmatprep.subr.mxu0 0.0
  %5382 = vmatpush1.msra.mxu0 0.0
  %5383 = vmatprep.subr.mxu0 0.0
  %5384 = vmatpush1.msra.mxu0 0.0
  %5385 = vmatprep.subr.mxu0 0.0
  %5386 = vmatpush1.msra.mxu0 0.0
  %5387 = vmatprep.subr.mxu0 0.0
  %5388 = vmatpush1.msra.mxu0 0.0
  %5389 = vmatprep.subr.mxu0 0.0
  %5390 = vmatpush1.msra.mxu0 0.0
  %5391 = vmatprep.subr.mxu0 0.0
  %5392 = vmatpush1.msra.mxu0 0.0
  %5393 = vmatprep.subr.mxu0 0.0
  %5394 = vmatpush1.msra.mxu0 0.0
  %5395 = vmatprep.subr.mxu0 0.0
  %5396 = vmatpush1.msra.mxu0 0.0
  %5397 = vmatprep.subr.mxu0 0.0
  %5398 = vmatpush1.msra.mxu0 0.0
  %5399 = vmatprep.subr.mxu0 0.0
  %5400 = vmatpush1.msra.mxu0 0.0
  %5401 = vmatprep.subr.mxu0 0.0
  %5402 = vmatpush1.msra.mxu0 0.0
  %5403 = vmatprep.subr.mxu0 0.0
  %5404 = vmatpush1.msra.mxu0 0.0
  %5405 = vmatprep.subr.mxu0 0.0
  %5406 = vmatpush1.msra.mxu0 0.0
  %5407 = vmatprep.subr.mxu0 0.0
  %5408 = vmatpush1.msra.mxu0 0.0
  %5409 = vmatprep.subr.mxu0 0.0
  %5410 = vmatpush1.msra.mxu0 0.0
  %5411 = vmatprep.subr.mxu0 0.0
  %5412 = vmatpush1.msra.mxu0 0.0
  %5413 = vmatprep.subr.mxu0 0.0
  %5414 = vmatpush1.msra.mxu0 0.0
  %5415 = vmatprep.subr.mxu0 0.0
  %5416 = vmatpush1.msra.mxu0 0.0
  %5417 = vmatprep.subr.mxu0 0.0
  %5418 = vmatpush1.msra.mxu0 0.0
  %5419 = vmatprep.mubr.f32.mxu0 0.0
  %5420 = vmatmul.mubr.f32.gmra.mrb[0].mxu0 %v5353
  %v5421 = vpop.f32.mrb[0].mxu0
  %v5422 = vadd.f32 0.0, %v5421
  %v5423 = vpop.f32.mrb[0].mxu0
  %5424 = vdwg.mxu0
  %5425 = vrot.lane.b32.xlu0 %v4170, 64
  %v5426 = vpop.permute.xlu0 %5425
  %v5429 = vsel %vm1119, %v4892, 0
  %5431 = vmatprep.subr.mxu0 0.0
  %5432 = vmatpush1.msra.mxu0 %v5426
  %5433 = vmatprep.subr.mxu0 0.0
  %5434 = vmatpush1.msra.mxu0 0.0
  %5435 = vmatprep.subr.mxu0 0.0
  %5436 = vmatpush1.msra.mxu0 0.0
  %5437 = vmatprep.subr.mxu0 0.0
  %5438 = vmatpush1.msra.mxu0 0.0
  %5439 = vmatprep.subr.mxu0 0.0
  %5440 = vmatpush1.msra.mxu0 0.0
  %5441 = vmatprep.subr.mxu0 0.0
  %5442 = vmatpush1.msra.mxu0 0.0
  %5443 = vmatprep.subr.mxu0 0.0
  %5444 = vmatpush1.msra.mxu0 0.0
  %5445 = vmatprep.subr.mxu0 0.0
  %5446 = vmatpush1.msra.mxu0 0.0
  %5447 = vmatprep.subr.mxu0 0.0
  %5448 = vmatpush1.msra.mxu0 0.0
  %5449 = vmatprep.subr.mxu0 0.0
  %5450 = vmatpush1.msra.mxu0 0.0
  %5451 = vmatprep.subr.mxu0 0.0
  %5452 = vmatpush1.msra.mxu0 0.0
  %5453 = vmatprep.subr.mxu0 0.0
  %5454 = vmatpush1.msra.mxu0 0.0
  %5455 = vmatprep.subr.mxu0 0.0
  %5456 = vmatpush1.msra.mxu0 0.0
  %5457 = vmatprep.subr.mxu0 0.0
  %5458 = vmatpush1.msra.mxu0 0.0
  %5459 = vmatprep.subr.mxu0 0.0
  %5460 = vmatpush1.msra.mxu0 0.0
  %5461 = vmatprep.subr.mxu0 0.0
  %5462 = vmatpush1.msra.mxu0 0.0
  %5463 = vmatprep.subr.mxu0 0.0
  %5464 = vmatpush1.msra.mxu0 0.0
  %5465 = vmatprep.subr.mxu0 0.0
  %5466 = vmatpush1.msra.mxu0 0.0
  %5467 = vmatprep.subr.mxu0 0.0
  %5468 = vmatpush1.msra.mxu0 0.0
  %5469 = vmatprep.subr.mxu0 0.0
  %5470 = vmatpush1.msra.mxu0 0.0
  %5471 = vmatprep.subr.mxu0 0.0
  %5472 = vmatpush1.msra.mxu0 0.0
  %5473 = vmatprep.subr.mxu0 0.0
  %5474 = vmatpush1.msra.mxu0 0.0
  %5475 = vmatprep.subr.mxu0 0.0
  %5476 = vmatpush1.msra.mxu0 0.0
  %5477 = vmatprep.subr.mxu0 0.0
  %5478 = vmatpush1.msra.mxu0 0.0
  %5479 = vmatprep.subr.mxu0 0.0
  %5480 = vmatpush1.msra.mxu0 0.0
  %5481 = vmatprep.subr.mxu0 0.0
  %5482 = vmatpush1.msra.mxu0 0.0
  %5483 = vmatprep.subr.mxu0 0.0
  %5484 = vmatpush1.msra.mxu0 0.0
  %5485 = vmatprep.subr.mxu0 0.0
  %5486 = vmatpush1.msra.mxu0 0.0
  %5487 = vmatprep.subr.mxu0 0.0
  %5488 = vmatpush1.msra.mxu0 0.0
  %5489 = vmatprep.subr.mxu0 0.0
  %5490 = vmatpush1.msra.mxu0 0.0
  %5491 = vmatprep.subr.mxu0 0.0
  %5492 = vmatpush1.msra.mxu0 0.0
  %5493 = vmatprep.subr.mxu0 0.0
  %5494 = vmatpush1.msra.mxu0 0.0
  %5495 = vmatprep.mubr.f32.mxu0 0.0
  %5496 = vmatmul.mubr.f32.gmra.mrb[0].mxu0 %v5429
  %v5497 = vpop.f32.mrb[0].mxu0
  %v5498 = vadd.f32 0.0, %v5497
  %v5499 = vpop.f32.mrb[0].mxu0
  %5500 = vdwg.mxu0
  %5501 = vrot.lane.b32.xlu0 %v4135, 112
  %v5502 = vpop.permute.xlu0 %5501
  %5503 = vrot.lane.b32.xlu0 %v4135, 80
  %v5504 = vpop.permute.xlu0 %5503
  %v5505 = vsel %vm441, %v5502, 0
  %v5507 = vsel %vm441, %v5504, 0
  %5509 = vmatprep.subr.mxu0 0.0
  %5510 = vmatpush1.xpose.msra.mxu0 %v5507
  %5511 = vmatprep.subr.mxu0 0.0
  %5512 = vmatpush1.xpose.msra.mxu0 0.0
  %5513 = vmatprep.subr.mxu0 0.0
  %5514 = vmatpush1.xpose.msra.mxu0 0.0
  %5515 = vmatprep.subr.mxu0 0.0
  %5516 = vmatpush1.xpose.msra.mxu0 0.0
  %5517 = vmatprep.subr.mxu0 0.0
  %5518 = vmatpush1.xpose.msra.mxu0 0.0
  %5519 = vmatprep.subr.mxu0 0.0
  %5520 = vmatpush1.xpose.msra.mxu0 0.0
  %5521 = vmatprep.subr.mxu0 0.0
  %5522 = vmatpush1.xpose.msra.mxu0 0.0
  %5523 = vmatprep.subr.mxu0 0.0
  %5524 = vmatpush1.xpose.msra.mxu0 0.0
  %5525 = vmatprep.subr.mxu0 0.0
  %5526 = vmatpush1.xpose.msra.mxu0 0.0
  %5527 = vmatprep.subr.mxu0 0.0
  %5528 = vmatpush1.xpose.msra.mxu0 0.0
  %5529 = vmatprep.subr.mxu0 0.0
  %5530 = vmatpush1.xpose.msra.mxu0 0.0
  %5531 = vmatprep.subr.mxu0 0.0
  %5532 = vmatpush1.xpose.msra.mxu0 0.0
  %5533 = vmatprep.subr.mxu0 0.0
  %5534 = vmatpush1.xpose.msra.mxu0 0.0
  %5535 = vmatprep.subr.mxu0 0.0
  %5536 = vmatpush1.xpose.msra.mxu0 0.0
  %5537 = vmatprep.subr.mxu0 0.0
  %5538 = vmatpush1.xpose.msra.mxu0 0.0
  %5539 = vmatprep.subr.mxu0 0.0
  %5540 = vmatpush1.xpose.msra.mxu0 0.0
  %5541 = vmatprep.subr.mxu0 0.0
  %5542 = vmatpush1.xpose.msra.mxu0 0.0
  %5543 = vmatprep.subr.mxu0 0.0
  %5544 = vmatpush1.xpose.msra.mxu0 0.0
  %5545 = vmatprep.subr.mxu0 0.0
  %5546 = vmatpush1.xpose.msra.mxu0 0.0
  %5547 = vmatprep.subr.mxu0 0.0
  %5548 = vmatpush1.xpose.msra.mxu0 0.0
  %5549 = vmatprep.subr.mxu0 0.0
  %5550 = vmatpush1.xpose.msra.mxu0 0.0
  %5551 = vmatprep.subr.mxu0 0.0
  %5552 = vmatpush1.xpose.msra.mxu0 0.0
  %5553 = vmatprep.subr.mxu0 0.0
  %5554 = vmatpush1.xpose.msra.mxu0 0.0
  %5555 = vmatprep.subr.mxu0 0.0
  %5556 = vmatpush1.xpose.msra.mxu0 0.0
  %5557 = vmatprep.subr.mxu0 0.0
  %5558 = vmatpush1.xpose.msra.mxu0 0.0
  %5559 = vmatprep.subr.mxu0 0.0
  %5560 = vmatpush1.xpose.msra.mxu0 0.0
  %5561 = vmatprep.subr.mxu0 0.0
  %5562 = vmatpush1.xpose.msra.mxu0 0.0
  %5563 = vmatprep.subr.mxu0 0.0
  %5564 = vmatpush1.xpose.msra.mxu0 0.0
  %5565 = vmatprep.subr.mxu0 0.0
  %5566 = vmatpush1.xpose.msra.mxu0 0.0
  %5567 = vmatprep.subr.mxu0 0.0
  %5568 = vmatpush1.xpose.msra.mxu0 0.0
  %5569 = vmatprep.subr.mxu0 0.0
  %5570 = vmatpush1.xpose.msra.mxu0 0.0
  %5571 = vmatprep.subr.mxu0 0.0
  %5572 = vmatpush1.xpose.msra.mxu0 0.0
  %5573 = vmatprep.mubr.f32.mxu0 0.0
  %5574 = vmatmul.mubr.f32.gmra.mrb[0].mxu0 %v5505
  %v5575 = vpop.f32.mrb[0].mxu0
  %v5576 = vadd.f32 0.0, %v5575
  %v5577 = vpop.f32.mrb[0].mxu0
  %5578 = vdwg.mxu0
  %5579 = vrot.lane.b32.xlu0 %v4140, 112
  %v5580 = vpop.permute.xlu0 %5579
  %5581 = vrot.lane.b32.xlu0 %v4140, 80
  %v5582 = vpop.permute.xlu0 %5581
  %v5583 = vsel %vm441, %v5580, 0
  %v5585 = vsel %vm441, %v5582, 0
  %5587 = vmatprep.subr.mxu0 0.0
  %5588 = vmatpush1.xpose.msra.mxu0 %v5585
  %5589 = vmatprep.subr.mxu0 0.0
  %5590 = vmatpush1.xpose.msra.mxu0 0.0
  %5591 = vmatprep.subr.mxu0 0.0
  %5592 = vmatpush1.xpose.msra.mxu0 0.0
  %5593 = vmatprep.subr.mxu0 0.0
  %5594 = vmatpush1.xpose.msra.mxu0 0.0
  %5595 = vmatprep.subr.mxu0 0.0
  %5596 = vmatpush1.xpose.msra.mxu0 0.0
  %5597 = vmatprep.subr.mxu0 0.0
  %5598 = vmatpush1.xpose.msra.mxu0 0.0
  %5599 = vmatprep.subr.mxu0 0.0
  %5600 = vmatpush1.xpose.msra.mxu0 0.0
  %5601 = vmatprep.subr.mxu0 0.0
  %5602 = vmatpush1.xpose.msra.mxu0 0.0
  %5603 = vmatprep.subr.mxu0 0.0
  %5604 = vmatpush1.xpose.msra.mxu0 0.0
  %5605 = vmatprep.subr.mxu0 0.0
  %5606 = vmatpush1.xpose.msra.mxu0 0.0
  %5607 = vmatprep.subr.mxu0 0.0
  %5608 = vmatpush1.xpose.msra.mxu0 0.0
  %5609 = vmatprep.subr.mxu0 0.0
  %5610 = vmatpush1.xpose.msra.mxu0 0.0
  %5611 = vmatprep.subr.mxu0 0.0
  %5612 = vmatpush1.xpose.msra.mxu0 0.0
  %5613 = vmatprep.subr.mxu0 0.0
  %5614 = vmatpush1.xpose.msra.mxu0 0.0
  %5615 = vmatprep.subr.mxu0 0.0
  %5616 = vmatpush1.xpose.msra.mxu0 0.0
  %5617 = vmatprep.subr.mxu0 0.0
  %5618 = vmatpush1.xpose.msra.mxu0 0.0
  %5619 = vmatprep.subr.mxu0 0.0
  %5620 = vmatpush1.xpose.msra.mxu0 0.0
  %5621 = vmatprep.subr.mxu0 0.0
  %5622 = vmatpush1.xpose.msra.mxu0 0.0
  %5623 = vmatprep.subr.mxu0 0.0
  %5624 = vmatpush1.xpose.msra.mxu0 0.0
  %5625 = vmatprep.subr.mxu0 0.0
  %5626 = vmatpush1.xpose.msra.mxu0 0.0
  %5627 = vmatprep.subr.mxu0 0.0
  %5628 = vmatpush1.xpose.msra.mxu0 0.0
  %5629 = vmatprep.subr.mxu0 0.0
  %5630 = vmatpush1.xpose.msra.mxu0 0.0
  %5631 = vmatprep.subr.mxu0 0.0
  %5632 = vmatpush1.xpose.msra.mxu0 0.0
  %5633 = vmatprep.subr.mxu0 0.0
  %5634 = vmatpush1.xpose.msra.mxu0 0.0
  %5635 = vmatprep.subr.mxu0 0.0
  %5636 = vmatpush1.xpose.msra.mxu0 0.0
  %5637 = vmatprep.subr.mxu0 0.0
  %5638 = vmatpush1.xpose.msra.mxu0 0.0
  %5639 = vmatprep.subr.mxu0 0.0
  %5640 = vmatpush1.xpose.msra.mxu0 0.0
  %5641 = vmatprep.subr.mxu0 0.0
  %5642 = vmatpush1.xpose.msra.mxu0 0.0
  %5643 = vmatprep.subr.mxu0 0.0
  %5644 = vmatpush1.xpose.msra.mxu0 0.0
  %5645 = vmatprep.subr.mxu0 0.0
  %5646 = vmatpush1.xpose.msra.mxu0 0.0
  %5647 = vmatprep.subr.mxu0 0.0
  %5648 = vmatpush1.xpose.msra.mxu0 0.0
  %5649 = vmatprep.subr.mxu0 0.0
  %5650 = vmatpush1.xpose.msra.mxu0 0.0
  %5651 = vmatprep.mubr.f32.mxu0 0.0
  %5652 = vmatmul.mubr.f32.gmra.mrb[0].mxu0 %v5583
  %v5653 = vpop.f32.mrb[0].mxu0
  %v5654 = vadd.f32 0.0, %v5653
  %v5655 = vpop.f32.mrb[0].mxu0
  %5656 = vdwg.mxu0
  %5657 = vrot.lane.b32.xlu0 %v4145, 112
  %v5658 = vpop.permute.xlu0 %5657
  %5659 = vrot.lane.b32.xlu0 %v4145, 80
  %v5660 = vpop.permute.xlu0 %5659
  %v5661 = vsel %vm441, %v5658, 0
  %v5663 = vsel %vm441, %v5660, 0
  %5665 = vmatprep.subr.mxu0 0.0
  %5666 = vmatpush1.xpose.msra.mxu0 %v5663
  %5667 = vmatprep.subr.mxu0 0.0
  %5668 = vmatpush1.xpose.msra.mxu0 0.0
  %5669 = vmatprep.subr.mxu0 0.0
  %5670 = vmatpush1.xpose.msra.mxu0 0.0
  %5671 = vmatprep.subr.mxu0 0.0
  %5672 = vmatpush1.xpose.msra.mxu0 0.0
  %5673 = vmatprep.subr.mxu0 0.0
  %5674 = vmatpush1.xpose.msra.mxu0 0.0
  %5675 = vmatprep.subr.mxu0 0.0
  %5676 = vmatpush1.xpose.msra.mxu0 0.0
  %5677 = vmatprep.subr.mxu0 0.0
  %5678 = vmatpush1.xpose.msra.mxu0 0.0
  %5679 = vmatprep.subr.mxu0 0.0
  %5680 = vmatpush1.xpose.msra.mxu0 0.0
  %5681 = vmatprep.subr.mxu0 0.0
  %5682 = vmatpush1.xpose.msra.mxu0 0.0
  %5683 = vmatprep.subr.mxu0 0.0
  %5684 = vmatpush1.xpose.msra.mxu0 0.0
  %5685 = vmatprep.subr.mxu0 0.0
  %5686 = vmatpush1.xpose.msra.mxu0 0.0
  %5687 = vmatprep.subr.mxu0 0.0
  %5688 = vmatpush1.xpose.msra.mxu0 0.0
  %5689 = vmatprep.subr.mxu0 0.0
  %5690 = vmatpush1.xpose.msra.mxu0 0.0
  %5691 = vmatprep.subr.mxu0 0.0
  %5692 = vmatpush1.xpose.msra.mxu0 0.0
  %5693 = vmatprep.subr.mxu0 0.0
  %5694 = vmatpush1.xpose.msra.mxu0 0.0
  %5695 = vmatprep.subr.mxu0 0.0
  %5696 = vmatpush1.xpose.msra.mxu0 0.0
  %5697 = vmatprep.subr.mxu0 0.0
  %5698 = vmatpush1.xpose.msra.mxu0 0.0
  %5699 = vmatprep.subr.mxu0 0.0
  %5700 = vmatpush1.xpose.msra.mxu0 0.0
  %5701 = vmatprep.subr.mxu0 0.0
  %5702 = vmatpush1.xpose.msra.mxu0 0.0
  %5703 = vmatprep.subr.mxu0 0.0
  %5704 = vmatpush1.xpose.msra.mxu0 0.0
  %5705 = vmatprep.subr.mxu0 0.0
  %5706 = vmatpush1.xpose.msra.mxu0 0.0
  %5707 = vmatprep.subr.mxu0 0.0
  %5708 = vmatpush1.xpose.msra.mxu0 0.0
  %5709 = vmatprep.subr.mxu0 0.0
  %5710 = vmatpush1.xpose.msra.mxu0 0.0
  %5711 = vmatprep.subr.mxu0 0.0
  %5712 = vmatpush1.xpose.msra.mxu0 0.0
  %5713 = vmatprep.subr.mxu0 0.0
  %5714 = vmatpush1.xpose.msra.mxu0 0.0
  %5715 = vmatprep.subr.mxu0 0.0
  %5716 = vmatpush1.xpose.msra.mxu0 0.0
  %5717 = vmatprep.subr.mxu0 0.0
  %5718 = vmatpush1.xpose.msra.mxu0 0.0
  %5719 = vmatprep.subr.mxu0 0.0
  %5720 = vmatpush1.xpose.msra.mxu0 0.0
  %5721 = vmatprep.subr.mxu0 0.0
  %5722 = vmatpush1.xpose.msra.mxu0 0.0
  %5723 = vmatprep.subr.mxu0 0.0
  %5724 = vmatpush1.xpose.msra.mxu0 0.0
  %5725 = vmatprep.subr.mxu0 0.0
  %5726 = vmatpush1.xpose.msra.mxu0 0.0
  %5727 = vmatprep.subr.mxu0 0.0
  %5728 = vmatpush1.xpose.msra.mxu0 0.0
  %5729 = vmatprep.mubr.f32.mxu0 0.0
  %5730 = vmatmul.mubr.f32.gmra.mrb[0].mxu0 %v5661
  %v5731 = vpop.f32.mrb[0].mxu0
  %v5732 = vadd.f32 0.0, %v5731
  %v5733 = vpop.f32.mrb[0].mxu0
  %5734 = vdwg.mxu0
  %5735 = vrot.lane.b32.xlu0 %v4150, 112
  %v5736 = vpop.permute.xlu0 %5735
  %5737 = vrot.lane.b32.xlu0 %v4150, 80
  %v5738 = vpop.permute.xlu0 %5737
  %v5739 = vsel %vm441, %v5736, 0
  %v5741 = vsel %vm441, %v5738, 0
  %5743 = vmatprep.subr.mxu0 0.0
  %5744 = vmatpush1.xpose.msra.mxu0 %v5741
  %5745 = vmatprep.subr.mxu0 0.0
  %5746 = vmatpush1.xpose.msra.mxu0 0.0
  %5747 = vmatprep.subr.mxu0 0.0
  %5748 = vmatpush1.xpose.msra.mxu0 0.0
  %5749 = vmatprep.subr.mxu0 0.0
  %5750 = vmatpush1.xpose.msra.mxu0 0.0
  %5751 = vmatprep.subr.mxu0 0.0
  %5752 = vmatpush1.xpose.msra.mxu0 0.0
  %5753 = vmatprep.subr.mxu0 0.0
  %5754 = vmatpush1.xpose.msra.mxu0 0.0
  %5755 = vmatprep.subr.mxu0 0.0
  %5756 = vmatpush1.xpose.msra.mxu0 0.0
  %5757 = vmatprep.subr.mxu0 0.0
  %5758 = vmatpush1.xpose.msra.mxu0 0.0
  %5759 = vmatprep.subr.mxu0 0.0
  %5760 = vmatpush1.xpose.msra.mxu0 0.0
  %5761 = vmatprep.subr.mxu0 0.0
  %5762 = vmatpush1.xpose.msra.mxu0 0.0
  %5763 = vmatprep.subr.mxu0 0.0
  %5764 = vmatpush1.xpose.msra.mxu0 0.0
  %5765 = vmatprep.subr.mxu0 0.0
  %5766 = vmatpush1.xpose.msra.mxu0 0.0
  %5767 = vmatprep.subr.mxu0 0.0
  %5768 = vmatpush1.xpose.msra.mxu0 0.0
  %5769 = vmatprep.subr.mxu0 0.0
  %5770 = vmatpush1.xpose.msra.mxu0 0.0
  %5771 = vmatprep.subr.mxu0 0.0
  %5772 = vmatpush1.xpose.msra.mxu0 0.0
  %5773 = vmatprep.subr.mxu0 0.0
  %5774 = vmatpush1.xpose.msra.mxu0 0.0
  %5775 = vmatprep.subr.mxu0 0.0
  %5776 = vmatpush1.xpose.msra.mxu0 0.0
  %5777 = vmatprep.subr.mxu0 0.0
  %5778 = vmatpush1.xpose.msra.mxu0 0.0
  %5779 = vmatprep.subr.mxu0 0.0
  %5780 = vmatpush1.xpose.msra.mxu0 0.0
  %5781 = vmatprep.subr.mxu0 0.0
  %5782 = vmatpush1.xpose.msra.mxu0 0.0
  %5783 = vmatprep.subr.mxu0 0.0
  %5784 = vmatpush1.xpose.msra.mxu0 0.0
  %5785 = vmatprep.subr.mxu0 0.0
  %5786 = vmatpush1.xpose.msra.mxu0 0.0
  %5787 = vmatprep.subr.mxu0 0.0
  %5788 = vmatpush1.xpose.msra.mxu0 0.0
  %5789 = vmatprep.subr.mxu0 0.0
  %5790 = vmatpush1.xpose.msra.mxu0 0.0
  %5791 = vmatprep.subr.mxu0 0.0
  %5792 = vmatpush1.xpose.msra.mxu0 0.0
  %5793 = vmatprep.subr.mxu0 0.0
  %5794 = vmatpush1.xpose.msra.mxu0 0.0
  %5795 = vmatprep.subr.mxu0 0.0
  %5796 = vmatpush1.xpose.msra.mxu0 0.0
  %5797 = vmatprep.subr.mxu0 0.0
  %5798 = vmatpush1.xpose.msra.mxu0 0.0
  %5799 = vmatprep.subr.mxu0 0.0
  %5800 = vmatpush1.xpose.msra.mxu0 0.0
  %5801 = vmatprep.subr.mxu0 0.0
  %5802 = vmatpush1.xpose.msra.mxu0 0.0
  %5803 = vmatprep.subr.mxu0 0.0
  %5804 = vmatpush1.xpose.msra.mxu0 0.0
  %5805 = vmatprep.subr.mxu0 0.0
  %5806 = vmatpush1.xpose.msra.mxu0 0.0
  %5807 = vmatprep.mubr.f32.mxu0 0.0
  %5808 = vmatmul.mubr.f32.gmra.mrb[0].mxu0 %v5739
  %v5809 = vpop.f32.mrb[0].mxu0
  %v5810 = vadd.f32 0.0, %v5809
  %v5811 = vpop.f32.mrb[0].mxu0
  %5812 = vdwg.mxu0
  %5813 = vrot.lane.b32.xlu0 %v4155, 112
  %v5814 = vpop.permute.xlu0 %5813
  %5815 = vrot.lane.b32.xlu0 %v4155, 80
  %v5816 = vpop.permute.xlu0 %5815
  %v5817 = vsel %vm441, %v5814, 0
  %v5819 = vsel %vm441, %v5816, 0
  %5821 = vmatprep.subr.mxu0 0.0
  %5822 = vmatpush1.xpose.msra.mxu0 %v5819
  %5823 = vmatprep.subr.mxu0 0.0
  %5824 = vmatpush1.xpose.msra.mxu0 0.0
  %5825 = vmatprep.subr.mxu0 0.0
  %5826 = vmatpush1.xpose.msra.mxu0 0.0
  %5827 = vmatprep.subr.mxu0 0.0
  %5828 = vmatpush1.xpose.msra.mxu0 0.0
  %5829 = vmatprep.subr.mxu0 0.0
  %5830 = vmatpush1.xpose.msra.mxu0 0.0
  %5831 = vmatprep.subr.mxu0 0.0
  %5832 = vmatpush1.xpose.msra.mxu0 0.0
  %5833 = vmatprep.subr.mxu0 0.0
  %5834 = vmatpush1.xpose.msra.mxu0 0.0
  %5835 = vmatprep.subr.mxu0 0.0
  %5836 = vmatpush1.xpose.msra.mxu0 0.0
  %5837 = vmatprep.subr.mxu0 0.0
  %5838 = vmatpush1.xpose.msra.mxu0 0.0
  %5839 = vmatprep.subr.mxu0 0.0
  %5840 = vmatpush1.xpose.msra.mxu0 0.0
  %5841 = vmatprep.subr.mxu0 0.0
  %5842 = vmatpush1.xpose.msra.mxu0 0.0
  %5843 = vmatprep.subr.mxu0 0.0
  %5844 = vmatpush1.xpose.msra.mxu0 0.0
  %5845 = vmatprep.subr.mxu0 0.0
  %5846 = vmatpush1.xpose.msra.mxu0 0.0
  %5847 = vmatprep.subr.mxu0 0.0
  %5848 = vmatpush1.xpose.msra.mxu0 0.0
  %5849 = vmatprep.subr.mxu0 0.0
  %5850 = vmatpush1.xpose.msra.mxu0 0.0
  %5851 = vmatprep.subr.mxu0 0.0
  %5852 = vmatpush1.xpose.msra.mxu0 0.0
  %5853 = vmatprep.subr.mxu0 0.0
  %5854 = vmatpush1.xpose.msra.mxu0 0.0
  %5855 = vmatprep.subr.mxu0 0.0
  %5856 = vmatpush1.xpose.msra.mxu0 0.0
  %5857 = vmatprep.subr.mxu0 0.0
  %5858 = vmatpush1.xpose.msra.mxu0 0.0
  %5859 = vmatprep.subr.mxu0 0.0
  %5860 = vmatpush1.xpose.msra.mxu0 0.0
  %5861 = vmatprep.subr.mxu0 0.0
  %5862 = vmatpush1.xpose.msra.mxu0 0.0
  %5863 = vmatprep.subr.mxu0 0.0
  %5864 = vmatpush1.xpose.msra.mxu0 0.0
  %5865 = vmatprep.subr.mxu0 0.0
  %5866 = vmatpush1.xpose.msra.mxu0 0.0
  %5867 = vmatprep.subr.mxu0 0.0
  %5868 = vmatpush1.xpose.msra.mxu0 0.0
  %5869 = vmatprep.subr.mxu0 0.0
  %5870 = vmatpush1.xpose.msra.mxu0 0.0
  %5871 = vmatprep.subr.mxu0 0.0
  %5872 = vmatpush1.xpose.msra.mxu0 0.0
  %5873 = vmatprep.subr.mxu0 0.0
  %5874 = vmatpush1.xpose.msra.mxu0 0.0
  %5875 = vmatprep.subr.mxu0 0.0
  %5876 = vmatpush1.xpose.msra.mxu0 0.0
  %5877 = vmatprep.subr.mxu0 0.0
  %5878 = vmatpush1.xpose.msra.mxu0 0.0
  %5879 = vmatprep.subr.mxu0 0.0
  %5880 = vmatpush1.xpose.msra.mxu0 0.0
  %5881 = vmatprep.subr.mxu0 0.0
  %5882 = vmatpush1.xpose.msra.mxu0 0.0
  %5883 = vmatprep.subr.mxu0 0.0
  %5884 = vmatpush1.xpose.msra.mxu0 0.0
  %5885 = vmatprep.mubr.f32.mxu0 0.0
  %5886 = vmatmul.mubr.f32.gmra.mrb[0].mxu0 %v5817
  %v5887 = vpop.f32.mrb[0].mxu0
  %v5888 = vadd.f32 0.0, %v5887
  %v5889 = vpop.f32.mrb[0].mxu0
  %5890 = vdwg.mxu0
  %5891 = vrot.lane.b32.xlu0 %v4160, 112
  %v5892 = vpop.permute.xlu0 %5891
  %5893 = vrot.lane.b32.xlu0 %v4160, 80
  %v5894 = vpop.permute.xlu0 %5893
  %v5895 = vsel %vm441, %v5892, 0
  %v5897 = vsel %vm441, %v5894, 0
  %5899 = vmatprep.subr.mxu0 0.0
  %5900 = vmatpush1.xpose.msra.mxu0 %v5897
  %5901 = vmatprep.subr.mxu0 0.0
  %5902 = vmatpush1.xpose.msra.mxu0 0.0
  %5903 = vmatprep.subr.mxu0 0.0
  %5904 = vmatpush1.xpose.msra.mxu0 0.0
  %5905 = vmatprep.subr.mxu0 0.0
  %5906 = vmatpush1.xpose.msra.mxu0 0.0
  %5907 = vmatprep.subr.mxu0 0.0
  %5908 = vmatpush1.xpose.msra.mxu0 0.0
  %5909 = vmatprep.subr.mxu0 0.0
  %5910 = vmatpush1.xpose.msra.mxu0 0.0
  %5911 = vmatprep.subr.mxu0 0.0
  %5912 = vmatpush1.xpose.msra.mxu0 0.0
  %5913 = vmatprep.subr.mxu0 0.0
  %5914 = vmatpush1.xpose.msra.mxu0 0.0
  %5915 = vmatprep.subr.mxu0 0.0
  %5916 = vmatpush1.xpose.msra.mxu0 0.0
  %5917 = vmatprep.subr.mxu0 0.0
  %5918 = vmatpush1.xpose.msra.mxu0 0.0
  %5919 = vmatprep.subr.mxu0 0.0
  %5920 = vmatpush1.xpose.msra.mxu0 0.0
  %5921 = vmatprep.subr.mxu0 0.0
  %5922 = vmatpush1.xpose.msra.mxu0 0.0
  %5923 = vmatprep.subr.mxu0 0.0
  %5924 = vmatpush1.xpose.msra.mxu0 0.0
  %5925 = vmatprep.subr.mxu0 0.0
  %5926 = vmatpush1.xpose.msra.mxu0 0.0
  %5927 = vmatprep.subr.mxu0 0.0
  %5928 = vmatpush1.xpose.msra.mxu0 0.0
  %5929 = vmatprep.subr.mxu0 0.0
  %5930 = vmatpush1.xpose.msra.mxu0 0.0
  %5931 = vmatprep.subr.mxu0 0.0
  %5932 = vmatpush1.xpose.msra.mxu0 0.0
  %5933 = vmatprep.subr.mxu0 0.0
  %5934 = vmatpush1.xpose.msra.mxu0 0.0
  %5935 = vmatprep.subr.mxu0 0.0
  %5936 = vmatpush1.xpose.msra.mxu0 0.0
  %5937 = vmatprep.subr.mxu0 0.0
  %5938 = vmatpush1.xpose.msra.mxu0 0.0
  %5939 = vmatprep.subr.mxu0 0.0
  %5940 = vmatpush1.xpose.msra.mxu0 0.0
  %5941 = vmatprep.subr.mxu0 0.0
  %5942 = vmatpush1.xpose.msra.mxu0 0.0
  %5943 = vmatprep.subr.mxu0 0.0
  %5944 = vmatpush1.xpose.msra.mxu0 0.0
  %5945 = vmatprep.subr.mxu0 0.0
  %5946 = vmatpush1.xpose.msra.mxu0 0.0
  %5947 = vmatprep.subr.mxu0 0.0
  %5948 = vmatpush1.xpose.msra.mxu0 0.0
  %5949 = vmatprep.subr.mxu0 0.0
  %5950 = vmatpush1.xpose.msra.mxu0 0.0
  %5951 = vmatprep.subr.mxu0 0.0
  %5952 = vmatpush1.xpose.msra.mxu0 0.0
  %5953 = vmatprep.subr.mxu0 0.0
  %5954 = vmatpush1.xpose.msra.mxu0 0.0
  %5955 = vmatprep.subr.mxu0 0.0
  %5956 = vmatpush1.xpose.msra.mxu0 0.0
  %5957 = vmatprep.subr.mxu0 0.0
  %5958 = vmatpush1.xpose.msra.mxu0 0.0
  %5959 = vmatprep.subr.mxu0 0.0
  %5960 = vmatpush1.xpose.msra.mxu0 0.0
  %5961 = vmatprep.subr.mxu0 0.0
  %5962 = vmatpush1.xpose.msra.mxu0 0.0
  %5963 = vmatprep.mubr.f32.mxu0 0.0
  %5964 = vmatmul.mubr.f32.gmra.mrb[0].mxu0 %v5895
  %v5965 = vpop.f32.mrb[0].mxu0
  %v5966 = vadd.f32 0.0, %v5965
  %v5967 = vpop.f32.mrb[0].mxu0
  %5968 = vdwg.mxu0
  %5969 = vrot.lane.b32.xlu0 %v4165, 112
  %v5970 = vpop.permute.xlu0 %5969
  %5971 = vrot.lane.b32.xlu0 %v4165, 80
  %v5972 = vpop.permute.xlu0 %5971
  %v5973 = vsel %vm441, %v5970, 0
  %v5975 = vsel %vm441, %v5972, 0
  %5977 = vmatprep.subr.mxu0 0.0
  %5978 = vmatpush1.xpose.msra.mxu0 %v5975
  %5979 = vmatprep.subr.mxu0 0.0
  %5980 = vmatpush1.xpose.msra.mxu0 0.0
  %5981 = vmatprep.subr.mxu0 0.0
  %5982 = vmatpush1.xpose.msra.mxu0 0.0
  %5983 = vmatprep.subr.mxu0 0.0
  %5984 = vmatpush1.xpose.msra.mxu0 0.0
  %5985 = vmatprep.subr.mxu0 0.0
  %5986 = vmatpush1.xpose.msra.mxu0 0.0
  %5987 = vmatprep.subr.mxu0 0.0
  %5988 = vmatpush1.xpose.msra.mxu0 0.0
  %5989 = vmatprep.subr.mxu0 0.0
  %5990 = vmatpush1.xpose.msra.mxu0 0.0
  %5991 = vmatprep.subr.mxu0 0.0
  %5992 = vmatpush1.xpose.msra.mxu0 0.0
  %5993 = vmatprep.subr.mxu0 0.0
  %5994 = vmatpush1.xpose.msra.mxu0 0.0
  %5995 = vmatprep.subr.mxu0 0.0
  %5996 = vmatpush1.xpose.msra.mxu0 0.0
  %5997 = vmatprep.subr.mxu0 0.0
  %5998 = vmatpush1.xpose.msra.mxu0 0.0
  %5999 = vmatprep.subr.mxu0 0.0
  %6000 = vmatpush1.xpose.msra.mxu0 0.0
  %6001 = vmatprep.subr.mxu0 0.0
  %6002 = vmatpush1.xpose.msra.mxu0 0.0
  %6003 = vmatprep.subr.mxu0 0.0
  %6004 = vmatpush1.xpose.msra.mxu0 0.0
  %6005 = vmatprep.subr.mxu0 0.0
  %6006 = vmatpush1.xpose.msra.mxu0 0.0
  %6007 = vmatprep.subr.mxu0 0.0
  %6008 = vmatpush1.xpose.msra.mxu0 0.0
  %6009 = vmatprep.subr.mxu0 0.0
  %6010 = vmatpush1.xpose.msra.mxu0 0.0
  %6011 = vmatprep.subr.mxu0 0.0
  %6012 = vmatpush1.xpose.msra.mxu0 0.0
  %6013 = vmatprep.subr.mxu0 0.0
  %6014 = vmatpush1.xpose.msra.mxu0 0.0
  %6015 = vmatprep.subr.mxu0 0.0
  %6016 = vmatpush1.xpose.msra.mxu0 0.0
  %6017 = vmatprep.subr.mxu0 0.0
  %6018 = vmatpush1.xpose.msra.mxu0 0.0
  %6019 = vmatprep.subr.mxu0 0.0
  %6020 = vmatpush1.xpose.msra.mxu0 0.0
  %6021 = vmatprep.subr.mxu0 0.0
  %6022 = vmatpush1.xpose.msra.mxu0 0.0
  %6023 = vmatprep.subr.mxu0 0.0
  %6024 = vmatpush1.xpose.msra.mxu0 0.0
  %6025 = vmatprep.subr.mxu0 0.0
  %6026 = vmatpush1.xpose.msra.mxu0 0.0
  %6027 = vmatprep.subr.mxu0 0.0
  %6028 = vmatpush1.xpose.msra.mxu0 0.0
  %6029 = vmatprep.subr.mxu0 0.0
  %6030 = vmatpush1.xpose.msra.mxu0 0.0
  %6031 = vmatprep.subr.mxu0 0.0
  %6032 = vmatpush1.xpose.msra.mxu0 0.0
  %6033 = vmatprep.subr.mxu0 0.0
  %6034 = vmatpush1.xpose.msra.mxu0 0.0
  %6035 = vmatprep.subr.mxu0 0.0
  %6036 = vmatpush1.xpose.msra.mxu0 0.0
  %6037 = vmatprep.subr.mxu0 0.0
  %6038 = vmatpush1.xpose.msra.mxu0 0.0
  %6039 = vmatprep.subr.mxu0 0.0
  %6040 = vmatpush1.xpose.msra.mxu0 0.0
  %6041 = vmatprep.mubr.f32.mxu0 0.0
  %6042 = vmatmul.mubr.f32.gmra.mrb[0].mxu0 %v5973
  %v6043 = vpop.f32.mrb[0].mxu0
  %v6044 = vadd.f32 0.0, %v6043
  %v6045 = vpop.f32.mrb[0].mxu0
  %6046 = vdwg.mxu0
  %6047 = vrot.lane.b32.xlu0 %v4170, 112
  %v6048 = vpop.permute.xlu0 %6047
  %6049 = vrot.lane.b32.xlu0 %v4170, 80
  %v6050 = vpop.permute.xlu0 %6049
  %v6051 = vsel %vm441, %v6048, 0
  %v6053 = vsel %vm441, %v6050, 0
  %6055 = vmatprep.subr.mxu0 0.0
  %6056 = vmatpush1.xpose.msra.mxu0 %v6053
  %6057 = vmatprep.subr.mxu0 0.0
  %6058 = vmatpush1.xpose.msra.mxu0 0.0
  %6059 = vmatprep.subr.mxu0 0.0
  %6060 = vmatpush1.xpose.msra.mxu0 0.0
  %6061 = vmatprep.subr.mxu0 0.0
  %6062 = vmatpush1.xpose.msra.mxu0 0.0
  %6063 = vmatprep.subr.mxu0 0.0
  %6064 = vmatpush1.xpose.msra.mxu0 0.0
  %6065 = vmatprep.subr.mxu0 0.0
  %6066 = vmatpush1.xpose.msra.mxu0 0.0
  %6067 = vmatprep.subr.mxu0 0.0
  %6068 = vmatpush1.xpose.msra.mxu0 0.0
  %6069 = vmatprep.subr.mxu0 0.0
  %6070 = vmatpush1.xpose.msra.mxu0 0.0
  %6071 = vmatprep.subr.mxu0 0.0
  %6072 = vmatpush1.xpose.msra.mxu0 0.0
  %6073 = vmatprep.subr.mxu0 0.0
  %6074 = vmatpush1.xpose.msra.mxu0 0.0
  %6075 = vmatprep.subr.mxu0 0.0
  %6076 = vmatpush1.xpose.msra.mxu0 0.0
  %6077 = vmatprep.subr.mxu0 0.0
  %6078 = vmatpush1.xpose.msra.mxu0 0.0
  %6079 = vmatprep.subr.mxu0 0.0
  %6080 = vmatpush1.xpose.msra.mxu0 0.0
  %6081 = vmatprep.subr.mxu0 0.0
  %6082 = vmatpush1.xpose.msra.mxu0 0.0
  %6083 = vmatprep.subr.mxu0 0.0
  %6084 = vmatpush1.xpose.msra.mxu0 0.0
  %6085 = vmatprep.subr.mxu0 0.0
  %6086 = vmatpush1.xpose.msra.mxu0 0.0
  %6087 = vmatprep.subr.mxu0 0.0
  %6088 = vmatpush1.xpose.msra.mxu0 0.0
  %6089 = vmatprep.subr.mxu0 0.0
  %6090 = vmatpush1.xpose.msra.mxu0 0.0
  %6091 = vmatprep.subr.mxu0 0.0
  %6092 = vmatpush1.xpose.msra.mxu0 0.0
  %6093 = vmatprep.subr.mxu0 0.0
  %6094 = vmatpush1.xpose.msra.mxu0 0.0
  %6095 = vmatprep.subr.mxu0 0.0
  %6096 = vmatpush1.xpose.msra.mxu0 0.0
  %6097 = vmatprep.subr.mxu0 0.0
  %6098 = vmatpush1.xpose.msra.mxu0 0.0
  %6099 = vmatprep.subr.mxu0 0.0
  %6100 = vmatpush1.xpose.msra.mxu0 0.0
  %6101 = vmatprep.subr.mxu0 0.0
  %6102 = vmatpush1.xpose.msra.mxu0 0.0
  %6103 = vmatprep.subr.mxu0 0.0
  %6104 = vmatpush1.xpose.msra.mxu0 0.0
  %6105 = vmatprep.subr.mxu0 0.0
  %6106 = vmatpush1.xpose.msra.mxu0 0.0
  %6107 = vmatprep.subr.mxu0 0.0
  %6108 = vmatpush1.xpose.msra.mxu0 0.0
  %6109 = vmatprep.subr.mxu0 0.0
  %6110 = vmatpush1.xpose.msra.mxu0 0.0
  %6111 = vmatprep.subr.mxu0 0.0
  %6112 = vmatpush1.xpose.msra.mxu0 0.0
  %6113 = vmatprep.subr.mxu0 0.0
  %6114 = vmatpush1.xpose.msra.mxu0 0.0
  %6115 = vmatprep.subr.mxu0 0.0
  %6116 = vmatpush1.xpose.msra.mxu0 0.0
  %6117 = vmatprep.subr.mxu0 0.0
  %6118 = vmatpush1.xpose.msra.mxu0 0.0
  %6119 = vmatprep.mubr.f32.mxu0 0.0
  %6120 = vmatmul.mubr.f32.gmra.mrb[0].mxu0 %v6051
  %v6121 = vpop.f32.mrb[0].mxu0
  %v6122 = vadd.f32 0.0, %v6121
  %v6123 = vpop.f32.mrb[0].mxu0
  %6124 = vdwg.mxu0
  %v6125 = vmul.f32 %v5576, 0.25
  %v6126 = vmul.f32 %v5654, 0.25
  %v6127 = vmul.f32 %v5732, 0.25
  %v6128 = vmul.f32 %v5810, 0.25
  %v6129 = vmul.f32 %v5888, 0.25
  %v6130 = vmul.f32 %v5966, 0.25
  %v6131 = vmul.f32 %v6044, 0.25
  %v6132 = vmul.f32 %v6122, 0.25
  %v6133 = vadd.f32 %v6125, %v1074
  %v6134 = vadd.f32 %v6126, %v1078
  %v6135 = vadd.f32 %v6127, %v1082
  %v6136 = vadd.f32 %v6128, %v1086
  %v6137 = vadd.f32 %v6129, %v1090
  %v6138 = vadd.f32 %v6130, %v1094
  %v6139 = vadd.f32 %v6131, %v1098
  %v6140 = vadd.f32 %v6132, %v1102
  %v6141 = vsel %vm1119, %v6133, -inf
  %6142 = vmax.xlane.f32.xlu0 %v6141
  %v6143 = vpop.xlane.xlu0 %6142
  %v6144 = vsel %vm1119, %v6134, -inf
  %6145 = vmax.xlane.f32.xlu0 %v6144
  %v6146 = vpop.xlane.xlu0 %6145
  %v6147 = vsel %vm1119, %v6135, -inf
  %6148 = vmax.xlane.f32.xlu0 %v6147
  %v6149 = vpop.xlane.xlu0 %6148
  %v6150 = vsel %vm1119, %v6136, -inf
  %6151 = vmax.xlane.f32.xlu0 %v6150
  %v6152 = vpop.xlane.xlu0 %6151
  %v6153 = vsel %vm1119, %v6137, -inf
  %6154 = vmax.xlane.f32.xlu0 %v6153
  %v6155 = vpop.xlane.xlu0 %6154
  %v6156 = vsel %vm1119, %v6138, -inf
  %6157 = vmax.xlane.f32.xlu0 %v6156
  %v6158 = vpop.xlane.xlu0 %6157
  %v6159 = vsel %vm1119, %v6139, -inf
  %6160 = vmax.xlane.f32.xlu0 %v6159
  %v6161 = vpop.xlane.xlu0 %6160
  %v6162 = vsel %vm1119, %v6140, -inf
  %6163 = vmax.xlane.f32.xlu0 %v6162
  %v6164 = vpop.xlane.xlu0 %6163
  %v6165 = vsub.f32 %v6133, %v6143
  %v6166 = vsub.f32 %v6134, %v6146
  %v6167 = vsub.f32 %v6135, %v6149
  %v6168 = vsub.f32 %v6136, %v6152
  %v6169 = vsub.f32 %v6137, %v6155
  %v6170 = vsub.f32 %v6138, %v6158
  %v6171 = vsub.f32 %v6139, %v6161
  %v6172 = vsub.f32 %v6140, %v6164
  %v6173 = vmul.f32 %v6165, 1.442695
  %v6174 = vpow.pop %v6173
  %v6175 = vmul.f32 %v6166, 1.442695
  %v6176 = vpow.pop %v6175
  %v6177 = vmul.f32 %v6167, 1.442695
  %v6178 = vpow.pop %v6177
  %v6179 = vmul.f32 %v6168, 1.442695
  %v6180 = vpow.pop %v6179
  %v6181 = vmul.f32 %v6169, 1.442695
  %v6182 = vpow.pop %v6181
  %v6183 = vmul.f32 %v6170, 1.442695
  %v6184 = vpow.pop %v6183
  %v6185 = vmul.f32 %v6171, 1.442695
  %v6186 = vpow.pop %v6185
  %v6187 = vmul.f32 %v6172, 1.442695
  %v6188 = vpow.pop %v6187
  %v6189 = vsel %vm1119, %v6174, 0.0
  %6190 = vadd.xlane.f32.xlu0 %v6189
  %v6191 = vpop.xlane.xlu0 %6190
  %v6192 = vsel %vm1119, %v6176, 0.0
  %6193 = vadd.xlane.f32.xlu0 %v6192
  %v6194 = vpop.xlane.xlu0 %6193
  %v6195 = vsel %vm1119, %v6178, 0.0
  %6196 = vadd.xlane.f32.xlu0 %v6195
  %v6197 = vpop.xlane.xlu0 %6196
  %v6198 = vsel %vm1119, %v6180, 0.0
  %6199 = vadd.xlane.f32.xlu0 %v6198
  %v6200 = vpop.xlane.xlu0 %6199
  %v6201 = vsel %vm1119, %v6182, 0.0
  %6202 = vadd.xlane.f32.xlu0 %v6201
  %v6203 = vpop.xlane.xlu0 %6202
  %v6204 = vsel %vm1119, %v6184, 0.0
  %6205 = vadd.xlane.f32.xlu0 %v6204
  %v6206 = vpop.xlane.xlu0 %6205
  %v6207 = vsel %vm1119, %v6186, 0.0
  %6208 = vadd.xlane.f32.xlu0 %v6207
  %v6209 = vpop.xlane.xlu0 %6208
  %v6210 = vsel %vm1119, %v6188, 0.0
  %6211 = vadd.xlane.f32.xlu0 %v6210
  %v6212 = vpop.xlane.xlu0 %6211
  %v6213 = vrcp.pop %v6191
  %v6214 = vrcp.pop %v6194
  %v6215 = vrcp.pop %v6197
  %v6216 = vrcp.pop %v6200
  %v6217 = vrcp.pop %v6203
  %v6218 = vrcp.pop %v6206
  %v6219 = vrcp.pop %v6209
  %v6220 = vrcp.pop %v6212
  %v6221 = vmul.f32 %v6174, %v6213
  %v6222 = vmul.f32 %v6176, %v6214
  %v6223 = vmul.f32 %v6178, %v6215
  %v6224 = vmul.f32 %v6180, %v6216
  %v6225 = vmul.f32 %v6182, %v6217
  %v6226 = vmul.f32 %v6184, %v6218
  %v6227 = vmul.f32 %v6186, %v6219
  %v6228 = vmul.f32 %v6188, %v6220
  %6229 = vrot.lane.b32.xlu0 %v4135, 48
  %v6230 = vpop.permute.xlu0 %6229
  %v6233 = vsel %vm1119, %v6221, 0
  %6235 = vmatprep.subr.mxu0 0.0
  %6236 = vmatpush1.msra.mxu0 %v6230
  %6237 = vmatprep.subr.mxu0 0.0
  %6238 = vmatpush1.msra.mxu0 0.0
  %6239 = vmatprep.subr.mxu0 0.0
  %6240 = vmatpush1.msra.mxu0 0.0
  %6241 = vmatprep.subr.mxu0 0.0
  %6242 = vmatpush1.msra.mxu0 0.0
  %6243 = vmatprep.subr.mxu0 0.0
  %6244 = vmatpush1.msra.mxu0 0.0
  %6245 = vmatprep.subr.mxu0 0.0
  %6246 = vmatpush1.msra.mxu0 0.0
  %6247 = vmatprep.subr.mxu0 0.0
  %6248 = vmatpush1.msra.mxu0 0.0
  %6249 = vmatprep.subr.mxu0 0.0
  %6250 = vmatpush1.msra.mxu0 0.0
  %6251 = vmatprep.subr.mxu0 0.0
  %6252 = vmatpush1.msra.mxu0 0.0
  %6253 = vmatprep.subr.mxu0 0.0
  %6254 = vmatpush1.msra.mxu0 0.0
  %6255 = vmatprep.subr.mxu0 0.0
  %6256 = vmatpush1.msra.mxu0 0.0
  %6257 = vmatprep.subr.mxu0 0.0
  %6258 = vmatpush1.msra.mxu0 0.0
  %6259 = vmatprep.subr.mxu0 0.0
  %6260 = vmatpush1.msra.mxu0 0.0
  %6261 = vmatprep.subr.mxu0 0.0
  %6262 = vmatpush1.msra.mxu0 0.0
  %6263 = vmatprep.subr.mxu0 0.0
  %6264 = vmatpush1.msra.mxu0 0.0
  %6265 = vmatprep.subr.mxu0 0.0
  %6266 = vmatpush1.msra.mxu0 0.0
  %6267 = vmatprep.subr.mxu0 0.0
  %6268 = vmatpush1.msra.mxu0 0.0
  %6269 = vmatprep.subr.mxu0 0.0
  %6270 = vmatpush1.msra.mxu0 0.0
  %6271 = vmatprep.subr.mxu0 0.0
  %6272 = vmatpush1.msra.mxu0 0.0
  %6273 = vmatprep.subr.mxu0 0.0
  %6274 = vmatpush1.msra.mxu0 0.0
  %6275 = vmatprep.subr.mxu0 0.0
  %6276 = vmatpush1.msra.mxu0 0.0
  %6277 = vmatprep.subr.mxu0 0.0
  %6278 = vmatpush1.msra.mxu0 0.0
  %6279 = vmatprep.subr.mxu0 0.0
  %6280 = vmatpush1.msra.mxu0 0.0
  %6281 = vmatprep.subr.mxu0 0.0
  %6282 = vmatpush1.msra.mxu0 0.0
  %6283 = vmatprep.subr.mxu0 0.0
  %6284 = vmatpush1.msra.mxu0 0.0
  %6285 = vmatprep.subr.mxu0 0.0
  %6286 = vmatpush1.msra.mxu0 0.0
  %6287 = vmatprep.subr.mxu0 0.0
  %6288 = vmatpush1.msra.mxu0 0.0
  %6289 = vmatprep.subr.mxu0 0.0
  %6290 = vmatpush1.msra.mxu0 0.0
  %6291 = vmatprep.subr.mxu0 0.0
  %6292 = vmatpush1.msra.mxu0 0.0
  %6293 = vmatprep.subr.mxu0 0.0
  %6294 = vmatpush1.msra.mxu0 0.0
  %6295 = vmatprep.subr.mxu0 0.0
  %6296 = vmatpush1.msra.mxu0 0.0
  %6297 = vmatprep.subr.mxu0 0.0
  %6298 = vmatpush1.msra.mxu0 0.0
  %6299 = vmatprep.mubr.f32.mxu0 0.0
  %6300 = vmatmul.mubr.f32.gmra.mrb[0].mxu0 %v6233
  %v6301 = vpop.f32.mrb[0].mxu0
  %v6302 = vadd.f32 0.0, %v6301
  %v6303 = vpop.f32.mrb[0].mxu0
  %6304 = vdwg.mxu0
  %6305 = vrot.lane.b32.xlu0 %v4140, 48
  %v6306 = vpop.permute.xlu0 %6305
  %v6309 = vsel %vm1119, %v6222, 0
  %6311 = vmatprep.subr.mxu0 0.0
  %6312 = vmatpush1.msra.mxu0 %v6306
  %6313 = vmatprep.subr.mxu0 0.0
  %6314 = vmatpush1.msra.mxu0 0.0
  %6315 = vmatprep.subr.mxu0 0.0
  %6316 = vmatpush1.msra.mxu0 0.0
  %6317 = vmatprep.subr.mxu0 0.0
  %6318 = vmatpush1.msra.mxu0 0.0
  %6319 = vmatprep.subr.mxu0 0.0
  %6320 = vmatpush1.msra.mxu0 0.0
  %6321 = vmatprep.subr.mxu0 0.0
  %6322 = vmatpush1.msra.mxu0 0.0
  %6323 = vmatprep.subr.mxu0 0.0
  %6324 = vmatpush1.msra.mxu0 0.0
  %6325 = vmatprep.subr.mxu0 0.0
  %6326 = vmatpush1.msra.mxu0 0.0
  %6327 = vmatprep.subr.mxu0 0.0
  %6328 = vmatpush1.msra.mxu0 0.0
  %6329 = vmatprep.subr.mxu0 0.0
  %6330 = vmatpush1.msra.mxu0 0.0
  %6331 = vmatprep.subr.mxu0 0.0
  %6332 = vmatpush1.msra.mxu0 0.0
  %6333 = vmatprep.subr.mxu0 0.0
  %6334 = vmatpush1.msra.mxu0 0.0
  %6335 = vmatprep.subr.mxu0 0.0
  %6336 = vmatpush1.msra.mxu0 0.0
  %6337 = vmatprep.subr.mxu0 0.0
  %6338 = vmatpush1.msra.mxu0 0.0
  %6339 = vmatprep.subr.mxu0 0.0
  %6340 = vmatpush1.msra.mxu0 0.0
  %6341 = vmatprep.subr.mxu0 0.0
  %6342 = vmatpush1.msra.mxu0 0.0
  %6343 = vmatprep.subr.mxu0 0.0
  %6344 = vmatpush1.msra.mxu0 0.0
  %6345 = vmatprep.subr.mxu0 0.0
  %6346 = vmatpush1.msra.mxu0 0.0
  %6347 = vmatprep.subr.mxu0 0.0
  %6348 = vmatpush1.msra.mxu0 0.0
  %6349 = vmatprep.subr.mxu0 0.0
  %6350 = vmatpush1.msra.mxu0 0.0
  %6351 = vmatprep.subr.mxu0 0.0
  %6352 = vmatpush1.msra.mxu0 0.0
  %6353 = vmatprep.subr.mxu0 0.0
  %6354 = vmatpush1.msra.mxu0 0.0
  %6355 = vmatprep.subr.mxu0 0.0
  %6356 = vmatpush1.msra.mxu0 0.0
  %6357 = vmatprep.subr.mxu0 0.0
  %6358 = vmatpush1.msra.mxu0 0.0
  %6359 = vmatprep.subr.mxu0 0.0
  %6360 = vmatpush1.msra.mxu0 0.0
  %6361 = vmatprep.subr.mxu0 0.0
  %6362 = vmatpush1.msra.mxu0 0.0
  %6363 = vmatprep.subr.mxu0 0.0
  %6364 = vmatpush1.msra.mxu0 0.0
  %6365 = vmatprep.subr.mxu0 0.0
  %6366 = vmatpush1.msra.mxu0 0.0
  %6367 = vmatprep.subr.mxu0 0.0
  %6368 = vmatpush1.msra.mxu0 0.0
  %6369 = vmatprep.subr.mxu0 0.0
  %6370 = vmatpush1.msra.mxu0 0.0
  %6371 = vmatprep.subr.mxu0 0.0
  %6372 = vmatpush1.msra.mxu0 0.0
  %6373 = vmatprep.subr.mxu0 0.0
  %6374 = vmatpush1.msra.mxu0 0.0
  %6375 = vmatprep.mubr.f32.mxu0 0.0
  %6376 = vmatmul.mubr.f32.gmra.mrb[0].mxu0 %v6309
  %v6377 = vpop.f32.mrb[0].mxu0
  %v6378 = vadd.f32 0.0, %v6377
  %v6379 = vpop.f32.mrb[0].mxu0
  %6380 = vdwg.mxu0
  %6381 = vrot.lane.b32.xlu0 %v4145, 48
  %v6382 = vpop.permute.xlu0 %6381
  %v6385 = vsel %vm1119, %v6223, 0
  %6387 = vmatprep.subr.mxu0 0.0
  %6388 = vmatpush1.msra.mxu0 %v6382
  %6389 = vmatprep.subr.mxu0 0.0
  %6390 = vmatpush1.msra.mxu0 0.0
  %6391 = vmatprep.subr.mxu0 0.0
  %6392 = vmatpush1.msra.mxu0 0.0
  %6393 = vmatprep.subr.mxu0 0.0
  %6394 = vmatpush1.msra.mxu0 0.0
  %6395 = vmatprep.subr.mxu0 0.0
  %6396 = vmatpush1.msra.mxu0 0.0
  %6397 = vmatprep.subr.mxu0 0.0
  %6398 = vmatpush1.msra.mxu0 0.0
  %6399 = vmatprep.subr.mxu0 0.0
  %6400 = vmatpush1.msra.mxu0 0.0
  %6401 = vmatprep.subr.mxu0 0.0
  %6402 = vmatpush1.msra.mxu0 0.0
  %6403 = vmatprep.subr.mxu0 0.0
  %6404 = vmatpush1.msra.mxu0 0.0
  %6405 = vmatprep.subr.mxu0 0.0
  %6406 = vmatpush1.msra.mxu0 0.0
  %6407 = vmatprep.subr.mxu0 0.0
  %6408 = vmatpush1.msra.mxu0 0.0
  %6409 = vmatprep.subr.mxu0 0.0
  %6410 = vmatpush1.msra.mxu0 0.0
  %6411 = vmatprep.subr.mxu0 0.0
  %6412 = vmatpush1.msra.mxu0 0.0
  %6413 = vmatprep.subr.mxu0 0.0
  %6414 = vmatpush1.msra.mxu0 0.0
  %6415 = vmatprep.subr.mxu0 0.0
  %6416 = vmatpush1.msra.mxu0 0.0
  %6417 = vmatprep.subr.mxu0 0.0
  %6418 = vmatpush1.msra.mxu0 0.0
  %6419 = vmatprep.subr.mxu0 0.0
  %6420 = vmatpush1.msra.mxu0 0.0
  %6421 = vmatprep.subr.mxu0 0.0
  %6422 = vmatpush1.msra.mxu0 0.0
  %6423 = vmatprep.subr.mxu0 0.0
  %6424 = vmatpush1.msra.mxu0 0.0
  %6425 = vmatprep.subr.mxu0 0.0
  %6426 = vmatpush1.msra.mxu0 0.0
  %6427 = vmatprep.subr.mxu0 0.0
  %6428 = vmatpush1.msra.mxu0 0.0
  %6429 = vmatprep.subr.mxu0 0.0
  %6430 = vmatpush1.msra.mxu0 0.0
  %6431 = vmatprep.subr.mxu0 0.0
  %6432 = vmatpush1.msra.mxu0 0.0
  %6433 = vmatprep.subr.mxu0 0.0
  %6434 = vmatpush1.msra.mxu0 0.0
  %6435 = vmatprep.subr.mxu0 0.0
  %6436 = vmatpush1.msra.mxu0 0.0
  %6437 = vmatprep.subr.mxu0 0.0
  %6438 = vmatpush1.msra.mxu0 0.0
  %6439 = vmatprep.subr.mxu0 0.0
  %6440 = vmatpush1.msra.mxu0 0.0
  %6441 = vmatprep.subr.mxu0 0.0
  %6442 = vmatpush1.msra.mxu0 0.0
  %6443 = vmatprep.subr.mxu0 0.0
  %6444 = vmatpush1.msra.mxu0 0.0
  %6445 = vmatprep.subr.mxu0 0.0
  %6446 = vmatpush1.msra.mxu0 0.0
  %6447 = vmatprep.subr.mxu0 0.0
  %6448 = vmatpush1.msra.mxu0 0.0
  %6449 = vmatprep.subr.mxu0 0.0
  %6450 = vmatpush1.msra.mxu0 0.0
  %6451 = vmatprep.mubr.f32.mxu0 0.0
  %6452 = vmatmul.mubr.f32.gmra.mrb[0].mxu0 %v6385
  %v6453 = vpop.f32.mrb[0].mxu0
  %v6454 = vadd.f32 0.0, %v6453
  %v6455 = vpop.f32.mrb[0].mxu0
  %6456 = vdwg.mxu0
  %6457 = vrot.lane.b32.xlu0 %v4150, 48
  %v6458 = vpop.permute.xlu0 %6457
  %v6461 = vsel %vm1119, %v6224, 0
  %6463 = vmatprep.subr.mxu0 0.0
  %6464 = vmatpush1.msra.mxu0 %v6458
  %6465 = vmatprep.subr.mxu0 0.0
  %6466 = vmatpush1.msra.mxu0 0.0
  %6467 = vmatprep.subr.mxu0 0.0
  %6468 = vmatpush1.msra.mxu0 0.0
  %6469 = vmatprep.subr.mxu0 0.0
  %6470 = vmatpush1.msra.mxu0 0.0
  %6471 = vmatprep.subr.mxu0 0.0
  %6472 = vmatpush1.msra.mxu0 0.0
  %6473 = vmatprep.subr.mxu0 0.0
  %6474 = vmatpush1.msra.mxu0 0.0
  %6475 = vmatprep.subr.mxu0 0.0
  %6476 = vmatpush1.msra.mxu0 0.0
  %6477 = vmatprep.subr.mxu0 0.0
  %6478 = vmatpush1.msra.mxu0 0.0
  %6479 = vmatprep.subr.mxu0 0.0
  %6480 = vmatpush1.msra.mxu0 0.0
  %6481 = vmatprep.subr.mxu0 0.0
  %6482 = vmatpush1.msra.mxu0 0.0
  %6483 = vmatprep.subr.mxu0 0.0
  %6484 = vmatpush1.msra.mxu0 0.0
  %6485 = vmatprep.subr.mxu0 0.0
  %6486 = vmatpush1.msra.mxu0 0.0
  %6487 = vmatprep.subr.mxu0 0.0
  %6488 = vmatpush1.msra.mxu0 0.0
  %6489 = vmatprep.subr.mxu0 0.0
  %6490 = vmatpush1.msra.mxu0 0.0
  %6491 = vmatprep.subr.mxu0 0.0
  %6492 = vmatpush1.msra.mxu0 0.0
  %6493 = vmatprep.subr.mxu0 0.0
  %6494 = vmatpush1.msra.mxu0 0.0
  %6495 = vmatprep.subr.mxu0 0.0
  %6496 = vmatpush1.msra.mxu0 0.0
  %6497 = vmatprep.subr.mxu0 0.0
  %6498 = vmatpush1.msra.mxu0 0.0
  %6499 = vmatprep.subr.mxu0 0.0
  %6500 = vmatpush1.msra.mxu0 0.0
  %6501 = vmatprep.subr.mxu0 0.0
  %6502 = vmatpush1.msra.mxu0 0.0
  %6503 = vmatprep.subr.mxu0 0.0
  %6504 = vmatpush1.msra.mxu0 0.0
  %6505 = vmatprep.subr.mxu0 0.0
  %6506 = vmatpush1.msra.mxu0 0.0
  %6507 = vmatprep.subr.mxu0 0.0
  %6508 = vmatpush1.msra.mxu0 0.0
  %6509 = vmatprep.subr.mxu0 0.0
  %6510 = vmatpush1.msra.mxu0 0.0
  %6511 = vmatprep.subr.mxu0 0.0
  %6512 = vmatpush1.msra.mxu0 0.0
  %6513 = vmatprep.subr.mxu0 0.0
  %6514 = vmatpush1.msra.mxu0 0.0
  %6515 = vmatprep.subr.mxu0 0.0
  %6516 = vmatpush1.msra.mxu0 0.0
  %6517 = vmatprep.subr.mxu0 0.0
  %6518 = vmatpush1.msra.mxu0 0.0
  %6519 = vmatprep.subr.mxu0 0.0
  %6520 = vmatpush1.msra.mxu0 0.0
  %6521 = vmatprep.subr.mxu0 0.0
  %6522 = vmatpush1.msra.mxu0 0.0
  %6523 = vmatprep.subr.mxu0 0.0
  %6524 = vmatpush1.msra.mxu0 0.0
  %6525 = vmatprep.subr.mxu0 0.0
  %6526 = vmatpush1.msra.mxu0 0.0
  %6527 = vmatprep.mubr.f32.mxu0 0.0
  %6528 = vmatmul.mubr.f32.gmra.mrb[0].mxu0 %v6461
  %v6529 = vpop.f32.mrb[0].mxu0
  %v6530 = vadd.f32 0.0, %v6529
  %v6531 = vpop.f32.mrb[0].mxu0
  %6532 = vdwg.mxu0
  %6533 = vrot.lane.b32.xlu0 %v4155, 48
  %v6534 = vpop.permute.xlu0 %6533
  %v6537 = vsel %vm1119, %v6225, 0
  %6539 = vmatprep.subr.mxu0 0.0
  %6540 = vmatpush1.msra.mxu0 %v6534
  %6541 = vmatprep.subr.mxu0 0.0
  %6542 = vmatpush1.msra.mxu0 0.0
  %6543 = vmatprep.subr.mxu0 0.0
  %6544 = vmatpush1.msra.mxu0 0.0
  %6545 = vmatprep.subr.mxu0 0.0
  %6546 = vmatpush1.msra.mxu0 0.0
  %6547 = vmatprep.subr.mxu0 0.0
  %6548 = vmatpush1.msra.mxu0 0.0
  %6549 = vmatprep.subr.mxu0 0.0
  %6550 = vmatpush1.msra.mxu0 0.0
  %6551 = vmatprep.subr.mxu0 0.0
  %6552 = vmatpush1.msra.mxu0 0.0
  %6553 = vmatprep.subr.mxu0 0.0
  %6554 = vmatpush1.msra.mxu0 0.0
  %6555 = vmatprep.subr.mxu0 0.0
  %6556 = vmatpush1.msra.mxu0 0.0
  %6557 = vmatprep.subr.mxu0 0.0
  %6558 = vmatpush1.msra.mxu0 0.0
  %6559 = vmatprep.subr.mxu0 0.0
  %6560 = vmatpush1.msra.mxu0 0.0
  %6561 = vmatprep.subr.mxu0 0.0
  %6562 = vmatpush1.msra.mxu0 0.0
  %6563 = vmatprep.subr.mxu0 0.0
  %6564 = vmatpush1.msra.mxu0 0.0
  %6565 = vmatprep.subr.mxu0 0.0
  %6566 = vmatpush1.msra.mxu0 0.0
  %6567 = vmatprep.subr.mxu0 0.0
  %6568 = vmatpush1.msra.mxu0 0.0
  %6569 = vmatprep.subr.mxu0 0.0
  %6570 = vmatpush1.msra.mxu0 0.0
  %6571 = vmatprep.subr.mxu0 0.0
  %6572 = vmatpush1.msra.mxu0 0.0
  %6573 = vmatprep.subr.mxu0 0.0
  %6574 = vmatpush1.msra.mxu0 0.0
  %6575 = vmatprep.subr.mxu0 0.0
  %6576 = vmatpush1.msra.mxu0 0.0
  %6577 = vmatprep.subr.mxu0 0.0
  %6578 = vmatpush1.msra.mxu0 0.0
  %6579 = vmatprep.subr.mxu0 0.0
  %6580 = vmatpush1.msra.mxu0 0.0
  %6581 = vmatprep.subr.mxu0 0.0
  %6582 = vmatpush1.msra.mxu0 0.0
  %6583 = vmatprep.subr.mxu0 0.0
  %6584 = vmatpush1.msra.mxu0 0.0
  %6585 = vmatprep.subr.mxu0 0.0
  %6586 = vmatpush1.msra.mxu0 0.0
  %6587 = vmatprep.subr.mxu0 0.0
  %6588 = vmatpush1.msra.mxu0 0.0
  %6589 = vmatprep.subr.mxu0 0.0
  %6590 = vmatpush1.msra.mxu0 0.0
  %6591 = vmatprep.subr.mxu0 0.0
  %6592 = vmatpush1.msra.mxu0 0.0
  %6593 = vmatprep.subr.mxu0 0.0
  %6594 = vmatpush1.msra.mxu0 0.0
  %6595 = vmatprep.subr.mxu0 0.0
  %6596 = vmatpush1.msra.mxu0 0.0
  %6597 = vmatprep.subr.mxu0 0.0
  %6598 = vmatpush1.msra.mxu0 0.0
  %6599 = vmatprep.subr.mxu0 0.0
  %6600 = vmatpush1.msra.mxu0 0.0
  %6601 = vmatprep.subr.mxu0 0.0
  %6602 = vmatpush1.msra.mxu0 0.0
  %6603 = vmatprep.mubr.f32.mxu0 0.0
  %6604 = vmatmul.mubr.f32.gmra.mrb[0].mxu0 %v6537
  %v6605 = vpop.f32.mrb[0].mxu0
  %v6606 = vadd.f32 0.0, %v6605
  %v6607 = vpop.f32.mrb[0].mxu0
  %6608 = vdwg.mxu0
  %6609 = vrot.lane.b32.xlu0 %v4160, 48
  %v6610 = vpop.permute.xlu0 %6609
  %v6613 = vsel %vm1119, %v6226, 0
  %6615 = vmatprep.subr.mxu0 0.0
  %6616 = vmatpush1.msra.mxu0 %v6610
  %6617 = vmatprep.subr.mxu0 0.0
  %6618 = vmatpush1.msra.mxu0 0.0
  %6619 = vmatprep.subr.mxu0 0.0
  %6620 = vmatpush1.msra.mxu0 0.0
  %6621 = vmatprep.subr.mxu0 0.0
  %6622 = vmatpush1.msra.mxu0 0.0
  %6623 = vmatprep.subr.mxu0 0.0
  %6624 = vmatpush1.msra.mxu0 0.0
  %6625 = vmatprep.subr.mxu0 0.0
  %6626 = vmatpush1.msra.mxu0 0.0
  %6627 = vmatprep.subr.mxu0 0.0
  %6628 = vmatpush1.msra.mxu0 0.0
  %6629 = vmatprep.subr.mxu0 0.0
  %6630 = vmatpush1.msra.mxu0 0.0
  %6631 = vmatprep.subr.mxu0 0.0
  %6632 = vmatpush1.msra.mxu0 0.0
  %6633 = vmatprep.subr.mxu0 0.0
  %6634 = vmatpush1.msra.mxu0 0.0
  %6635 = vmatprep.subr.mxu0 0.0
  %6636 = vmatpush1.msra.mxu0 0.0
  %6637 = vmatprep.subr.mxu0 0.0
  %6638 = vmatpush1.msra.mxu0 0.0
  %6639 = vmatprep.subr.mxu0 0.0
  %6640 = vmatpush1.msra.mxu0 0.0
  %6641 = vmatprep.subr.mxu0 0.0
  %6642 = vmatpush1.msra.mxu0 0.0
  %6643 = vmatprep.subr.mxu0 0.0
  %6644 = vmatpush1.msra.mxu0 0.0
  %6645 = vmatprep.subr.mxu0 0.0
  %6646 = vmatpush1.msra.mxu0 0.0
  %6647 = vmatprep.subr.mxu0 0.0
  %6648 = vmatpush1.msra.mxu0 0.0
  %6649 = vmatprep.subr.mxu0 0.0
  %6650 = vmatpush1.msra.mxu0 0.0
  %6651 = vmatprep.subr.mxu0 0.0
  %6652 = vmatpush1.msra.mxu0 0.0
  %6653 = vmatprep.subr.mxu0 0.0
  %6654 = vmatpush1.msra.mxu0 0.0
  %6655 = vmatprep.subr.mxu0 0.0
  %6656 = vmatpush1.msra.mxu0 0.0
  %6657 = vmatprep.subr.mxu0 0.0
  %6658 = vmatpush1.msra.mxu0 0.0
  %6659 = vmatprep.subr.mxu0 0.0
  %6660 = vmatpush1.msra.mxu0 0.0
  %6661 = vmatprep.subr.mxu0 0.0
  %6662 = vmatpush1.msra.mxu0 0.0
  %6663 = vmatprep.subr.mxu0 0.0
  %6664 = vmatpush1.msra.mxu0 0.0
  %6665 = vmatprep.subr.mxu0 0.0
  %6666 = vmatpush1.msra.mxu0 0.0
  %6667 = vmatprep.subr.mxu0 0.0
  %6668 = vmatpush1.msra.mxu0 0.0
  %6669 = vmatprep.subr.mxu0 0.0
  %6670 = vmatpush1.msra.mxu0 0.0
  %6671 = vmatprep.subr.mxu0 0.0
  %6672 = vmatpush1.msra.mxu0 0.0
  %6673 = vmatprep.subr.mxu0 0.0
  %6674 = vmatpush1.msra.mxu0 0.0
  %6675 = vmatprep.subr.mxu0 0.0
  %6676 = vmatpush1.msra.mxu0 0.0
  %6677 = vmatprep.subr.mxu0 0.0
  %6678 = vmatpush1.msra.mxu0 0.0
  %6679 = vmatprep.mubr.f32.mxu0 0.0
  %6680 = vmatmul.mubr.f32.gmra.mrb[0].mxu0 %v6613
  %v6681 = vpop.f32.mrb[0].mxu0
  %v6682 = vadd.f32 0.0, %v6681
  %v6683 = vpop.f32.mrb[0].mxu0
  %6684 = vdwg.mxu0
  %6685 = vrot.lane.b32.xlu0 %v4165, 48
  %v6686 = vpop.permute.xlu0 %6685
  %v6689 = vsel %vm1119, %v6227, 0
  %6691 = vmatprep.subr.mxu0 0.0
  %6692 = vmatpush1.msra.mxu0 %v6686
  %6693 = vmatprep.subr.mxu0 0.0
  %6694 = vmatpush1.msra.mxu0 0.0
  %6695 = vmatprep.subr.mxu0 0.0
  %6696 = vmatpush1.msra.mxu0 0.0
  %6697 = vmatprep.subr.mxu0 0.0
  %6698 = vmatpush1.msra.mxu0 0.0
  %6699 = vmatprep.subr.mxu0 0.0
  %6700 = vmatpush1.msra.mxu0 0.0
  %6701 = vmatprep.subr.mxu0 0.0
  %6702 = vmatpush1.msra.mxu0 0.0
  %6703 = vmatprep.subr.mxu0 0.0
  %6704 = vmatpush1.msra.mxu0 0.0
  %6705 = vmatprep.subr.mxu0 0.0
  %6706 = vmatpush1.msra.mxu0 0.0
  %6707 = vmatprep.subr.mxu0 0.0
  %6708 = vmatpush1.msra.mxu0 0.0
  %6709 = vmatprep.subr.mxu0 0.0
  %6710 = vmatpush1.msra.mxu0 0.0
  %6711 = vmatprep.subr.mxu0 0.0
  %6712 = vmatpush1.msra.mxu0 0.0
  %6713 = vmatprep.subr.mxu0 0.0
  %6714 = vmatpush1.msra.mxu0 0.0
  %6715 = vmatprep.subr.mxu0 0.0
  %6716 = vmatpush1.msra.mxu0 0.0
  %6717 = vmatprep.subr.mxu0 0.0
  %6718 = vmatpush1.msra.mxu0 0.0
  %6719 = vmatprep.subr.mxu0 0.0
  %6720 = vmatpush1.msra.mxu0 0.0
  %6721 = vmatprep.subr.mxu0 0.0
  %6722 = vmatpush1.msra.mxu0 0.0
  %6723 = vmatprep.subr.mxu0 0.0
  %6724 = vmatpush1.msra.mxu0 0.0
  %6725 = vmatprep.subr.mxu0 0.0
  %6726 = vmatpush1.msra.mxu0 0.0
  %6727 = vmatprep.subr.mxu0 0.0
  %6728 = vmatpush1.msra.mxu0 0.0
  %6729 = vmatprep.subr.mxu0 0.0
  %6730 = vmatpush1.msra.mxu0 0.0
  %6731 = vmatprep.subr.mxu0 0.0
  %6732 = vmatpush1.msra.mxu0 0.0
  %6733 = vmatprep.subr.mxu0 0.0
  %6734 = vmatpush1.msra.mxu0 0.0
  %6735 = vmatprep.subr.mxu0 0.0
  %6736 = vmatpush1.msra.mxu0 0.0
  %6737 = vmatprep.subr.mxu0 0.0
  %6738 = vmatpush1.msra.mxu0 0.0
  %6739 = vmatprep.subr.mxu0 0.0
  %6740 = vmatpush1.msra.mxu0 0.0
  %6741 = vmatprep.subr.mxu0 0.0
  %6742 = vmatpush1.msra.mxu0 0.0
  %6743 = vmatprep.subr.mxu0 0.0
  %6744 = vmatpush1.msra.mxu0 0.0
  %6745 = vmatprep.subr.mxu0 0.0
  %6746 = vmatpush1.msra.mxu0 0.0
  %6747 = vmatprep.subr.mxu0 0.0
  %6748 = vmatpush1.msra.mxu0 0.0
  %6749 = vmatprep.subr.mxu0 0.0
  %6750 = vmatpush1.msra.mxu0 0.0
  %6751 = vmatprep.subr.mxu0 0.0
  %6752 = vmatpush1.msra.mxu0 0.0
  %6753 = vmatprep.subr.mxu0 0.0
  %6754 = vmatpush1.msra.mxu0 0.0
  %6755 = vmatprep.mubr.f32.mxu0 0.0
  %6756 = vmatmul.mubr.f32.gmra.mrb[0].mxu0 %v6689
  %v6757 = vpop.f32.mrb[0].mxu0
  %v6758 = vadd.f32 0.0, %v6757
  %v6759 = vpop.f32.mrb[0].mxu0
  %6760 = vdwg.mxu0
  %6761 = vrot.lane.b32.xlu0 %v4170, 48
  %v6762 = vpop.permute.xlu0 %6761
  %v6765 = vsel %vm1119, %v6228, 0
  %6767 = vmatprep.subr.mxu0 0.0
  %6768 = vmatpush1.msra.mxu0 %v6762
  %6769 = vmatprep.subr.mxu0 0.0
  %6770 = vmatpush1.msra.mxu0 0.0
  %6771 = vmatprep.subr.mxu0 0.0
  %6772 = vmatpush1.msra.mxu0 0.0
  %6773 = vmatprep.subr.mxu0 0.0
  %6774 = vmatpush1.msra.mxu0 0.0
  %6775 = vmatprep.subr.mxu0 0.0
  %6776 = vmatpush1.msra.mxu0 0.0
  %6777 = vmatprep.subr.mxu0 0.0
  %6778 = vmatpush1.msra.mxu0 0.0
  %6779 = vmatprep.subr.mxu0 0.0
  %6780 = vmatpush1.msra.mxu0 0.0
  %6781 = vmatprep.subr.mxu0 0.0
  %6782 = vmatpush1.msra.mxu0 0.0
  %6783 = vmatprep.subr.mxu0 0.0
  %6784 = vmatpush1.msra.mxu0 0.0
  %6785 = vmatprep.subr.mxu0 0.0
  %6786 = vmatpush1.msra.mxu0 0.0
  %6787 = vmatprep.subr.mxu0 0.0
  %6788 = vmatpush1.msra.mxu0 0.0
  %6789 = vmatprep.subr.mxu0 0.0
  %6790 = vmatpush1.msra.mxu0 0.0
  %6791 = vmatprep.subr.mxu0 0.0
  %6792 = vmatpush1.msra.mxu0 0.0
  %6793 = vmatprep.subr.mxu0 0.0
  %6794 = vmatpush1.msra.mxu0 0.0
  %6795 = vmatprep.subr.mxu0 0.0
  %6796 = vmatpush1.msra.mxu0 0.0
  %6797 = vmatprep.subr.mxu0 0.0
  %6798 = vmatpush1.msra.mxu0 0.0
  %6799 = vmatprep.subr.mxu0 0.0
  %6800 = vmatpush1.msra.mxu0 0.0
  %6801 = vmatprep.subr.mxu0 0.0
  %6802 = vmatpush1.msra.mxu0 0.0
  %6803 = vmatprep.subr.mxu0 0.0
  %6804 = vmatpush1.msra.mxu0 0.0
  %6805 = vmatprep.subr.mxu0 0.0
  %6806 = vmatpush1.msra.mxu0 0.0
  %6807 = vmatprep.subr.mxu0 0.0
  %6808 = vmatpush1.msra.mxu0 0.0
  %6809 = vmatprep.subr.mxu0 0.0
  %6810 = vmatpush1.msra.mxu0 0.0
  %6811 = vmatprep.subr.mxu0 0.0
  %6812 = vmatpush1.msra.mxu0 0.0
  %6813 = vmatprep.subr.mxu0 0.0
  %6814 = vmatpush1.msra.mxu0 0.0
  %6815 = vmatprep.subr.mxu0 0.0
  %6816 = vmatpush1.msra.mxu0 0.0
  %6817 = vmatprep.subr.mxu0 0.0
  %6818 = vmatpush1.msra.mxu0 0.0
  %6819 = vmatprep.subr.mxu0 0.0
  %6820 = vmatpush1.msra.mxu0 0.0
  %6821 = vmatprep.subr.mxu0 0.0
  %6822 = vmatpush1.msra.mxu0 0.0
  %6823 = vmatprep.subr.mxu0 0.0
  %6824 = vmatpush1.msra.mxu0 0.0
  %6825 = vmatprep.subr.mxu0 0.0
  %6826 = vmatpush1.msra.mxu0 0.0
  %6827 = vmatprep.subr.mxu0 0.0
  %6828 = vmatpush1.msra.mxu0 0.0
  %6829 = vmatprep.subr.mxu0 0.0
  %6830 = vmatpush1.msra.mxu0 0.0
  %6831 = vmatprep.mubr.f32.mxu0 0.0
  %6832 = vmatmul.mubr.f32.gmra.mrb[0].mxu0 %v6765
  %v6833 = vpop.f32.mrb[0].mxu0
  %v6834 = vadd.f32 0.0, %v6833
  %v6835 = vpop.f32.mrb[0].mxu0
  %6836 = vdwg.mxu0
  %6845 = vrot.lane.b32.xlu0 %v6302, 16
  %v6846 = vpop.permute.xlu0 %6845
  %6847 = vrot.lane.b32.xlu0 %v6378, 16
  %v6848 = vpop.permute.xlu0 %6847
  %6849 = vrot.lane.b32.xlu0 %v6454, 16
  %v6850 = vpop.permute.xlu0 %6849
  %6851 = vrot.lane.b32.xlu0 %v6530, 16
  %v6852 = vpop.permute.xlu0 %6851
  %6853 = vrot.lane.b32.xlu0 %v6606, 16
  %v6854 = vpop.permute.xlu0 %6853
  %6855 = vrot.lane.b32.xlu0 %v6682, 16
  %v6856 = vpop.permute.xlu0 %6855
  %6857 = vrot.lane.b32.xlu0 %v6758, 16
  %v6858 = vpop.permute.xlu0 %6857
  %6859 = vrot.lane.b32.xlu0 %v6834, 16
  %v6860 = vpop.permute.xlu0 %6859
  %v6869 = vsel %vm441, %v4966, %v6846
  %v6870 = vsel %vm441, %v5042, %v6848
  %v6871 = vsel %vm441, %v5118, %v6850
  %v6872 = vsel %vm441, %v5194, %v6852
  %v6873 = vsel %vm441, %v5270, %v6854
  %v6874 = vsel %vm441, %v5346, %v6856
  %v6875 = vsel %vm441, %v5422, %v6858
  %v6876 = vsel %vm441, %v5498, %v6860
  %v6878 = vlaneseq
  %v6879 = vshrl.u32 %v6878, 7
  %v6880 = vsub.s32 0, %v6879
  %v6881 = vrot.slane %v3827, %v6880
  %v6884 = vsel %vm113, %v6869, 0
  %v6887 = vsel %vm113, %v6870, 0
  %v6890 = vsel %vm113, %v6871, 0
  %v6893 = vsel %vm113, %v6872, 0
  %v6896 = vsel %vm113, %v6873, 0
  %v6899 = vsel %vm113, %v6874, 0
  %v6902 = vsel %vm113, %v6875, 0
  %v6905 = vsel %vm113, %v6876, 0
  %6907 = vmatprep.subr.mxu0 0.0
  %6908 = vmatpush1.msra.mxu0 %v3822
  %6909 = vmatprep.subr.mxu0 0.0
  %6910 = vmatpush1.msra.mxu0 %v3823
  %6911 = vmatprep.subr.mxu0 0.0
  %6912 = vmatpush1.msra.mxu0 %v3824
  %6913 = vmatprep.subr.mxu0 0.0
  %6914 = vmatpush1.msra.mxu0 %v3825
  %6915 = vmatprep.subr.mxu0 0.0
  %6916 = vmatpush1.msra.mxu0 0.0
  %6917 = vmatprep.subr.mxu0 0.0
  %6918 = vmatpush1.msra.mxu0 0.0
  %6919 = vmatprep.subr.mxu0 0.0
  %6920 = vmatpush1.msra.mxu0 0.0
  %6921 = vmatprep.subr.mxu0 0.0
  %6922 = vmatpush1.msra.mxu0 0.0
  %6923 = vmatprep.subr.mxu0 0.0
  %6924 = vmatpush1.msra.mxu0 0.0
  %6925 = vmatprep.subr.mxu0 0.0
  %6926 = vmatpush1.msra.mxu0 0.0
  %6927 = vmatprep.subr.mxu0 0.0
  %6928 = vmatpush1.msra.mxu0 0.0
  %6929 = vmatprep.subr.mxu0 0.0
  %6930 = vmatpush1.msra.mxu0 0.0
  %6931 = vmatprep.subr.mxu0 0.0
  %6932 = vmatpush1.msra.mxu0 0.0
  %6933 = vmatprep.subr.mxu0 0.0
  %6934 = vmatpush1.msra.mxu0 0.0
  %6935 = vmatprep.subr.mxu0 0.0
  %6936 = vmatpush1.msra.mxu0 0.0
  %6937 = vmatprep.subr.mxu0 0.0
  %6938 = vmatpush1.msra.mxu0 0.0
  %6939 = vmatprep.subr.mxu0 0.0
  %6940 = vmatpush1.msra.mxu0 0.0
  %6941 = vmatprep.subr.mxu0 0.0
  %6942 = vmatpush1.msra.mxu0 0.0
  %6943 = vmatprep.subr.mxu0 0.0
  %6944 = vmatpush1.msra.mxu0 0.0
  %6945 = vmatprep.subr.mxu0 0.0
  %6946 = vmatpush1.msra.mxu0 0.0
  %6947 = vmatprep.subr.mxu0 0.0
  %6948 = vmatpush1.msra.mxu0 0.0
  %6949 = vmatprep.subr.mxu0 0.0
  %6950 = vmatpush1.msra.mxu0 0.0
  %6951 = vmatprep.subr.mxu0 0.0
  %6952 = vmatpush1.msra.mxu0 0.0
  %6953 = vmatprep.subr.mxu0 0.0
  %6954 = vmatpush1.msra.mxu0 0.0
  %6955 = vmatprep.subr.mxu0 0.0
  %6956 = vmatpush1.msra.mxu0 0.0
  %6957 = vmatprep.subr.mxu0 0.0
  %6958 = vmatpush1.msra.mxu0 0.0
  %6959 = vmatprep.subr.mxu0 0.0
  %6960 = vmatpush1.msra.mxu0 0.0
  %6961 = vmatprep.subr.mxu0 0.0
  %6962 = vmatpush1.msra.mxu0 0.0
  %6963 = vmatprep.subr.mxu0 0.0
  %6964 = vmatpush1.msra.mxu0 0.0
  %6965 = vmatprep.subr.mxu0 0.0
  %6966 = vmatpush1.msra.mxu0 0.0
  %6967 = vmatprep.subr.mxu0 0.0
  %6968 = vmatpush1.msra.mxu0 0.0
  %6969 = vmatprep.subr.mxu0 0.0
  %6970 = vmatpush1.msra.mxu0 0.0
  %6971 = vmatprep.mubr.f32.mxu0 0.0
  %6972 = vmatmul.mubr.f32.gmra.mrb[0].mxu0 %v6884
  %v6973 = vpop.f32.mrb[0].mxu0
  %v6974 = vadd.f32 %v6881, %v6973
  %v6975 = vpop.f32.mrb[0].mxu0
  %6976 = vmatprep.mubr.f32.mxu0 0.0
  %6977 = vmatmul.mubr.f32.gmra.mrb[0].mxu0 %v6887
  %v6978 = vpop.f32.mrb[0].mxu0
  %v6979 = vadd.f32 %v6881, %v6978
  %v6980 = vpop.f32.mrb[0].mxu0
  %6981 = vmatprep.mubr.f32.mxu0 0.0
  %6982 = vmatmul.mubr.f32.gmra.mrb[0].mxu0 %v6890
  %v6983 = vpop.f32.mrb[0].mxu0
  %v6984 = vadd.f32 %v6881, %v6983
  %v6985 = vpop.f32.mrb[0].mxu0
  %6986 = vmatprep.mubr.f32.mxu0 0.0
  %6987 = vmatmul.mubr.f32.gmra.mrb[0].mxu0 %v6893
  %v6988 = vpop.f32.mrb[0].mxu0
  %v6989 = vadd.f32 %v6881, %v6988
  %v6990 = vpop.f32.mrb[0].mxu0
  %6991 = vmatprep.mubr.f32.mxu0 0.0
  %6992 = vmatmul.mubr.f32.gmra.mrb[0].mxu0 %v6896
  %v6993 = vpop.f32.mrb[0].mxu0
  %v6994 = vadd.f32 %v6881, %v6993
  %v6995 = vpop.f32.mrb[0].mxu0
  %6996 = vmatprep.mubr.f32.mxu0 0.0
  %6997 = vmatmul.mubr.f32.gmra.mrb[0].mxu0 %v6899
  %v6998 = vpop.f32.mrb[0].mxu0
  %v6999 = vadd.f32 %v6881, %v6998
  %v7000 = vpop.f32.mrb[0].mxu0
  %7001 = vmatprep.mubr.f32.mxu0 0.0
  %7002 = vmatmul.mubr.f32.gmra.mrb[0].mxu0 %v6902
  %v7003 = vpop.f32.mrb[0].mxu0
  %v7004 = vadd.f32 %v6881, %v7003
  %v7005 = vpop.f32.mrb[0].mxu0
  %7006 = vmatprep.mubr.f32.mxu0 0.0
  %7007 = vmatmul.mubr.f32.gmra.mrb[0].mxu0 %v6905
  %v7008 = vpop.f32.mrb[0].mxu0
  %v7009 = vadd.f32 %v6881, %v7008
  %v7010 = vpop.f32.mrb[0].mxu0
  %7011 = vdwg.mxu0
  %v7012 = vadd.f32 %v3802, %v6974
  %v7013 = vadd.f32 %v3803, %v6979
  %v7014 = vadd.f32 %v3804, %v6984
  %v7015 = vadd.f32 %v3805, %v6989
  %v7016 = vadd.f32 %v3806, %v6994
  %v7017 = vadd.f32 %v3807, %v6999
  %v7018 = vadd.f32 %v3808, %v7004
  %v7019 = vadd.f32 %v3809, %v7009
  %v7020 = vsel %vm113, %v7012, 0.0
  %7021 = vadd.xlane.f32.xlu0 %v7020
  %v7022 = vpop.xlane.xlu0 %7021
  %v7023 = vsel %vm113, %v7013, 0.0
  %7024 = vadd.xlane.f32.xlu0 %v7023
  %v7025 = vpop.xlane.xlu0 %7024
  %v7026 = vsel %vm113, %v7014, 0.0
  %7027 = vadd.xlane.f32.xlu0 %v7026
  %v7028 = vpop.xlane.xlu0 %7027
  %v7029 = vsel %vm113, %v7015, 0.0
  %7030 = vadd.xlane.f32.xlu0 %v7029
  %v7031 = vpop.xlane.xlu0 %7030
  %v7032 = vsel %vm113, %v7016, 0.0
  %7033 = vadd.xlane.f32.xlu0 %v7032
  %v7034 = vpop.xlane.xlu0 %7033
  %v7035 = vsel %vm113, %v7017, 0.0
  %7036 = vadd.xlane.f32.xlu0 %v7035
  %v7037 = vpop.xlane.xlu0 %7036
  %v7038 = vsel %vm113, %v7018, 0.0
  %7039 = vadd.xlane.f32.xlu0 %v7038
  %v7040 = vpop.xlane.xlu0 %7039
  %v7041 = vsel %vm113, %v7019, 0.0
  %7042 = vadd.xlane.f32.xlu0 %v7041
  %v7043 = vpop.xlane.xlu0 %7042
  %v7044 = vmul.f32 %v7022, %v138
  %v7045 = vmul.f32 %v7025, %v138
  %v7046 = vmul.f32 %v7028, %v138
  %v7047 = vmul.f32 %v7031, %v138
  %v7048 = vmul.f32 %v7034, %v138
  %v7049 = vmul.f32 %v7037, %v138
  %v7050 = vmul.f32 %v7040, %v138
  %v7051 = vmul.f32 %v7043, %v138
  %v7052 = vsub.f32 %v7012, %v7044
  %v7053 = vsub.f32 %v7013, %v7045
  %v7054 = vsub.f32 %v7014, %v7046
  %v7055 = vsub.f32 %v7015, %v7047
  %v7056 = vsub.f32 %v7016, %v7048
  %v7057 = vsub.f32 %v7017, %v7049
  %v7058 = vsub.f32 %v7018, %v7050
  %v7059 = vsub.f32 %v7019, %v7051
  %v7060 = vmul.f32 %v7052, %v7052
  %v7061 = vmul.f32 %v7053, %v7053
  %v7062 = vmul.f32 %v7054, %v7054
  %v7063 = vmul.f32 %v7055, %v7055
  %v7064 = vmul.f32 %v7056, %v7056
  %v7065 = vmul.f32 %v7057, %v7057
  %v7066 = vmul.f32 %v7058, %v7058
  %v7067 = vmul.f32 %v7059, %v7059
  %v7068 = vsel %vm113, %v7060, 0.0
  %7069 = vadd.xlane.f32.xlu0 %v7068
  %v7070 = vpop.xlane.xlu0 %7069
  %v7071 = vsel %vm113, %v7061, 0.0
  %7072 = vadd.xlane.f32.xlu0 %v7071
  %v7073 = vpop.xlane.xlu0 %7072
  %v7074 = vsel %vm113, %v7062, 0.0
  %7075 = vadd.xlane.f32.xlu0 %v7074
  %v7076 = vpop.xlane.xlu0 %7075
  %v7077 = vsel %vm113, %v7063, 0.0
  %7078 = vadd.xlane.f32.xlu0 %v7077
  %v7079 = vpop.xlane.xlu0 %7078
  %v7080 = vsel %vm113, %v7064, 0.0
  %7081 = vadd.xlane.f32.xlu0 %v7080
  %v7082 = vpop.xlane.xlu0 %7081
  %v7083 = vsel %vm113, %v7065, 0.0
  %7084 = vadd.xlane.f32.xlu0 %v7083
  %v7085 = vpop.xlane.xlu0 %7084
  %v7086 = vsel %vm113, %v7066, 0.0
  %7087 = vadd.xlane.f32.xlu0 %v7086
  %v7088 = vpop.xlane.xlu0 %7087
  %v7089 = vsel %vm113, %v7067, 0.0
  %7090 = vadd.xlane.f32.xlu0 %v7089
  %v7091 = vpop.xlane.xlu0 %7090
  %v7092 = vmul.f32 %v7070, 0.032258064
  %v7093 = vmul.f32 %v7073, 0.032258064
  %v7094 = vmul.f32 %v7076, 0.032258064
  %v7095 = vmul.f32 %v7079, 0.032258064
  %v7096 = vmul.f32 %v7082, 0.032258064
  %v7097 = vmul.f32 %v7085, 0.032258064
  %v7098 = vmul.f32 %v7088, 0.032258064
  %v7099 = vmul.f32 %v7091, 0.032258064
  %v7100 = vrsqrt.pop %v7092
  %v7101 = vmul.f32 %v7092, %v7100
  %vm7102 = vcmp.eq.f32.partialorder %v7092, inf
  %v7103 = vsel %vm7102, %v7092, %v7101
  %vm7104 = vcmp.eq.f32.partialorder %v7092, 0.0
  %v7105 = vand.u32 %v7092, 2147483648
  %v7106 = vsel %vm7104, %v7105, %v7103
  %v7107 = vrsqrt.pop %v7093
  %v7108 = vmul.f32 %v7093, %v7107
  %vm7109 = vcmp.eq.f32.partialorder %v7093, inf
  %v7110 = vsel %vm7109, %v7093, %v7108
  %vm7111 = vcmp.eq.f32.partialorder %v7093, 0.0
  %v7112 = vand.u32 %v7093, 2147483648
  %v7113 = vsel %vm7111, %v7112, %v7110
  %v7114 = vrsqrt.pop %v7094
  %v7115 = vmul.f32 %v7094, %v7114
  %vm7116 = vcmp.eq.f32.partialorder %v7094, inf
  %v7117 = vsel %vm7116, %v7094, %v7115
  %vm7118 = vcmp.eq.f32.partialorder %v7094, 0.0
  %v7119 = vand.u32 %v7094, 2147483648
  %v7120 = vsel %vm7118, %v7119, %v7117
  %v7121 = vrsqrt.pop %v7095
  %v7122 = vmul.f32 %v7095, %v7121
  %vm7123 = vcmp.eq.f32.partialorder %v7095, inf
  %v7124 = vsel %vm7123, %v7095, %v7122
  %vm7125 = vcmp.eq.f32.partialorder %v7095, 0.0
  %v7126 = vand.u32 %v7095, 2147483648
  %v7127 = vsel %vm7125, %v7126, %v7124
  %v7128 = vrsqrt.pop %v7096
  %v7129 = vmul.f32 %v7096, %v7128
  %vm7130 = vcmp.eq.f32.partialorder %v7096, inf
  %v7131 = vsel %vm7130, %v7096, %v7129
  %vm7132 = vcmp.eq.f32.partialorder %v7096, 0.0
  %v7133 = vand.u32 %v7096, 2147483648
  %v7134 = vsel %vm7132, %v7133, %v7131
  %v7135 = vrsqrt.pop %v7097
  %v7136 = vmul.f32 %v7097, %v7135
  %vm7137 = vcmp.eq.f32.partialorder %v7097, inf
  %v7138 = vsel %vm7137, %v7097, %v7136
  %vm7139 = vcmp.eq.f32.partialorder %v7097, 0.0
  %v7140 = vand.u32 %v7097, 2147483648
  %v7141 = vsel %vm7139, %v7140, %v7138
  %v7142 = vrsqrt.pop %v7098
  %v7143 = vmul.f32 %v7098, %v7142
  %vm7144 = vcmp.eq.f32.partialorder %v7098, inf
  %v7145 = vsel %vm7144, %v7098, %v7143
  %vm7146 = vcmp.eq.f32.partialorder %v7098, 0.0
  %v7147 = vand.u32 %v7098, 2147483648
  %v7148 = vsel %vm7146, %v7147, %v7145
  %v7149 = vrsqrt.pop %v7099
  %v7150 = vmul.f32 %v7099, %v7149
  %vm7151 = vcmp.eq.f32.partialorder %v7099, inf
  %v7152 = vsel %vm7151, %v7099, %v7150
  %vm7153 = vcmp.eq.f32.partialorder %v7099, 0.0
  %v7154 = vand.u32 %v7099, 2147483648
  %v7155 = vsel %vm7153, %v7154, %v7152
  %v7156 = vadd.f32 %v7106, 1e-06
  %v7157 = vadd.f32 %v7113, 1e-06
  %v7158 = vadd.f32 %v7120, 1e-06
  %v7159 = vadd.f32 %v7127, 1e-06
  %v7160 = vadd.f32 %v7134, 1e-06
  %v7161 = vadd.f32 %v7141, 1e-06
  %v7162 = vadd.f32 %v7148, 1e-06
  %v7163 = vadd.f32 %v7155, 1e-06
  %v7164 = vrcp.pop %v7156
  %v7165 = vrcp.pop %v7157
  %v7166 = vrcp.pop %v7158
  %v7167 = vrcp.pop %v7159
  %v7168 = vrcp.pop %v7160
  %v7169 = vrcp.pop %v7161
  %v7170 = vrcp.pop %v7162
  %v7171 = vrcp.pop %v7163
  %v7173 = vlaneseq
  %v7174 = vshrl.u32 %v7173, 7
  %v7175 = vsub.s32 0, %v7174
  %v7176 = vrot.slane %v3829, %v7175
  %v7178 = vmul.f32 %v7176, %v7052
  %v7179 = vmul.f32 %v7176, %v7053
  %v7180 = vmul.f32 %v7176, %v7054
  %v7181 = vmul.f32 %v7176, %v7055
  %v7182 = vmul.f32 %v7176, %v7056
  %v7183 = vmul.f32 %v7176, %v7057
  %v7184 = vmul.f32 %v7176, %v7058
  %v7185 = vmul.f32 %v7176, %v7059
  %v7186 = vmul.f32 %v7178, %v7164
  %v7187 = vmul.f32 %v7179, %v7165
  %v7188 = vmul.f32 %v7180, %v7166
  %v7189 = vmul.f32 %v7181, %v7167
  %v7190 = vmul.f32 %v7182, %v7168
  %v7191 = vmul.f32 %v7183, %v7169
  %v7192 = vmul.f32 %v7184, %v7170
  %v7193 = vmul.f32 %v7185, %v7171
  %v7195 = vlaneseq
  %v7196 = vshrl.u32 %v7195, 7
  %v7197 = vsub.s32 0, %v7196
  %v7198 = vrot.slane %v3831, %v7197
  %v7200 = vadd.f32 %v7186, %v7198
  %v7201 = vadd.f32 %v7187, %v7198
  %v7202 = vadd.f32 %v7188, %v7198
  %v7203 = vadd.f32 %v7189, %v7198
  %v7204 = vadd.f32 %v7190, %v7198
  %v7205 = vadd.f32 %v7191, %v7198
  %v7206 = vadd.f32 %v7192, %v7198
  %v7207 = vadd.f32 %v7193, %v7198
  %v7209 = vlaneseq
  %v7210 = vshrl.u32 %v7209, 7
  %v7211 = vsub.s32 0, %v7210
  %v7212 = vrot.slane %v3838, %v7211
  %v7215 = vsel %vm113, %v7200, 0
  %v7218 = vsel %vm113, %v7201, 0
  %v7221 = vsel %vm113, %v7202, 0
  %v7224 = vsel %vm113, %v7203, 0
  %v7227 = vsel %vm113, %v7204, 0
  %v7230 = vsel %vm113, %v7205, 0
  %v7233 = vsel %vm113, %v7206, 0
  %v7236 = vsel %vm113, %v7207, 0
  %7238 = vmatprep.subr.mxu0 0.0
  %7239 = vmatpush1.msra.mxu0 %v3833
  %7240 = vmatprep.subr.mxu0 0.0
  %7241 = vmatpush1.msra.mxu0 %v3834
  %7242 = vmatprep.subr.mxu0 0.0
  %7243 = vmatpush1.msra.mxu0 %v3835
  %7244 = vmatprep.subr.mxu0 0.0
  %7245 = vmatpush1.msra.mxu0 %v3836
  %7246 = vmatprep.subr.mxu0 0.0
  %7247 = vmatpush1.msra.mxu0 0.0
  %7248 = vmatprep.subr.mxu0 0.0
  %7249 = vmatpush1.msra.mxu0 0.0
  %7250 = vmatprep.subr.mxu0 0.0
  %7251 = vmatpush1.msra.mxu0 0.0
  %7252 = vmatprep.subr.mxu0 0.0
  %7253 = vmatpush1.msra.mxu0 0.0
  %7254 = vmatprep.subr.mxu0 0.0
  %7255 = vmatpush1.msra.mxu0 0.0
  %7256 = vmatprep.subr.mxu0 0.0
  %7257 = vmatpush1.msra.mxu0 0.0
  %7258 = vmatprep.subr.mxu0 0.0
  %7259 = vmatpush1.msra.mxu0 0.0
  %7260 = vmatprep.subr.mxu0 0.0
  %7261 = vmatpush1.msra.mxu0 0.0
  %7262 = vmatprep.subr.mxu0 0.0
  %7263 = vmatpush1.msra.mxu0 0.0
  %7264 = vmatprep.subr.mxu0 0.0
  %7265 = vmatpush1.msra.mxu0 0.0
  %7266 = vmatprep.subr.mxu0 0.0
  %7267 = vmatpush1.msra.mxu0 0.0
  %7268 = vmatprep.subr.mxu0 0.0
  %7269 = vmatpush1.msra.mxu0 0.0
  %7270 = vmatprep.subr.mxu0 0.0
  %7271 = vmatpush1.msra.mxu0 0.0
  %7272 = vmatprep.subr.mxu0 0.0
  %7273 = vmatpush1.msra.mxu0 0.0
  %7274 = vmatprep.subr.mxu0 0.0
  %7275 = vmatpush1.msra.mxu0 0.0
  %7276 = vmatprep.subr.mxu0 0.0
  %7277 = vmatpush1.msra.mxu0 0.0
  %7278 = vmatprep.subr.mxu0 0.0
  %7279 = vmatpush1.msra.mxu0 0.0
  %7280 = vmatprep.subr.mxu0 0.0
  %7281 = vmatpush1.msra.mxu0 0.0
  %7282 = vmatprep.subr.mxu0 0.0
  %7283 = vmatpush1.msra.mxu0 0.0
  %7284 = vmatprep.subr.mxu0 0.0
  %7285 = vmatpush1.msra.mxu0 0.0
  %7286 = vmatprep.subr.mxu0 0.0
  %7287 = vmatpush1.msra.mxu0 0.0
  %7288 = vmatprep.subr.mxu0 0.0
  %7289 = vmatpush1.msra.mxu0 0.0
  %7290 = vmatprep.subr.mxu0 0.0
  %7291 = vmatpush1.msra.mxu0 0.0
  %7292 = vmatprep.subr.mxu0 0.0
  %7293 = vmatpush1.msra.mxu0 0.0
  %7294 = vmatprep.subr.mxu0 0.0
  %7295 = vmatpush1.msra.mxu0 0.0
  %7296 = vmatprep.subr.mxu0 0.0
  %7297 = vmatpush1.msra.mxu0 0.0
  %7298 = vmatprep.subr.mxu0 0.0
  %7299 = vmatpush1.msra.mxu0 0.0
  %7300 = vmatprep.subr.mxu0 0.0
  %7301 = vmatpush1.msra.mxu0 0.0
  %7302 = vmatprep.mubr.f32.mxu0 0.0
  %7303 = vmatmul.mubr.f32.gmra.mrb[0].mxu0 %v7215
  %v7304 = vpop.f32.mrb[0].mxu0
  %v7305 = vadd.f32 %v7212, %v7304
  %v7306 = vpop.f32.mrb[0].mxu0
  %7307 = vmatprep.mubr.f32.mxu0 0.0
  %7308 = vmatmul.mubr.f32.gmra.mrb[0].mxu0 %v7218
  %v7309 = vpop.f32.mrb[0].mxu0
  %v7310 = vadd.f32 %v7212, %v7309
  %v7311 = vpop.f32.mrb[0].mxu0
  %7312 = vmatprep.mubr.f32.mxu0 0.0
  %7313 = vmatmul.mubr.f32.gmra.mrb[0].mxu0 %v7221
  %v7314 = vpop.f32.mrb[0].mxu0
  %v7315 = vadd.f32 %v7212, %v7314
  %v7316 = vpop.f32.mrb[0].mxu0
  %7317 = vmatprep.mubr.f32.mxu0 0.0
  %7318 = vmatmul.mubr.f32.gmra.mrb[0].mxu0 %v7224
  %v7319 = vpop.f32.mrb[0].mxu0
  %v7320 = vadd.f32 %v7212, %v7319
  %v7321 = vpop.f32.mrb[0].mxu0
  %7322 = vmatprep.mubr.f32.mxu0 0.0
  %7323 = vmatmul.mubr.f32.gmra.mrb[0].mxu0 %v7227
  %v7324 = vpop.f32.mrb[0].mxu0
  %v7325 = vadd.f32 %v7212, %v7324
  %v7326 = vpop.f32.mrb[0].mxu0
  %7327 = vmatprep.mubr.f32.mxu0 0.0
  %7328 = vmatmul.mubr.f32.gmra.mrb[0].mxu0 %v7230
  %v7329 = vpop.f32.mrb[0].mxu0
  %v7330 = vadd.f32 %v7212, %v7329
  %v7331 = vpop.f32.mrb[0].mxu0
  %7332 = vmatprep.mubr.f32.mxu0 0.0
  %7333 = vmatmul.mubr.f32.gmra.mrb[0].mxu0 %v7233
  %v7334 = vpop.f32.mrb[0].mxu0
  %v7335 = vadd.f32 %v7212, %v7334
  %v7336 = vpop.f32.mrb[0].mxu0
  %7337 = vmatprep.mubr.f32.mxu0 0.0
  %7338 = vmatmul.mubr.f32.gmra.mrb[0].mxu0 %v7236
  %v7339 = vpop.f32.mrb[0].mxu0
  %v7340 = vadd.f32 %v7212, %v7339
  %v7341 = vpop.f32.mrb[0].mxu0
  %7342 = vdwg.mxu0
  %v7343 = vmax.f32 %v7305, 0.0
  %v7344 = vmax.f32 %v7310, 0.0
  %v7345 = vmax.f32 %v7315, 0.0
  %v7346 = vmax.f32 %v7320, 0.0
  %v7347 = vmax.f32 %v7325, 0.0
  %v7348 = vmax.f32 %v7330, 0.0
  %v7349 = vmax.f32 %v7335, 0.0
  %v7350 = vmax.f32 %v7340, 0.0
  %v7352 = vlaneseq
  %v7353 = vshrl.u32 %v7352, 7
  %v7354 = vsub.s32 0, %v7353
  %v7355 = vrot.slane %v3849, %v7354
  %v7358 = vsel %vm3672, %v7343, 0
  %v7361 = vsel %vm3672, %v7344, 0
  %v7364 = vsel %vm3672, %v7345, 0
  %v7367 = vsel %vm3672, %v7346, 0
  %v7370 = vsel %vm3672, %v7347, 0
  %v7373 = vsel %vm3672, %v7348, 0
  %v7376 = vsel %vm3672, %v7349, 0
  %v7379 = vsel %vm3672, %v7350, 0
  %7381 = vmatprep.subr.mxu0 0.0
  %7382 = vmatpush1.msra.mxu0 %v3840
  %7383 = vmatprep.subr.mxu0 0.0
  %7384 = vmatpush1.msra.mxu0 %v3841
  %7385 = vmatprep.subr.mxu0 0.0
  %7386 = vmatpush1.msra.mxu0 %v3842
  %7387 = vmatprep.subr.mxu0 0.0
  %7388 = vmatpush1.msra.mxu0 %v3843
  %7389 = vmatprep.subr.mxu0 0.0
  %7390 = vmatpush1.msra.mxu0 %v3844
  %7391 = vmatprep.subr.mxu0 0.0
  %7392 = vmatpush1.msra.mxu0 %v3845
  %7393 = vmatprep.subr.mxu0 0.0
  %7394 = vmatpush1.msra.mxu0 %v3846
  %7395 = vmatprep.subr.mxu0 0.0
  %7396 = vmatpush1.msra.mxu0 %v3847
  %7397 = vmatprep.subr.mxu0 0.0
  %7398 = vmatpush1.msra.mxu0 0.0
  %7399 = vmatprep.subr.mxu0 0.0
  %7400 = vmatpush1.msra.mxu0 0.0
  %7401 = vmatprep.subr.mxu0 0.0
  %7402 = vmatpush1.msra.mxu0 0.0
  %7403 = vmatprep.subr.mxu0 0.0
  %7404 = vmatpush1.msra.mxu0 0.0
  %7405 = vmatprep.subr.mxu0 0.0
  %7406 = vmatpush1.msra.mxu0 0.0
  %7407 = vmatprep.subr.mxu0 0.0
  %7408 = vmatpush1.msra.mxu0 0.0
  %7409 = vmatprep.subr.mxu0 0.0
  %7410 = vmatpush1.msra.mxu0 0.0
  %7411 = vmatprep.subr.mxu0 0.0
  %7412 = vmatpush1.msra.mxu0 0.0
  %7413 = vmatprep.subr.mxu0 0.0
  %7414 = vmatpush1.msra.mxu0 0.0
  %7415 = vmatprep.subr.mxu0 0.0
  %7416 = vmatpush1.msra.mxu0 0.0
  %7417 = vmatprep.subr.mxu0 0.0
  %7418 = vmatpush1.msra.mxu0 0.0
  %7419 = vmatprep.subr.mxu0 0.0
  %7420 = vmatpush1.msra.mxu0 0.0
  %7421 = vmatprep.subr.mxu0 0.0
  %7422 = vmatpush1.msra.mxu0 0.0
  %7423 = vmatprep.subr.mxu0 0.0
  %7424 = vmatpush1.msra.mxu0 0.0
  %7425 = vmatprep.subr.mxu0 0.0
  %7426 = vmatpush1.msra.mxu0 0.0
  %7427 = vmatprep.subr.mxu0 0.0
  %7428 = vmatpush1.msra.mxu0 0.0
  %7429 = vmatprep.subr.mxu0 0.0
  %7430 = vmatpush1.msra.mxu0 0.0
  %7431 = vmatprep.subr.mxu0 0.0
  %7432 = vmatpush1.msra.mxu0 0.0
  %7433 = vmatprep.subr.mxu0 0.0
  %7434 = vmatpush1.msra.mxu0 0.0
  %7435 = vmatprep.subr.mxu0 0.0
  %7436 = vmatpush1.msra.mxu0 0.0
  %7437 = vmatprep.subr.mxu0 0.0
  %7438 = vmatpush1.msra.mxu0 0.0
  %7439 = vmatprep.subr.mxu0 0.0
  %7440 = vmatpush1.msra.mxu0 0.0
  %7441 = vmatprep.subr.mxu0 0.0
  %7442 = vmatpush1.msra.mxu0 0.0
  %7443 = vmatprep.subr.mxu0 0.0
  %7444 = vmatpush1.msra.mxu0 0.0
  %7445 = vmatprep.mubr.f32.mxu0 0.0
  %7446 = vmatmul.mubr.f32.gmra.mrb[0].mxu0 %v7358
  %v7447 = vpop.f32.mrb[0].mxu0
  %v7448 = vadd.f32 %v7355, %v7447
  %v7449 = vpop.f32.mrb[0].mxu0
  %7450 = vmatprep.mubr.f32.mxu0 0.0
  %7451 = vmatmul.mubr.f32.gmra.mrb[0].mxu0 %v7361
  %v7452 = vpop.f32.mrb[0].mxu0
  %v7453 = vadd.f32 %v7355, %v7452
  %v7454 = vpop.f32.mrb[0].mxu0
  %7455 = vmatprep.mubr.f32.mxu0 0.0
  %7456 = vmatmul.mubr.f32.gmra.mrb[0].mxu0 %v7364
  %v7457 = vpop.f32.mrb[0].mxu0
  %v7458 = vadd.f32 %v7355, %v7457
  %v7459 = vpop.f32.mrb[0].mxu0
  %7460 = vmatprep.mubr.f32.mxu0 0.0
  %7461 = vmatmul.mubr.f32.gmra.mrb[0].mxu0 %v7367
  %v7462 = vpop.f32.mrb[0].mxu0
  %v7463 = vadd.f32 %v7355, %v7462
  %v7464 = vpop.f32.mrb[0].mxu0
  %7465 = vmatprep.mubr.f32.mxu0 0.0
  %7466 = vmatmul.mubr.f32.gmra.mrb[0].mxu0 %v7370
  %v7467 = vpop.f32.mrb[0].mxu0
  %v7468 = vadd.f32 %v7355, %v7467
  %v7469 = vpop.f32.mrb[0].mxu0
  %7470 = vmatprep.mubr.f32.mxu0 0.0
  %7471 = vmatmul.mubr.f32.gmra.mrb[0].mxu0 %v7373
  %v7472 = vpop.f32.mrb[0].mxu0
  %v7473 = vadd.f32 %v7355, %v7472
  %v7474 = vpop.f32.mrb[0].mxu0
  %7475 = vmatprep.mubr.f32.mxu0 0.0
  %7476 = vmatmul.mubr.f32.gmra.mrb[0].mxu0 %v7376
  %v7477 = vpop.f32.mrb[0].mxu0
  %v7478 = vadd.f32 %v7355, %v7477
  %v7479 = vpop.f32.mrb[0].mxu0
  %7480 = vmatprep.mubr.f32.mxu0 0.0
  %7481 = vmatmul.mubr.f32.gmra.mrb[0].mxu0 %v7379
  %v7482 = vpop.f32.mrb[0].mxu0
  %v7483 = vadd.f32 %v7355, %v7482
  %v7484 = vpop.f32.mrb[0].mxu0
  %7485 = vdwg.mxu0
  %v7486 = vadd.f32 %v7012, %v7448
  %v7487 = vadd.f32 %v7013, %v7453
  %v7488 = vadd.f32 %v7014, %v7458
  %v7489 = vadd.f32 %v7015, %v7463
  %v7490 = vadd.f32 %v7016, %v7468
  %v7491 = vadd.f32 %v7017, %v7473
  %v7492 = vadd.f32 %v7018, %v7478
  %v7493 = vadd.f32 %v7019, %v7483
  %v7494 = vld [vmem:[%s14] sm:$0x1]
  %v7495 = vld [vmem:[%s15] sm:$0x1]
  %v7496 = vsel %vm113, %v7486, 0.0
  %7497 = vadd.xlane.f32.xlu0 %v7496
  %v7498 = vpop.xlane.xlu0 %7497
  %v7499 = vsel %vm113, %v7487, 0.0
  %7500 = vadd.xlane.f32.xlu0 %v7499
  %v7501 = vpop.xlane.xlu0 %7500
  %v7502 = vsel %vm113, %v7488, 0.0
  %7503 = vadd.xlane.f32.xlu0 %v7502
  %v7504 = vpop.xlane.xlu0 %7503
  %v7505 = vsel %vm113, %v7489, 0.0
  %7506 = vadd.xlane.f32.xlu0 %v7505
  %v7507 = vpop.xlane.xlu0 %7506
  %v7508 = vsel %vm113, %v7490, 0.0
  %7509 = vadd.xlane.f32.xlu0 %v7508
  %v7510 = vpop.xlane.xlu0 %7509
  %v7511 = vsel %vm113, %v7491, 0.0
  %7512 = vadd.xlane.f32.xlu0 %v7511
  %v7513 = vpop.xlane.xlu0 %7512
  %v7514 = vsel %vm113, %v7492, 0.0
  %7515 = vadd.xlane.f32.xlu0 %v7514
  %v7516 = vpop.xlane.xlu0 %7515
  %v7517 = vsel %vm113, %v7493, 0.0
  %7518 = vadd.xlane.f32.xlu0 %v7517
  %v7519 = vpop.xlane.xlu0 %7518
  %v7520 = vmul.f32 %v7498, %v138
  %v7521 = vmul.f32 %v7501, %v138
  %v7522 = vmul.f32 %v7504, %v138
  %v7523 = vmul.f32 %v7507, %v138
  %v7524 = vmul.f32 %v7510, %v138
  %v7525 = vmul.f32 %v7513, %v138
  %v7526 = vmul.f32 %v7516, %v138
  %v7527 = vmul.f32 %v7519, %v138
  %v7528 = vsub.f32 %v7486, %v7520
  %v7529 = vsub.f32 %v7487, %v7521
  %v7530 = vsub.f32 %v7488, %v7522
  %v7531 = vsub.f32 %v7489, %v7523
  %v7532 = vsub.f32 %v7490, %v7524
  %v7533 = vsub.f32 %v7491, %v7525
  %v7534 = vsub.f32 %v7492, %v7526
  %v7535 = vsub.f32 %v7493, %v7527
  %v7536 = vmul.f32 %v7528, %v7528
  %v7537 = vmul.f32 %v7529, %v7529
  %v7538 = vmul.f32 %v7530, %v7530
  %v7539 = vmul.f32 %v7531, %v7531
  %v7540 = vmul.f32 %v7532, %v7532
  %v7541 = vmul.f32 %v7533, %v7533
  %v7542 = vmul.f32 %v7534, %v7534
  %v7543 = vmul.f32 %v7535, %v7535
  %v7544 = vsel %vm113, %v7536, 0.0
  %7545 = vadd.xlane.f32.xlu0 %v7544
  %v7546 = vpop.xlane.xlu0 %7545
  %v7547 = vsel %vm113, %v7537, 0.0
  %7548 = vadd.xlane.f32.xlu0 %v7547
  %v7549 = vpop.xlane.xlu0 %7548
  %v7550 = vsel %vm113, %v7538, 0.0
  %7551 = vadd.xlane.f32.xlu0 %v7550
  %v7552 = vpop.xlane.xlu0 %7551
  %v7553 = vsel %vm113, %v7539, 0.0
  %7554 = vadd.xlane.f32.xlu0 %v7553
  %v7555 = vpop.xlane.xlu0 %7554
  %v7556 = vsel %vm113, %v7540, 0.0
  %7557 = vadd.xlane.f32.xlu0 %v7556
  %v7558 = vpop.xlane.xlu0 %7557
  %v7559 = vsel %vm113, %v7541, 0.0
  %7560 = vadd.xlane.f32.xlu0 %v7559
  %v7561 = vpop.xlane.xlu0 %7560
  %v7562 = vsel %vm113, %v7542, 0.0
  %7563 = vadd.xlane.f32.xlu0 %v7562
  %v7564 = vpop.xlane.xlu0 %7563
  %v7565 = vsel %vm113, %v7543, 0.0
  %7566 = vadd.xlane.f32.xlu0 %v7565
  %v7567 = vpop.xlane.xlu0 %7566
  %v7568 = vmul.f32 %v7546, 0.032258064
  %v7569 = vmul.f32 %v7549, 0.032258064
  %v7570 = vmul.f32 %v7552, 0.032258064
  %v7571 = vmul.f32 %v7555, 0.032258064
  %v7572 = vmul.f32 %v7558, 0.032258064
  %v7573 = vmul.f32 %v7561, 0.032258064
  %v7574 = vmul.f32 %v7564, 0.032258064
  %v7575 = vmul.f32 %v7567, 0.032258064
  %v7576 = vrsqrt.pop %v7568
  %v7577 = vmul.f32 %v7568, %v7576
  %vm7578 = vcmp.eq.f32.partialorder %v7568, inf
  %v7579 = vsel %vm7578, %v7568, %v7577
  %vm7580 = vcmp.eq.f32.partialorder %v7568, 0.0
  %v7581 = vand.u32 %v7568, 2147483648
  %v7582 = vsel %vm7580, %v7581, %v7579
  %v7583 = vrsqrt.pop %v7569
  %v7584 = vmul.f32 %v7569, %v7583
  %vm7585 = vcmp.eq.f32.partialorder %v7569, inf
  %v7586 = vsel %vm7585, %v7569, %v7584
  %vm7587 = vcmp.eq.f32.partialorder %v7569, 0.0
  %v7588 = vand.u32 %v7569, 2147483648
  %v7589 = vsel %vm7587, %v7588, %v7586
  %v7590 = vrsqrt.pop %v7570
  %v7591 = vmul.f32 %v7570, %v7590
  %vm7592 = vcmp.eq.f32.partialorder %v7570, inf
  %v7593 = vsel %vm7592, %v7570, %v7591
  %vm7594 = vcmp.eq.f32.partialorder %v7570, 0.0
  %v7595 = vand.u32 %v7570, 2147483648
  %v7596 = vsel %vm7594, %v7595, %v7593
  %v7597 = vrsqrt.pop %v7571
  %v7598 = vmul.f32 %v7571, %v7597
  %vm7599 = vcmp.eq.f32.partialorder %v7571, inf
  %v7600 = vsel %vm7599, %v7571, %v7598
  %vm7601 = vcmp.eq.f32.partialorder %v7571, 0.0
  %v7602 = vand.u32 %v7571, 2147483648
  %v7603 = vsel %vm7601, %v7602, %v7600
  %v7604 = vrsqrt.pop %v7572
  %v7605 = vmul.f32 %v7572, %v7604
  %vm7606 = vcmp.eq.f32.partialorder %v7572, inf
  %v7607 = vsel %vm7606, %v7572, %v7605
  %vm7608 = vcmp.eq.f32.partialorder %v7572, 0.0
  %v7609 = vand.u32 %v7572, 2147483648
  %v7610 = vsel %vm7608, %v7609, %v7607
  %v7611 = vrsqrt.pop %v7573
  %v7612 = vmul.f32 %v7573, %v7611
  %vm7613 = vcmp.eq.f32.partialorder %v7573, inf
  %v7614 = vsel %vm7613, %v7573, %v7612
  %vm7615 = vcmp.eq.f32.partialorder %v7573, 0.0
  %v7616 = vand.u32 %v7573, 2147483648
  %v7617 = vsel %vm7615, %v7616, %v7614
  %v7618 = vrsqrt.pop %v7574
  %v7619 = vmul.f32 %v7574, %v7618
  %vm7620 = vcmp.eq.f32.partialorder %v7574, inf
  %v7621 = vsel %vm7620, %v7574, %v7619
  %vm7622 = vcmp.eq.f32.partialorder %v7574, 0.0
  %v7623 = vand.u32 %v7574, 2147483648
  %v7624 = vsel %vm7622, %v7623, %v7621
  %v7625 = vrsqrt.pop %v7575
  %v7626 = vmul.f32 %v7575, %v7625
  %vm7627 = vcmp.eq.f32.partialorder %v7575, inf
  %v7628 = vsel %vm7627, %v7575, %v7626
  %vm7629 = vcmp.eq.f32.partialorder %v7575, 0.0
  %v7630 = vand.u32 %v7575, 2147483648
  %v7631 = vsel %vm7629, %v7630, %v7628
  %v7632 = vadd.f32 %v7582, 1e-06
  %v7633 = vadd.f32 %v7589, 1e-06
  %v7634 = vadd.f32 %v7596, 1e-06
  %v7635 = vadd.f32 %v7603, 1e-06
  %v7636 = vadd.f32 %v7610, 1e-06
  %v7637 = vadd.f32 %v7617, 1e-06
  %v7638 = vadd.f32 %v7624, 1e-06
  %v7639 = vadd.f32 %v7631, 1e-06
  %v7640 = vrcp.pop %v7632
  %v7641 = vrcp.pop %v7633
  %v7642 = vrcp.pop %v7634
  %v7643 = vrcp.pop %v7635
  %v7644 = vrcp.pop %v7636
  %v7645 = vrcp.pop %v7637
  %v7646 = vrcp.pop %v7638
  %v7647 = vrcp.pop %v7639
  %v7649 = vlaneseq
  %v7650 = vshrl.u32 %v7649, 7
  %v7651 = vsub.s32 0, %v7650
  %v7652 = vrot.slane %v7494, %v7651
  %v7654 = vmul.f32 %v7652, %v7528
  %v7655 = vmul.f32 %v7652, %v7529
  %v7656 = vmul.f32 %v7652, %v7530
  %v7657 = vmul.f32 %v7652, %v7531
  %v7658 = vmul.f32 %v7652, %v7532
  %v7659 = vmul.f32 %v7652, %v7533
  %v7660 = vmul.f32 %v7652, %v7534
  %v7661 = vmul.f32 %v7652, %v7535
  %v7662 = vmul.f32 %v7654, %v7640
  %v7663 = vmul.f32 %v7655, %v7641
  %v7664 = vmul.f32 %v7656, %v7642
  %v7665 = vmul.f32 %v7657, %v7643
  %v7666 = vmul.f32 %v7658, %v7644
  %v7667 = vmul.f32 %v7659, %v7645
  %v7668 = vmul.f32 %v7660, %v7646
  %v7669 = vmul.f32 %v7661, %v7647
  %v7671 = vlaneseq
  %v7672 = vshrl.u32 %v7671, 7
  %v7673 = vsub.s32 0, %v7672
  %v7674 = vrot.slane %v7495, %v7673
  %v7676 = vadd.f32 %v7662, %v7674
  %v7677 = vadd.f32 %v7663, %v7674
  %v7678 = vadd.f32 %v7664, %v7674
  %v7679 = vadd.f32 %v7665, %v7674
  %v7680 = vadd.f32 %v7666, %v7674
  %v7681 = vadd.f32 %v7667, %v7674
  %v7682 = vadd.f32 %v7668, %v7674
  %v7683 = vadd.f32 %v7669, %v7674
  %v7684 = vsel %vm113, %v7676, 0.0
  %v7685 = vrot.slane %v7684, 4
  %v7686 = vadd.f32 %v7684, %v7685
  %v7687 = vrot.slane %v7686, 2
  %v7688 = vadd.f32 %v7686, %v7687
  %v7689 = vrot.slane %v7688, 1
  %v7690 = vadd.f32 %v7688, %v7689
  %v7691 = vsel %vm113, %v7677, 0.0
  %v7692 = vrot.slane %v7691, 4
  %v7693 = vadd.f32 %v7691, %v7692
  %v7694 = vrot.slane %v7693, 2
  %v7695 = vadd.f32 %v7693, %v7694
  %v7696 = vrot.slane %v7695, 1
  %v7697 = vadd.f32 %v7695, %v7696
  %v7698 = vsel %vm113, %v7678, 0.0
  %v7699 = vrot.slane %v7698, 4
  %v7700 = vadd.f32 %v7698, %v7699
  %v7701 = vrot.slane %v7700, 2
  %v7702 = vadd.f32 %v7700, %v7701
  %v7703 = vrot.slane %v7702, 1
  %v7704 = vadd.f32 %v7702, %v7703
  %v7705 = vsel %vm113, %v7679, 0.0
  %v7706 = vrot.slane %v7705, 4
  %v7707 = vadd.f32 %v7705, %v7706
  %v7708 = vrot.slane %v7707, 2
  %v7709 = vadd.f32 %v7707, %v7708
  %v7710 = vrot.slane %v7709, 1
  %v7711 = vadd.f32 %v7709, %v7710
  %v7712 = vsel %vm113, %v7680, 0.0
  %v7713 = vrot.slane %v7712, 4
  %v7714 = vadd.f32 %v7712, %v7713
  %v7715 = vrot.slane %v7714, 2
  %v7716 = vadd.f32 %v7714, %v7715
  %v7717 = vrot.slane %v7716, 1
  %v7718 = vadd.f32 %v7716, %v7717
  %v7719 = vsel %vm113, %v7681, 0.0
  %v7720 = vrot.slane %v7719, 4
  %v7721 = vadd.f32 %v7719, %v7720
  %v7722 = vrot.slane %v7721, 2
  %v7723 = vadd.f32 %v7721, %v7722
  %v7724 = vrot.slane %v7723, 1
  %v7725 = vadd.f32 %v7723, %v7724
  %v7726 = vsel %vm113, %v7682, 0.0
  %v7727 = vrot.slane %v7726, 4
  %v7728 = vadd.f32 %v7726, %v7727
  %v7729 = vrot.slane %v7728, 2
  %v7730 = vadd.f32 %v7728, %v7729
  %v7731 = vrot.slane %v7730, 1
  %v7732 = vadd.f32 %v7730, %v7731
  %v7733 = vsel %vm113, %v7683, 0.0
  %v7734 = vrot.slane %v7733, 4
  %v7735 = vadd.f32 %v7733, %v7734
  %v7736 = vrot.slane %v7735, 2
  %v7737 = vadd.f32 %v7735, %v7736
  %v7738 = vrot.slane %v7737, 1
  %v7739 = vadd.f32 %v7737, %v7738
  %v7740 = vrcp.pop 8.0
  %v7741 = vmul.f32 %v7690, %v7740
  %v7742 = vmul.f32 %v7697, %v7740
  %v7743 = vmul.f32 %v7704, %v7740
  %v7744 = vmul.f32 %v7711, %v7740
  %v7745 = vmul.f32 %v7718, %v7740
  %v7746 = vmul.f32 %v7725, %v7740
  %v7747 = vmul.f32 %v7732, %v7740
  %v7748 = vmul.f32 %v7739, %v7740
  %vm7757 = vcmask 1041409
  %v7758 = vsel %vm7757, %v7742, %v7741
  %vm7759 = vcmask 1042434
  %v7760 = vsel %vm7759, %v7743, %v7758
  %vm7761 = vcmask 1043459
  %v7762 = vsel %vm7761, %v7744, %v7760
  %vm7763 = vcmask 1044484
  %v7764 = vsel %vm7763, %v7745, %v7762
  %vm7765 = vcmask 1045509
  %v7766 = vsel %vm7765, %v7746, %v7764
  %vm7767 = vcmask 1046534
  %v7768 = vsel %vm7767, %v7747, %v7766
  %vm7769 = vcmask 1047559
  %v7770 = vsel %vm7769, %v7748, %v7768
  %7772 = vst.msk [vmem:[%s16] sm:$0xff] %vm113, %v7770
  // Predicated region
  $region66: #{hierarchical_transformer_forward.2} parent=0 // pred_check
    _
  $region67: #{hierarchical_transformer_forward.2} parent=0 // pred_check_branch
    %7774 = sbr.rel (0) target = $region69
  $region68: #{hierarchical_transformer_forward.2} parent=0 // pred_region
    _
  $region69: #{hierarchical_transformer_forward.2} parent=0 // pred_fallthru
    _
  // Predicated region
  $region70: #{hierarchical_transformer_forward.2} parent=0 // pred_check
    _
  $region71: #{hierarchical_transformer_forward.2} parent=0 // pred_check_branch
    %7776 = sbr.rel (0) target = $region73
  $region72: #{hierarchical_transformer_forward.2} parent=0 // pred_region
    _
  $region73: #{hierarchical_transformer_forward.2} parent=0 // pred_fallthru
    _

</llo_original>
